<compile_context>
chip_gen: v6e
topology: v6e:2x2x1
jax: 0.10.0
libtpu: 0.0.40
codegen_flags: <defaults>
</compile_context>

<pallas_src>
import functools

import numpy as np
import jax
import jax.numpy as jnp
from jax import lax
from jax.experimental import pallas as pl
from jax.experimental.pallas import tpu as pltpu


def _num_tensorcores():
    """2 only on v7x-class chips (2 TensorCores); 1 on v5e/v6e/unknown."""
    try:
        kind = jax.devices()[0].device_kind.lower()
    except Exception:
        return 1
    return 2 if ("v7" in kind or "7x" in kind) else 1


def _choose_tm(m8, tm_max):
    """Pick a multiple-of-8 frame tile <= tm_max that minimises masked rows.

    m8 is the (already 8-padded) number of frame rows. If it fits in one tile,
    use exactly one tile (zero waste); otherwise scan multiples of 8 from tm_max
    down and keep the one with the least waste (ties -> bigger tile)."""
    tm_max = max(8, (tm_max // 8) * 8)
    if m8 <= tm_max:
        return m8
    best_tm, best_waste = 8, m8
    for tm in range(tm_max, 7, -8):
        waste = (-m8) % tm           # num_tiles * tm - m8
        if waste < best_waste:
            best_tm, best_waste = tm, waste
        if waste == 0:
            break
    return best_tm


# ----------------------------------------------------------------------------
# Pallas kernel: one STFT scale.
# Grid = (split, frame_tile). Per tile: 2 MXU matmuls against the resident fused
# cos|sin basis, VPU magnitude/log math, a sublane tree-fold into three (8,128)
# VMEM accumulators, and at the last tile of each split one cross-lane reduction
# plus a single lane-dense (1,8,128) store of [sum((Sx-Sy)^2), sum(Sx^2), sum|dlog|].
# ----------------------------------------------------------------------------
def _stft_distance_kernel(fx_ref, fy_ref, w_ref, out_ref,
                          acc_sqd, acc_sqx, acc_log,
                          *, log_eps, m_total, tiles_per_split, tm,
                          half, packed, needs_mask, mxu_precision):
    i = pl.program_id(0)          # split index (core-parallel on v7x, size 1 otherwise)
    j = pl.program_id(1)          # frame-tile within split (accumulation axis)

    @pl.when(j == 0)
    def _():
        acc_sqd[...] = jnp.zeros_like(acc_sqd)
        acc_sqx[...] = jnp.zeros_like(acc_sqx)
        acc_log[...] = jnp.zeros_like(acc_log)

    fx = fx_ref[...]
    fy = fy_ref[...]
    if needs_mask:
        # Zero invalid rows BEFORE the matmul (select semantics): stale VMEM in a
        # ragged/clamped tile can never leak, and every downstream quantity for a
        # zeroed row is exactly 0 (log(eps)-log(eps)=0), so no per-lane selects in
        # the hot elementwise path.
        tile_idx = i * tiles_per_split + j
        rows = lax.broadcasted_iota(jnp.int32, (tm, 1), 0)
        valid = (tile_idx * tm + rows) < m_total
        fx = jnp.where(valid, fx, jnp.zeros_like(fx))
        fy = jnp.where(valid, fy, jnp.zeros_like(fy))

    w = w_ref[...]
    zx = jnp.dot(fx, w, preferred_element_type=jnp.float32, precision=mxu_precision)
    zy = jnp.dot(fy, w, preferred_element_type=jnp.float32, precision=mxu_precision)

    if packed:
        # cos in lanes [0,n_freq), sin in lanes [64,64+n_freq): |z|^2 per frequency
        # is z^2 + roll(z^2, 64); lanes >= 64 hold duplicates and are masked out.
        qx = zx * zx
        qy = zy * zy
        keep = lax.broadcasted_iota(jnp.int32, (1, 128), 1) < 64
        px = jnp.where(keep, qx + pltpu.roll(qx, shift=64, axis=1), 0.0)
        py = jnp.where(keep, qy + pltpu.roll(qy, shift=64, axis=1), 0.0)
    else:
        xr, xi = zx[:, :half], zx[:, half:]
        yr, yi = zy[:, :half], zy[:, half:]
        px = xr * xr + xi * xi        # |STFT(x)|^2 (no sqrt on the sum-Sx^2 path)
        py = yr * yr + yi * yi

    mx = jnp.sqrt(px)
    my = jnp.sqrt(py)
    d = mx - my
    # Two logs (matches the PyTorch formula exactly) instead of one log + an exact
    # f32 divide: shorter single-slot EUP chain per element.
    dlog = jnp.log(mx + log_eps) - jnp.log(my + log_eps)

    F = px.shape[-1]

    def fold(v):
        # (tm, F) -> (8, F) by adding groups of 8 sublanes: pure vreg adds, so the
        # accumulator read-modify-write touches only one (8,128) slab per sum.
        return jnp.sum(v.reshape(tm // 8, 8, F), axis=0)

    acc_sqd[...] += fold(d * d)
    acc_sqx[...] += fold(px)
    acc_log[...] += fold(jnp.abs(dlog))

    # Single cross-lane reduction + one lane-dense store per split.
    @pl.when(j == pl.num_programs(1) - 1)
    def _():
        sqd = jnp.sum(acc_sqd[...])
        sqx = jnp.sum(acc_sqx[...])
        slg = jnp.sum(acc_log[...])
        lane = lax.broadcasted_iota(jnp.int32, (8, 128), 1)
        srow = lax.broadcasted_iota(jnp.int32, (8, 128), 0)
        vec = jnp.where((srow == 0) & (lane == 0), sqd,
              jnp.where((srow == 0) & (lane == 1), sqx,
              jnp.where((srow == 0) & (lane == 2), slg, 0.0)))
        out_ref[...] = vec.reshape(1, 8, 128)


def _stft_scale_sums(frames_x, frames_y, basis, packed, log_eps,
                     tm_max=512, use_bf16=False):
    """One pallas_call per scale; returns (sum_sq_diff, sum_sq_x, sum_abs_logdiff)."""
    M, K = frames_x.shape
    n_cols = basis.shape[1]
    acc_lanes = 128 if packed else n_cols // 2

    # Pad the frame count up to a multiple of 8 with zero rows (<= 7 rows; zero
    # frames contribute exactly 0 to every sum). This lets the common case use a
    # single exact tile with no ragged tail at all.
    m8 = ((M + 7) // 8) * 8
    if m8 != M:
        frames_x = jnp.pad(frames_x, ((0, m8 - M), (0, 0)))
        frames_y = jnp.pad(frames_y, ((0, m8 - M), (0, 0)))

    tm = _choose_tm(m8, tm_max)
    num_tiles = -(-m8 // tm)
    nsplit = max(1, min(_num_tensorcores(), num_tiles))   # 1 on v5e/v6e, up to 2 on v7x
    tps = -(-num_tiles // nsplit)                          # tiles per split
    needs_mask = (num_tiles * tm != m8) or (nsplit * tps != num_tiles)

    def frame_map(i, j):
        # Clamp so over-provisioned (fully masked) tiles on a ragged split stay in
        # bounds; the unclamped tile index in the kernel mask zeroes them out.
        return (jnp.minimum(i * tps + j, num_tiles - 1), 0)

    mxu_precision = lax.Precision.DEFAULT if use_bf16 else lax.Precision.HIGHEST

    kernel = functools.partial(
        _stft_distance_kernel,
        log_eps=float(log_eps), m_total=m8, tiles_per_split=tps, tm=tm,
        half=acc_lanes, packed=packed, needs_mask=needs_mask,
        mxu_precision=mxu_precision)

    # Deeper input buffering only pays off when there are enough grid steps.
    frame_kw = {"pipeline_mode": pl.Buffered(3)} if tps >= 3 else {}

    split_sem = pltpu.CORE_PARALLEL if nsplit > 1 else pltpu.ARBITRARY

    out = pl.pallas_call(
        kernel,
        out_shape=jax.ShapeDtypeStruct((nsplit, 8, 128), jnp.float32),
        grid_spec=pltpu.PrefetchScalarGridSpec(
            num_scalar_prefetch=0,
            grid=(nsplit, tps),
            in_specs=[
                pl.BlockSpec((tm, K), frame_map, **frame_kw),
                pl.BlockSpec((tm, K), frame_map, **frame_kw),
                pl.BlockSpec((K, n_cols), lambda i, j: (0, 0)),   # resident basis
            ],
            out_specs=pl.BlockSpec((1, 8, 128), lambda i, j: (i, 0, 0)),
            scratch_shapes=[pltpu.VMEM((8, acc_lanes), jnp.float32)] * 3,
        ),
        compiler_params=pltpu.CompilerParams(
            dimension_semantics=(split_sem, pltpu.ARBITRARY)),
    )(frames_x, frames_y, basis)

    sums = jnp.sum(out, axis=0)                  # reduce the per-split partials
    return sums[0, 0], sums[0, 1], sums[0, 2]


# ----------------------------------------------------------------------------
# Plain-JAX glue: synthetic MultiScaleSTFT (periodic Hann window, hop = n_fft//4,
# no center padding, magnitude output).  "Parameters" = windowed Fourier basis.
# ----------------------------------------------------------------------------
def _hann_dft(n_fft):
    n = np.arange(n_fft)
    win = 0.5 - 0.5 * np.cos(2.0 * np.pi * n / n_fft)   # periodic Hann
    n_freq = n_fft // 2 + 1
    k = np.arange(n_freq)
    ang = 2.0 * np.pi * np.outer(n, k) / n_fft
    cos = (win[:, None] * np.cos(ang)).astype(np.float32)
    sin = (-win[:, None] * np.sin(ang)).astype(np.float32)
    return cos, sin, n_freq


def make_basis(n_fft):
    """Windowed DFT basis. For small scales (n_freq <= 64) cos and sin are packed
    into one 128-lane group (cos lanes [0,n_freq), sin lanes [64,64+n_freq)); for
    bigger scales cos|sin are fused column-wise, each half zero-padded to a
    multiple of 128 lanes (zero columns contribute exactly zero to every sum)."""
    cos, sin, n_freq = _hann_dft(n_fft)
    if n_freq <= 64:
        w = np.zeros((n_fft, 128), np.float32)
        w[:, :n_freq] = cos
        w[:, 64:64 + n_freq] = sin
        return jnp.asarray(w), n_freq, True
    half = ((n_freq + 127) // 128) * 128
    w = np.zeros((n_fft, 2 * half), np.float32)
    w[:, :n_freq] = cos
    w[:, half:half + n_freq] = sin
    return jnp.asarray(w), n_freq, False


def frame_signal(x, n_fft, hop):
    B, T = x.shape
    num_frames = (T - n_fft) // hop + 1
    idx = jnp.arange(num_frames)[:, None] * hop + jnp.arange(n_fft)[None, :]
    # TODO(synk): stream the raw [B, T] signal (memory_space=pl.ANY + in-kernel
    # hop-shifted matmul decomposition) to remove this overlapping gather's ~4x
    # HBM read expansion for production-length audio; kept host-side for robustness.
    return x[:, idx]                              # [B, num_frames, n_fft]


def audio_distance_v1(x, y, scales=(128, 64), log_epsilon=1e-7, use_bf16=False):
    """JAX/Pallas equivalent of AudioDistanceV1.forward."""
    # TODO(synk): for tiny inputs the two scales could be fused into one pallas_call
    # (scalar-prefetch-selected basis region) to halve launch overhead.
    distance = jnp.float32(0.0)
    for n_fft in scales:
        hop = n_fft // 4
        w, n_freq, packed = make_basis(n_fft)
        fx = frame_signal(x, n_fft, hop).reshape(-1, n_fft)
        fy = frame_signal(y, n_fft, hop).reshape(-1, n_fft)
        n_rows = fx.shape[0]
        if use_bf16:
            fx = fx.astype(jnp.bfloat16)
            fy = fy.astype(jnp.bfloat16)
            w = w.astype(jnp.bfloat16)
        sqd, sqx, logd = _stft_scale_sums(fx, fy, w, packed, log_epsilon,
                                          use_bf16=use_bf16)
        lin_distance = sqd / sqx                        # mean((Sx-Sy)^2)/mean(Sx^2)
        log_distance = logd / (n_rows * n_freq)         # mean(|log Sx - log Sy|)
        distance = distance + lin_distance + log_distance
    return {"spectral_distance": distance}


def audio_distance_v1_ref(x, y, scales=(128, 64), log_epsilon=1e-7):
    """Pure-JAX reference for validation (faithful to the PyTorch spec)."""
    hp = lax.Precision.HIGHEST
    distance = jnp.float32(0.0)
    for n_fft in scales:
        hop = n_fft // 4
        cos_np, sin_np, _ = _hann_dft(n_fft)
        cos, sin = jnp.asarray(cos_np), jnp.asarray(sin_np)
        fx = frame_signal(x, n_fft, hop)
        fy = frame_signal(y, n_fft, hop)

        def mag(f):
            re = jnp.einsum("bmk,kf->bmf", f, cos, precision=hp)
            im = jnp.einsum("bmk,kf->bmf", f, sin, precision=hp)
            return jnp.sqrt(re * re + im * im)

        sx, sy = mag(fx), mag(fy)
        lin = jnp.mean((sx - sy) ** 2) / jnp.mean(sx ** 2)
        logd = jnp.mean(jnp.abs(jnp.log(sx + log_epsilon) - jnp.log(sy + log_epsilon)))
        distance = distance + lin + logd
    return distance


if __name__ == "__main__":
    key = jax.random.PRNGKey(0)
    kx, ky = jax.random.split(key)
    B, T = 2, 2048
    x = jax.random.normal(kx, (B, T), dtype=jnp.float32)
    y = x + 0.1 * jax.random.normal(ky, (B, T), dtype=jnp.float32)

    fwd = jax.jit(audio_distance_v1)
    out = fwd(x, y)
    dist = jax.block_until_ready(out["spectral_distance"])

    ref = jax.block_until_ready(audio_distance_v1_ref(x, y))
    np.testing.assert_allclose(np.asarray(dist), np.asarray(ref), rtol=5e-4, atol=1e-6)

    print("KERNEL_OK")
</pallas_src>

<mosaic_0001>
module attributes {stable_mosaic.version = 11 : i64} {
  func.func @_stft_distance_kernel(%arg0: i32, %arg1: i32, %arg2: memref<128x128xf32, #tpu.memory_space<vmem>>, %arg3: memref<128x128xf32, #tpu.memory_space<vmem>>, %arg4: memref<128x256xf32, #tpu.memory_space<vmem>>, %arg5: memref<1x8x128xf32, #tpu.memory_space<vmem>>, %arg6: memref<8x128xf32, #tpu.memory_space<vmem>>, %arg7: memref<8x128xf32, #tpu.memory_space<vmem>>, %arg8: memref<8x128xf32, #tpu.memory_space<vmem>>) attributes {dimension_semantics = [#tpu.dimension_semantics<arbitrary>, #tpu.dimension_semantics<arbitrary>], iteration_bounds = array<i64: 1, 1>, scalar_prefetch = 0 : i64, scratch_operands = 3 : i64, tpu.core_type = #tpu.core_type<tc>, window_params = [{transform_indices = @transform_0, window_bounds = array<i64: 128, 128>}, {transform_indices = @transform_1, window_bounds = array<i64: 128, 128>}, {pipeline_mode = #tpu.pipeline_mode<synchronous>, transform_indices = @transform_2, window_bounds = array<i64: 128, 256>}, {transform_indices = @transform_3, window_bounds = array<i64: 1, 8, 128>}]} {
    %c0_i32 = arith.constant 0 : i32
    %0 = arith.cmpi eq, %arg1, %c0_i32 : i32
    %1 = arith.extui %0 : i1 to i32
    %c0_i32_0 = arith.constant 0 : i32
    %2 = arith.cmpi ne, %1, %c0_i32_0 : i32
    scf.if %2 {
      %cst_26 = arith.constant 0.000000e+00 : f32
      %48 = vector.broadcast %cst_26 : f32 to vector<8x128xf32>
      %c0_27 = arith.constant 0 : index
      %c0_28 = arith.constant 0 : index
      %49 = vector.load %arg6[%c0_27, %c0_28] : memref<8x128xf32, #tpu.memory_space<vmem>>, vector<8x128xf32>
      tpu.vector_store %arg6[%c0_27, %c0_28], %48 {strides = array<i32>} : memref<8x128xf32, #tpu.memory_space<vmem>>, vector<8x128xf32>,
      %cst_29 = arith.constant 0.000000e+00 : f32
      %50 = vector.broadcast %cst_29 : f32 to vector<8x128xf32>
      %c0_30 = arith.constant 0 : index
      %c0_31 = arith.constant 0 : index
      %51 = vector.load %arg7[%c0_30, %c0_31] : memref<8x128xf32, #tpu.memory_space<vmem>>, vector<8x128xf32>
      tpu.vector_store %arg7[%c0_30, %c0_31], %50 {strides = array<i32>} : memref<8x128xf32, #tpu.memory_space<vmem>>, vector<8x128xf32>,
      %cst_32 = arith.constant 0.000000e+00 : f32
      %52 = vector.broadcast %cst_32 : f32 to vector<8x128xf32>
      %c0_33 = arith.constant 0 : index
      %c0_34 = arith.constant 0 : index
      %53 = vector.load %arg8[%c0_33, %c0_34] : memref<8x128xf32, #tpu.memory_space<vmem>>, vector<8x128xf32>
      tpu.vector_store %arg8[%c0_33, %c0_34], %52 {strides = array<i32>} : memref<8x128xf32, #tpu.memory_space<vmem>>, vector<8x128xf32>,
    } else {
    }
    %c0 = arith.constant 0 : index
    %c0_1 = arith.constant 0 : index
    %3 = vector.load %arg2[%c0, %c0_1] : memref<128x128xf32, #tpu.memory_space<vmem>>, vector<128x128xf32>
    %c0_2 = arith.constant 0 : index
    %c0_3 = arith.constant 0 : index
    %4 = vector.load %arg3[%c0_2, %c0_3] : memref<128x128xf32, #tpu.memory_space<vmem>>, vector<128x128xf32>
    %c0_4 = arith.constant 0 : index
    %c0_5 = arith.constant 0 : index
    %5 = vector.load %arg4[%c0_4, %c0_5] : memref<128x256xf32, #tpu.memory_space<vmem>>, vector<128x256xf32>
    %cst = arith.constant dense<0.000000e+00> : vector<128x256xf32>
    %6 = tpu.matmul %3, %5, %cst {dimension_numbers = #tpu.dot_dimension_numbers<[1], [0], [0], [1], [0, 0, 1, 1], [], []>, precision = #tpu.contract_precision<fp32>} : vector<128x128xf32>, vector<128x256xf32>, vector<128x256xf32> -> vector<128x256xf32>
    %cst_6 = arith.constant dense<0.000000e+00> : vector<128x256xf32>
    %7 = tpu.matmul %4, %5, %cst_6 {dimension_numbers = #tpu.dot_dimension_numbers<[1], [0], [0], [1], [0, 0, 1, 1], [], []>, precision = #tpu.contract_precision<fp32>} : vector<128x128xf32>, vector<128x256xf32>, vector<128x256xf32> -> vector<128x256xf32>
    %8 = vector.extract_strided_slice %6 {offsets = [0, 0], sizes = [128, 128], strides = [1, 1]} : vector<128x256xf32> to vector<128x128xf32>
    %9 = vector.extract_strided_slice %6 {offsets = [0, 128], sizes = [128, 128], strides = [1, 1]} : vector<128x256xf32> to vector<128x128xf32>
    %10 = vector.extract_strided_slice %7 {offsets = [0, 0], sizes = [128, 128], strides = [1, 1]} : vector<128x256xf32> to vector<128x128xf32>
    %11 = vector.extract_strided_slice %7 {offsets = [0, 128], sizes = [128, 128], strides = [1, 1]} : vector<128x256xf32> to vector<128x128xf32>
    %12 = arith.mulf %8, %8 : vector<128x128xf32>
    %13 = arith.mulf %9, %9 : vector<128x128xf32>
    %14 = arith.addf %12, %13 : vector<128x128xf32>
    %15 = arith.mulf %10, %10 : vector<128x128xf32>
    %16 = arith.mulf %11, %11 : vector<128x128xf32>
    %17 = arith.addf %15, %16 : vector<128x128xf32>
    %18 = math.sqrt %14 : vector<128x128xf32>
    %19 = math.sqrt %17 : vector<128x128xf32>
    %20 = arith.subf %18, %19 : vector<128x128xf32>
    %cst_7 = arith.constant 1.000000e-07 : f32
    %21 = vector.broadcast %cst_7 : f32 to vector<128x128xf32>
    %22 = arith.addf %18, %21 : vector<128x128xf32>
    %23 = math.log %22 : vector<128x128xf32>
    %cst_8 = arith.constant 1.000000e-07 : f32
    %24 = vector.broadcast %cst_8 : f32 to vector<128x128xf32>
    %25 = arith.addf %19, %24 : vector<128x128xf32>
    %26 = math.log %25 : vector<128x128xf32>
    %27 = arith.subf %23, %26 : vector<128x128xf32>
    %c0_9 = arith.constant 0 : index
    %c0_10 = arith.constant 0 : index
    %28 = vector.load %arg6[%c0_9, %c0_10] : memref<8x128xf32, #tpu.memory_space<vmem>>, vector<8x128xf32>
    %29 = arith.mulf %20, %20 : vector<128x128xf32>
    %30 = vector.shape_cast %29 : vector<128x128xf32> to vector<16x8x128xf32>
    %cst_11 = arith.constant dense<0.000000e+00> : vector<8x128xf32>
    %31 = vector.multi_reduction <add>, %30, %cst_11 [0] : vector<16x8x128xf32> to vector<8x128xf32>
    %32 = arith.addf %28, %31 : vector<8x128xf32>
    %c0_12 = arith.constant 0 : index
    %c0_13 = arith.constant 0 : index
    %33 = vector.load %arg6[%c0_12, %c0_13] : memref<8x128xf32, #tpu.memory_space<vmem>>, vector<8x128xf32>
    tpu.vector_store %arg6[%c0_12, %c0_13], %32 {strides = array<i32>} : memref<8x128xf32, #tpu.memory_space<vmem>>, vector<8x128xf32>,
    %c0_14 = arith.constant 0 : index
    %c0_15 = arith.constant 0 : index
    %34 = vector.load %arg7[%c0_14, %c0_15] : memref<8x128xf32, #tpu.memory_space<vmem>>, vector<8x128xf32>
    %35 = vector.shape_cast %14 : vector<128x128xf32> to vector<16x8x128xf32>
    %cst_16 = arith.constant dense<0.000000e+00> : vector<8x128xf32>
    %36 = vector.multi_reduction <add>, %35, %cst_16 [0] : vector<16x8x128xf32> to vector<8x128xf32>
    %37 = arith.addf %34, %36 : vector<8x128xf32>
    %c0_17 = arith.constant 0 : index
    %c0_18 = arith.constant 0 : index
    %38 = vector.load %arg7[%c0_17, %c0_18] : memref<8x128xf32, #tpu.memory_space<vmem>>, vector<8x128xf32>
    tpu.vector_store %arg7[%c0_17, %c0_18], %37 {strides = array<i32>} : memref<8x128xf32, #tpu.memory_space<vmem>>, vector<8x128xf32>,
    %c0_19 = arith.constant 0 : index
    %c0_20 = arith.constant 0 : index
    %39 = vector.load %arg8[%c0_19, %c0_20] : memref<8x128xf32, #tpu.memory_space<vmem>>, vector<8x128xf32>
    %40 = math.absf %27 : vector<128x128xf32>
    %41 = vector.shape_cast %40 : vector<128x128xf32> to vector<16x8x128xf32>
    %cst_21 = arith.constant dense<0.000000e+00> : vector<8x128xf32>
    %42 = vector.multi_reduction <add>, %41, %cst_21 [0] : vector<16x8x128xf32> to vector<8x128xf32>
    %43 = arith.addf %39, %42 : vector<8x128xf32>
    %c0_22 = arith.constant 0 : index
    %c0_23 = arith.constant 0 : index
    %44 = vector.load %arg8[%c0_22, %c0_23] : memref<8x128xf32, #tpu.memory_space<vmem>>, vector<8x128xf32>
    tpu.vector_store %arg8[%c0_22, %c0_23], %43 {strides = array<i32>} : memref<8x128xf32, #tpu.memory_space<vmem>>, vector<8x128xf32>,
    %c0_i32_24 = arith.constant 0 : i32
    %45 = arith.cmpi eq, %arg1, %c0_i32_24 : i32
    %46 = arith.extui %45 : i1 to i32
    %c0_i32_25 = arith.constant 0 : i32
    %47 = arith.cmpi ne, %46, %c0_i32_25 : i32
    scf.if %47 {
      %c0_26 = arith.constant 0 : index
      %c0_27 = arith.constant 0 : index
      %48 = vector.load %arg6[%c0_26, %c0_27] : memref<8x128xf32, #tpu.memory_space<vmem>>, vector<8x128xf32>
      %49 = vector.shape_cast %48 : vector<8x128xf32> to vector<1x8x128xf32>
      %cst_28 = arith.constant dense<0.000000e+00> : vector<1xf32>
      %50 = vector.multi_reduction <add>, %49, %cst_28 [1, 2] : vector<1x8x128xf32> to vector<1xf32>
      %51 = vector.shape_cast %50 : vector<1xf32> to vector<1x1x1xf32>
      %52 = vector.extract %51[0, 0, 0] : f32 from vector<1x1x1xf32>
      %c0_29 = arith.constant 0 : index
      %c0_30 = arith.constant 0 : index
      %53 = vector.load %arg7[%c0_29, %c0_30] : memref<8x128xf32, #tpu.memory_space<vmem>>, vector<8x128xf32>
      %54 = vector.shape_cast %53 : vector<8x128xf32> to vector<1x8x128xf32>
      %cst_31 = arith.constant dense<0.000000e+00> : vector<1xf32>
      %55 = vector.multi_reduction <add>, %54, %cst_31 [1, 2] : vector<1x8x128xf32> to vector<1xf32>
      %56 = vector.shape_cast %55 : vector<1xf32> to vector<1x1x1xf32>
      %57 = vector.extract %56[0, 0, 0] : f32 from vector<1x1x1xf32>
      %c0_32 = arith.constant 0 : index
      %c0_33 = arith.constant 0 : index
      %58 = vector.load %arg8[%c0_32, %c0_33] : memref<8x128xf32, #tpu.memory_space<vmem>>, vector<8x128xf32>
      %59 = vector.shape_cast %58 : vector<8x128xf32> to vector<1x8x128xf32>
      %cst_34 = arith.constant dense<0.000000e+00> : vector<1xf32>
      %60 = vector.multi_reduction <add>, %59, %cst_34 [1, 2] : vector<1x8x128xf32> to vector<1xf32>
      %61 = vector.shape_cast %60 : vector<1xf32> to vector<1x1x1xf32>
      %62 = vector.extract %61[0, 0, 0] : f32 from vector<1x1x1xf32>
      %63 = tpu.iota {dimensions = array<i32: 1>} : vector<8x128xi32>
      %64 = tpu.iota {dimensions = array<i32: 0>} : vector<8x128xi32>
      %c0_i32_35 = arith.constant 0 : i32
      %65 = vector.broadcast %c0_i32_35 : i32 to vector<8x128xi32>
      %66 = arith.cmpi eq, %64, %65 : vector<8x128xi32>
      %c0_i32_36 = arith.constant 0 : i32
      %67 = vector.broadcast %c0_i32_36 : i32 to vector<8x128xi32>
      %68 = arith.cmpi eq, %63, %67 : vector<8x128xi32>
      %69 = arith.andi %66, %68 : vector<8x128xi1>
      %c0_i32_37 = arith.constant 0 : i32
      %70 = vector.broadcast %c0_i32_37 : i32 to vector<8x128xi32>
      %71 = arith.cmpi eq, %64, %70 : vector<8x128xi32>
      %c1_i32 = arith.constant 1 : i32
      %72 = vector.broadcast %c1_i32 : i32 to vector<8x128xi32>
      %73 = arith.cmpi eq, %63, %72 : vector<8x128xi32>
      %74 = arith.andi %71, %73 : vector<8x128xi1>
      %c0_i32_38 = arith.constant 0 : i32
      %75 = vector.broadcast %c0_i32_38 : i32 to vector<8x128xi32>
      %76 = arith.cmpi eq, %64, %75 : vector<8x128xi32>
      %c2_i32 = arith.constant 2 : i32
      %77 = vector.broadcast %c2_i32 : i32 to vector<8x128xi32>
      %78 = arith.cmpi eq, %63, %77 : vector<8x128xi32>
      %79 = arith.andi %76, %78 : vector<8x128xi1>
      %cst_39 = arith.constant 0.000000e+00 : f32
      %80 = vector.broadcast %62 : f32 to vector<8x128xf32>
      %81 = vector.broadcast %cst_39 : f32 to vector<8x128xf32>
      %82 = arith.select %79, %80, %81 : vector<8x128xi1>, vector<8x128xf32>
      %83 = vector.broadcast %57 : f32 to vector<8x128xf32>
      %84 = arith.select %74, %83, %82 : vector<8x128xi1>, vector<8x128xf32>
      %85 = vector.broadcast %52 : f32 to vector<8x128xf32>
      %86 = arith.select %69, %85, %84 : vector<8x128xi1>, vector<8x128xf32>
      %87 = vector.shape_cast %86 : vector<8x128xf32> to vector<1x8x128xf32>
      %c0_40 = arith.constant 0 : index
      %c0_41 = arith.constant 0 : index
      %c0_42 = arith.constant 0 : index
      %88 = vector.load %arg5[%c0_40, %c0_41, %c0_42] : memref<1x8x128xf32, #tpu.memory_space<vmem>>, vector<1x8x128xf32>
      tpu.vector_store %arg5[%c0_40, %c0_41, %c0_42], %87 {strides = array<i32>} : memref<1x8x128xf32, #tpu.memory_space<vmem>>, vector<1x8x128xf32>,
    } else {
    }
    return
  }
  func.func @transform_0(%arg0: i32, %arg1: i32) -> (i32, i32) {
    %c1_i32 = arith.constant 1 : i32
    %0 = arith.muli %arg0, %c1_i32 : i32
    %1 = arith.addi %0, %arg1 : i32
    %c0_i32 = arith.constant 0 : i32
    %2 = arith.minsi %1, %c0_i32 : i32
    %c0_i32_0 = arith.constant 0 : i32
    %c0_i32_1 = arith.constant 0 : i32
    return %2, %c0_i32_0 : i32, i32
  }
  func.func @transform_1(%arg0: i32, %arg1: i32) -> (i32, i32) {
    %c1_i32 = arith.constant 1 : i32
    %0 = arith.muli %arg0, %c1_i32 : i32
    %1 = arith.addi %0, %arg1 : i32
    %c0_i32 = arith.constant 0 : i32
    %2 = arith.minsi %1, %c0_i32 : i32
    %c0_i32_0 = arith.constant 0 : i32
    %c0_i32_1 = arith.constant 0 : i32
    return %2, %c0_i32_0 : i32, i32
  }
  func.func @transform_2(%arg0: i32, %arg1: i32) -> (i32, i32) {
    %c0_i32 = arith.constant 0 : i32
    %c0_i32_0 = arith.constant 0 : i32
    %c0_i32_1 = arith.constant 0 : i32
    return %c0_i32, %c0_i32_0 : i32, i32
  }
  func.func @transform_3(%arg0: i32, %arg1: i32) -> (i32, i32, i32) {
    %c0_i32 = arith.constant 0 : i32
    %c0_i32_0 = arith.constant 0 : i32
    %c0_i32_1 = arith.constant 0 : i32
    return %arg0, %c0_i32, %c0_i32_0 : i32, i32, i32
  }
}

module attributes {stable_mosaic.version = 11 : i64} {
  func.func @_stft_distance_kernel(%arg0: i32, %arg1: i32, %arg2: memref<256x64xf32, #tpu.memory_space<vmem>>, %arg3: memref<256x64xf32, #tpu.memory_space<vmem>>, %arg4: memref<64x128xf32, #tpu.memory_space<vmem>>, %arg5: memref<1x8x128xf32, #tpu.memory_space<vmem>>, %arg6: memref<8x128xf32, #tpu.memory_space<vmem>>, %arg7: memref<8x128xf32, #tpu.memory_space<vmem>>, %arg8: memref<8x128xf32, #tpu.memory_space<vmem>>) attributes {dimension_semantics = [#tpu.dimension_semantics<arbitrary>, #tpu.dimension_semantics<arbitrary>], iteration_bounds = array<i64: 1, 1>, scalar_prefetch = 0 : i64, scratch_operands = 3 : i64, tpu.core_type = #tpu.core_type<tc>, window_params = [{transform_indices = @transform_0, window_bounds = array<i64: 256, 64>}, {transform_indices = @transform_1, window_bounds = array<i64: 256, 64>}, {pipeline_mode = #tpu.pipeline_mode<synchronous>, transform_indices = @transform_2, window_bounds = array<i64: 64, 128>}, {transform_indices = @transform_3, window_bounds = array<i64: 1, 8, 128>}]} {
    %c0_i32 = arith.constant 0 : i32
    %0 = arith.cmpi eq, %arg1, %c0_i32 : i32
    %1 = arith.extui %0 : i1 to i32
    %c0_i32_0 = arith.constant 0 : i32
    %2 = arith.cmpi ne, %1, %c0_i32_0 : i32
    scf.if %2 {
      %cst_30 = arith.constant 0.000000e+00 : f32
      %55 = vector.broadcast %cst_30 : f32 to vector<8x128xf32>
      %c0_31 = arith.constant 0 : index
      %c0_32 = arith.constant 0 : index
      %56 = vector.load %arg6[%c0_31, %c0_32] : memref<8x128xf32, #tpu.memory_space<vmem>>, vector<8x128xf32>
      tpu.vector_store %arg6[%c0_31, %c0_32], %55 {strides = array<i32>} : memref<8x128xf32, #tpu.memory_space<vmem>>, vector<8x128xf32>,
      %cst_33 = arith.constant 0.000000e+00 : f32
      %57 = vector.broadcast %cst_33 : f32 to vector<8x128xf32>
      %c0_34 = arith.constant 0 : index
      %c0_35 = arith.constant 0 : index
      %58 = vector.load %arg7[%c0_34, %c0_35] : memref<8x128xf32, #tpu.memory_space<vmem>>, vector<8x128xf32>
      tpu.vector_store %arg7[%c0_34, %c0_35], %57 {strides = array<i32>} : memref<8x128xf32, #tpu.memory_space<vmem>>, vector<8x128xf32>,
      %cst_36 = arith.constant 0.000000e+00 : f32
      %59 = vector.broadcast %cst_36 : f32 to vector<8x128xf32>
      %c0_37 = arith.constant 0 : index
      %c0_38 = arith.constant 0 : index
      %60 = vector.load %arg8[%c0_37, %c0_38] : memref<8x128xf32, #tpu.memory_space<vmem>>, vector<8x128xf32>
      tpu.vector_store %arg8[%c0_37, %c0_38], %59 {strides = array<i32>} : memref<8x128xf32, #tpu.memory_space<vmem>>, vector<8x128xf32>,
    } else {
    }
    %c0 = arith.constant 0 : index
    %c0_1 = arith.constant 0 : index
    %3 = vector.load %arg2[%c0, %c0_1] : memref<256x64xf32, #tpu.memory_space<vmem>>, vector<256x64xf32>
    %c0_2 = arith.constant 0 : index
    %c0_3 = arith.constant 0 : index
    %4 = vector.load %arg3[%c0_2, %c0_3] : memref<256x64xf32, #tpu.memory_space<vmem>>, vector<256x64xf32>
    %c0_4 = arith.constant 0 : index
    %c0_5 = arith.constant 0 : index
    %5 = vector.load %arg4[%c0_4, %c0_5] : memref<64x128xf32, #tpu.memory_space<vmem>>, vector<64x128xf32>
    %cst = arith.constant dense<0.000000e+00> : vector<256x128xf32>
    %6 = tpu.matmul %3, %5, %cst {dimension_numbers = #tpu.dot_dimension_numbers<[1], [0], [0], [1], [0, 0, 1, 1], [], []>, precision = #tpu.contract_precision<fp32>} : vector<256x64xf32>, vector<64x128xf32>, vector<256x128xf32> -> vector<256x128xf32>
    %cst_6 = arith.constant dense<0.000000e+00> : vector<256x128xf32>
    %7 = tpu.matmul %4, %5, %cst_6 {dimension_numbers = #tpu.dot_dimension_numbers<[1], [0], [0], [1], [0, 0, 1, 1], [], []>, precision = #tpu.contract_precision<fp32>} : vector<256x64xf32>, vector<64x128xf32>, vector<256x128xf32> -> vector<256x128xf32>
    %8 = arith.mulf %6, %6 : vector<256x128xf32>
    %9 = arith.mulf %7, %7 : vector<256x128xf32>
    %10 = tpu.iota {dimensions = array<i32: 1>} : vector<1x128xi32>
    %c64_i32 = arith.constant 64 : i32
    %11 = vector.broadcast %c64_i32 : i32 to vector<1x128xi32>
    %12 = arith.cmpi slt, %10, %11 : vector<1x128xi32>
    %c64_i32_7 = arith.constant 64 : i32
    %13 = tpu.dynamic_rotate %8 by %c64_i32_7 dim 1 : vector<256x128xf32>, i32 -> vector<256x128xf32>
    %14 = arith.addf %8, %13 : vector<256x128xf32>
    %cst_8 = arith.constant 0.000000e+00 : f32
    %15 = vector.shape_cast %12 : vector<1x128xi1> to vector<1x128xi1>
    %16 = vector.broadcast %15 : vector<1x128xi1> to vector<256x128xi1>
    %17 = vector.broadcast %cst_8 : f32 to vector<256x128xf32>
    %18 = arith.select %16, %14, %17 : vector<256x128xi1>, vector<256x128xf32>
    %c64_i32_9 = arith.constant 64 : i32
    %19 = tpu.dynamic_rotate %9 by %c64_i32_9 dim 1 : vector<256x128xf32>, i32 -> vector<256x128xf32>
    %20 = arith.addf %9, %19 : vector<256x128xf32>
    %cst_10 = arith.constant 0.000000e+00 : f32
    %21 = vector.shape_cast %12 : vector<1x128xi1> to vector<1x128xi1>
    %22 = vector.broadcast %21 : vector<1x128xi1> to vector<256x128xi1>
    %23 = vector.broadcast %cst_10 : f32 to vector<256x128xf32>
    %24 = arith.select %22, %20, %23 : vector<256x128xi1>, vector<256x128xf32>
    %25 = math.sqrt %18 : vector<256x128xf32>
    %26 = math.sqrt %24 : vector<256x128xf32>
    %27 = arith.subf %25, %26 : vector<256x128xf32>
    %cst_11 = arith.constant 1.000000e-07 : f32
    %28 = vector.broadcast %cst_11 : f32 to vector<256x128xf32>
    %29 = arith.addf %25, %28 : vector<256x128xf32>
    %30 = math.log %29 : vector<256x128xf32>
    %cst_12 = arith.constant 1.000000e-07 : f32
    %31 = vector.broadcast %cst_12 : f32 to vector<256x128xf32>
    %32 = arith.addf %26, %31 : vector<256x128xf32>
    %33 = math.log %32 : vector<256x128xf32>
    %34 = arith.subf %30, %33 : vector<256x128xf32>
    %c0_13 = arith.constant 0 : index
    %c0_14 = arith.constant 0 : index
    %35 = vector.load %arg6[%c0_13, %c0_14] : memref<8x128xf32, #tpu.memory_space<vmem>>, vector<8x128xf32>
    %36 = arith.mulf %27, %27 : vector<256x128xf32>
    %37 = vector.shape_cast %36 : vector<256x128xf32> to vector<32x8x128xf32>
    %cst_15 = arith.constant dense<0.000000e+00> : vector<8x128xf32>
    %38 = vector.multi_reduction <add>, %37, %cst_15 [0] : vector<32x8x128xf32> to vector<8x128xf32>
    %39 = arith.addf %35, %38 : vector<8x128xf32>
    %c0_16 = arith.constant 0 : index
    %c0_17 = arith.constant 0 : index
    %40 = vector.load %arg6[%c0_16, %c0_17] : memref<8x128xf32, #tpu.memory_space<vmem>>, vector<8x128xf32>
    tpu.vector_store %arg6[%c0_16, %c0_17], %39 {strides = array<i32>} : memref<8x128xf32, #tpu.memory_space<vmem>>, vector<8x128xf32>,
    %c0_18 = arith.constant 0 : index
    %c0_19 = arith.constant 0 : index
    %41 = vector.load %arg7[%c0_18, %c0_19] : memref<8x128xf32, #tpu.memory_space<vmem>>, vector<8x128xf32>
    %42 = vector.shape_cast %18 : vector<256x128xf32> to vector<32x8x128xf32>
    %cst_20 = arith.constant dense<0.000000e+00> : vector<8x128xf32>
    %43 = vector.multi_reduction <add>, %42, %cst_20 [0] : vector<32x8x128xf32> to vector<8x128xf32>
    %44 = arith.addf %41, %43 : vector<8x128xf32>
    %c0_21 = arith.constant 0 : index
    %c0_22 = arith.constant 0 : index
    %45 = vector.load %arg7[%c0_21, %c0_22] : memref<8x128xf32, #tpu.memory_space<vmem>>, vector<8x128xf32>
    tpu.vector_store %arg7[%c0_21, %c0_22], %44 {strides = array<i32>} : memref<8x128xf32, #tpu.memory_space<vmem>>, vector<8x128xf32>,
    %c0_23 = arith.constant 0 : index
    %c0_24 = arith.constant 0 : index
    %46 = vector.load %arg8[%c0_23, %c0_24] : memref<8x128xf32, #tpu.memory_space<vmem>>, vector<8x128xf32>
    %47 = math.absf %34 : vector<256x128xf32>
    %48 = vector.shape_cast %47 : vector<256x128xf32> to vector<32x8x128xf32>
    %cst_25 = arith.constant dense<0.000000e+00> : vector<8x128xf32>
    %49 = vector.multi_reduction <add>, %48, %cst_25 [0] : vector<32x8x128xf32> to vector<8x128xf32>
    %50 = arith.addf %46, %49 : vector<8x128xf32>
    %c0_26 = arith.constant 0 : index
    %c0_27 = arith.constant 0 : index
    %51 = vector.load %arg8[%c0_26, %c0_27] : memref<8x128xf32, #tpu.memory_space<vmem>>, vector<8x128xf32>
    tpu.vector_store %arg8[%c0_26, %c0_27], %50 {strides = array<i32>} : memref<8x128xf32, #tpu.memory_space<vmem>>, vector<8x128xf32>,
    %c0_i32_28 = arith.constant 0 : i32
    %52 = arith.cmpi eq, %arg1, %c0_i32_28 : i32
    %53 = arith.extui %52 : i1 to i32
    %c0_i32_29 = arith.constant 0 : i32
    %54 = arith.cmpi ne, %53, %c0_i32_29 : i32
    scf.if %54 {
      %c0_30 = arith.constant 0 : index
      %c0_31 = arith.constant 0 : index
      %55 = vector.load %arg6[%c0_30, %c0_31] : memref<8x128xf32, #tpu.memory_space<vmem>>, vector<8x128xf32>
      %56 = vector.shape_cast %55 : vector<8x128xf32> to vector<1x8x128xf32>
      %cst_32 = arith.constant dense<0.000000e+00> : vector<1xf32>
      %57 = vector.multi_reduction <add>, %56, %cst_32 [1, 2] : vector<1x8x128xf32> to vector<1xf32>
      %58 = vector.shape_cast %57 : vector<1xf32> to vector<1x1x1xf32>
      %59 = vector.extract %58[0, 0, 0] : f32 from vector<1x1x1xf32>
      %c0_33 = arith.constant 0 : index
      %c0_34 = arith.constant 0 : index
      %60 = vector.load %arg7[%c0_33, %c0_34] : memref<8x128xf32, #tpu.memory_space<vmem>>, vector<8x128xf32>
      %61 = vector.shape_cast %60 : vector<8x128xf32> to vector<1x8x128xf32>
      %cst_35 = arith.constant dense<0.000000e+00> : vector<1xf32>
      %62 = vector.multi_reduction <add>, %61, %cst_35 [1, 2] : vector<1x8x128xf32> to vector<1xf32>
      %63 = vector.shape_cast %62 : vector<1xf32> to vector<1x1x1xf32>
      %64 = vector.extract %63[0, 0, 0] : f32 from vector<1x1x1xf32>
      %c0_36 = arith.constant 0 : index
      %c0_37 = arith.constant 0 : index
      %65 = vector.load %arg8[%c0_36, %c0_37] : memref<8x128xf32, #tpu.memory_space<vmem>>, vector<8x128xf32>
      %66 = vector.shape_cast %65 : vector<8x128xf32> to vector<1x8x128xf32>
      %cst_38 = arith.constant dense<0.000000e+00> : vector<1xf32>
      %67 = vector.multi_reduction <add>, %66, %cst_38 [1, 2] : vector<1x8x128xf32> to vector<1xf32>
      %68 = vector.shape_cast %67 : vector<1xf32> to vector<1x1x1xf32>
      %69 = vector.extract %68[0, 0, 0] : f32 from vector<1x1x1xf32>
      %70 = tpu.iota {dimensions = array<i32: 1>} : vector<8x128xi32>
      %71 = tpu.iota {dimensions = array<i32: 0>} : vector<8x128xi32>
      %c0_i32_39 = arith.constant 0 : i32
      %72 = vector.broadcast %c0_i32_39 : i32 to vector<8x128xi32>
      %73 = arith.cmpi eq, %71, %72 : vector<8x128xi32>
      %c0_i32_40 = arith.constant 0 : i32
      %74 = vector.broadcast %c0_i32_40 : i32 to vector<8x128xi32>
      %75 = arith.cmpi eq, %70, %74 : vector<8x128xi32>
      %76 = arith.andi %73, %75 : vector<8x128xi1>
      %c0_i32_41 = arith.constant 0 : i32
      %77 = vector.broadcast %c0_i32_41 : i32 to vector<8x128xi32>
      %78 = arith.cmpi eq, %71, %77 : vector<8x128xi32>
      %c1_i32 = arith.constant 1 : i32
      %79 = vector.broadcast %c1_i32 : i32 to vector<8x128xi32>
      %80 = arith.cmpi eq, %70, %79 : vector<8x128xi32>
      %81 = arith.andi %78, %80 : vector<8x128xi1>
      %c0_i32_42 = arith.constant 0 : i32
      %82 = vector.broadcast %c0_i32_42 : i32 to vector<8x128xi32>
      %83 = arith.cmpi eq, %71, %82 : vector<8x128xi32>
      %c2_i32 = arith.constant 2 : i32
      %84 = vector.broadcast %c2_i32 : i32 to vector<8x128xi32>
      %85 = arith.cmpi eq, %70, %84 : vector<8x128xi32>
      %86 = arith.andi %83, %85 : vector<8x128xi1>
      %cst_43 = arith.constant 0.000000e+00 : f32
      %87 = vector.broadcast %69 : f32 to vector<8x128xf32>
      %88 = vector.broadcast %cst_43 : f32 to vector<8x128xf32>
      %89 = arith.select %86, %87, %88 : vector<8x128xi1>, vector<8x128xf32>
      %90 = vector.broadcast %64 : f32 to vector<8x128xf32>
      %91 = arith.select %81, %90, %89 : vector<8x128xi1>, vector<8x128xf32>
      %92 = vector.broadcast %59 : f32 to vector<8x128xf32>
      %93 = arith.select %76, %92, %91 : vector<8x128xi1>, vector<8x128xf32>
      %94 = vector.shape_cast %93 : vector<8x128xf32> to vector<1x8x128xf32>
      %c0_44 = arith.constant 0 : index
      %c0_45 = arith.constant 0 : index
      %c0_46 = arith.constant 0 : index
      %95 = vector.load %arg5[%c0_44, %c0_45, %c0_46] : memref<1x8x128xf32, #tpu.memory_space<vmem>>, vector<1x8x128xf32>
      tpu.vector_store %arg5[%c0_44, %c0_45, %c0_46], %94 {strides = array<i32>} : memref<1x8x128xf32, #tpu.memory_space<vmem>>, vector<1x8x128xf32>,
    } else {
    }
    return
  }
  func.func @transform_0(%arg0: i32, %arg1: i32) -> (i32, i32) {
    %c1_i32 = arith.constant 1 : i32
    %0 = arith.muli %arg0, %c1_i32 : i32
    %1 = arith.addi %0, %arg1 : i32
    %c0_i32 = arith.constant 0 : i32
    %2 = arith.minsi %1, %c0_i32 : i32
    %c0_i32_0 = arith.constant 0 : i32
    %c0_i32_1 = arith.constant 0 : i32
    return %2, %c0_i32_0 : i32, i32
  }
  func.func @transform_1(%arg0: i32, %arg1: i32) -> (i32, i32) {
    %c1_i32 = arith.constant 1 : i32
    %0 = arith.muli %arg0, %c1_i32 : i32
    %1 = arith.addi %0, %arg1 : i32
    %c0_i32 = arith.constant 0 : i32
    %2 = arith.minsi %1, %c0_i32 : i32
    %c0_i32_0 = arith.constant 0 : i32
    %c0_i32_1 = arith.constant 0 : i32
    return %2, %c0_i32_0 : i32, i32
  }
  func.func @transform_2(%arg0: i32, %arg1: i32) -> (i32, i32) {
    %c0_i32 = arith.constant 0 : i32
    %c0_i32_0 = arith.constant 0 : i32
    %c0_i32_1 = arith.constant 0 : i32
    return %c0_i32, %c0_i32_0 : i32, i32
  }
  func.func @transform_3(%arg0: i32, %arg1: i32) -> (i32, i32, i32) {
    %c0_i32 = arith.constant 0 : i32
    %c0_i32_0 = arith.constant 0 : i32
    %c0_i32_1 = arith.constant 0 : i32
    return %arg0, %c0_i32, %c0_i32_0 : i32, i32, i32
  }
}

</mosaic_0001>

<llo_original>
// kernel: audio_distance_v1.2
$region0: #{audio_distance_v1.2}
  #allocation0 [shape = 'u32[]', space=smem, size = 0x4, offset = 0x4, fixed_abs, tag = 'smem constant byte address 0x4 - core index']
  #allocation1 [shape = 'u32[144,128]{1,0:T(1,128)}', space=vmem, size = 0x12000, scoped, tag = 'internal scratch']
  #allocation2 [shape = 'f32[8,128]{1,0:T(8,128)}', space=vmem, size = 0x1000, scoped, tag = 'scratch operand']
  #allocation3 [shape = 'f32[8,128]{1,0:T(8,128)}', space=vmem, size = 0x1000, scoped, tag = 'scratch operand']
  #allocation4 [shape = 'f32[8,128]{1,0:T(8,128)}', space=vmem, size = 0x1000, scoped, tag = 'scratch operand']
  %s0 = inlined_call_operand.vmem [shape: f32[128,128], index: 0, kind: input, shape index: {}]
  %s1 = inlined_call_operand.vmem [shape: f32[128,128], index: 1, kind: input, shape index: {}]
  %s2 = inlined_call_operand.vmem [shape: f32[128,256], index: 2, kind: input, shape index: {}]
  %s3 = inlined_call_operand.vmem [shape: f32[1,8,128], index: 3, kind: output, shape index: {}]
  %s4 = sld [smem:[#allocation0]]
  $region30: #{audio_distance_v1.2} parent=0
    _
  %s6 = ssub.s32 1, %s4
  %s7 = scalar_select 0, %s6, %s4
  // Predicated region
  $region2: #{audio_distance_v1.2} parent=0 // pred_check
    _
  $region3: #{audio_distance_v1.2} parent=0 // pred_check_branch
    %9 = sbr.rel (0) target = $region5
  $region4: #{audio_distance_v1.2} parent=0 // pred_region
    %s10 = sadd.s32 0, 0
    %p11 = scmp.lt.s32.totalorder %s10, 0
    %s12 = scalar_select %p11, %s10, 0
    %s13 = smul.u32 16, %s12
    %p14 = scmp.lt.s32.totalorder %s13, 15
    %s15 = scalar_select %p14, %s13, 15
    %s16 = smul.addr %s15, 8
    %s17 = scalar_lea.vmem %s0, %s16
    %s18 = sadd.s32 0, 0
    %p19 = scmp.lt.s32.totalorder %s18, 0
    %s20 = scalar_select %p19, %s18, 0
    %s21 = smul.u32 16, %s20
  $region5: #{audio_distance_v1.2} parent=0 // pred_fallthru
    _
  // Predicated region
  $region6: #{audio_distance_v1.2} parent=0 // pred_check
    _
  $region7: #{audio_distance_v1.2} parent=0 // pred_check_branch
    %23 = sbr.rel (0) target = $region9
  $region8: #{audio_distance_v1.2} parent=0 // pred_region
    %s24 = sadd.s32 0, 0
    %p25 = scmp.lt.s32.totalorder %s24, 0
    %s26 = scalar_select %p25, %s24, 0
    %s27 = smul.u32 16, %s26
    %p28 = scmp.lt.s32.totalorder %s27, 15
    %s29 = scalar_select %p28, %s27, 15
    %s30 = smul.addr %s29, 8
    %s31 = scalar_lea.vmem %s1, %s30
    %s32 = sadd.s32 0, 0
    %p33 = scmp.lt.s32.totalorder %s32, 0
    %s34 = scalar_select %p33, %s32, 0
    %s35 = smul.u32 16, %s34
  $region9: #{audio_distance_v1.2} parent=0 // pred_fallthru
    _
  // Predicated region
  $region10: #{audio_distance_v1.2} parent=0 // pred_check
    _
  $region11: #{audio_distance_v1.2} parent=0 // pred_check_branch
    %37 = sbr.rel (0) target = $region13
  $region12: #{audio_distance_v1.2} parent=0 // pred_region
    _
  $region13: #{audio_distance_v1.2} parent=0 // pred_fallthru
    _
  %s38 = sadd.s32 0, 0
  %p39 = scmp.lt.s32.totalorder %s38, 0
  %s40 = scalar_select %p39, %s38, 0
  %s41 = smul.u32 16, %s40
  %p42 = scmp.lt.s32.totalorder %s41, 15
  %s43 = scalar_select %p42, %s41, 15
  %s44 = smul.addr %s43, 8
  %s45 = scalar_lea.vmem %s0, %s44
  %s46 = sadd.s32 0, 0
  %p47 = scmp.lt.s32.totalorder %s46, 0
  %s48 = scalar_select %p47, %s46, 0
  %s49 = smul.u32 16, %s48
  %p50 = scmp.lt.s32.totalorder %s49, 15
  %s51 = scalar_select %p50, %s49, 15
  %s52 = smul.addr %s51, 8
  %s53 = scalar_lea.vmem %s1, %s52
  %s54 = sadd.s32 0, 0
  %p55 = scmp.lt.s32.totalorder %s54, 0
  %s56 = scalar_select %p55, %s54, 0
  %s57 = smul.u32 16, %s56
  %p58 = scmp.lt.s32.totalorder %s57, 15
  %s59 = scalar_select %p58, %s57, 15
  %s60 = smul.addr %s59, 8
  %s61 = scalar_lea.vmem %s0, %s60
  %s62 = sadd.s32 0, 0
  %p63 = scmp.lt.s32.totalorder %s62, 0
  %s64 = scalar_select %p63, %s62, 0
  %s65 = smul.u32 16, %s64
  %s66 = sadd.s32 0, 0
  %p67 = scmp.lt.s32.totalorder %s66, 0
  %s68 = scalar_select %p67, %s66, 0
  %s69 = smul.u32 16, %s68
  %p70 = scmp.lt.s32.totalorder %s69, 15
  %s71 = scalar_select %p70, %s69, 15
  %s72 = smul.addr %s71, 8
  %s73 = scalar_lea.vmem %s1, %s72
  %s74 = sadd.s32 0, 0
  %p75 = scmp.lt.s32.totalorder %s74, 0
  %s76 = scalar_select %p75, %s74, 0
  %s77 = smul.u32 16, %s76
  %p78 = scmp.eq.s32.totalorder 0, 0
  // Predicated region
  $region14: #{audio_distance_v1.2} parent=0 // pred_check
    %p79 = pneg %p78
  $region15: #{audio_distance_v1.2} parent=0 // pred_check_branch
    %81 = sbr.rel (%p79) target = $region17
  $region16: #{audio_distance_v1.2} parent=0 // pred_region
    %82 = vst [vmem:[#allocation2] sm:$0xff] 0.0
    %83 = vst [vmem:[#allocation3] sm:$0xff] 0.0
    %84 = vst [vmem:[#allocation4] sm:$0xff] 0.0
  $region17: #{audio_distance_v1.2} parent=0 // pred_fallthru
    _
  %v85 = vld [vmem:[%s61] sm:$0xff]
  %v86 = vld [vmem:[%s61 + $0x8] sm:$0xff]
  %v87 = vld [vmem:[%s61 + $0x10] sm:$0xff]
  %v88 = vld [vmem:[%s61 + $0x18] sm:$0xff]
  %v89 = vld [vmem:[%s61 + $0x20] sm:$0xff]
  %v90 = vld [vmem:[%s61 + $0x28] sm:$0xff]
  %v91 = vld [vmem:[%s61 + $0x30] sm:$0xff]
  %v92 = vld [vmem:[%s61 + $0x38] sm:$0xff]
  %v93 = vld [vmem:[%s61 + $0x40] sm:$0xff]
  %v94 = vld [vmem:[%s61 + $0x48] sm:$0xff]
  %v95 = vld [vmem:[%s61 + $0x50] sm:$0xff]
  %v96 = vld [vmem:[%s61 + $0x58] sm:$0xff]
  %v97 = vld [vmem:[%s61 + $0x60] sm:$0xff]
  %v98 = vld [vmem:[%s61 + $0x68] sm:$0xff]
  %v99 = vld [vmem:[%s61 + $0x70] sm:$0xff]
  %v100 = vld [vmem:[%s61 + $0x78] sm:$0xff]
  %v101 = vld [vmem:[%s73] sm:$0xff]
  %v102 = vld [vmem:[%s73 + $0x8] sm:$0xff]
  %v103 = vld [vmem:[%s73 + $0x10] sm:$0xff]
  %v104 = vld [vmem:[%s73 + $0x18] sm:$0xff]
  %v105 = vld [vmem:[%s73 + $0x20] sm:$0xff]
  %v106 = vld [vmem:[%s73 + $0x28] sm:$0xff]
  %v107 = vld [vmem:[%s73 + $0x30] sm:$0xff]
  %v108 = vld [vmem:[%s73 + $0x38] sm:$0xff]
  %v109 = vld [vmem:[%s73 + $0x40] sm:$0xff]
  %v110 = vld [vmem:[%s73 + $0x48] sm:$0xff]
  %v111 = vld [vmem:[%s73 + $0x50] sm:$0xff]
  %v112 = vld [vmem:[%s73 + $0x58] sm:$0xff]
  %v113 = vld [vmem:[%s73 + $0x60] sm:$0xff]
  %v114 = vld [vmem:[%s73 + $0x68] sm:$0xff]
  %v115 = vld [vmem:[%s73 + $0x70] sm:$0xff]
  %v116 = vld [vmem:[%s73 + $0x78] sm:$0xff]
  %v117 = vld [vmem:[%s2] sm:$0xff]
  %v118 = vld [vmem:[%s2 + $0x8] sm:$0xff]
  %v119 = vld [vmem:[%s2 + $0x10] sm:$0xff]
  %v120 = vld [vmem:[%s2 + $0x18] sm:$0xff]
  %v121 = vld [vmem:[%s2 + $0x20] sm:$0xff]
  %v122 = vld [vmem:[%s2 + $0x28] sm:$0xff]
  %v123 = vld [vmem:[%s2 + $0x30] sm:$0xff]
  %v124 = vld [vmem:[%s2 + $0x38] sm:$0xff]
  %v125 = vld [vmem:[%s2 + $0x40] sm:$0xff]
  %v126 = vld [vmem:[%s2 + $0x48] sm:$0xff]
  %v127 = vld [vmem:[%s2 + $0x50] sm:$0xff]
  %v128 = vld [vmem:[%s2 + $0x58] sm:$0xff]
  %v129 = vld [vmem:[%s2 + $0x60] sm:$0xff]
  %v130 = vld [vmem:[%s2 + $0x68] sm:$0xff]
  %v131 = vld [vmem:[%s2 + $0x70] sm:$0xff]
  %v132 = vld [vmem:[%s2 + $0x78] sm:$0xff]
  %v133 = vld [vmem:[%s2 + $0x80] sm:$0xff]
  %v134 = vld [vmem:[%s2 + $0x88] sm:$0xff]
  %v135 = vld [vmem:[%s2 + $0x90] sm:$0xff]
  %v136 = vld [vmem:[%s2 + $0x98] sm:$0xff]
  %v137 = vld [vmem:[%s2 + $0xa0] sm:$0xff]
  %v138 = vld [vmem:[%s2 + $0xa8] sm:$0xff]
  %v139 = vld [vmem:[%s2 + $0xb0] sm:$0xff]
  %v140 = vld [vmem:[%s2 + $0xb8] sm:$0xff]
  %v141 = vld [vmem:[%s2 + $0xc0] sm:$0xff]
  %v142 = vld [vmem:[%s2 + $0xc8] sm:$0xff]
  %v143 = vld [vmem:[%s2 + $0xd0] sm:$0xff]
  %v144 = vld [vmem:[%s2 + $0xd8] sm:$0xff]
  %v145 = vld [vmem:[%s2 + $0xe0] sm:$0xff]
  %v146 = vld [vmem:[%s2 + $0xe8] sm:$0xff]
  %v147 = vld [vmem:[%s2 + $0xf0] sm:$0xff]
  %v148 = vld [vmem:[%s2 + $0xf8] sm:$0xff]
  %v149 = vand.u32 %v148, 4294901760
  %150 = vmatprep.subr.mxu0 %v149
  %v151 = vand.u32 %v147, 4294901760
  %152 = vmatpush1.msra.mxu0 %v151
  %v153 = vand.u32 %v146, 4294901760
  %154 = vmatprep.subr.mxu0 %v153
  %v155 = vand.u32 %v145, 4294901760
  %156 = vmatpush1.msra.mxu0 %v155
  %v157 = vand.u32 %v144, 4294901760
  %158 = vmatprep.subr.mxu0 %v157
  %v159 = vand.u32 %v143, 4294901760
  %160 = vmatpush1.msra.mxu0 %v159
  %v161 = vand.u32 %v142, 4294901760
  %162 = vmatprep.subr.mxu0 %v161
  %v163 = vand.u32 %v141, 4294901760
  %164 = vmatpush1.msra.mxu0 %v163
  %v165 = vand.u32 %v140, 4294901760
  %166 = vmatprep.subr.mxu0 %v165
  %v167 = vand.u32 %v139, 4294901760
  %168 = vmatpush1.msra.mxu0 %v167
  %v169 = vand.u32 %v138, 4294901760
  %170 = vmatprep.subr.mxu0 %v169
  %v171 = vand.u32 %v137, 4294901760
  %172 = vmatpush1.msra.mxu0 %v171
  %v173 = vand.u32 %v136, 4294901760
  %174 = vmatprep.subr.mxu0 %v173
  %v175 = vand.u32 %v135, 4294901760
  %176 = vmatpush1.msra.mxu0 %v175
  %v177 = vand.u32 %v134, 4294901760
  %178 = vmatprep.subr.mxu0 %v177
  %v179 = vand.u32 %v133, 4294901760
  %180 = vmatpush1.msra.mxu0 %v179
  %v181 = vand.u32 %v132, 4294901760
  %182 = vmatprep.subr.mxu0 %v181
  %v183 = vand.u32 %v131, 4294901760
  %184 = vmatpush1.msra.mxu0 %v183
  %v185 = vand.u32 %v130, 4294901760
  %186 = vmatprep.subr.mxu0 %v185
  %v187 = vand.u32 %v129, 4294901760
  %188 = vmatpush1.msra.mxu0 %v187
  %v189 = vand.u32 %v128, 4294901760
  %190 = vmatprep.subr.mxu0 %v189
  %v191 = vand.u32 %v127, 4294901760
  %192 = vmatpush1.msra.mxu0 %v191
  %v193 = vand.u32 %v126, 4294901760
  %194 = vmatprep.subr.mxu0 %v193
  %v195 = vand.u32 %v125, 4294901760
  %196 = vmatpush1.msra.mxu0 %v195
  %v197 = vand.u32 %v124, 4294901760
  %198 = vmatprep.subr.mxu0 %v197
  %v199 = vand.u32 %v123, 4294901760
  %200 = vmatpush1.msra.mxu0 %v199
  %v201 = vand.u32 %v122, 4294901760
  %202 = vmatprep.subr.mxu0 %v201
  %v203 = vand.u32 %v121, 4294901760
  %204 = vmatpush1.msra.mxu0 %v203
  %v205 = vand.u32 %v120, 4294901760
  %206 = vmatprep.subr.mxu0 %v205
  %v207 = vand.u32 %v119, 4294901760
  %208 = vmatpush1.msra.mxu0 %v207
  %v209 = vand.u32 %v118, 4294901760
  %210 = vmatprep.subr.mxu0 %v209
  %v211 = vand.u32 %v117, 4294901760
  %212 = vmatpush1.msra.mxu0 %v211
  %213 = vmatprep.subr.mxu0 0.0
  %214 = vmatpush2.msra.mxu0 0.0
  %215 = vmatprep.subr.mxu0 0.0
  %216 = vmatpush2.msra.mxu0 0.0
  %217 = vmatprep.subr.mxu0 0.0
  %218 = vmatpush2.msra.mxu0 0.0
  %219 = vmatprep.subr.mxu0 0.0
  %220 = vmatpush2.msra.mxu0 0.0
  %221 = vmatprep.subr.mxu0 0.0
  %222 = vmatpush2.msra.mxu0 0.0
  %223 = vmatprep.subr.mxu0 0.0
  %224 = vmatpush2.msra.mxu0 0.0
  %225 = vmatprep.subr.mxu0 0.0
  %226 = vmatpush2.msra.mxu0 0.0
  %227 = vmatprep.subr.mxu0 0.0
  %228 = vmatpush2.msra.mxu0 0.0
  %229 = vmatprep.subr.mxu0 0.0
  %230 = vmatpush2.msra.mxu0 0.0
  %231 = vmatprep.subr.mxu0 0.0
  %232 = vmatpush2.msra.mxu0 0.0
  %233 = vmatprep.subr.mxu0 0.0
  %234 = vmatpush2.msra.mxu0 0.0
  %235 = vmatprep.subr.mxu0 0.0
  %236 = vmatpush2.msra.mxu0 0.0
  %237 = vmatprep.subr.mxu0 0.0
  %238 = vmatpush2.msra.mxu0 0.0
  %239 = vmatprep.subr.mxu0 0.0
  %240 = vmatpush2.msra.mxu0 0.0
  %241 = vmatprep.subr.mxu0 0.0
  %242 = vmatpush2.msra.mxu0 0.0
  %243 = vmatprep.subr.mxu0 0.0
  %244 = vmatpush2.msra.mxu0 0.0
  %245 = vmatprep.mubr.f32.mxu0 0.0
  %v246 = vand.u32 %v85, 4294901760
  %v247 = vsub.f32 %v85, %v246
  %v248 = vand.u32 %v247, 4294901760
  %v249 = vsub.f32 %v247, %v248
  %v250 = vand.u32 %v249, 4294901760
  %251 = vmatmul.mubr.f32.gmra.mxu0 %v250
  %v252 = vpop.f32.mrf.mxu0
  %v253 = vadd.f32 0.0, %v252
  %v254 = vpop.f32.mrf.mxu0
  %v255 = vadd.f32 0.0, %v254
  %256 = vmatprep.mubr.f32.mxu0 0.0
  %v257 = vand.u32 %v86, 4294901760
  %v258 = vsub.f32 %v86, %v257
  %v259 = vand.u32 %v258, 4294901760
  %v260 = vsub.f32 %v258, %v259
  %v261 = vand.u32 %v260, 4294901760
  %262 = vmatmul.mubr.f32.gmra.mxu0 %v261
  %v263 = vpop.f32.mrf.mxu0
  %v264 = vadd.f32 0.0, %v263
  %v265 = vpop.f32.mrf.mxu0
  %v266 = vadd.f32 0.0, %v265
  %267 = vmatprep.mubr.f32.mxu0 0.0
  %v268 = vand.u32 %v87, 4294901760
  %v269 = vsub.f32 %v87, %v268
  %v270 = vand.u32 %v269, 4294901760
  %v271 = vsub.f32 %v269, %v270
  %v272 = vand.u32 %v271, 4294901760
  %273 = vmatmul.mubr.f32.gmra.mxu0 %v272
  %v274 = vpop.f32.mrf.mxu0
  %v275 = vadd.f32 0.0, %v274
  %v276 = vpop.f32.mrf.mxu0
  %v277 = vadd.f32 0.0, %v276
  %278 = vmatprep.mubr.f32.mxu0 0.0
  %v279 = vand.u32 %v88, 4294901760
  %v280 = vsub.f32 %v88, %v279
  %v281 = vand.u32 %v280, 4294901760
  %v282 = vsub.f32 %v280, %v281
  %v283 = vand.u32 %v282, 4294901760
  %284 = vmatmul.mubr.f32.gmra.mxu0 %v283
  %v285 = vpop.f32.mrf.mxu0
  %v286 = vadd.f32 0.0, %v285
  %v287 = vpop.f32.mrf.mxu0
  %v288 = vadd.f32 0.0, %v287
  %289 = vmatprep.mubr.f32.mxu0 0.0
  %v290 = vand.u32 %v89, 4294901760
  %v291 = vsub.f32 %v89, %v290
  %v292 = vand.u32 %v291, 4294901760
  %v293 = vsub.f32 %v291, %v292
  %v294 = vand.u32 %v293, 4294901760
  %295 = vmatmul.mubr.f32.gmra.mxu0 %v294
  %v296 = vpop.f32.mrf.mxu0
  %v297 = vadd.f32 0.0, %v296
  %v298 = vpop.f32.mrf.mxu0
  %v299 = vadd.f32 0.0, %v298
  %300 = vmatprep.mubr.f32.mxu0 0.0
  %v301 = vand.u32 %v90, 4294901760
  %v302 = vsub.f32 %v90, %v301
  %v303 = vand.u32 %v302, 4294901760
  %v304 = vsub.f32 %v302, %v303
  %v305 = vand.u32 %v304, 4294901760
  %306 = vmatmul.mubr.f32.gmra.mxu0 %v305
  %v307 = vpop.f32.mrf.mxu0
  %v308 = vadd.f32 0.0, %v307
  %v309 = vpop.f32.mrf.mxu0
  %v310 = vadd.f32 0.0, %v309
  %311 = vmatprep.mubr.f32.mxu0 0.0
  %v312 = vand.u32 %v91, 4294901760
  %v313 = vsub.f32 %v91, %v312
  %v314 = vand.u32 %v313, 4294901760
  %v315 = vsub.f32 %v313, %v314
  %v316 = vand.u32 %v315, 4294901760
  %317 = vmatmul.mubr.f32.gmra.mxu0 %v316
  %v318 = vpop.f32.mrf.mxu0
  %v319 = vadd.f32 0.0, %v318
  %v320 = vpop.f32.mrf.mxu0
  %v321 = vadd.f32 0.0, %v320
  %322 = vmatprep.mubr.f32.mxu0 0.0
  %v323 = vand.u32 %v92, 4294901760
  %v324 = vsub.f32 %v92, %v323
  %v325 = vand.u32 %v324, 4294901760
  %v326 = vsub.f32 %v324, %v325
  %v327 = vand.u32 %v326, 4294901760
  %328 = vmatmul.mubr.f32.gmra.mxu0 %v327
  %v329 = vpop.f32.mrf.mxu0
  %v330 = vadd.f32 0.0, %v329
  %v331 = vpop.f32.mrf.mxu0
  %v332 = vadd.f32 0.0, %v331
  %333 = vmatprep.mubr.f32.mxu0 0.0
  %v334 = vand.u32 %v93, 4294901760
  %v335 = vsub.f32 %v93, %v334
  %v336 = vand.u32 %v335, 4294901760
  %v337 = vsub.f32 %v335, %v336
  %v338 = vand.u32 %v337, 4294901760
  %339 = vmatmul.mubr.f32.gmra.mxu0 %v338
  %v340 = vpop.f32.mrf.mxu0
  %v341 = vadd.f32 0.0, %v340
  %v342 = vpop.f32.mrf.mxu0
  %v343 = vadd.f32 0.0, %v342
  %344 = vmatprep.mubr.f32.mxu0 0.0
  %v345 = vand.u32 %v94, 4294901760
  %v346 = vsub.f32 %v94, %v345
  %v347 = vand.u32 %v346, 4294901760
  %v348 = vsub.f32 %v346, %v347
  %v349 = vand.u32 %v348, 4294901760
  %350 = vmatmul.mubr.f32.gmra.mxu0 %v349
  %v351 = vpop.f32.mrf.mxu0
  %v352 = vadd.f32 0.0, %v351
  %v353 = vpop.f32.mrf.mxu0
  %v354 = vadd.f32 0.0, %v353
  %355 = vmatprep.mubr.f32.mxu0 0.0
  %v356 = vand.u32 %v95, 4294901760
  %v357 = vsub.f32 %v95, %v356
  %v358 = vand.u32 %v357, 4294901760
  %v359 = vsub.f32 %v357, %v358
  %v360 = vand.u32 %v359, 4294901760
  %361 = vmatmul.mubr.f32.gmra.mxu0 %v360
  %v362 = vpop.f32.mrf.mxu0
  %v363 = vadd.f32 0.0, %v362
  %v364 = vpop.f32.mrf.mxu0
  %v365 = vadd.f32 0.0, %v364
  %366 = vmatprep.mubr.f32.mxu0 0.0
  %v367 = vand.u32 %v96, 4294901760
  %v368 = vsub.f32 %v96, %v367
  %v369 = vand.u32 %v368, 4294901760
  %v370 = vsub.f32 %v368, %v369
  %v371 = vand.u32 %v370, 4294901760
  %372 = vmatmul.mubr.f32.gmra.mxu0 %v371
  %v373 = vpop.f32.mrf.mxu0
  %v374 = vadd.f32 0.0, %v373
  %v375 = vpop.f32.mrf.mxu0
  %v376 = vadd.f32 0.0, %v375
  %377 = vmatprep.mubr.f32.mxu0 0.0
  %v378 = vand.u32 %v97, 4294901760
  %v379 = vsub.f32 %v97, %v378
  %v380 = vand.u32 %v379, 4294901760
  %v381 = vsub.f32 %v379, %v380
  %v382 = vand.u32 %v381, 4294901760
  %383 = vmatmul.mubr.f32.gmra.mxu0 %v382
  %v384 = vpop.f32.mrf.mxu0
  %v385 = vadd.f32 0.0, %v384
  %v386 = vpop.f32.mrf.mxu0
  %v387 = vadd.f32 0.0, %v386
  %388 = vmatprep.mubr.f32.mxu0 0.0
  %v389 = vand.u32 %v98, 4294901760
  %v390 = vsub.f32 %v98, %v389
  %v391 = vand.u32 %v390, 4294901760
  %v392 = vsub.f32 %v390, %v391
  %v393 = vand.u32 %v392, 4294901760
  %394 = vmatmul.mubr.f32.gmra.mxu0 %v393
  %v395 = vpop.f32.mrf.mxu0
  %v396 = vadd.f32 0.0, %v395
  %v397 = vpop.f32.mrf.mxu0
  %v398 = vadd.f32 0.0, %v397
  %399 = vmatprep.mubr.f32.mxu0 0.0
  %v400 = vand.u32 %v99, 4294901760
  %v401 = vsub.f32 %v99, %v400
  %v402 = vand.u32 %v401, 4294901760
  %v403 = vsub.f32 %v401, %v402
  %v404 = vand.u32 %v403, 4294901760
  %405 = vmatmul.mubr.f32.gmra.mxu0 %v404
  %v406 = vpop.f32.mrf.mxu0
  %v407 = vadd.f32 0.0, %v406
  %v408 = vpop.f32.mrf.mxu0
  %v409 = vadd.f32 0.0, %v408
  %410 = vmatprep.mubr.f32.mxu0 0.0
  %v411 = vand.u32 %v100, 4294901760
  %v412 = vsub.f32 %v100, %v411
  %v413 = vand.u32 %v412, 4294901760
  %v414 = vsub.f32 %v412, %v413
  %v415 = vand.u32 %v414, 4294901760
  %416 = vmatmul.mubr.f32.gmra.mxu0 %v415
  %v417 = vpop.f32.mrf.mxu0
  %v418 = vadd.f32 0.0, %v417
  %v419 = vpop.f32.mrf.mxu0
  %v420 = vadd.f32 0.0, %v419
  %421 = vdwg.mxu0
  %v422 = vand.u32 %v148, 4294901760
  %v423 = vsub.f32 %v148, %v422
  %v424 = vand.u32 %v423, 4294901760
  %v425 = vsub.f32 %v423, %v424
  %v426 = vand.u32 %v425, 4294901760
  %427 = vmatprep.subr.mxu0 %v426
  %v428 = vand.u32 %v147, 4294901760
  %v429 = vsub.f32 %v147, %v428
  %v430 = vand.u32 %v429, 4294901760
  %v431 = vsub.f32 %v429, %v430
  %v432 = vand.u32 %v431, 4294901760
  %433 = vmatpush1.msra.mxu0 %v432
  %v434 = vand.u32 %v146, 4294901760
  %v435 = vsub.f32 %v146, %v434
  %v436 = vand.u32 %v435, 4294901760
  %v437 = vsub.f32 %v435, %v436
  %v438 = vand.u32 %v437, 4294901760
  %439 = vmatprep.subr.mxu0 %v438
  %v440 = vand.u32 %v145, 4294901760
  %v441 = vsub.f32 %v145, %v440
  %v442 = vand.u32 %v441, 4294901760
  %v443 = vsub.f32 %v441, %v442
  %v444 = vand.u32 %v443, 4294901760
  %445 = vmatpush1.msra.mxu0 %v444
  %v446 = vand.u32 %v144, 4294901760
  %v447 = vsub.f32 %v144, %v446
  %v448 = vand.u32 %v447, 4294901760
  %v449 = vsub.f32 %v447, %v448
  %v450 = vand.u32 %v449, 4294901760
  %451 = vmatprep.subr.mxu0 %v450
  %v452 = vand.u32 %v143, 4294901760
  %v453 = vsub.f32 %v143, %v452
  %v454 = vand.u32 %v453, 4294901760
  %v455 = vsub.f32 %v453, %v454
  %v456 = vand.u32 %v455, 4294901760
  %457 = vmatpush1.msra.mxu0 %v456
  %v458 = vand.u32 %v142, 4294901760
  %v459 = vsub.f32 %v142, %v458
  %v460 = vand.u32 %v459, 4294901760
  %v461 = vsub.f32 %v459, %v460
  %v462 = vand.u32 %v461, 4294901760
  %463 = vmatprep.subr.mxu0 %v462
  %v464 = vand.u32 %v141, 4294901760
  %v465 = vsub.f32 %v141, %v464
  %v466 = vand.u32 %v465, 4294901760
  %v467 = vsub.f32 %v465, %v466
  %v468 = vand.u32 %v467, 4294901760
  %469 = vmatpush1.msra.mxu0 %v468
  %v470 = vand.u32 %v140, 4294901760
  %v471 = vsub.f32 %v140, %v470
  %v472 = vand.u32 %v471, 4294901760
  %v473 = vsub.f32 %v471, %v472
  %v474 = vand.u32 %v473, 4294901760
  %475 = vmatprep.subr.mxu0 %v474
  %v476 = vand.u32 %v139, 4294901760
  %v477 = vsub.f32 %v139, %v476
  %v478 = vand.u32 %v477, 4294901760
  %v479 = vsub.f32 %v477, %v478
  %v480 = vand.u32 %v479, 4294901760
  %481 = vmatpush1.msra.mxu0 %v480
  %v482 = vand.u32 %v138, 4294901760
  %v483 = vsub.f32 %v138, %v482
  %v484 = vand.u32 %v483, 4294901760
  %v485 = vsub.f32 %v483, %v484
  %v486 = vand.u32 %v485, 4294901760
  %487 = vmatprep.subr.mxu0 %v486
  %v488 = vand.u32 %v137, 4294901760
  %v489 = vsub.f32 %v137, %v488
  %v490 = vand.u32 %v489, 4294901760
  %v491 = vsub.f32 %v489, %v490
  %v492 = vand.u32 %v491, 4294901760
  %493 = vmatpush1.msra.mxu0 %v492
  %v494 = vand.u32 %v136, 4294901760
  %v495 = vsub.f32 %v136, %v494
  %v496 = vand.u32 %v495, 4294901760
  %v497 = vsub.f32 %v495, %v496
  %v498 = vand.u32 %v497, 4294901760
  %499 = vmatprep.subr.mxu0 %v498
  %v500 = vand.u32 %v135, 4294901760
  %v501 = vsub.f32 %v135, %v500
  %v502 = vand.u32 %v501, 4294901760
  %v503 = vsub.f32 %v501, %v502
  %v504 = vand.u32 %v503, 4294901760
  %505 = vmatpush1.msra.mxu0 %v504
  %v506 = vand.u32 %v134, 4294901760
  %v507 = vsub.f32 %v134, %v506
  %v508 = vand.u32 %v507, 4294901760
  %v509 = vsub.f32 %v507, %v508
  %v510 = vand.u32 %v509, 4294901760
  %511 = vmatprep.subr.mxu0 %v510
  %v512 = vand.u32 %v133, 4294901760
  %v513 = vsub.f32 %v133, %v512
  %v514 = vand.u32 %v513, 4294901760
  %v515 = vsub.f32 %v513, %v514
  %v516 = vand.u32 %v515, 4294901760
  %517 = vmatpush1.msra.mxu0 %v516
  %v518 = vand.u32 %v132, 4294901760
  %v519 = vsub.f32 %v132, %v518
  %v520 = vand.u32 %v519, 4294901760
  %v521 = vsub.f32 %v519, %v520
  %v522 = vand.u32 %v521, 4294901760
  %523 = vmatprep.subr.mxu0 %v522
  %v524 = vand.u32 %v131, 4294901760
  %v525 = vsub.f32 %v131, %v524
  %v526 = vand.u32 %v525, 4294901760
  %v527 = vsub.f32 %v525, %v526
  %v528 = vand.u32 %v527, 4294901760
  %529 = vmatpush1.msra.mxu0 %v528
  %v530 = vand.u32 %v130, 4294901760
  %v531 = vsub.f32 %v130, %v530
  %v532 = vand.u32 %v531, 4294901760
  %v533 = vsub.f32 %v531, %v532
  %v534 = vand.u32 %v533, 4294901760
  %535 = vmatprep.subr.mxu0 %v534
  %v536 = vand.u32 %v129, 4294901760
  %v537 = vsub.f32 %v129, %v536
  %v538 = vand.u32 %v537, 4294901760
  %v539 = vsub.f32 %v537, %v538
  %v540 = vand.u32 %v539, 4294901760
  %541 = vmatpush1.msra.mxu0 %v540
  %v542 = vand.u32 %v128, 4294901760
  %v543 = vsub.f32 %v128, %v542
  %v544 = vand.u32 %v543, 4294901760
  %v545 = vsub.f32 %v543, %v544
  %v546 = vand.u32 %v545, 4294901760
  %547 = vmatprep.subr.mxu0 %v546
  %v548 = vand.u32 %v127, 4294901760
  %v549 = vsub.f32 %v127, %v548
  %v550 = vand.u32 %v549, 4294901760
  %v551 = vsub.f32 %v549, %v550
  %v552 = vand.u32 %v551, 4294901760
  %553 = vmatpush1.msra.mxu0 %v552
  %v554 = vand.u32 %v126, 4294901760
  %v555 = vsub.f32 %v126, %v554
  %v556 = vand.u32 %v555, 4294901760
  %v557 = vsub.f32 %v555, %v556
  %v558 = vand.u32 %v557, 4294901760
  %559 = vmatprep.subr.mxu0 %v558
  %v560 = vand.u32 %v125, 4294901760
  %v561 = vsub.f32 %v125, %v560
  %v562 = vand.u32 %v561, 4294901760
  %v563 = vsub.f32 %v561, %v562
  %v564 = vand.u32 %v563, 4294901760
  %565 = vmatpush1.msra.mxu0 %v564
  %v566 = vand.u32 %v124, 4294901760
  %v567 = vsub.f32 %v124, %v566
  %v568 = vand.u32 %v567, 4294901760
  %v569 = vsub.f32 %v567, %v568
  %v570 = vand.u32 %v569, 4294901760
  %571 = vmatprep.subr.mxu0 %v570
  %v572 = vand.u32 %v123, 4294901760
  %v573 = vsub.f32 %v123, %v572
  %v574 = vand.u32 %v573, 4294901760
  %v575 = vsub.f32 %v573, %v574
  %v576 = vand.u32 %v575, 4294901760
  %577 = vmatpush1.msra.mxu0 %v576
  %v578 = vand.u32 %v122, 4294901760
  %v579 = vsub.f32 %v122, %v578
  %v580 = vand.u32 %v579, 4294901760
  %v581 = vsub.f32 %v579, %v580
  %v582 = vand.u32 %v581, 4294901760
  %583 = vmatprep.subr.mxu0 %v582
  %v584 = vand.u32 %v121, 4294901760
  %v585 = vsub.f32 %v121, %v584
  %v586 = vand.u32 %v585, 4294901760
  %v587 = vsub.f32 %v585, %v586
  %v588 = vand.u32 %v587, 4294901760
  %589 = vmatpush1.msra.mxu0 %v588
  %v590 = vand.u32 %v120, 4294901760
  %v591 = vsub.f32 %v120, %v590
  %v592 = vand.u32 %v591, 4294901760
  %v593 = vsub.f32 %v591, %v592
  %v594 = vand.u32 %v593, 4294901760
  %595 = vmatprep.subr.mxu0 %v594
  %v596 = vand.u32 %v119, 4294901760
  %v597 = vsub.f32 %v119, %v596
  %v598 = vand.u32 %v597, 4294901760
  %v599 = vsub.f32 %v597, %v598
  %v600 = vand.u32 %v599, 4294901760
  %601 = vmatpush1.msra.mxu0 %v600
  %v602 = vand.u32 %v118, 4294901760
  %v603 = vsub.f32 %v118, %v602
  %v604 = vand.u32 %v603, 4294901760
  %v605 = vsub.f32 %v603, %v604
  %v606 = vand.u32 %v605, 4294901760
  %607 = vmatprep.subr.mxu0 %v606
  %v608 = vand.u32 %v117, 4294901760
  %v609 = vsub.f32 %v117, %v608
  %v610 = vand.u32 %v609, 4294901760
  %v611 = vsub.f32 %v609, %v610
  %v612 = vand.u32 %v611, 4294901760
  %613 = vmatpush1.msra.mxu0 %v612
  %614 = vmatprep.subr.mxu0 0.0
  %615 = vmatpush2.msra.mxu0 0.0
  %616 = vmatprep.subr.mxu0 0.0
  %617 = vmatpush2.msra.mxu0 0.0
  %618 = vmatprep.subr.mxu0 0.0
  %619 = vmatpush2.msra.mxu0 0.0
  %620 = vmatprep.subr.mxu0 0.0
  %621 = vmatpush2.msra.mxu0 0.0
  %622 = vmatprep.subr.mxu0 0.0
  %623 = vmatpush2.msra.mxu0 0.0
  %624 = vmatprep.subr.mxu0 0.0
  %625 = vmatpush2.msra.mxu0 0.0
  %626 = vmatprep.subr.mxu0 0.0
  %627 = vmatpush2.msra.mxu0 0.0
  %628 = vmatprep.subr.mxu0 0.0
  %629 = vmatpush2.msra.mxu0 0.0
  %630 = vmatprep.subr.mxu0 0.0
  %631 = vmatpush2.msra.mxu0 0.0
  %632 = vmatprep.subr.mxu0 0.0
  %633 = vmatpush2.msra.mxu0 0.0
  %634 = vmatprep.subr.mxu0 0.0
  %635 = vmatpush2.msra.mxu0 0.0
  %636 = vmatprep.subr.mxu0 0.0
  %637 = vmatpush2.msra.mxu0 0.0
  %638 = vmatprep.subr.mxu0 0.0
  %639 = vmatpush2.msra.mxu0 0.0
  %640 = vmatprep.subr.mxu0 0.0
  %641 = vmatpush2.msra.mxu0 0.0
  %642 = vmatprep.subr.mxu0 0.0
  %643 = vmatpush2.msra.mxu0 0.0
  %644 = vmatprep.subr.mxu0 0.0
  %645 = vmatpush2.msra.mxu0 0.0
  %646 = vmatprep.mubr.f32.mxu0 0.0
  %v647 = vand.u32 %v85, 4294901760
  %648 = vmatmul.mubr.f32.gmra.mxu0 %v647
  %v649 = vpop.f32.mrf.mxu0
  %v650 = vadd.f32 %v253, %v649
  %v651 = vpop.f32.mrf.mxu0
  %v652 = vadd.f32 %v255, %v651
  %653 = vmatprep.mubr.f32.mxu0 0.0
  %v654 = vand.u32 %v86, 4294901760
  %655 = vmatmul.mubr.f32.gmra.mxu0 %v654
  %v656 = vpop.f32.mrf.mxu0
  %v657 = vadd.f32 %v264, %v656
  %v658 = vpop.f32.mrf.mxu0
  %v659 = vadd.f32 %v266, %v658
  %660 = vmatprep.mubr.f32.mxu0 0.0
  %v661 = vand.u32 %v87, 4294901760
  %662 = vmatmul.mubr.f32.gmra.mxu0 %v661
  %v663 = vpop.f32.mrf.mxu0
  %v664 = vadd.f32 %v275, %v663
  %v665 = vpop.f32.mrf.mxu0
  %v666 = vadd.f32 %v277, %v665
  %667 = vmatprep.mubr.f32.mxu0 0.0
  %v668 = vand.u32 %v88, 4294901760
  %669 = vmatmul.mubr.f32.gmra.mxu0 %v668
  %v670 = vpop.f32.mrf.mxu0
  %v671 = vadd.f32 %v286, %v670
  %v672 = vpop.f32.mrf.mxu0
  %v673 = vadd.f32 %v288, %v672
  %674 = vmatprep.mubr.f32.mxu0 0.0
  %v675 = vand.u32 %v89, 4294901760
  %676 = vmatmul.mubr.f32.gmra.mxu0 %v675
  %v677 = vpop.f32.mrf.mxu0
  %v678 = vadd.f32 %v297, %v677
  %v679 = vpop.f32.mrf.mxu0
  %v680 = vadd.f32 %v299, %v679
  %681 = vmatprep.mubr.f32.mxu0 0.0
  %v682 = vand.u32 %v90, 4294901760
  %683 = vmatmul.mubr.f32.gmra.mxu0 %v682
  %v684 = vpop.f32.mrf.mxu0
  %v685 = vadd.f32 %v308, %v684
  %v686 = vpop.f32.mrf.mxu0
  %v687 = vadd.f32 %v310, %v686
  %688 = vmatprep.mubr.f32.mxu0 0.0
  %v689 = vand.u32 %v91, 4294901760
  %690 = vmatmul.mubr.f32.gmra.mxu0 %v689
  %v691 = vpop.f32.mrf.mxu0
  %v692 = vadd.f32 %v319, %v691
  %v693 = vpop.f32.mrf.mxu0
  %v694 = vadd.f32 %v321, %v693
  %695 = vmatprep.mubr.f32.mxu0 0.0
  %v696 = vand.u32 %v92, 4294901760
  %697 = vmatmul.mubr.f32.gmra.mxu0 %v696
  %v698 = vpop.f32.mrf.mxu0
  %v699 = vadd.f32 %v330, %v698
  %v700 = vpop.f32.mrf.mxu0
  %v701 = vadd.f32 %v332, %v700
  %702 = vmatprep.mubr.f32.mxu0 0.0
  %v703 = vand.u32 %v93, 4294901760
  %704 = vmatmul.mubr.f32.gmra.mxu0 %v703
  %v705 = vpop.f32.mrf.mxu0
  %v706 = vadd.f32 %v341, %v705
  %v707 = vpop.f32.mrf.mxu0
  %v708 = vadd.f32 %v343, %v707
  %709 = vmatprep.mubr.f32.mxu0 0.0
  %v710 = vand.u32 %v94, 4294901760
  %711 = vmatmul.mubr.f32.gmra.mxu0 %v710
  %v712 = vpop.f32.mrf.mxu0
  %v713 = vadd.f32 %v352, %v712
  %v714 = vpop.f32.mrf.mxu0
  %v715 = vadd.f32 %v354, %v714
  %716 = vmatprep.mubr.f32.mxu0 0.0
  %v717 = vand.u32 %v95, 4294901760
  %718 = vmatmul.mubr.f32.gmra.mxu0 %v717
  %v719 = vpop.f32.mrf.mxu0
  %v720 = vadd.f32 %v363, %v719
  %v721 = vpop.f32.mrf.mxu0
  %v722 = vadd.f32 %v365, %v721
  %723 = vmatprep.mubr.f32.mxu0 0.0
  %v724 = vand.u32 %v96, 4294901760
  %725 = vmatmul.mubr.f32.gmra.mxu0 %v724
  %v726 = vpop.f32.mrf.mxu0
  %v727 = vadd.f32 %v374, %v726
  %v728 = vpop.f32.mrf.mxu0
  %v729 = vadd.f32 %v376, %v728
  %730 = vmatprep.mubr.f32.mxu0 0.0
  %v731 = vand.u32 %v97, 4294901760
  %732 = vmatmul.mubr.f32.gmra.mxu0 %v731
  %v733 = vpop.f32.mrf.mxu0
  %v734 = vadd.f32 %v385, %v733
  %v735 = vpop.f32.mrf.mxu0
  %v736 = vadd.f32 %v387, %v735
  %737 = vmatprep.mubr.f32.mxu0 0.0
  %v738 = vand.u32 %v98, 4294901760
  %739 = vmatmul.mubr.f32.gmra.mxu0 %v738
  %v740 = vpop.f32.mrf.mxu0
  %v741 = vadd.f32 %v396, %v740
  %v742 = vpop.f32.mrf.mxu0
  %v743 = vadd.f32 %v398, %v742
  %744 = vmatprep.mubr.f32.mxu0 0.0
  %v745 = vand.u32 %v99, 4294901760
  %746 = vmatmul.mubr.f32.gmra.mxu0 %v745
  %v747 = vpop.f32.mrf.mxu0
  %v748 = vadd.f32 %v407, %v747
  %v749 = vpop.f32.mrf.mxu0
  %v750 = vadd.f32 %v409, %v749
  %751 = vmatprep.mubr.f32.mxu0 0.0
  %v752 = vand.u32 %v100, 4294901760
  %753 = vmatmul.mubr.f32.gmra.mxu0 %v752
  %v754 = vpop.f32.mrf.mxu0
  %v755 = vadd.f32 %v418, %v754
  %v756 = vpop.f32.mrf.mxu0
  %v757 = vadd.f32 %v420, %v756
  %758 = vdwg.mxu0
  %v759 = vand.u32 %v148, 4294901760
  %v760 = vsub.f32 %v148, %v759
  %761 = vmatprep.subr.mxu0 %v760
  %v762 = vand.u32 %v147, 4294901760
  %v763 = vsub.f32 %v147, %v762
  %764 = vmatpush1.msra.mxu0 %v763
  %v765 = vand.u32 %v146, 4294901760
  %v766 = vsub.f32 %v146, %v765
  %767 = vmatprep.subr.mxu0 %v766
  %v768 = vand.u32 %v145, 4294901760
  %v769 = vsub.f32 %v145, %v768
  %770 = vmatpush1.msra.mxu0 %v769
  %v771 = vand.u32 %v144, 4294901760
  %v772 = vsub.f32 %v144, %v771
  %773 = vmatprep.subr.mxu0 %v772
  %v774 = vand.u32 %v143, 4294901760
  %v775 = vsub.f32 %v143, %v774
  %776 = vmatpush1.msra.mxu0 %v775
  %v777 = vand.u32 %v142, 4294901760
  %v778 = vsub.f32 %v142, %v777
  %779 = vmatprep.subr.mxu0 %v778
  %v780 = vand.u32 %v141, 4294901760
  %v781 = vsub.f32 %v141, %v780
  %782 = vmatpush1.msra.mxu0 %v781
  %v783 = vand.u32 %v140, 4294901760
  %v784 = vsub.f32 %v140, %v783
  %785 = vmatprep.subr.mxu0 %v784
  %v786 = vand.u32 %v139, 4294901760
  %v787 = vsub.f32 %v139, %v786
  %788 = vmatpush1.msra.mxu0 %v787
  %v789 = vand.u32 %v138, 4294901760
  %v790 = vsub.f32 %v138, %v789
  %791 = vmatprep.subr.mxu0 %v790
  %v792 = vand.u32 %v137, 4294901760
  %v793 = vsub.f32 %v137, %v792
  %794 = vmatpush1.msra.mxu0 %v793
  %v795 = vand.u32 %v136, 4294901760
  %v796 = vsub.f32 %v136, %v795
  %797 = vmatprep.subr.mxu0 %v796
  %v798 = vand.u32 %v135, 4294901760
  %v799 = vsub.f32 %v135, %v798
  %800 = vmatpush1.msra.mxu0 %v799
  %v801 = vand.u32 %v134, 4294901760
  %v802 = vsub.f32 %v134, %v801
  %803 = vmatprep.subr.mxu0 %v802
  %v804 = vand.u32 %v133, 4294901760
  %v805 = vsub.f32 %v133, %v804
  %806 = vmatpush1.msra.mxu0 %v805
  %v807 = vand.u32 %v132, 4294901760
  %v808 = vsub.f32 %v132, %v807
  %809 = vmatprep.subr.mxu0 %v808
  %v810 = vand.u32 %v131, 4294901760
  %v811 = vsub.f32 %v131, %v810
  %812 = vmatpush1.msra.mxu0 %v811
  %v813 = vand.u32 %v130, 4294901760
  %v814 = vsub.f32 %v130, %v813
  %815 = vmatprep.subr.mxu0 %v814
  %v816 = vand.u32 %v129, 4294901760
  %v817 = vsub.f32 %v129, %v816
  %818 = vmatpush1.msra.mxu0 %v817
  %v819 = vand.u32 %v128, 4294901760
  %v820 = vsub.f32 %v128, %v819
  %821 = vmatprep.subr.mxu0 %v820
  %v822 = vand.u32 %v127, 4294901760
  %v823 = vsub.f32 %v127, %v822
  %824 = vmatpush1.msra.mxu0 %v823
  %v825 = vand.u32 %v126, 4294901760
  %v826 = vsub.f32 %v126, %v825
  %827 = vmatprep.subr.mxu0 %v826
  %v828 = vand.u32 %v125, 4294901760
  %v829 = vsub.f32 %v125, %v828
  %830 = vmatpush1.msra.mxu0 %v829
  %v831 = vand.u32 %v124, 4294901760
  %v832 = vsub.f32 %v124, %v831
  %833 = vmatprep.subr.mxu0 %v832
  %v834 = vand.u32 %v123, 4294901760
  %v835 = vsub.f32 %v123, %v834
  %836 = vmatpush1.msra.mxu0 %v835
  %v837 = vand.u32 %v122, 4294901760
  %v838 = vsub.f32 %v122, %v837
  %839 = vmatprep.subr.mxu0 %v838
  %v840 = vand.u32 %v121, 4294901760
  %v841 = vsub.f32 %v121, %v840
  %842 = vmatpush1.msra.mxu0 %v841
  %v843 = vand.u32 %v120, 4294901760
  %v844 = vsub.f32 %v120, %v843
  %845 = vmatprep.subr.mxu0 %v844
  %v846 = vand.u32 %v119, 4294901760
  %v847 = vsub.f32 %v119, %v846
  %848 = vmatpush1.msra.mxu0 %v847
  %v849 = vand.u32 %v118, 4294901760
  %v850 = vsub.f32 %v118, %v849
  %851 = vmatprep.subr.mxu0 %v850
  %v852 = vand.u32 %v117, 4294901760
  %v853 = vsub.f32 %v117, %v852
  %854 = vmatpush1.msra.mxu0 %v853
  %855 = vmatprep.subr.mxu0 0.0
  %856 = vmatpush2.msra.mxu0 0.0
  %857 = vmatprep.subr.mxu0 0.0
  %858 = vmatpush2.msra.mxu0 0.0
  %859 = vmatprep.subr.mxu0 0.0
  %860 = vmatpush2.msra.mxu0 0.0
  %861 = vmatprep.subr.mxu0 0.0
  %862 = vmatpush2.msra.mxu0 0.0
  %863 = vmatprep.subr.mxu0 0.0
  %864 = vmatpush2.msra.mxu0 0.0
  %865 = vmatprep.subr.mxu0 0.0
  %866 = vmatpush2.msra.mxu0 0.0
  %867 = vmatprep.subr.mxu0 0.0
  %868 = vmatpush2.msra.mxu0 0.0
  %869 = vmatprep.subr.mxu0 0.0
  %870 = vmatpush2.msra.mxu0 0.0
  %871 = vmatprep.subr.mxu0 0.0
  %872 = vmatpush2.msra.mxu0 0.0
  %873 = vmatprep.subr.mxu0 0.0
  %874 = vmatpush2.msra.mxu0 0.0
  %875 = vmatprep.subr.mxu0 0.0
  %876 = vmatpush2.msra.mxu0 0.0
  %877 = vmatprep.subr.mxu0 0.0
  %878 = vmatpush2.msra.mxu0 0.0
  %879 = vmatprep.subr.mxu0 0.0
  %880 = vmatpush2.msra.mxu0 0.0
  %881 = vmatprep.subr.mxu0 0.0
  %882 = vmatpush2.msra.mxu0 0.0
  %883 = vmatprep.subr.mxu0 0.0
  %884 = vmatpush2.msra.mxu0 0.0
  %885 = vmatprep.subr.mxu0 0.0
  %886 = vmatpush2.msra.mxu0 0.0
  %887 = vmatprep.mubr.f32.mxu0 0.0
  %v888 = vand.u32 %v85, 4294901760
  %v889 = vsub.f32 %v85, %v888
  %890 = vmatmul.mubr.f32.gmra.mxu0 %v889
  %v891 = vpop.f32.mrf.mxu0
  %v892 = vadd.f32 %v650, %v891
  %v893 = vpop.f32.mrf.mxu0
  %v894 = vadd.f32 %v652, %v893
  %895 = vmatprep.mubr.f32.mxu0 0.0
  %v896 = vand.u32 %v86, 4294901760
  %v897 = vsub.f32 %v86, %v896
  %898 = vmatmul.mubr.f32.gmra.mxu0 %v897
  %v899 = vpop.f32.mrf.mxu0
  %v900 = vadd.f32 %v657, %v899
  %v901 = vpop.f32.mrf.mxu0
  %v902 = vadd.f32 %v659, %v901
  %903 = vmatprep.mubr.f32.mxu0 0.0
  %v904 = vand.u32 %v87, 4294901760
  %v905 = vsub.f32 %v87, %v904
  %906 = vmatmul.mubr.f32.gmra.mxu0 %v905
  %v907 = vpop.f32.mrf.mxu0
  %v908 = vadd.f32 %v664, %v907
  %v909 = vpop.f32.mrf.mxu0
  %v910 = vadd.f32 %v666, %v909
  %911 = vmatprep.mubr.f32.mxu0 0.0
  %v912 = vand.u32 %v88, 4294901760
  %v913 = vsub.f32 %v88, %v912
  %914 = vmatmul.mubr.f32.gmra.mxu0 %v913
  %v915 = vpop.f32.mrf.mxu0
  %v916 = vadd.f32 %v671, %v915
  %v917 = vpop.f32.mrf.mxu0
  %v918 = vadd.f32 %v673, %v917
  %919 = vmatprep.mubr.f32.mxu0 0.0
  %v920 = vand.u32 %v89, 4294901760
  %v921 = vsub.f32 %v89, %v920
  %922 = vmatmul.mubr.f32.gmra.mxu0 %v921
  %v923 = vpop.f32.mrf.mxu0
  %v924 = vadd.f32 %v678, %v923
  %v925 = vpop.f32.mrf.mxu0
  %v926 = vadd.f32 %v680, %v925
  %927 = vmatprep.mubr.f32.mxu0 0.0
  %v928 = vand.u32 %v90, 4294901760
  %v929 = vsub.f32 %v90, %v928
  %930 = vmatmul.mubr.f32.gmra.mxu0 %v929
  %v931 = vpop.f32.mrf.mxu0
  %v932 = vadd.f32 %v685, %v931
  %v933 = vpop.f32.mrf.mxu0
  %v934 = vadd.f32 %v687, %v933
  %935 = vmatprep.mubr.f32.mxu0 0.0
  %v936 = vand.u32 %v91, 4294901760
  %v937 = vsub.f32 %v91, %v936
  %938 = vmatmul.mubr.f32.gmra.mxu0 %v937
  %v939 = vpop.f32.mrf.mxu0
  %v940 = vadd.f32 %v692, %v939
  %v941 = vpop.f32.mrf.mxu0
  %v942 = vadd.f32 %v694, %v941
  %943 = vmatprep.mubr.f32.mxu0 0.0
  %v944 = vand.u32 %v92, 4294901760
  %v945 = vsub.f32 %v92, %v944
  %946 = vmatmul.mubr.f32.gmra.mxu0 %v945
  %v947 = vpop.f32.mrf.mxu0
  %v948 = vadd.f32 %v699, %v947
  %v949 = vpop.f32.mrf.mxu0
  %v950 = vadd.f32 %v701, %v949
  %951 = vmatprep.mubr.f32.mxu0 0.0
  %v952 = vand.u32 %v93, 4294901760
  %v953 = vsub.f32 %v93, %v952
  %954 = vmatmul.mubr.f32.gmra.mxu0 %v953
  %v955 = vpop.f32.mrf.mxu0
  %v956 = vadd.f32 %v706, %v955
  %v957 = vpop.f32.mrf.mxu0
  %v958 = vadd.f32 %v708, %v957
  %959 = vmatprep.mubr.f32.mxu0 0.0
  %v960 = vand.u32 %v94, 4294901760
  %v961 = vsub.f32 %v94, %v960
  %962 = vmatmul.mubr.f32.gmra.mxu0 %v961
  %v963 = vpop.f32.mrf.mxu0
  %v964 = vadd.f32 %v713, %v963
  %v965 = vpop.f32.mrf.mxu0
  %v966 = vadd.f32 %v715, %v965
  %967 = vmatprep.mubr.f32.mxu0 0.0
  %v968 = vand.u32 %v95, 4294901760
  %v969 = vsub.f32 %v95, %v968
  %970 = vmatmul.mubr.f32.gmra.mxu0 %v969
  %v971 = vpop.f32.mrf.mxu0
  %v972 = vadd.f32 %v720, %v971
  %v973 = vpop.f32.mrf.mxu0
  %v974 = vadd.f32 %v722, %v973
  %975 = vmatprep.mubr.f32.mxu0 0.0
  %v976 = vand.u32 %v96, 4294901760
  %v977 = vsub.f32 %v96, %v976
  %978 = vmatmul.mubr.f32.gmra.mxu0 %v977
  %v979 = vpop.f32.mrf.mxu0
  %v980 = vadd.f32 %v727, %v979
  %v981 = vpop.f32.mrf.mxu0
  %v982 = vadd.f32 %v729, %v981
  %983 = vmatprep.mubr.f32.mxu0 0.0
  %v984 = vand.u32 %v97, 4294901760
  %v985 = vsub.f32 %v97, %v984
  %986 = vmatmul.mubr.f32.gmra.mxu0 %v985
  %v987 = vpop.f32.mrf.mxu0
  %v988 = vadd.f32 %v734, %v987
  %v989 = vpop.f32.mrf.mxu0
  %v990 = vadd.f32 %v736, %v989
  %991 = vmatprep.mubr.f32.mxu0 0.0
  %v992 = vand.u32 %v98, 4294901760
  %v993 = vsub.f32 %v98, %v992
  %994 = vmatmul.mubr.f32.gmra.mxu0 %v993
  %v995 = vpop.f32.mrf.mxu0
  %v996 = vadd.f32 %v741, %v995
  %v997 = vpop.f32.mrf.mxu0
  %v998 = vadd.f32 %v743, %v997
  %999 = vmatprep.mubr.f32.mxu0 0.0
  %v1000 = vand.u32 %v99, 4294901760
  %v1001 = vsub.f32 %v99, %v1000
  %1002 = vmatmul.mubr.f32.gmra.mxu0 %v1001
  %v1003 = vpop.f32.mrf.mxu0
  %v1004 = vadd.f32 %v748, %v1003
  %v1005 = vpop.f32.mrf.mxu0
  %v1006 = vadd.f32 %v750, %v1005
  %1007 = vmatprep.mubr.f32.mxu0 0.0
  %v1008 = vand.u32 %v100, 4294901760
  %v1009 = vsub.f32 %v100, %v1008
  %1010 = vmatmul.mubr.f32.gmra.mxu0 %v1009
  %v1011 = vpop.f32.mrf.mxu0
  %v1012 = vadd.f32 %v755, %v1011
  %v1013 = vpop.f32.mrf.mxu0
  %v1014 = vadd.f32 %v757, %v1013
  %1015 = vdwg.mxu0
  %v1016 = vand.u32 %v148, 4294901760
  %1017 = vmatprep.subr.mxu0 %v1016
  %v1018 = vand.u32 %v147, 4294901760
  %1019 = vmatpush1.msra.mxu0 %v1018
  %v1020 = vand.u32 %v146, 4294901760
  %1021 = vmatprep.subr.mxu0 %v1020
  %v1022 = vand.u32 %v145, 4294901760
  %1023 = vmatpush1.msra.mxu0 %v1022
  %v1024 = vand.u32 %v144, 4294901760
  %1025 = vmatprep.subr.mxu0 %v1024
  %v1026 = vand.u32 %v143, 4294901760
  %1027 = vmatpush1.msra.mxu0 %v1026
  %v1028 = vand.u32 %v142, 4294901760
  %1029 = vmatprep.subr.mxu0 %v1028
  %v1030 = vand.u32 %v141, 4294901760
  %1031 = vmatpush1.msra.mxu0 %v1030
  %v1032 = vand.u32 %v140, 4294901760
  %1033 = vmatprep.subr.mxu0 %v1032
  %v1034 = vand.u32 %v139, 4294901760
  %1035 = vmatpush1.msra.mxu0 %v1034
  %v1036 = vand.u32 %v138, 4294901760
  %1037 = vmatprep.subr.mxu0 %v1036
  %v1038 = vand.u32 %v137, 4294901760
  %1039 = vmatpush1.msra.mxu0 %v1038
  %v1040 = vand.u32 %v136, 4294901760
  %1041 = vmatprep.subr.mxu0 %v1040
  %v1042 = vand.u32 %v135, 4294901760
  %1043 = vmatpush1.msra.mxu0 %v1042
  %v1044 = vand.u32 %v134, 4294901760
  %1045 = vmatprep.subr.mxu0 %v1044
  %v1046 = vand.u32 %v133, 4294901760
  %1047 = vmatpush1.msra.mxu0 %v1046
  %v1048 = vand.u32 %v132, 4294901760
  %1049 = vmatprep.subr.mxu0 %v1048
  %v1050 = vand.u32 %v131, 4294901760
  %1051 = vmatpush1.msra.mxu0 %v1050
  %v1052 = vand.u32 %v130, 4294901760
  %1053 = vmatprep.subr.mxu0 %v1052
  %v1054 = vand.u32 %v129, 4294901760
  %1055 = vmatpush1.msra.mxu0 %v1054
  %v1056 = vand.u32 %v128, 4294901760
  %1057 = vmatprep.subr.mxu0 %v1056
  %v1058 = vand.u32 %v127, 4294901760
  %1059 = vmatpush1.msra.mxu0 %v1058
  %v1060 = vand.u32 %v126, 4294901760
  %1061 = vmatprep.subr.mxu0 %v1060
  %v1062 = vand.u32 %v125, 4294901760
  %1063 = vmatpush1.msra.mxu0 %v1062
  %v1064 = vand.u32 %v124, 4294901760
  %1065 = vmatprep.subr.mxu0 %v1064
  %v1066 = vand.u32 %v123, 4294901760
  %1067 = vmatpush1.msra.mxu0 %v1066
  %v1068 = vand.u32 %v122, 4294901760
  %1069 = vmatprep.subr.mxu0 %v1068
  %v1070 = vand.u32 %v121, 4294901760
  %1071 = vmatpush1.msra.mxu0 %v1070
  %v1072 = vand.u32 %v120, 4294901760
  %1073 = vmatprep.subr.mxu0 %v1072
  %v1074 = vand.u32 %v119, 4294901760
  %1075 = vmatpush1.msra.mxu0 %v1074
  %v1076 = vand.u32 %v118, 4294901760
  %1077 = vmatprep.subr.mxu0 %v1076
  %v1078 = vand.u32 %v117, 4294901760
  %1079 = vmatpush1.msra.mxu0 %v1078
  %1080 = vmatprep.subr.mxu0 0.0
  %1081 = vmatpush2.msra.mxu0 0.0
  %1082 = vmatprep.subr.mxu0 0.0
  %1083 = vmatpush2.msra.mxu0 0.0
  %1084 = vmatprep.subr.mxu0 0.0
  %1085 = vmatpush2.msra.mxu0 0.0
  %1086 = vmatprep.subr.mxu0 0.0
  %1087 = vmatpush2.msra.mxu0 0.0
  %1088 = vmatprep.subr.mxu0 0.0
  %1089 = vmatpush2.msra.mxu0 0.0
  %1090 = vmatprep.subr.mxu0 0.0
  %1091 = vmatpush2.msra.mxu0 0.0
  %1092 = vmatprep.subr.mxu0 0.0
  %1093 = vmatpush2.msra.mxu0 0.0
  %1094 = vmatprep.subr.mxu0 0.0
  %1095 = vmatpush2.msra.mxu0 0.0
  %1096 = vmatprep.subr.mxu0 0.0
  %1097 = vmatpush2.msra.mxu0 0.0
  %1098 = vmatprep.subr.mxu0 0.0
  %1099 = vmatpush2.msra.mxu0 0.0
  %1100 = vmatprep.subr.mxu0 0.0
  %1101 = vmatpush2.msra.mxu0 0.0
  %1102 = vmatprep.subr.mxu0 0.0
  %1103 = vmatpush2.msra.mxu0 0.0
  %1104 = vmatprep.subr.mxu0 0.0
  %1105 = vmatpush2.msra.mxu0 0.0
  %1106 = vmatprep.subr.mxu0 0.0
  %1107 = vmatpush2.msra.mxu0 0.0
  %1108 = vmatprep.subr.mxu0 0.0
  %1109 = vmatpush2.msra.mxu0 0.0
  %1110 = vmatprep.subr.mxu0 0.0
  %1111 = vmatpush2.msra.mxu0 0.0
  %1112 = vmatprep.mubr.f32.mxu0 0.0
  %v1113 = vand.u32 %v85, 4294901760
  %v1114 = vsub.f32 %v85, %v1113
  %v1115 = vand.u32 %v1114, 4294901760
  %1116 = vmatmul.mubr.f32.gmra.mxu0 %v1115
  %v1117 = vpop.f32.mrf.mxu0
  %v1118 = vadd.f32 %v892, %v1117
  %v1119 = vpop.f32.mrf.mxu0
  %v1120 = vadd.f32 %v894, %v1119
  %1121 = vmatprep.mubr.f32.mxu0 0.0
  %v1122 = vand.u32 %v86, 4294901760
  %v1123 = vsub.f32 %v86, %v1122
  %v1124 = vand.u32 %v1123, 4294901760
  %1125 = vmatmul.mubr.f32.gmra.mxu0 %v1124
  %v1126 = vpop.f32.mrf.mxu0
  %v1127 = vadd.f32 %v900, %v1126
  %v1128 = vpop.f32.mrf.mxu0
  %v1129 = vadd.f32 %v902, %v1128
  %1130 = vmatprep.mubr.f32.mxu0 0.0
  %v1131 = vand.u32 %v87, 4294901760
  %v1132 = vsub.f32 %v87, %v1131
  %v1133 = vand.u32 %v1132, 4294901760
  %1134 = vmatmul.mubr.f32.gmra.mxu0 %v1133
  %v1135 = vpop.f32.mrf.mxu0
  %v1136 = vadd.f32 %v908, %v1135
  %v1137 = vpop.f32.mrf.mxu0
  %v1138 = vadd.f32 %v910, %v1137
  %1139 = vmatprep.mubr.f32.mxu0 0.0
  %v1140 = vand.u32 %v88, 4294901760
  %v1141 = vsub.f32 %v88, %v1140
  %v1142 = vand.u32 %v1141, 4294901760
  %1143 = vmatmul.mubr.f32.gmra.mxu0 %v1142
  %v1144 = vpop.f32.mrf.mxu0
  %v1145 = vadd.f32 %v916, %v1144
  %v1146 = vpop.f32.mrf.mxu0
  %v1147 = vadd.f32 %v918, %v1146
  %1148 = vmatprep.mubr.f32.mxu0 0.0
  %v1149 = vand.u32 %v89, 4294901760
  %v1150 = vsub.f32 %v89, %v1149
  %v1151 = vand.u32 %v1150, 4294901760
  %1152 = vmatmul.mubr.f32.gmra.mxu0 %v1151
  %v1153 = vpop.f32.mrf.mxu0
  %v1154 = vadd.f32 %v924, %v1153
  %v1155 = vpop.f32.mrf.mxu0
  %v1156 = vadd.f32 %v926, %v1155
  %1157 = vmatprep.mubr.f32.mxu0 0.0
  %v1158 = vand.u32 %v90, 4294901760
  %v1159 = vsub.f32 %v90, %v1158
  %v1160 = vand.u32 %v1159, 4294901760
  %1161 = vmatmul.mubr.f32.gmra.mxu0 %v1160
  %v1162 = vpop.f32.mrf.mxu0
  %v1163 = vadd.f32 %v932, %v1162
  %v1164 = vpop.f32.mrf.mxu0
  %v1165 = vadd.f32 %v934, %v1164
  %1166 = vmatprep.mubr.f32.mxu0 0.0
  %v1167 = vand.u32 %v91, 4294901760
  %v1168 = vsub.f32 %v91, %v1167
  %v1169 = vand.u32 %v1168, 4294901760
  %1170 = vmatmul.mubr.f32.gmra.mxu0 %v1169
  %v1171 = vpop.f32.mrf.mxu0
  %v1172 = vadd.f32 %v940, %v1171
  %v1173 = vpop.f32.mrf.mxu0
  %v1174 = vadd.f32 %v942, %v1173
  %1175 = vmatprep.mubr.f32.mxu0 0.0
  %v1176 = vand.u32 %v92, 4294901760
  %v1177 = vsub.f32 %v92, %v1176
  %v1178 = vand.u32 %v1177, 4294901760
  %1179 = vmatmul.mubr.f32.gmra.mxu0 %v1178
  %v1180 = vpop.f32.mrf.mxu0
  %v1181 = vadd.f32 %v948, %v1180
  %v1182 = vpop.f32.mrf.mxu0
  %v1183 = vadd.f32 %v950, %v1182
  %1184 = vmatprep.mubr.f32.mxu0 0.0
  %v1185 = vand.u32 %v93, 4294901760
  %v1186 = vsub.f32 %v93, %v1185
  %v1187 = vand.u32 %v1186, 4294901760
  %1188 = vmatmul.mubr.f32.gmra.mxu0 %v1187
  %v1189 = vpop.f32.mrf.mxu0
  %v1190 = vadd.f32 %v956, %v1189
  %v1191 = vpop.f32.mrf.mxu0
  %v1192 = vadd.f32 %v958, %v1191
  %1193 = vmatprep.mubr.f32.mxu0 0.0
  %v1194 = vand.u32 %v94, 4294901760
  %v1195 = vsub.f32 %v94, %v1194
  %v1196 = vand.u32 %v1195, 4294901760
  %1197 = vmatmul.mubr.f32.gmra.mxu0 %v1196
  %v1198 = vpop.f32.mrf.mxu0
  %v1199 = vadd.f32 %v964, %v1198
  %v1200 = vpop.f32.mrf.mxu0
  %v1201 = vadd.f32 %v966, %v1200
  %1202 = vmatprep.mubr.f32.mxu0 0.0
  %v1203 = vand.u32 %v95, 4294901760
  %v1204 = vsub.f32 %v95, %v1203
  %v1205 = vand.u32 %v1204, 4294901760
  %1206 = vmatmul.mubr.f32.gmra.mxu0 %v1205
  %v1207 = vpop.f32.mrf.mxu0
  %v1208 = vadd.f32 %v972, %v1207
  %v1209 = vpop.f32.mrf.mxu0
  %v1210 = vadd.f32 %v974, %v1209
  %1211 = vmatprep.mubr.f32.mxu0 0.0
  %v1212 = vand.u32 %v96, 4294901760
  %v1213 = vsub.f32 %v96, %v1212
  %v1214 = vand.u32 %v1213, 4294901760
  %1215 = vmatmul.mubr.f32.gmra.mxu0 %v1214
  %v1216 = vpop.f32.mrf.mxu0
  %v1217 = vadd.f32 %v980, %v1216
  %v1218 = vpop.f32.mrf.mxu0
  %v1219 = vadd.f32 %v982, %v1218
  %1220 = vmatprep.mubr.f32.mxu0 0.0
  %v1221 = vand.u32 %v97, 4294901760
  %v1222 = vsub.f32 %v97, %v1221
  %v1223 = vand.u32 %v1222, 4294901760
  %1224 = vmatmul.mubr.f32.gmra.mxu0 %v1223
  %v1225 = vpop.f32.mrf.mxu0
  %v1226 = vadd.f32 %v988, %v1225
  %v1227 = vpop.f32.mrf.mxu0
  %v1228 = vadd.f32 %v990, %v1227
  %1229 = vmatprep.mubr.f32.mxu0 0.0
  %v1230 = vand.u32 %v98, 4294901760
  %v1231 = vsub.f32 %v98, %v1230
  %v1232 = vand.u32 %v1231, 4294901760
  %1233 = vmatmul.mubr.f32.gmra.mxu0 %v1232
  %v1234 = vpop.f32.mrf.mxu0
  %v1235 = vadd.f32 %v996, %v1234
  %v1236 = vpop.f32.mrf.mxu0
  %v1237 = vadd.f32 %v998, %v1236
  %1238 = vmatprep.mubr.f32.mxu0 0.0
  %v1239 = vand.u32 %v99, 4294901760
  %v1240 = vsub.f32 %v99, %v1239
  %v1241 = vand.u32 %v1240, 4294901760
  %1242 = vmatmul.mubr.f32.gmra.mxu0 %v1241
  %v1243 = vpop.f32.mrf.mxu0
  %v1244 = vadd.f32 %v1004, %v1243
  %v1245 = vpop.f32.mrf.mxu0
  %v1246 = vadd.f32 %v1006, %v1245
  %1247 = vmatprep.mubr.f32.mxu0 0.0
  %v1248 = vand.u32 %v100, 4294901760
  %v1249 = vsub.f32 %v100, %v1248
  %v1250 = vand.u32 %v1249, 4294901760
  %1251 = vmatmul.mubr.f32.gmra.mxu0 %v1250
  %v1252 = vpop.f32.mrf.mxu0
  %v1253 = vadd.f32 %v1012, %v1252
  %v1254 = vpop.f32.mrf.mxu0
  %v1255 = vadd.f32 %v1014, %v1254
  %1256 = vdwg.mxu0
  %v1257 = vand.u32 %v148, 4294901760
  %v1258 = vsub.f32 %v148, %v1257
  %v1259 = vand.u32 %v1258, 4294901760
  %1260 = vmatprep.subr.mxu0 %v1259
  %v1261 = vand.u32 %v147, 4294901760
  %v1262 = vsub.f32 %v147, %v1261
  %v1263 = vand.u32 %v1262, 4294901760
  %1264 = vmatpush1.msra.mxu0 %v1263
  %v1265 = vand.u32 %v146, 4294901760
  %v1266 = vsub.f32 %v146, %v1265
  %v1267 = vand.u32 %v1266, 4294901760
  %1268 = vmatprep.subr.mxu0 %v1267
  %v1269 = vand.u32 %v145, 4294901760
  %v1270 = vsub.f32 %v145, %v1269
  %v1271 = vand.u32 %v1270, 4294901760
  %1272 = vmatpush1.msra.mxu0 %v1271
  %v1273 = vand.u32 %v144, 4294901760
  %v1274 = vsub.f32 %v144, %v1273
  %v1275 = vand.u32 %v1274, 4294901760
  %1276 = vmatprep.subr.mxu0 %v1275
  %v1277 = vand.u32 %v143, 4294901760
  %v1278 = vsub.f32 %v143, %v1277
  %v1279 = vand.u32 %v1278, 4294901760
  %1280 = vmatpush1.msra.mxu0 %v1279
  %v1281 = vand.u32 %v142, 4294901760
  %v1282 = vsub.f32 %v142, %v1281
  %v1283 = vand.u32 %v1282, 4294901760
  %1284 = vmatprep.subr.mxu0 %v1283
  %v1285 = vand.u32 %v141, 4294901760
  %v1286 = vsub.f32 %v141, %v1285
  %v1287 = vand.u32 %v1286, 4294901760
  %1288 = vmatpush1.msra.mxu0 %v1287
  %v1289 = vand.u32 %v140, 4294901760
  %v1290 = vsub.f32 %v140, %v1289
  %v1291 = vand.u32 %v1290, 4294901760
  %1292 = vmatprep.subr.mxu0 %v1291
  %v1293 = vand.u32 %v139, 4294901760
  %v1294 = vsub.f32 %v139, %v1293
  %v1295 = vand.u32 %v1294, 4294901760
  %1296 = vmatpush1.msra.mxu0 %v1295
  %v1297 = vand.u32 %v138, 4294901760
  %v1298 = vsub.f32 %v138, %v1297
  %v1299 = vand.u32 %v1298, 4294901760
  %1300 = vmatprep.subr.mxu0 %v1299
  %v1301 = vand.u32 %v137, 4294901760
  %v1302 = vsub.f32 %v137, %v1301
  %v1303 = vand.u32 %v1302, 4294901760
  %1304 = vmatpush1.msra.mxu0 %v1303
  %v1305 = vand.u32 %v136, 4294901760
  %v1306 = vsub.f32 %v136, %v1305
  %v1307 = vand.u32 %v1306, 4294901760
  %1308 = vmatprep.subr.mxu0 %v1307
  %v1309 = vand.u32 %v135, 4294901760
  %v1310 = vsub.f32 %v135, %v1309
  %v1311 = vand.u32 %v1310, 4294901760
  %1312 = vmatpush1.msra.mxu0 %v1311
  %v1313 = vand.u32 %v134, 4294901760
  %v1314 = vsub.f32 %v134, %v1313
  %v1315 = vand.u32 %v1314, 4294901760
  %1316 = vmatprep.subr.mxu0 %v1315
  %v1317 = vand.u32 %v133, 4294901760
  %v1318 = vsub.f32 %v133, %v1317
  %v1319 = vand.u32 %v1318, 4294901760
  %1320 = vmatpush1.msra.mxu0 %v1319
  %v1321 = vand.u32 %v132, 4294901760
  %v1322 = vsub.f32 %v132, %v1321
  %v1323 = vand.u32 %v1322, 4294901760
  %1324 = vmatprep.subr.mxu0 %v1323
  %v1325 = vand.u32 %v131, 4294901760
  %v1326 = vsub.f32 %v131, %v1325
  %v1327 = vand.u32 %v1326, 4294901760
  %1328 = vmatpush1.msra.mxu0 %v1327
  %v1329 = vand.u32 %v130, 4294901760
  %v1330 = vsub.f32 %v130, %v1329
  %v1331 = vand.u32 %v1330, 4294901760
  %1332 = vmatprep.subr.mxu0 %v1331
  %v1333 = vand.u32 %v129, 4294901760
  %v1334 = vsub.f32 %v129, %v1333
  %v1335 = vand.u32 %v1334, 4294901760
  %1336 = vmatpush1.msra.mxu0 %v1335
  %v1337 = vand.u32 %v128, 4294901760
  %v1338 = vsub.f32 %v128, %v1337
  %v1339 = vand.u32 %v1338, 4294901760
  %1340 = vmatprep.subr.mxu0 %v1339
  %v1341 = vand.u32 %v127, 4294901760
  %v1342 = vsub.f32 %v127, %v1341
  %v1343 = vand.u32 %v1342, 4294901760
  %1344 = vmatpush1.msra.mxu0 %v1343
  %v1345 = vand.u32 %v126, 4294901760
  %v1346 = vsub.f32 %v126, %v1345
  %v1347 = vand.u32 %v1346, 4294901760
  %1348 = vmatprep.subr.mxu0 %v1347
  %v1349 = vand.u32 %v125, 4294901760
  %v1350 = vsub.f32 %v125, %v1349
  %v1351 = vand.u32 %v1350, 4294901760
  %1352 = vmatpush1.msra.mxu0 %v1351
  %v1353 = vand.u32 %v124, 4294901760
  %v1354 = vsub.f32 %v124, %v1353
  %v1355 = vand.u32 %v1354, 4294901760
  %1356 = vmatprep.subr.mxu0 %v1355
  %v1357 = vand.u32 %v123, 4294901760
  %v1358 = vsub.f32 %v123, %v1357
  %v1359 = vand.u32 %v1358, 4294901760
  %1360 = vmatpush1.msra.mxu0 %v1359
  %v1361 = vand.u32 %v122, 4294901760
  %v1362 = vsub.f32 %v122, %v1361
  %v1363 = vand.u32 %v1362, 4294901760
  %1364 = vmatprep.subr.mxu0 %v1363
  %v1365 = vand.u32 %v121, 4294901760
  %v1366 = vsub.f32 %v121, %v1365
  %v1367 = vand.u32 %v1366, 4294901760
  %1368 = vmatpush1.msra.mxu0 %v1367
  %v1369 = vand.u32 %v120, 4294901760
  %v1370 = vsub.f32 %v120, %v1369
  %v1371 = vand.u32 %v1370, 4294901760
  %1372 = vmatprep.subr.mxu0 %v1371
  %v1373 = vand.u32 %v119, 4294901760
  %v1374 = vsub.f32 %v119, %v1373
  %v1375 = vand.u32 %v1374, 4294901760
  %1376 = vmatpush1.msra.mxu0 %v1375
  %v1377 = vand.u32 %v118, 4294901760
  %v1378 = vsub.f32 %v118, %v1377
  %v1379 = vand.u32 %v1378, 4294901760
  %1380 = vmatprep.subr.mxu0 %v1379
  %v1381 = vand.u32 %v117, 4294901760
  %v1382 = vsub.f32 %v117, %v1381
  %v1383 = vand.u32 %v1382, 4294901760
  %1384 = vmatpush1.msra.mxu0 %v1383
  %1385 = vmatprep.subr.mxu0 0.0
  %1386 = vmatpush2.msra.mxu0 0.0
  %1387 = vmatprep.subr.mxu0 0.0
  %1388 = vmatpush2.msra.mxu0 0.0
  %1389 = vmatprep.subr.mxu0 0.0
  %1390 = vmatpush2.msra.mxu0 0.0
  %1391 = vmatprep.subr.mxu0 0.0
  %1392 = vmatpush2.msra.mxu0 0.0
  %1393 = vmatprep.subr.mxu0 0.0
  %1394 = vmatpush2.msra.mxu0 0.0
  %1395 = vmatprep.subr.mxu0 0.0
  %1396 = vmatpush2.msra.mxu0 0.0
  %1397 = vmatprep.subr.mxu0 0.0
  %1398 = vmatpush2.msra.mxu0 0.0
  %1399 = vmatprep.subr.mxu0 0.0
  %1400 = vmatpush2.msra.mxu0 0.0
  %1401 = vmatprep.subr.mxu0 0.0
  %1402 = vmatpush2.msra.mxu0 0.0
  %1403 = vmatprep.subr.mxu0 0.0
  %1404 = vmatpush2.msra.mxu0 0.0
  %1405 = vmatprep.subr.mxu0 0.0
  %1406 = vmatpush2.msra.mxu0 0.0
  %1407 = vmatprep.subr.mxu0 0.0
  %1408 = vmatpush2.msra.mxu0 0.0
  %1409 = vmatprep.subr.mxu0 0.0
  %1410 = vmatpush2.msra.mxu0 0.0
  %1411 = vmatprep.subr.mxu0 0.0
  %1412 = vmatpush2.msra.mxu0 0.0
  %1413 = vmatprep.subr.mxu0 0.0
  %1414 = vmatpush2.msra.mxu0 0.0
  %1415 = vmatprep.subr.mxu0 0.0
  %1416 = vmatpush2.msra.mxu0 0.0
  %1417 = vmatprep.mubr.f32.mxu0 0.0
  %v1418 = vand.u32 %v85, 4294901760
  %1419 = vmatmul.mubr.f32.gmra.mxu0 %v1418
  %v1420 = vpop.f32.mrf.mxu0
  %v1421 = vadd.f32 %v1118, %v1420
  %v1422 = vpop.f32.mrf.mxu0
  %v1423 = vadd.f32 %v1120, %v1422
  %1424 = vmatprep.mubr.f32.mxu0 0.0
  %v1425 = vand.u32 %v86, 4294901760
  %1426 = vmatmul.mubr.f32.gmra.mxu0 %v1425
  %v1427 = vpop.f32.mrf.mxu0
  %v1428 = vadd.f32 %v1127, %v1427
  %v1429 = vpop.f32.mrf.mxu0
  %v1430 = vadd.f32 %v1129, %v1429
  %1431 = vmatprep.mubr.f32.mxu0 0.0
  %v1432 = vand.u32 %v87, 4294901760
  %1433 = vmatmul.mubr.f32.gmra.mxu0 %v1432
  %v1434 = vpop.f32.mrf.mxu0
  %v1435 = vadd.f32 %v1136, %v1434
  %v1436 = vpop.f32.mrf.mxu0
  %v1437 = vadd.f32 %v1138, %v1436
  %1438 = vmatprep.mubr.f32.mxu0 0.0
  %v1439 = vand.u32 %v88, 4294901760
  %1440 = vmatmul.mubr.f32.gmra.mxu0 %v1439
  %v1441 = vpop.f32.mrf.mxu0
  %v1442 = vadd.f32 %v1145, %v1441
  %v1443 = vpop.f32.mrf.mxu0
  %v1444 = vadd.f32 %v1147, %v1443
  %1445 = vmatprep.mubr.f32.mxu0 0.0
  %v1446 = vand.u32 %v89, 4294901760
  %1447 = vmatmul.mubr.f32.gmra.mxu0 %v1446
  %v1448 = vpop.f32.mrf.mxu0
  %v1449 = vadd.f32 %v1154, %v1448
  %v1450 = vpop.f32.mrf.mxu0
  %v1451 = vadd.f32 %v1156, %v1450
  %1452 = vmatprep.mubr.f32.mxu0 0.0
  %v1453 = vand.u32 %v90, 4294901760
  %1454 = vmatmul.mubr.f32.gmra.mxu0 %v1453
  %v1455 = vpop.f32.mrf.mxu0
  %v1456 = vadd.f32 %v1163, %v1455
  %v1457 = vpop.f32.mrf.mxu0
  %v1458 = vadd.f32 %v1165, %v1457
  %1459 = vmatprep.mubr.f32.mxu0 0.0
  %v1460 = vand.u32 %v91, 4294901760
  %1461 = vmatmul.mubr.f32.gmra.mxu0 %v1460
  %v1462 = vpop.f32.mrf.mxu0
  %v1463 = vadd.f32 %v1172, %v1462
  %v1464 = vpop.f32.mrf.mxu0
  %v1465 = vadd.f32 %v1174, %v1464
  %1466 = vmatprep.mubr.f32.mxu0 0.0
  %v1467 = vand.u32 %v92, 4294901760
  %1468 = vmatmul.mubr.f32.gmra.mxu0 %v1467
  %v1469 = vpop.f32.mrf.mxu0
  %v1470 = vadd.f32 %v1181, %v1469
  %v1471 = vpop.f32.mrf.mxu0
  %v1472 = vadd.f32 %v1183, %v1471
  %1473 = vmatprep.mubr.f32.mxu0 0.0
  %v1474 = vand.u32 %v93, 4294901760
  %1475 = vmatmul.mubr.f32.gmra.mxu0 %v1474
  %v1476 = vpop.f32.mrf.mxu0
  %v1477 = vadd.f32 %v1190, %v1476
  %v1478 = vpop.f32.mrf.mxu0
  %v1479 = vadd.f32 %v1192, %v1478
  %1480 = vmatprep.mubr.f32.mxu0 0.0
  %v1481 = vand.u32 %v94, 4294901760
  %1482 = vmatmul.mubr.f32.gmra.mxu0 %v1481
  %v1483 = vpop.f32.mrf.mxu0
  %v1484 = vadd.f32 %v1199, %v1483
  %v1485 = vpop.f32.mrf.mxu0
  %v1486 = vadd.f32 %v1201, %v1485
  %1487 = vmatprep.mubr.f32.mxu0 0.0
  %v1488 = vand.u32 %v95, 4294901760
  %1489 = vmatmul.mubr.f32.gmra.mxu0 %v1488
  %v1490 = vpop.f32.mrf.mxu0
  %v1491 = vadd.f32 %v1208, %v1490
  %v1492 = vpop.f32.mrf.mxu0
  %v1493 = vadd.f32 %v1210, %v1492
  %1494 = vmatprep.mubr.f32.mxu0 0.0
  %v1495 = vand.u32 %v96, 4294901760
  %1496 = vmatmul.mubr.f32.gmra.mxu0 %v1495
  %v1497 = vpop.f32.mrf.mxu0
  %v1498 = vadd.f32 %v1217, %v1497
  %v1499 = vpop.f32.mrf.mxu0
  %v1500 = vadd.f32 %v1219, %v1499
  %1501 = vmatprep.mubr.f32.mxu0 0.0
  %v1502 = vand.u32 %v97, 4294901760
  %1503 = vmatmul.mubr.f32.gmra.mxu0 %v1502
  %v1504 = vpop.f32.mrf.mxu0
  %v1505 = vadd.f32 %v1226, %v1504
  %v1506 = vpop.f32.mrf.mxu0
  %v1507 = vadd.f32 %v1228, %v1506
  %1508 = vmatprep.mubr.f32.mxu0 0.0
  %v1509 = vand.u32 %v98, 4294901760
  %1510 = vmatmul.mubr.f32.gmra.mxu0 %v1509
  %v1511 = vpop.f32.mrf.mxu0
  %v1512 = vadd.f32 %v1235, %v1511
  %v1513 = vpop.f32.mrf.mxu0
  %v1514 = vadd.f32 %v1237, %v1513
  %1515 = vmatprep.mubr.f32.mxu0 0.0
  %v1516 = vand.u32 %v99, 4294901760
  %1517 = vmatmul.mubr.f32.gmra.mxu0 %v1516
  %v1518 = vpop.f32.mrf.mxu0
  %v1519 = vadd.f32 %v1244, %v1518
  %v1520 = vpop.f32.mrf.mxu0
  %v1521 = vadd.f32 %v1246, %v1520
  %1522 = vmatprep.mubr.f32.mxu0 0.0
  %v1523 = vand.u32 %v100, 4294901760
  %1524 = vmatmul.mubr.f32.gmra.mxu0 %v1523
  %v1525 = vpop.f32.mrf.mxu0
  %v1526 = vadd.f32 %v1253, %v1525
  %v1527 = vpop.f32.mrf.mxu0
  %v1528 = vadd.f32 %v1255, %v1527
  %1529 = vdwg.mxu0
  %v1530 = vand.u32 %v148, 4294901760
  %1531 = vmatprep.subr.mxu0 %v1530
  %v1532 = vand.u32 %v147, 4294901760
  %1533 = vmatpush1.msra.mxu0 %v1532
  %v1534 = vand.u32 %v146, 4294901760
  %1535 = vmatprep.subr.mxu0 %v1534
  %v1536 = vand.u32 %v145, 4294901760
  %1537 = vmatpush1.msra.mxu0 %v1536
  %v1538 = vand.u32 %v144, 4294901760
  %1539 = vmatprep.subr.mxu0 %v1538
  %v1540 = vand.u32 %v143, 4294901760
  %1541 = vmatpush1.msra.mxu0 %v1540
  %v1542 = vand.u32 %v142, 4294901760
  %1543 = vmatprep.subr.mxu0 %v1542
  %v1544 = vand.u32 %v141, 4294901760
  %1545 = vmatpush1.msra.mxu0 %v1544
  %v1546 = vand.u32 %v140, 4294901760
  %1547 = vmatprep.subr.mxu0 %v1546
  %v1548 = vand.u32 %v139, 4294901760
  %1549 = vmatpush1.msra.mxu0 %v1548
  %v1550 = vand.u32 %v138, 4294901760
  %1551 = vmatprep.subr.mxu0 %v1550
  %v1552 = vand.u32 %v137, 4294901760
  %1553 = vmatpush1.msra.mxu0 %v1552
  %v1554 = vand.u32 %v136, 4294901760
  %1555 = vmatprep.subr.mxu0 %v1554
  %v1556 = vand.u32 %v135, 4294901760
  %1557 = vmatpush1.msra.mxu0 %v1556
  %v1558 = vand.u32 %v134, 4294901760
  %1559 = vmatprep.subr.mxu0 %v1558
  %v1560 = vand.u32 %v133, 4294901760
  %1561 = vmatpush1.msra.mxu0 %v1560
  %v1562 = vand.u32 %v132, 4294901760
  %1563 = vmatprep.subr.mxu0 %v1562
  %v1564 = vand.u32 %v131, 4294901760
  %1565 = vmatpush1.msra.mxu0 %v1564
  %v1566 = vand.u32 %v130, 4294901760
  %1567 = vmatprep.subr.mxu0 %v1566
  %v1568 = vand.u32 %v129, 4294901760
  %1569 = vmatpush1.msra.mxu0 %v1568
  %v1570 = vand.u32 %v128, 4294901760
  %1571 = vmatprep.subr.mxu0 %v1570
  %v1572 = vand.u32 %v127, 4294901760
  %1573 = vmatpush1.msra.mxu0 %v1572
  %v1574 = vand.u32 %v126, 4294901760
  %1575 = vmatprep.subr.mxu0 %v1574
  %v1576 = vand.u32 %v125, 4294901760
  %1577 = vmatpush1.msra.mxu0 %v1576
  %v1578 = vand.u32 %v124, 4294901760
  %1579 = vmatprep.subr.mxu0 %v1578
  %v1580 = vand.u32 %v123, 4294901760
  %1581 = vmatpush1.msra.mxu0 %v1580
  %v1582 = vand.u32 %v122, 4294901760
  %1583 = vmatprep.subr.mxu0 %v1582
  %v1584 = vand.u32 %v121, 4294901760
  %1585 = vmatpush1.msra.mxu0 %v1584
  %v1586 = vand.u32 %v120, 4294901760
  %1587 = vmatprep.subr.mxu0 %v1586
  %v1588 = vand.u32 %v119, 4294901760
  %1589 = vmatpush1.msra.mxu0 %v1588
  %v1590 = vand.u32 %v118, 4294901760
  %1591 = vmatprep.subr.mxu0 %v1590
  %v1592 = vand.u32 %v117, 4294901760
  %1593 = vmatpush1.msra.mxu0 %v1592
  %1594 = vmatprep.subr.mxu0 0.0
  %1595 = vmatpush2.msra.mxu0 0.0
  %1596 = vmatprep.subr.mxu0 0.0
  %1597 = vmatpush2.msra.mxu0 0.0
  %1598 = vmatprep.subr.mxu0 0.0
  %1599 = vmatpush2.msra.mxu0 0.0
  %1600 = vmatprep.subr.mxu0 0.0
  %1601 = vmatpush2.msra.mxu0 0.0
  %1602 = vmatprep.subr.mxu0 0.0
  %1603 = vmatpush2.msra.mxu0 0.0
  %1604 = vmatprep.subr.mxu0 0.0
  %1605 = vmatpush2.msra.mxu0 0.0
  %1606 = vmatprep.subr.mxu0 0.0
  %1607 = vmatpush2.msra.mxu0 0.0
  %1608 = vmatprep.subr.mxu0 0.0
  %1609 = vmatpush2.msra.mxu0 0.0
  %1610 = vmatprep.subr.mxu0 0.0
  %1611 = vmatpush2.msra.mxu0 0.0
  %1612 = vmatprep.subr.mxu0 0.0
  %1613 = vmatpush2.msra.mxu0 0.0
  %1614 = vmatprep.subr.mxu0 0.0
  %1615 = vmatpush2.msra.mxu0 0.0
  %1616 = vmatprep.subr.mxu0 0.0
  %1617 = vmatpush2.msra.mxu0 0.0
  %1618 = vmatprep.subr.mxu0 0.0
  %1619 = vmatpush2.msra.mxu0 0.0
  %1620 = vmatprep.subr.mxu0 0.0
  %1621 = vmatpush2.msra.mxu0 0.0
  %1622 = vmatprep.subr.mxu0 0.0
  %1623 = vmatpush2.msra.mxu0 0.0
  %1624 = vmatprep.subr.mxu0 0.0
  %1625 = vmatpush2.msra.mxu0 0.0
  %1626 = vmatprep.mubr.f32.mxu0 0.0
  %v1627 = vand.u32 %v85, 4294901760
  %1628 = vmatmul.mubr.f32.gmra.mxu0 %v1627
  %v1629 = vpop.f32.mrf.mxu0
  %v1630 = vadd.f32 %v1421, %v1629
  %v1631 = vpop.f32.mrf.mxu0
  %v1632 = vadd.f32 %v1423, %v1631
  %1633 = vmatprep.mubr.f32.mxu0 0.0
  %v1634 = vand.u32 %v86, 4294901760
  %1635 = vmatmul.mubr.f32.gmra.mxu0 %v1634
  %v1636 = vpop.f32.mrf.mxu0
  %v1637 = vadd.f32 %v1428, %v1636
  %v1638 = vpop.f32.mrf.mxu0
  %v1639 = vadd.f32 %v1430, %v1638
  %1640 = vmatprep.mubr.f32.mxu0 0.0
  %v1641 = vand.u32 %v87, 4294901760
  %1642 = vmatmul.mubr.f32.gmra.mxu0 %v1641
  %v1643 = vpop.f32.mrf.mxu0
  %v1644 = vadd.f32 %v1435, %v1643
  %v1645 = vpop.f32.mrf.mxu0
  %v1646 = vadd.f32 %v1437, %v1645
  %1647 = vmatprep.mubr.f32.mxu0 0.0
  %v1648 = vand.u32 %v88, 4294901760
  %1649 = vmatmul.mubr.f32.gmra.mxu0 %v1648
  %v1650 = vpop.f32.mrf.mxu0
  %v1651 = vadd.f32 %v1442, %v1650
  %v1652 = vpop.f32.mrf.mxu0
  %v1653 = vadd.f32 %v1444, %v1652
  %1654 = vmatprep.mubr.f32.mxu0 0.0
  %v1655 = vand.u32 %v89, 4294901760
  %1656 = vmatmul.mubr.f32.gmra.mxu0 %v1655
  %v1657 = vpop.f32.mrf.mxu0
  %v1658 = vadd.f32 %v1449, %v1657
  %v1659 = vpop.f32.mrf.mxu0
  %v1660 = vadd.f32 %v1451, %v1659
  %1661 = vmatprep.mubr.f32.mxu0 0.0
  %v1662 = vand.u32 %v90, 4294901760
  %1663 = vmatmul.mubr.f32.gmra.mxu0 %v1662
  %v1664 = vpop.f32.mrf.mxu0
  %v1665 = vadd.f32 %v1456, %v1664
  %v1666 = vpop.f32.mrf.mxu0
  %v1667 = vadd.f32 %v1458, %v1666
  %1668 = vmatprep.mubr.f32.mxu0 0.0
  %v1669 = vand.u32 %v91, 4294901760
  %1670 = vmatmul.mubr.f32.gmra.mxu0 %v1669
  %v1671 = vpop.f32.mrf.mxu0
  %v1672 = vadd.f32 %v1463, %v1671
  %v1673 = vpop.f32.mrf.mxu0
  %v1674 = vadd.f32 %v1465, %v1673
  %1675 = vmatprep.mubr.f32.mxu0 0.0
  %v1676 = vand.u32 %v92, 4294901760
  %1677 = vmatmul.mubr.f32.gmra.mxu0 %v1676
  %v1678 = vpop.f32.mrf.mxu0
  %v1679 = vadd.f32 %v1470, %v1678
  %v1680 = vpop.f32.mrf.mxu0
  %v1681 = vadd.f32 %v1472, %v1680
  %1682 = vmatprep.mubr.f32.mxu0 0.0
  %v1683 = vand.u32 %v93, 4294901760
  %1684 = vmatmul.mubr.f32.gmra.mxu0 %v1683
  %v1685 = vpop.f32.mrf.mxu0
  %v1686 = vadd.f32 %v1477, %v1685
  %v1687 = vpop.f32.mrf.mxu0
  %v1688 = vadd.f32 %v1479, %v1687
  %1689 = vmatprep.mubr.f32.mxu0 0.0
  %v1690 = vand.u32 %v94, 4294901760
  %1691 = vmatmul.mubr.f32.gmra.mxu0 %v1690
  %v1692 = vpop.f32.mrf.mxu0
  %v1693 = vadd.f32 %v1484, %v1692
  %v1694 = vpop.f32.mrf.mxu0
  %v1695 = vadd.f32 %v1486, %v1694
  %1696 = vmatprep.mubr.f32.mxu0 0.0
  %v1697 = vand.u32 %v95, 4294901760
  %1698 = vmatmul.mubr.f32.gmra.mxu0 %v1697
  %v1699 = vpop.f32.mrf.mxu0
  %v1700 = vadd.f32 %v1491, %v1699
  %v1701 = vpop.f32.mrf.mxu0
  %v1702 = vadd.f32 %v1493, %v1701
  %1703 = vmatprep.mubr.f32.mxu0 0.0
  %v1704 = vand.u32 %v96, 4294901760
  %1705 = vmatmul.mubr.f32.gmra.mxu0 %v1704
  %v1706 = vpop.f32.mrf.mxu0
  %v1707 = vadd.f32 %v1498, %v1706
  %v1708 = vpop.f32.mrf.mxu0
  %v1709 = vadd.f32 %v1500, %v1708
  %1710 = vmatprep.mubr.f32.mxu0 0.0
  %v1711 = vand.u32 %v97, 4294901760
  %1712 = vmatmul.mubr.f32.gmra.mxu0 %v1711
  %v1713 = vpop.f32.mrf.mxu0
  %v1714 = vadd.f32 %v1505, %v1713
  %v1715 = vpop.f32.mrf.mxu0
  %v1716 = vadd.f32 %v1507, %v1715
  %1717 = vmatprep.mubr.f32.mxu0 0.0
  %v1718 = vand.u32 %v98, 4294901760
  %1719 = vmatmul.mubr.f32.gmra.mxu0 %v1718
  %v1720 = vpop.f32.mrf.mxu0
  %v1721 = vadd.f32 %v1512, %v1720
  %v1722 = vpop.f32.mrf.mxu0
  %v1723 = vadd.f32 %v1514, %v1722
  %1724 = vmatprep.mubr.f32.mxu0 0.0
  %v1725 = vand.u32 %v99, 4294901760
  %1726 = vmatmul.mubr.f32.gmra.mxu0 %v1725
  %v1727 = vpop.f32.mrf.mxu0
  %v1728 = vadd.f32 %v1519, %v1727
  %v1729 = vpop.f32.mrf.mxu0
  %v1730 = vadd.f32 %v1521, %v1729
  %1731 = vmatprep.mubr.f32.mxu0 0.0
  %v1732 = vand.u32 %v100, 4294901760
  %1733 = vmatmul.mubr.f32.gmra.mxu0 %v1732
  %v1734 = vpop.f32.mrf.mxu0
  %v1735 = vadd.f32 %v1526, %v1734
  %v1736 = vpop.f32.mrf.mxu0
  %v1737 = vadd.f32 %v1528, %v1736
  %1738 = vdwg.mxu0
  %v1739 = vand.u32 %v148, 4294901760
  %1740 = vmatprep.subr.mxu0 %v1739
  %v1741 = vand.u32 %v147, 4294901760
  %1742 = vmatpush1.msra.mxu0 %v1741
  %v1743 = vand.u32 %v146, 4294901760
  %1744 = vmatprep.subr.mxu0 %v1743
  %v1745 = vand.u32 %v145, 4294901760
  %1746 = vmatpush1.msra.mxu0 %v1745
  %v1747 = vand.u32 %v144, 4294901760
  %1748 = vmatprep.subr.mxu0 %v1747
  %v1749 = vand.u32 %v143, 4294901760
  %1750 = vmatpush1.msra.mxu0 %v1749
  %v1751 = vand.u32 %v142, 4294901760
  %1752 = vmatprep.subr.mxu0 %v1751
  %v1753 = vand.u32 %v141, 4294901760
  %1754 = vmatpush1.msra.mxu0 %v1753
  %v1755 = vand.u32 %v140, 4294901760
  %1756 = vmatprep.subr.mxu0 %v1755
  %v1757 = vand.u32 %v139, 4294901760
  %1758 = vmatpush1.msra.mxu0 %v1757
  %v1759 = vand.u32 %v138, 4294901760
  %1760 = vmatprep.subr.mxu0 %v1759
  %v1761 = vand.u32 %v137, 4294901760
  %1762 = vmatpush1.msra.mxu0 %v1761
  %v1763 = vand.u32 %v136, 4294901760
  %1764 = vmatprep.subr.mxu0 %v1763
  %v1765 = vand.u32 %v135, 4294901760
  %1766 = vmatpush1.msra.mxu0 %v1765
  %v1767 = vand.u32 %v134, 4294901760
  %1768 = vmatprep.subr.mxu0 %v1767
  %v1769 = vand.u32 %v133, 4294901760
  %1770 = vmatpush1.msra.mxu0 %v1769
  %v1771 = vand.u32 %v132, 4294901760
  %1772 = vmatprep.subr.mxu0 %v1771
  %v1773 = vand.u32 %v131, 4294901760
  %1774 = vmatpush1.msra.mxu0 %v1773
  %v1775 = vand.u32 %v130, 4294901760
  %1776 = vmatprep.subr.mxu0 %v1775
  %v1777 = vand.u32 %v129, 4294901760
  %1778 = vmatpush1.msra.mxu0 %v1777
  %v1779 = vand.u32 %v128, 4294901760
  %1780 = vmatprep.subr.mxu0 %v1779
  %v1781 = vand.u32 %v127, 4294901760
  %1782 = vmatpush1.msra.mxu0 %v1781
  %v1783 = vand.u32 %v126, 4294901760
  %1784 = vmatprep.subr.mxu0 %v1783
  %v1785 = vand.u32 %v125, 4294901760
  %1786 = vmatpush1.msra.mxu0 %v1785
  %v1787 = vand.u32 %v124, 4294901760
  %1788 = vmatprep.subr.mxu0 %v1787
  %v1789 = vand.u32 %v123, 4294901760
  %1790 = vmatpush1.msra.mxu0 %v1789
  %v1791 = vand.u32 %v122, 4294901760
  %1792 = vmatprep.subr.mxu0 %v1791
  %v1793 = vand.u32 %v121, 4294901760
  %1794 = vmatpush1.msra.mxu0 %v1793
  %v1795 = vand.u32 %v120, 4294901760
  %1796 = vmatprep.subr.mxu0 %v1795
  %v1797 = vand.u32 %v119, 4294901760
  %1798 = vmatpush1.msra.mxu0 %v1797
  %v1799 = vand.u32 %v118, 4294901760
  %1800 = vmatprep.subr.mxu0 %v1799
  %v1801 = vand.u32 %v117, 4294901760
  %1802 = vmatpush1.msra.mxu0 %v1801
  %1803 = vmatprep.subr.mxu0 0.0
  %1804 = vmatpush2.msra.mxu0 0.0
  %1805 = vmatprep.subr.mxu0 0.0
  %1806 = vmatpush2.msra.mxu0 0.0
  %1807 = vmatprep.subr.mxu0 0.0
  %1808 = vmatpush2.msra.mxu0 0.0
  %1809 = vmatprep.subr.mxu0 0.0
  %1810 = vmatpush2.msra.mxu0 0.0
  %1811 = vmatprep.subr.mxu0 0.0
  %1812 = vmatpush2.msra.mxu0 0.0
  %1813 = vmatprep.subr.mxu0 0.0
  %1814 = vmatpush2.msra.mxu0 0.0
  %1815 = vmatprep.subr.mxu0 0.0
  %1816 = vmatpush2.msra.mxu0 0.0
  %1817 = vmatprep.subr.mxu0 0.0
  %1818 = vmatpush2.msra.mxu0 0.0
  %1819 = vmatprep.subr.mxu0 0.0
  %1820 = vmatpush2.msra.mxu0 0.0
  %1821 = vmatprep.subr.mxu0 0.0
  %1822 = vmatpush2.msra.mxu0 0.0
  %1823 = vmatprep.subr.mxu0 0.0
  %1824 = vmatpush2.msra.mxu0 0.0
  %1825 = vmatprep.subr.mxu0 0.0
  %1826 = vmatpush2.msra.mxu0 0.0
  %1827 = vmatprep.subr.mxu0 0.0
  %1828 = vmatpush2.msra.mxu0 0.0
  %1829 = vmatprep.subr.mxu0 0.0
  %1830 = vmatpush2.msra.mxu0 0.0
  %1831 = vmatprep.subr.mxu0 0.0
  %1832 = vmatpush2.msra.mxu0 0.0
  %1833 = vmatprep.subr.mxu0 0.0
  %1834 = vmatpush2.msra.mxu0 0.0
  %1835 = vmatprep.mubr.f32.mxu0 0.0
  %v1836 = vand.u32 %v101, 4294901760
  %v1837 = vsub.f32 %v101, %v1836
  %v1838 = vand.u32 %v1837, 4294901760
  %v1839 = vsub.f32 %v1837, %v1838
  %v1840 = vand.u32 %v1839, 4294901760
  %1841 = vmatmul.mubr.f32.gmra.mxu0 %v1840
  %v1842 = vpop.f32.mrf.mxu0
  %v1843 = vadd.f32 0.0, %v1842
  %v1844 = vpop.f32.mrf.mxu0
  %v1845 = vadd.f32 0.0, %v1844
  %1846 = vmatprep.mubr.f32.mxu0 0.0
  %v1847 = vand.u32 %v102, 4294901760
  %v1848 = vsub.f32 %v102, %v1847
  %v1849 = vand.u32 %v1848, 4294901760
  %v1850 = vsub.f32 %v1848, %v1849
  %v1851 = vand.u32 %v1850, 4294901760
  %1852 = vmatmul.mubr.f32.gmra.mxu0 %v1851
  %v1853 = vpop.f32.mrf.mxu0
  %v1854 = vadd.f32 0.0, %v1853
  %v1855 = vpop.f32.mrf.mxu0
  %v1856 = vadd.f32 0.0, %v1855
  %1857 = vmatprep.mubr.f32.mxu0 0.0
  %v1858 = vand.u32 %v103, 4294901760
  %v1859 = vsub.f32 %v103, %v1858
  %v1860 = vand.u32 %v1859, 4294901760
  %v1861 = vsub.f32 %v1859, %v1860
  %v1862 = vand.u32 %v1861, 4294901760
  %1863 = vmatmul.mubr.f32.gmra.mxu0 %v1862
  %v1864 = vpop.f32.mrf.mxu0
  %v1865 = vadd.f32 0.0, %v1864
  %v1866 = vpop.f32.mrf.mxu0
  %v1867 = vadd.f32 0.0, %v1866
  %1868 = vmatprep.mubr.f32.mxu0 0.0
  %v1869 = vand.u32 %v104, 4294901760
  %v1870 = vsub.f32 %v104, %v1869
  %v1871 = vand.u32 %v1870, 4294901760
  %v1872 = vsub.f32 %v1870, %v1871
  %v1873 = vand.u32 %v1872, 4294901760
  %1874 = vmatmul.mubr.f32.gmra.mxu0 %v1873
  %v1875 = vpop.f32.mrf.mxu0
  %v1876 = vadd.f32 0.0, %v1875
  %v1877 = vpop.f32.mrf.mxu0
  %v1878 = vadd.f32 0.0, %v1877
  %1879 = vmatprep.mubr.f32.mxu0 0.0
  %v1880 = vand.u32 %v105, 4294901760
  %v1881 = vsub.f32 %v105, %v1880
  %v1882 = vand.u32 %v1881, 4294901760
  %v1883 = vsub.f32 %v1881, %v1882
  %v1884 = vand.u32 %v1883, 4294901760
  %1885 = vmatmul.mubr.f32.gmra.mxu0 %v1884
  %v1886 = vpop.f32.mrf.mxu0
  %v1887 = vadd.f32 0.0, %v1886
  %v1888 = vpop.f32.mrf.mxu0
  %v1889 = vadd.f32 0.0, %v1888
  %1890 = vmatprep.mubr.f32.mxu0 0.0
  %v1891 = vand.u32 %v106, 4294901760
  %v1892 = vsub.f32 %v106, %v1891
  %v1893 = vand.u32 %v1892, 4294901760
  %v1894 = vsub.f32 %v1892, %v1893
  %v1895 = vand.u32 %v1894, 4294901760
  %1896 = vmatmul.mubr.f32.gmra.mxu0 %v1895
  %v1897 = vpop.f32.mrf.mxu0
  %v1898 = vadd.f32 0.0, %v1897
  %v1899 = vpop.f32.mrf.mxu0
  %v1900 = vadd.f32 0.0, %v1899
  %1901 = vmatprep.mubr.f32.mxu0 0.0
  %v1902 = vand.u32 %v107, 4294901760
  %v1903 = vsub.f32 %v107, %v1902
  %v1904 = vand.u32 %v1903, 4294901760
  %v1905 = vsub.f32 %v1903, %v1904
  %v1906 = vand.u32 %v1905, 4294901760
  %1907 = vmatmul.mubr.f32.gmra.mxu0 %v1906
  %v1908 = vpop.f32.mrf.mxu0
  %v1909 = vadd.f32 0.0, %v1908
  %v1910 = vpop.f32.mrf.mxu0
  %v1911 = vadd.f32 0.0, %v1910
  %1912 = vmatprep.mubr.f32.mxu0 0.0
  %v1913 = vand.u32 %v108, 4294901760
  %v1914 = vsub.f32 %v108, %v1913
  %v1915 = vand.u32 %v1914, 4294901760
  %v1916 = vsub.f32 %v1914, %v1915
  %v1917 = vand.u32 %v1916, 4294901760
  %1918 = vmatmul.mubr.f32.gmra.mxu0 %v1917
  %v1919 = vpop.f32.mrf.mxu0
  %v1920 = vadd.f32 0.0, %v1919
  %v1921 = vpop.f32.mrf.mxu0
  %v1922 = vadd.f32 0.0, %v1921
  %1923 = vmatprep.mubr.f32.mxu0 0.0
  %v1924 = vand.u32 %v109, 4294901760
  %v1925 = vsub.f32 %v109, %v1924
  %v1926 = vand.u32 %v1925, 4294901760
  %v1927 = vsub.f32 %v1925, %v1926
  %v1928 = vand.u32 %v1927, 4294901760
  %1929 = vmatmul.mubr.f32.gmra.mxu0 %v1928
  %v1930 = vpop.f32.mrf.mxu0
  %v1931 = vadd.f32 0.0, %v1930
  %v1932 = vpop.f32.mrf.mxu0
  %v1933 = vadd.f32 0.0, %v1932
  %1934 = vmatprep.mubr.f32.mxu0 0.0
  %v1935 = vand.u32 %v110, 4294901760
  %v1936 = vsub.f32 %v110, %v1935
  %v1937 = vand.u32 %v1936, 4294901760
  %v1938 = vsub.f32 %v1936, %v1937
  %v1939 = vand.u32 %v1938, 4294901760
  %1940 = vmatmul.mubr.f32.gmra.mxu0 %v1939
  %v1941 = vpop.f32.mrf.mxu0
  %v1942 = vadd.f32 0.0, %v1941
  %v1943 = vpop.f32.mrf.mxu0
  %v1944 = vadd.f32 0.0, %v1943
  %1945 = vmatprep.mubr.f32.mxu0 0.0
  %v1946 = vand.u32 %v111, 4294901760
  %v1947 = vsub.f32 %v111, %v1946
  %v1948 = vand.u32 %v1947, 4294901760
  %v1949 = vsub.f32 %v1947, %v1948
  %v1950 = vand.u32 %v1949, 4294901760
  %1951 = vmatmul.mubr.f32.gmra.mxu0 %v1950
  %v1952 = vpop.f32.mrf.mxu0
  %v1953 = vadd.f32 0.0, %v1952
  %v1954 = vpop.f32.mrf.mxu0
  %v1955 = vadd.f32 0.0, %v1954
  %1956 = vmatprep.mubr.f32.mxu0 0.0
  %v1957 = vand.u32 %v112, 4294901760
  %v1958 = vsub.f32 %v112, %v1957
  %v1959 = vand.u32 %v1958, 4294901760
  %v1960 = vsub.f32 %v1958, %v1959
  %v1961 = vand.u32 %v1960, 4294901760
  %1962 = vmatmul.mubr.f32.gmra.mxu0 %v1961
  %v1963 = vpop.f32.mrf.mxu0
  %v1964 = vadd.f32 0.0, %v1963
  %v1965 = vpop.f32.mrf.mxu0
  %v1966 = vadd.f32 0.0, %v1965
  %1967 = vmatprep.mubr.f32.mxu0 0.0
  %v1968 = vand.u32 %v113, 4294901760
  %v1969 = vsub.f32 %v113, %v1968
  %v1970 = vand.u32 %v1969, 4294901760
  %v1971 = vsub.f32 %v1969, %v1970
  %v1972 = vand.u32 %v1971, 4294901760
  %1973 = vmatmul.mubr.f32.gmra.mxu0 %v1972
  %v1974 = vpop.f32.mrf.mxu0
  %v1975 = vadd.f32 0.0, %v1974
  %v1976 = vpop.f32.mrf.mxu0
  %v1977 = vadd.f32 0.0, %v1976
  %1978 = vmatprep.mubr.f32.mxu0 0.0
  %v1979 = vand.u32 %v114, 4294901760
  %v1980 = vsub.f32 %v114, %v1979
  %v1981 = vand.u32 %v1980, 4294901760
  %v1982 = vsub.f32 %v1980, %v1981
  %v1983 = vand.u32 %v1982, 4294901760
  %1984 = vmatmul.mubr.f32.gmra.mxu0 %v1983
  %v1985 = vpop.f32.mrf.mxu0
  %v1986 = vadd.f32 0.0, %v1985
  %v1987 = vpop.f32.mrf.mxu0
  %v1988 = vadd.f32 0.0, %v1987
  %1989 = vmatprep.mubr.f32.mxu0 0.0
  %v1990 = vand.u32 %v115, 4294901760
  %v1991 = vsub.f32 %v115, %v1990
  %v1992 = vand.u32 %v1991, 4294901760
  %v1993 = vsub.f32 %v1991, %v1992
  %v1994 = vand.u32 %v1993, 4294901760
  %1995 = vmatmul.mubr.f32.gmra.mxu0 %v1994
  %v1996 = vpop.f32.mrf.mxu0
  %v1997 = vadd.f32 0.0, %v1996
  %v1998 = vpop.f32.mrf.mxu0
  %v1999 = vadd.f32 0.0, %v1998
  %2000 = vmatprep.mubr.f32.mxu0 0.0
  %v2001 = vand.u32 %v116, 4294901760
  %v2002 = vsub.f32 %v116, %v2001
  %v2003 = vand.u32 %v2002, 4294901760
  %v2004 = vsub.f32 %v2002, %v2003
  %v2005 = vand.u32 %v2004, 4294901760
  %2006 = vmatmul.mubr.f32.gmra.mxu0 %v2005
  %v2007 = vpop.f32.mrf.mxu0
  %v2008 = vadd.f32 0.0, %v2007
  %v2009 = vpop.f32.mrf.mxu0
  %v2010 = vadd.f32 0.0, %v2009
  %2011 = vdwg.mxu0
  %v2012 = vand.u32 %v148, 4294901760
  %v2013 = vsub.f32 %v148, %v2012
  %v2014 = vand.u32 %v2013, 4294901760
  %v2015 = vsub.f32 %v2013, %v2014
  %v2016 = vand.u32 %v2015, 4294901760
  %2017 = vmatprep.subr.mxu0 %v2016
  %v2018 = vand.u32 %v147, 4294901760
  %v2019 = vsub.f32 %v147, %v2018
  %v2020 = vand.u32 %v2019, 4294901760
  %v2021 = vsub.f32 %v2019, %v2020
  %v2022 = vand.u32 %v2021, 4294901760
  %2023 = vmatpush1.msra.mxu0 %v2022
  %v2024 = vand.u32 %v146, 4294901760
  %v2025 = vsub.f32 %v146, %v2024
  %v2026 = vand.u32 %v2025, 4294901760
  %v2027 = vsub.f32 %v2025, %v2026
  %v2028 = vand.u32 %v2027, 4294901760
  %2029 = vmatprep.subr.mxu0 %v2028
  %v2030 = vand.u32 %v145, 4294901760
  %v2031 = vsub.f32 %v145, %v2030
  %v2032 = vand.u32 %v2031, 4294901760
  %v2033 = vsub.f32 %v2031, %v2032
  %v2034 = vand.u32 %v2033, 4294901760
  %2035 = vmatpush1.msra.mxu0 %v2034
  %v2036 = vand.u32 %v144, 4294901760
  %v2037 = vsub.f32 %v144, %v2036
  %v2038 = vand.u32 %v2037, 4294901760
  %v2039 = vsub.f32 %v2037, %v2038
  %v2040 = vand.u32 %v2039, 4294901760
  %2041 = vmatprep.subr.mxu0 %v2040
  %v2042 = vand.u32 %v143, 4294901760
  %v2043 = vsub.f32 %v143, %v2042
  %v2044 = vand.u32 %v2043, 4294901760
  %v2045 = vsub.f32 %v2043, %v2044
  %v2046 = vand.u32 %v2045, 4294901760
  %2047 = vmatpush1.msra.mxu0 %v2046
  %v2048 = vand.u32 %v142, 4294901760
  %v2049 = vsub.f32 %v142, %v2048
  %v2050 = vand.u32 %v2049, 4294901760
  %v2051 = vsub.f32 %v2049, %v2050
  %v2052 = vand.u32 %v2051, 4294901760
  %2053 = vmatprep.subr.mxu0 %v2052
  %v2054 = vand.u32 %v141, 4294901760
  %v2055 = vsub.f32 %v141, %v2054
  %v2056 = vand.u32 %v2055, 4294901760
  %v2057 = vsub.f32 %v2055, %v2056
  %v2058 = vand.u32 %v2057, 4294901760
  %2059 = vmatpush1.msra.mxu0 %v2058
  %v2060 = vand.u32 %v140, 4294901760
  %v2061 = vsub.f32 %v140, %v2060
  %v2062 = vand.u32 %v2061, 4294901760
  %v2063 = vsub.f32 %v2061, %v2062
  %v2064 = vand.u32 %v2063, 4294901760
  %2065 = vmatprep.subr.mxu0 %v2064
  %v2066 = vand.u32 %v139, 4294901760
  %v2067 = vsub.f32 %v139, %v2066
  %v2068 = vand.u32 %v2067, 4294901760
  %v2069 = vsub.f32 %v2067, %v2068
  %v2070 = vand.u32 %v2069, 4294901760
  %2071 = vmatpush1.msra.mxu0 %v2070
  %v2072 = vand.u32 %v138, 4294901760
  %v2073 = vsub.f32 %v138, %v2072
  %v2074 = vand.u32 %v2073, 4294901760
  %v2075 = vsub.f32 %v2073, %v2074
  %v2076 = vand.u32 %v2075, 4294901760
  %2077 = vmatprep.subr.mxu0 %v2076
  %v2078 = vand.u32 %v137, 4294901760
  %v2079 = vsub.f32 %v137, %v2078
  %v2080 = vand.u32 %v2079, 4294901760
  %v2081 = vsub.f32 %v2079, %v2080
  %v2082 = vand.u32 %v2081, 4294901760
  %2083 = vmatpush1.msra.mxu0 %v2082
  %v2084 = vand.u32 %v136, 4294901760
  %v2085 = vsub.f32 %v136, %v2084
  %v2086 = vand.u32 %v2085, 4294901760
  %v2087 = vsub.f32 %v2085, %v2086
  %v2088 = vand.u32 %v2087, 4294901760
  %2089 = vmatprep.subr.mxu0 %v2088
  %v2090 = vand.u32 %v135, 4294901760
  %v2091 = vsub.f32 %v135, %v2090
  %v2092 = vand.u32 %v2091, 4294901760
  %v2093 = vsub.f32 %v2091, %v2092
  %v2094 = vand.u32 %v2093, 4294901760
  %2095 = vmatpush1.msra.mxu0 %v2094
  %v2096 = vand.u32 %v134, 4294901760
  %v2097 = vsub.f32 %v134, %v2096
  %v2098 = vand.u32 %v2097, 4294901760
  %v2099 = vsub.f32 %v2097, %v2098
  %v2100 = vand.u32 %v2099, 4294901760
  %2101 = vmatprep.subr.mxu0 %v2100
  %v2102 = vand.u32 %v133, 4294901760
  %v2103 = vsub.f32 %v133, %v2102
  %v2104 = vand.u32 %v2103, 4294901760
  %v2105 = vsub.f32 %v2103, %v2104
  %v2106 = vand.u32 %v2105, 4294901760
  %2107 = vmatpush1.msra.mxu0 %v2106
  %v2108 = vand.u32 %v132, 4294901760
  %v2109 = vsub.f32 %v132, %v2108
  %v2110 = vand.u32 %v2109, 4294901760
  %v2111 = vsub.f32 %v2109, %v2110
  %v2112 = vand.u32 %v2111, 4294901760
  %2113 = vmatprep.subr.mxu0 %v2112
  %v2114 = vand.u32 %v131, 4294901760
  %v2115 = vsub.f32 %v131, %v2114
  %v2116 = vand.u32 %v2115, 4294901760
  %v2117 = vsub.f32 %v2115, %v2116
  %v2118 = vand.u32 %v2117, 4294901760
  %2119 = vmatpush1.msra.mxu0 %v2118
  %v2120 = vand.u32 %v130, 4294901760
  %v2121 = vsub.f32 %v130, %v2120
  %v2122 = vand.u32 %v2121, 4294901760
  %v2123 = vsub.f32 %v2121, %v2122
  %v2124 = vand.u32 %v2123, 4294901760
  %2125 = vmatprep.subr.mxu0 %v2124
  %v2126 = vand.u32 %v129, 4294901760
  %v2127 = vsub.f32 %v129, %v2126
  %v2128 = vand.u32 %v2127, 4294901760
  %v2129 = vsub.f32 %v2127, %v2128
  %v2130 = vand.u32 %v2129, 4294901760
  %2131 = vmatpush1.msra.mxu0 %v2130
  %v2132 = vand.u32 %v128, 4294901760
  %v2133 = vsub.f32 %v128, %v2132
  %v2134 = vand.u32 %v2133, 4294901760
  %v2135 = vsub.f32 %v2133, %v2134
  %v2136 = vand.u32 %v2135, 4294901760
  %2137 = vmatprep.subr.mxu0 %v2136
  %v2138 = vand.u32 %v127, 4294901760
  %v2139 = vsub.f32 %v127, %v2138
  %v2140 = vand.u32 %v2139, 4294901760
  %v2141 = vsub.f32 %v2139, %v2140
  %v2142 = vand.u32 %v2141, 4294901760
  %2143 = vmatpush1.msra.mxu0 %v2142
  %v2144 = vand.u32 %v126, 4294901760
  %v2145 = vsub.f32 %v126, %v2144
  %v2146 = vand.u32 %v2145, 4294901760
  %v2147 = vsub.f32 %v2145, %v2146
  %v2148 = vand.u32 %v2147, 4294901760
  %2149 = vmatprep.subr.mxu0 %v2148
  %v2150 = vand.u32 %v125, 4294901760
  %v2151 = vsub.f32 %v125, %v2150
  %v2152 = vand.u32 %v2151, 4294901760
  %v2153 = vsub.f32 %v2151, %v2152
  %v2154 = vand.u32 %v2153, 4294901760
  %2155 = vmatpush1.msra.mxu0 %v2154
  %v2156 = vand.u32 %v124, 4294901760
  %v2157 = vsub.f32 %v124, %v2156
  %v2158 = vand.u32 %v2157, 4294901760
  %v2159 = vsub.f32 %v2157, %v2158
  %v2160 = vand.u32 %v2159, 4294901760
  %2161 = vmatprep.subr.mxu0 %v2160
  %v2162 = vand.u32 %v123, 4294901760
  %v2163 = vsub.f32 %v123, %v2162
  %v2164 = vand.u32 %v2163, 4294901760
  %v2165 = vsub.f32 %v2163, %v2164
  %v2166 = vand.u32 %v2165, 4294901760
  %2167 = vmatpush1.msra.mxu0 %v2166
  %v2168 = vand.u32 %v122, 4294901760
  %v2169 = vsub.f32 %v122, %v2168
  %v2170 = vand.u32 %v2169, 4294901760
  %v2171 = vsub.f32 %v2169, %v2170
  %v2172 = vand.u32 %v2171, 4294901760
  %2173 = vmatprep.subr.mxu0 %v2172
  %v2174 = vand.u32 %v121, 4294901760
  %v2175 = vsub.f32 %v121, %v2174
  %v2176 = vand.u32 %v2175, 4294901760
  %v2177 = vsub.f32 %v2175, %v2176
  %v2178 = vand.u32 %v2177, 4294901760
  %2179 = vmatpush1.msra.mxu0 %v2178
  %v2180 = vand.u32 %v120, 4294901760
  %v2181 = vsub.f32 %v120, %v2180
  %v2182 = vand.u32 %v2181, 4294901760
  %v2183 = vsub.f32 %v2181, %v2182
  %v2184 = vand.u32 %v2183, 4294901760
  %2185 = vmatprep.subr.mxu0 %v2184
  %v2186 = vand.u32 %v119, 4294901760
  %v2187 = vsub.f32 %v119, %v2186
  %v2188 = vand.u32 %v2187, 4294901760
  %v2189 = vsub.f32 %v2187, %v2188
  %v2190 = vand.u32 %v2189, 4294901760
  %2191 = vmatpush1.msra.mxu0 %v2190
  %v2192 = vand.u32 %v118, 4294901760
  %v2193 = vsub.f32 %v118, %v2192
  %v2194 = vand.u32 %v2193, 4294901760
  %v2195 = vsub.f32 %v2193, %v2194
  %v2196 = vand.u32 %v2195, 4294901760
  %2197 = vmatprep.subr.mxu0 %v2196
  %v2198 = vand.u32 %v117, 4294901760
  %v2199 = vsub.f32 %v117, %v2198
  %v2200 = vand.u32 %v2199, 4294901760
  %v2201 = vsub.f32 %v2199, %v2200
  %v2202 = vand.u32 %v2201, 4294901760
  %2203 = vmatpush1.msra.mxu0 %v2202
  %2204 = vmatprep.subr.mxu0 0.0
  %2205 = vmatpush2.msra.mxu0 0.0
  %2206 = vmatprep.subr.mxu0 0.0
  %2207 = vmatpush2.msra.mxu0 0.0
  %2208 = vmatprep.subr.mxu0 0.0
  %2209 = vmatpush2.msra.mxu0 0.0
  %2210 = vmatprep.subr.mxu0 0.0
  %2211 = vmatpush2.msra.mxu0 0.0
  %2212 = vmatprep.subr.mxu0 0.0
  %2213 = vmatpush2.msra.mxu0 0.0
  %2214 = vmatprep.subr.mxu0 0.0
  %2215 = vmatpush2.msra.mxu0 0.0
  %2216 = vmatprep.subr.mxu0 0.0
  %2217 = vmatpush2.msra.mxu0 0.0
  %2218 = vmatprep.subr.mxu0 0.0
  %2219 = vmatpush2.msra.mxu0 0.0
  %2220 = vmatprep.subr.mxu0 0.0
  %2221 = vmatpush2.msra.mxu0 0.0
  %2222 = vmatprep.subr.mxu0 0.0
  %2223 = vmatpush2.msra.mxu0 0.0
  %2224 = vmatprep.subr.mxu0 0.0
  %2225 = vmatpush2.msra.mxu0 0.0
  %2226 = vmatprep.subr.mxu0 0.0
  %2227 = vmatpush2.msra.mxu0 0.0
  %2228 = vmatprep.subr.mxu0 0.0
  %2229 = vmatpush2.msra.mxu0 0.0
  %2230 = vmatprep.subr.mxu0 0.0
  %2231 = vmatpush2.msra.mxu0 0.0
  %2232 = vmatprep.subr.mxu0 0.0
  %2233 = vmatpush2.msra.mxu0 0.0
  %2234 = vmatprep.subr.mxu0 0.0
  %2235 = vmatpush2.msra.mxu0 0.0
  %2236 = vmatprep.mubr.f32.mxu0 0.0
  %v2237 = vand.u32 %v101, 4294901760
  %2238 = vmatmul.mubr.f32.gmra.mxu0 %v2237
  %v2239 = vpop.f32.mrf.mxu0
  %v2240 = vadd.f32 %v1843, %v2239
  %v2241 = vpop.f32.mrf.mxu0
  %v2242 = vadd.f32 %v1845, %v2241
  %2243 = vmatprep.mubr.f32.mxu0 0.0
  %v2244 = vand.u32 %v102, 4294901760
  %2245 = vmatmul.mubr.f32.gmra.mxu0 %v2244
  %v2246 = vpop.f32.mrf.mxu0
  %v2247 = vadd.f32 %v1854, %v2246
  %v2248 = vpop.f32.mrf.mxu0
  %v2249 = vadd.f32 %v1856, %v2248
  %2250 = vmatprep.mubr.f32.mxu0 0.0
  %v2251 = vand.u32 %v103, 4294901760
  %2252 = vmatmul.mubr.f32.gmra.mxu0 %v2251
  %v2253 = vpop.f32.mrf.mxu0
  %v2254 = vadd.f32 %v1865, %v2253
  %v2255 = vpop.f32.mrf.mxu0
  %v2256 = vadd.f32 %v1867, %v2255
  %2257 = vmatprep.mubr.f32.mxu0 0.0
  %v2258 = vand.u32 %v104, 4294901760
  %2259 = vmatmul.mubr.f32.gmra.mxu0 %v2258
  %v2260 = vpop.f32.mrf.mxu0
  %v2261 = vadd.f32 %v1876, %v2260
  %v2262 = vpop.f32.mrf.mxu0
  %v2263 = vadd.f32 %v1878, %v2262
  %2264 = vmatprep.mubr.f32.mxu0 0.0
  %v2265 = vand.u32 %v105, 4294901760
  %2266 = vmatmul.mubr.f32.gmra.mxu0 %v2265
  %v2267 = vpop.f32.mrf.mxu0
  %v2268 = vadd.f32 %v1887, %v2267
  %v2269 = vpop.f32.mrf.mxu0
  %v2270 = vadd.f32 %v1889, %v2269
  %2271 = vmatprep.mubr.f32.mxu0 0.0
  %v2272 = vand.u32 %v106, 4294901760
  %2273 = vmatmul.mubr.f32.gmra.mxu0 %v2272
  %v2274 = vpop.f32.mrf.mxu0
  %v2275 = vadd.f32 %v1898, %v2274
  %v2276 = vpop.f32.mrf.mxu0
  %v2277 = vadd.f32 %v1900, %v2276
  %2278 = vmatprep.mubr.f32.mxu0 0.0
  %v2279 = vand.u32 %v107, 4294901760
  %2280 = vmatmul.mubr.f32.gmra.mxu0 %v2279
  %v2281 = vpop.f32.mrf.mxu0
  %v2282 = vadd.f32 %v1909, %v2281
  %v2283 = vpop.f32.mrf.mxu0
  %v2284 = vadd.f32 %v1911, %v2283
  %2285 = vmatprep.mubr.f32.mxu0 0.0
  %v2286 = vand.u32 %v108, 4294901760
  %2287 = vmatmul.mubr.f32.gmra.mxu0 %v2286
  %v2288 = vpop.f32.mrf.mxu0
  %v2289 = vadd.f32 %v1920, %v2288
  %v2290 = vpop.f32.mrf.mxu0
  %v2291 = vadd.f32 %v1922, %v2290
  %2292 = vmatprep.mubr.f32.mxu0 0.0
  %v2293 = vand.u32 %v109, 4294901760
  %2294 = vmatmul.mubr.f32.gmra.mxu0 %v2293
  %v2295 = vpop.f32.mrf.mxu0
  %v2296 = vadd.f32 %v1931, %v2295
  %v2297 = vpop.f32.mrf.mxu0
  %v2298 = vadd.f32 %v1933, %v2297
  %2299 = vmatprep.mubr.f32.mxu0 0.0
  %v2300 = vand.u32 %v110, 4294901760
  %2301 = vmatmul.mubr.f32.gmra.mxu0 %v2300
  %v2302 = vpop.f32.mrf.mxu0
  %v2303 = vadd.f32 %v1942, %v2302
  %v2304 = vpop.f32.mrf.mxu0
  %v2305 = vadd.f32 %v1944, %v2304
  %2306 = vmatprep.mubr.f32.mxu0 0.0
  %v2307 = vand.u32 %v111, 4294901760
  %2308 = vmatmul.mubr.f32.gmra.mxu0 %v2307
  %v2309 = vpop.f32.mrf.mxu0
  %v2310 = vadd.f32 %v1953, %v2309
  %v2311 = vpop.f32.mrf.mxu0
  %v2312 = vadd.f32 %v1955, %v2311
  %2313 = vmatprep.mubr.f32.mxu0 0.0
  %v2314 = vand.u32 %v112, 4294901760
  %2315 = vmatmul.mubr.f32.gmra.mxu0 %v2314
  %v2316 = vpop.f32.mrf.mxu0
  %v2317 = vadd.f32 %v1964, %v2316
  %v2318 = vpop.f32.mrf.mxu0
  %v2319 = vadd.f32 %v1966, %v2318
  %2320 = vmatprep.mubr.f32.mxu0 0.0
  %v2321 = vand.u32 %v113, 4294901760
  %2322 = vmatmul.mubr.f32.gmra.mxu0 %v2321
  %v2323 = vpop.f32.mrf.mxu0
  %v2324 = vadd.f32 %v1975, %v2323
  %v2325 = vpop.f32.mrf.mxu0
  %v2326 = vadd.f32 %v1977, %v2325
  %2327 = vmatprep.mubr.f32.mxu0 0.0
  %v2328 = vand.u32 %v114, 4294901760
  %2329 = vmatmul.mubr.f32.gmra.mxu0 %v2328
  %v2330 = vpop.f32.mrf.mxu0
  %v2331 = vadd.f32 %v1986, %v2330
  %v2332 = vpop.f32.mrf.mxu0
  %v2333 = vadd.f32 %v1988, %v2332
  %2334 = vmatprep.mubr.f32.mxu0 0.0
  %v2335 = vand.u32 %v115, 4294901760
  %2336 = vmatmul.mubr.f32.gmra.mxu0 %v2335
  %v2337 = vpop.f32.mrf.mxu0
  %v2338 = vadd.f32 %v1997, %v2337
  %v2339 = vpop.f32.mrf.mxu0
  %v2340 = vadd.f32 %v1999, %v2339
  %2341 = vmatprep.mubr.f32.mxu0 0.0
  %v2342 = vand.u32 %v116, 4294901760
  %2343 = vmatmul.mubr.f32.gmra.mxu0 %v2342
  %v2344 = vpop.f32.mrf.mxu0
  %v2345 = vadd.f32 %v2008, %v2344
  %v2346 = vpop.f32.mrf.mxu0
  %v2347 = vadd.f32 %v2010, %v2346
  %2348 = vdwg.mxu0
  %v2349 = vand.u32 %v148, 4294901760
  %v2350 = vsub.f32 %v148, %v2349
  %2351 = vmatprep.subr.mxu0 %v2350
  %v2352 = vand.u32 %v147, 4294901760
  %v2353 = vsub.f32 %v147, %v2352
  %2354 = vmatpush1.msra.mxu0 %v2353
  %v2355 = vand.u32 %v146, 4294901760
  %v2356 = vsub.f32 %v146, %v2355
  %2357 = vmatprep.subr.mxu0 %v2356
  %v2358 = vand.u32 %v145, 4294901760
  %v2359 = vsub.f32 %v145, %v2358
  %2360 = vmatpush1.msra.mxu0 %v2359
  %v2361 = vand.u32 %v144, 4294901760
  %v2362 = vsub.f32 %v144, %v2361
  %2363 = vmatprep.subr.mxu0 %v2362
  %v2364 = vand.u32 %v143, 4294901760
  %v2365 = vsub.f32 %v143, %v2364
  %2366 = vmatpush1.msra.mxu0 %v2365
  %v2367 = vand.u32 %v142, 4294901760
  %v2368 = vsub.f32 %v142, %v2367
  %2369 = vmatprep.subr.mxu0 %v2368
  %v2370 = vand.u32 %v141, 4294901760
  %v2371 = vsub.f32 %v141, %v2370
  %2372 = vmatpush1.msra.mxu0 %v2371
  %v2373 = vand.u32 %v140, 4294901760
  %v2374 = vsub.f32 %v140, %v2373
  %2375 = vmatprep.subr.mxu0 %v2374
  %v2376 = vand.u32 %v139, 4294901760
  %v2377 = vsub.f32 %v139, %v2376
  %2378 = vmatpush1.msra.mxu0 %v2377
  %v2379 = vand.u32 %v138, 4294901760
  %v2380 = vsub.f32 %v138, %v2379
  %2381 = vmatprep.subr.mxu0 %v2380
  %v2382 = vand.u32 %v137, 4294901760
  %v2383 = vsub.f32 %v137, %v2382
  %2384 = vmatpush1.msra.mxu0 %v2383
  %v2385 = vand.u32 %v136, 4294901760
  %v2386 = vsub.f32 %v136, %v2385
  %2387 = vmatprep.subr.mxu0 %v2386
  %v2388 = vand.u32 %v135, 4294901760
  %v2389 = vsub.f32 %v135, %v2388
  %2390 = vmatpush1.msra.mxu0 %v2389
  %v2391 = vand.u32 %v134, 4294901760
  %v2392 = vsub.f32 %v134, %v2391
  %2393 = vmatprep.subr.mxu0 %v2392
  %v2394 = vand.u32 %v133, 4294901760
  %v2395 = vsub.f32 %v133, %v2394
  %2396 = vmatpush1.msra.mxu0 %v2395
  %v2397 = vand.u32 %v132, 4294901760
  %v2398 = vsub.f32 %v132, %v2397
  %2399 = vmatprep.subr.mxu0 %v2398
  %v2400 = vand.u32 %v131, 4294901760
  %v2401 = vsub.f32 %v131, %v2400
  %2402 = vmatpush1.msra.mxu0 %v2401
  %v2403 = vand.u32 %v130, 4294901760
  %v2404 = vsub.f32 %v130, %v2403
  %2405 = vmatprep.subr.mxu0 %v2404
  %v2406 = vand.u32 %v129, 4294901760
  %v2407 = vsub.f32 %v129, %v2406
  %2408 = vmatpush1.msra.mxu0 %v2407
  %v2409 = vand.u32 %v128, 4294901760
  %v2410 = vsub.f32 %v128, %v2409
  %2411 = vmatprep.subr.mxu0 %v2410
  %v2412 = vand.u32 %v127, 4294901760
  %v2413 = vsub.f32 %v127, %v2412
  %2414 = vmatpush1.msra.mxu0 %v2413
  %v2415 = vand.u32 %v126, 4294901760
  %v2416 = vsub.f32 %v126, %v2415
  %2417 = vmatprep.subr.mxu0 %v2416
  %v2418 = vand.u32 %v125, 4294901760
  %v2419 = vsub.f32 %v125, %v2418
  %2420 = vmatpush1.msra.mxu0 %v2419
  %v2421 = vand.u32 %v124, 4294901760
  %v2422 = vsub.f32 %v124, %v2421
  %2423 = vmatprep.subr.mxu0 %v2422
  %v2424 = vand.u32 %v123, 4294901760
  %v2425 = vsub.f32 %v123, %v2424
  %2426 = vmatpush1.msra.mxu0 %v2425
  %v2427 = vand.u32 %v122, 4294901760
  %v2428 = vsub.f32 %v122, %v2427
  %2429 = vmatprep.subr.mxu0 %v2428
  %v2430 = vand.u32 %v121, 4294901760
  %v2431 = vsub.f32 %v121, %v2430
  %2432 = vmatpush1.msra.mxu0 %v2431
  %v2433 = vand.u32 %v120, 4294901760
  %v2434 = vsub.f32 %v120, %v2433
  %2435 = vmatprep.subr.mxu0 %v2434
  %v2436 = vand.u32 %v119, 4294901760
  %v2437 = vsub.f32 %v119, %v2436
  %2438 = vmatpush1.msra.mxu0 %v2437
  %v2439 = vand.u32 %v118, 4294901760
  %v2440 = vsub.f32 %v118, %v2439
  %2441 = vmatprep.subr.mxu0 %v2440
  %v2442 = vand.u32 %v117, 4294901760
  %v2443 = vsub.f32 %v117, %v2442
  %2444 = vmatpush1.msra.mxu0 %v2443
  %2445 = vmatprep.subr.mxu0 0.0
  %2446 = vmatpush2.msra.mxu0 0.0
  %2447 = vmatprep.subr.mxu0 0.0
  %2448 = vmatpush2.msra.mxu0 0.0
  %2449 = vmatprep.subr.mxu0 0.0
  %2450 = vmatpush2.msra.mxu0 0.0
  %2451 = vmatprep.subr.mxu0 0.0
  %2452 = vmatpush2.msra.mxu0 0.0
  %2453 = vmatprep.subr.mxu0 0.0
  %2454 = vmatpush2.msra.mxu0 0.0
  %2455 = vmatprep.subr.mxu0 0.0
  %2456 = vmatpush2.msra.mxu0 0.0
  %2457 = vmatprep.subr.mxu0 0.0
  %2458 = vmatpush2.msra.mxu0 0.0
  %2459 = vmatprep.subr.mxu0 0.0
  %2460 = vmatpush2.msra.mxu0 0.0
  %2461 = vmatprep.subr.mxu0 0.0
  %2462 = vmatpush2.msra.mxu0 0.0
  %2463 = vmatprep.subr.mxu0 0.0
  %2464 = vmatpush2.msra.mxu0 0.0
  %2465 = vmatprep.subr.mxu0 0.0
  %2466 = vmatpush2.msra.mxu0 0.0
  %2467 = vmatprep.subr.mxu0 0.0
  %2468 = vmatpush2.msra.mxu0 0.0
  %2469 = vmatprep.subr.mxu0 0.0
  %2470 = vmatpush2.msra.mxu0 0.0
  %2471 = vmatprep.subr.mxu0 0.0
  %2472 = vmatpush2.msra.mxu0 0.0
  %2473 = vmatprep.subr.mxu0 0.0
  %2474 = vmatpush2.msra.mxu0 0.0
  %2475 = vmatprep.subr.mxu0 0.0
  %2476 = vmatpush2.msra.mxu0 0.0
  %2477 = vmatprep.mubr.f32.mxu0 0.0
  %v2478 = vand.u32 %v101, 4294901760
  %v2479 = vsub.f32 %v101, %v2478
  %2480 = vmatmul.mubr.f32.gmra.mxu0 %v2479
  %v2481 = vpop.f32.mrf.mxu0
  %v2482 = vadd.f32 %v2240, %v2481
  %v2483 = vpop.f32.mrf.mxu0
  %v2484 = vadd.f32 %v2242, %v2483
  %2485 = vmatprep.mubr.f32.mxu0 0.0
  %v2486 = vand.u32 %v102, 4294901760
  %v2487 = vsub.f32 %v102, %v2486
  %2488 = vmatmul.mubr.f32.gmra.mxu0 %v2487
  %v2489 = vpop.f32.mrf.mxu0
  %v2490 = vadd.f32 %v2247, %v2489
  %v2491 = vpop.f32.mrf.mxu0
  %v2492 = vadd.f32 %v2249, %v2491
  %2493 = vmatprep.mubr.f32.mxu0 0.0
  %v2494 = vand.u32 %v103, 4294901760
  %v2495 = vsub.f32 %v103, %v2494
  %2496 = vmatmul.mubr.f32.gmra.mxu0 %v2495
  %v2497 = vpop.f32.mrf.mxu0
  %v2498 = vadd.f32 %v2254, %v2497
  %v2499 = vpop.f32.mrf.mxu0
  %v2500 = vadd.f32 %v2256, %v2499
  %2501 = vmatprep.mubr.f32.mxu0 0.0
  %v2502 = vand.u32 %v104, 4294901760
  %v2503 = vsub.f32 %v104, %v2502
  %2504 = vmatmul.mubr.f32.gmra.mxu0 %v2503
  %v2505 = vpop.f32.mrf.mxu0
  %v2506 = vadd.f32 %v2261, %v2505
  %v2507 = vpop.f32.mrf.mxu0
  %v2508 = vadd.f32 %v2263, %v2507
  %2509 = vmatprep.mubr.f32.mxu0 0.0
  %v2510 = vand.u32 %v105, 4294901760
  %v2511 = vsub.f32 %v105, %v2510
  %2512 = vmatmul.mubr.f32.gmra.mxu0 %v2511
  %v2513 = vpop.f32.mrf.mxu0
  %v2514 = vadd.f32 %v2268, %v2513
  %v2515 = vpop.f32.mrf.mxu0
  %v2516 = vadd.f32 %v2270, %v2515
  %2517 = vmatprep.mubr.f32.mxu0 0.0
  %v2518 = vand.u32 %v106, 4294901760
  %v2519 = vsub.f32 %v106, %v2518
  %2520 = vmatmul.mubr.f32.gmra.mxu0 %v2519
  %v2521 = vpop.f32.mrf.mxu0
  %v2522 = vadd.f32 %v2275, %v2521
  %v2523 = vpop.f32.mrf.mxu0
  %v2524 = vadd.f32 %v2277, %v2523
  %2525 = vmatprep.mubr.f32.mxu0 0.0
  %v2526 = vand.u32 %v107, 4294901760
  %v2527 = vsub.f32 %v107, %v2526
  %2528 = vmatmul.mubr.f32.gmra.mxu0 %v2527
  %v2529 = vpop.f32.mrf.mxu0
  %v2530 = vadd.f32 %v2282, %v2529
  %v2531 = vpop.f32.mrf.mxu0
  %v2532 = vadd.f32 %v2284, %v2531
  %2533 = vmatprep.mubr.f32.mxu0 0.0
  %v2534 = vand.u32 %v108, 4294901760
  %v2535 = vsub.f32 %v108, %v2534
  %2536 = vmatmul.mubr.f32.gmra.mxu0 %v2535
  %v2537 = vpop.f32.mrf.mxu0
  %v2538 = vadd.f32 %v2289, %v2537
  %v2539 = vpop.f32.mrf.mxu0
  %v2540 = vadd.f32 %v2291, %v2539
  %2541 = vmatprep.mubr.f32.mxu0 0.0
  %v2542 = vand.u32 %v109, 4294901760
  %v2543 = vsub.f32 %v109, %v2542
  %2544 = vmatmul.mubr.f32.gmra.mxu0 %v2543
  %v2545 = vpop.f32.mrf.mxu0
  %v2546 = vadd.f32 %v2296, %v2545
  %v2547 = vpop.f32.mrf.mxu0
  %v2548 = vadd.f32 %v2298, %v2547
  %2549 = vmatprep.mubr.f32.mxu0 0.0
  %v2550 = vand.u32 %v110, 4294901760
  %v2551 = vsub.f32 %v110, %v2550
  %2552 = vmatmul.mubr.f32.gmra.mxu0 %v2551
  %v2553 = vpop.f32.mrf.mxu0
  %v2554 = vadd.f32 %v2303, %v2553
  %v2555 = vpop.f32.mrf.mxu0
  %v2556 = vadd.f32 %v2305, %v2555
  %2557 = vmatprep.mubr.f32.mxu0 0.0
  %v2558 = vand.u32 %v111, 4294901760
  %v2559 = vsub.f32 %v111, %v2558
  %2560 = vmatmul.mubr.f32.gmra.mxu0 %v2559
  %v2561 = vpop.f32.mrf.mxu0
  %v2562 = vadd.f32 %v2310, %v2561
  %v2563 = vpop.f32.mrf.mxu0
  %v2564 = vadd.f32 %v2312, %v2563
  %2565 = vmatprep.mubr.f32.mxu0 0.0
  %v2566 = vand.u32 %v112, 4294901760
  %v2567 = vsub.f32 %v112, %v2566
  %2568 = vmatmul.mubr.f32.gmra.mxu0 %v2567
  %v2569 = vpop.f32.mrf.mxu0
  %v2570 = vadd.f32 %v2317, %v2569
  %v2571 = vpop.f32.mrf.mxu0
  %v2572 = vadd.f32 %v2319, %v2571
  %2573 = vmatprep.mubr.f32.mxu0 0.0
  %v2574 = vand.u32 %v113, 4294901760
  %v2575 = vsub.f32 %v113, %v2574
  %2576 = vmatmul.mubr.f32.gmra.mxu0 %v2575
  %v2577 = vpop.f32.mrf.mxu0
  %v2578 = vadd.f32 %v2324, %v2577
  %v2579 = vpop.f32.mrf.mxu0
  %v2580 = vadd.f32 %v2326, %v2579
  %2581 = vmatprep.mubr.f32.mxu0 0.0
  %v2582 = vand.u32 %v114, 4294901760
  %v2583 = vsub.f32 %v114, %v2582
  %2584 = vmatmul.mubr.f32.gmra.mxu0 %v2583
  %v2585 = vpop.f32.mrf.mxu0
  %v2586 = vadd.f32 %v2331, %v2585
  %v2587 = vpop.f32.mrf.mxu0
  %v2588 = vadd.f32 %v2333, %v2587
  %2589 = vmatprep.mubr.f32.mxu0 0.0
  %v2590 = vand.u32 %v115, 4294901760
  %v2591 = vsub.f32 %v115, %v2590
  %2592 = vmatmul.mubr.f32.gmra.mxu0 %v2591
  %v2593 = vpop.f32.mrf.mxu0
  %v2594 = vadd.f32 %v2338, %v2593
  %v2595 = vpop.f32.mrf.mxu0
  %v2596 = vadd.f32 %v2340, %v2595
  %2597 = vmatprep.mubr.f32.mxu0 0.0
  %v2598 = vand.u32 %v116, 4294901760
  %v2599 = vsub.f32 %v116, %v2598
  %2600 = vmatmul.mubr.f32.gmra.mxu0 %v2599
  %v2601 = vpop.f32.mrf.mxu0
  %v2602 = vadd.f32 %v2345, %v2601
  %v2603 = vpop.f32.mrf.mxu0
  %v2604 = vadd.f32 %v2347, %v2603
  %2605 = vdwg.mxu0
  %v2606 = vand.u32 %v148, 4294901760
  %2607 = vmatprep.subr.mxu0 %v2606
  %v2608 = vand.u32 %v147, 4294901760
  %2609 = vmatpush1.msra.mxu0 %v2608
  %v2610 = vand.u32 %v146, 4294901760
  %2611 = vmatprep.subr.mxu0 %v2610
  %v2612 = vand.u32 %v145, 4294901760
  %2613 = vmatpush1.msra.mxu0 %v2612
  %v2614 = vand.u32 %v144, 4294901760
  %2615 = vmatprep.subr.mxu0 %v2614
  %v2616 = vand.u32 %v143, 4294901760
  %2617 = vmatpush1.msra.mxu0 %v2616
  %v2618 = vand.u32 %v142, 4294901760
  %2619 = vmatprep.subr.mxu0 %v2618
  %v2620 = vand.u32 %v141, 4294901760
  %2621 = vmatpush1.msra.mxu0 %v2620
  %v2622 = vand.u32 %v140, 4294901760
  %2623 = vmatprep.subr.mxu0 %v2622
  %v2624 = vand.u32 %v139, 4294901760
  %2625 = vmatpush1.msra.mxu0 %v2624
  %v2626 = vand.u32 %v138, 4294901760
  %2627 = vmatprep.subr.mxu0 %v2626
  %v2628 = vand.u32 %v137, 4294901760
  %2629 = vmatpush1.msra.mxu0 %v2628
  %v2630 = vand.u32 %v136, 4294901760
  %2631 = vmatprep.subr.mxu0 %v2630
  %v2632 = vand.u32 %v135, 4294901760
  %2633 = vmatpush1.msra.mxu0 %v2632
  %v2634 = vand.u32 %v134, 4294901760
  %2635 = vmatprep.subr.mxu0 %v2634
  %v2636 = vand.u32 %v133, 4294901760
  %2637 = vmatpush1.msra.mxu0 %v2636
  %v2638 = vand.u32 %v132, 4294901760
  %2639 = vmatprep.subr.mxu0 %v2638
  %v2640 = vand.u32 %v131, 4294901760
  %2641 = vmatpush1.msra.mxu0 %v2640
  %v2642 = vand.u32 %v130, 4294901760
  %2643 = vmatprep.subr.mxu0 %v2642
  %v2644 = vand.u32 %v129, 4294901760
  %2645 = vmatpush1.msra.mxu0 %v2644
  %v2646 = vand.u32 %v128, 4294901760
  %2647 = vmatprep.subr.mxu0 %v2646
  %v2648 = vand.u32 %v127, 4294901760
  %2649 = vmatpush1.msra.mxu0 %v2648
  %v2650 = vand.u32 %v126, 4294901760
  %2651 = vmatprep.subr.mxu0 %v2650
  %v2652 = vand.u32 %v125, 4294901760
  %2653 = vmatpush1.msra.mxu0 %v2652
  %v2654 = vand.u32 %v124, 4294901760
  %2655 = vmatprep.subr.mxu0 %v2654
  %v2656 = vand.u32 %v123, 4294901760
  %2657 = vmatpush1.msra.mxu0 %v2656
  %v2658 = vand.u32 %v122, 4294901760
  %2659 = vmatprep.subr.mxu0 %v2658
  %v2660 = vand.u32 %v121, 4294901760
  %2661 = vmatpush1.msra.mxu0 %v2660
  %v2662 = vand.u32 %v120, 4294901760
  %2663 = vmatprep.subr.mxu0 %v2662
  %v2664 = vand.u32 %v119, 4294901760
  %2665 = vmatpush1.msra.mxu0 %v2664
  %v2666 = vand.u32 %v118, 4294901760
  %2667 = vmatprep.subr.mxu0 %v2666
  %v2668 = vand.u32 %v117, 4294901760
  %2669 = vmatpush1.msra.mxu0 %v2668
  %2670 = vmatprep.subr.mxu0 0.0
  %2671 = vmatpush2.msra.mxu0 0.0
  %2672 = vmatprep.subr.mxu0 0.0
  %2673 = vmatpush2.msra.mxu0 0.0
  %2674 = vmatprep.subr.mxu0 0.0
  %2675 = vmatpush2.msra.mxu0 0.0
  %2676 = vmatprep.subr.mxu0 0.0
  %2677 = vmatpush2.msra.mxu0 0.0
  %2678 = vmatprep.subr.mxu0 0.0
  %2679 = vmatpush2.msra.mxu0 0.0
  %2680 = vmatprep.subr.mxu0 0.0
  %2681 = vmatpush2.msra.mxu0 0.0
  %2682 = vmatprep.subr.mxu0 0.0
  %2683 = vmatpush2.msra.mxu0 0.0
  %2684 = vmatprep.subr.mxu0 0.0
  %2685 = vmatpush2.msra.mxu0 0.0
  %2686 = vmatprep.subr.mxu0 0.0
  %2687 = vmatpush2.msra.mxu0 0.0
  %2688 = vmatprep.subr.mxu0 0.0
  %2689 = vmatpush2.msra.mxu0 0.0
  %2690 = vmatprep.subr.mxu0 0.0
  %2691 = vmatpush2.msra.mxu0 0.0
  %2692 = vmatprep.subr.mxu0 0.0
  %2693 = vmatpush2.msra.mxu0 0.0
  %2694 = vmatprep.subr.mxu0 0.0
  %2695 = vmatpush2.msra.mxu0 0.0
  %2696 = vmatprep.subr.mxu0 0.0
  %2697 = vmatpush2.msra.mxu0 0.0
  %2698 = vmatprep.subr.mxu0 0.0
  %2699 = vmatpush2.msra.mxu0 0.0
  %2700 = vmatprep.subr.mxu0 0.0
  %2701 = vmatpush2.msra.mxu0 0.0
  %2702 = vmatprep.mubr.f32.mxu0 0.0
  %v2703 = vand.u32 %v101, 4294901760
  %v2704 = vsub.f32 %v101, %v2703
  %v2705 = vand.u32 %v2704, 4294901760
  %2706 = vmatmul.mubr.f32.gmra.mxu0 %v2705
  %v2707 = vpop.f32.mrf.mxu0
  %v2708 = vadd.f32 %v2482, %v2707
  %v2709 = vpop.f32.mrf.mxu0
  %v2710 = vadd.f32 %v2484, %v2709
  %2711 = vmatprep.mubr.f32.mxu0 0.0
  %v2712 = vand.u32 %v102, 4294901760
  %v2713 = vsub.f32 %v102, %v2712
  %v2714 = vand.u32 %v2713, 4294901760
  %2715 = vmatmul.mubr.f32.gmra.mxu0 %v2714
  %v2716 = vpop.f32.mrf.mxu0
  %v2717 = vadd.f32 %v2490, %v2716
  %v2718 = vpop.f32.mrf.mxu0
  %v2719 = vadd.f32 %v2492, %v2718
  %2720 = vmatprep.mubr.f32.mxu0 0.0
  %v2721 = vand.u32 %v103, 4294901760
  %v2722 = vsub.f32 %v103, %v2721
  %v2723 = vand.u32 %v2722, 4294901760
  %2724 = vmatmul.mubr.f32.gmra.mxu0 %v2723
  %v2725 = vpop.f32.mrf.mxu0
  %v2726 = vadd.f32 %v2498, %v2725
  %v2727 = vpop.f32.mrf.mxu0
  %v2728 = vadd.f32 %v2500, %v2727
  %2729 = vmatprep.mubr.f32.mxu0 0.0
  %v2730 = vand.u32 %v104, 4294901760
  %v2731 = vsub.f32 %v104, %v2730
  %v2732 = vand.u32 %v2731, 4294901760
  %2733 = vmatmul.mubr.f32.gmra.mxu0 %v2732
  %v2734 = vpop.f32.mrf.mxu0
  %v2735 = vadd.f32 %v2506, %v2734
  %v2736 = vpop.f32.mrf.mxu0
  %v2737 = vadd.f32 %v2508, %v2736
  %2738 = vmatprep.mubr.f32.mxu0 0.0
  %v2739 = vand.u32 %v105, 4294901760
  %v2740 = vsub.f32 %v105, %v2739
  %v2741 = vand.u32 %v2740, 4294901760
  %2742 = vmatmul.mubr.f32.gmra.mxu0 %v2741
  %v2743 = vpop.f32.mrf.mxu0
  %v2744 = vadd.f32 %v2514, %v2743
  %v2745 = vpop.f32.mrf.mxu0
  %v2746 = vadd.f32 %v2516, %v2745
  %2747 = vmatprep.mubr.f32.mxu0 0.0
  %v2748 = vand.u32 %v106, 4294901760
  %v2749 = vsub.f32 %v106, %v2748
  %v2750 = vand.u32 %v2749, 4294901760
  %2751 = vmatmul.mubr.f32.gmra.mxu0 %v2750
  %v2752 = vpop.f32.mrf.mxu0
  %v2753 = vadd.f32 %v2522, %v2752
  %v2754 = vpop.f32.mrf.mxu0
  %v2755 = vadd.f32 %v2524, %v2754
  %2756 = vmatprep.mubr.f32.mxu0 0.0
  %v2757 = vand.u32 %v107, 4294901760
  %v2758 = vsub.f32 %v107, %v2757
  %v2759 = vand.u32 %v2758, 4294901760
  %2760 = vmatmul.mubr.f32.gmra.mxu0 %v2759
  %v2761 = vpop.f32.mrf.mxu0
  %v2762 = vadd.f32 %v2530, %v2761
  %v2763 = vpop.f32.mrf.mxu0
  %v2764 = vadd.f32 %v2532, %v2763
  %2765 = vmatprep.mubr.f32.mxu0 0.0
  %v2766 = vand.u32 %v108, 4294901760
  %v2767 = vsub.f32 %v108, %v2766
  %v2768 = vand.u32 %v2767, 4294901760
  %2769 = vmatmul.mubr.f32.gmra.mxu0 %v2768
  %v2770 = vpop.f32.mrf.mxu0
  %v2771 = vadd.f32 %v2538, %v2770
  %v2772 = vpop.f32.mrf.mxu0
  %v2773 = vadd.f32 %v2540, %v2772
  %2774 = vmatprep.mubr.f32.mxu0 0.0
  %v2775 = vand.u32 %v109, 4294901760
  %v2776 = vsub.f32 %v109, %v2775
  %v2777 = vand.u32 %v2776, 4294901760
  %2778 = vmatmul.mubr.f32.gmra.mxu0 %v2777
  %v2779 = vpop.f32.mrf.mxu0
  %v2780 = vadd.f32 %v2546, %v2779
  %v2781 = vpop.f32.mrf.mxu0
  %v2782 = vadd.f32 %v2548, %v2781
  %2783 = vmatprep.mubr.f32.mxu0 0.0
  %v2784 = vand.u32 %v110, 4294901760
  %v2785 = vsub.f32 %v110, %v2784
  %v2786 = vand.u32 %v2785, 4294901760
  %2787 = vmatmul.mubr.f32.gmra.mxu0 %v2786
  %v2788 = vpop.f32.mrf.mxu0
  %v2789 = vadd.f32 %v2554, %v2788
  %v2790 = vpop.f32.mrf.mxu0
  %v2791 = vadd.f32 %v2556, %v2790
  %2792 = vmatprep.mubr.f32.mxu0 0.0
  %v2793 = vand.u32 %v111, 4294901760
  %v2794 = vsub.f32 %v111, %v2793
  %v2795 = vand.u32 %v2794, 4294901760
  %2796 = vmatmul.mubr.f32.gmra.mxu0 %v2795
  %v2797 = vpop.f32.mrf.mxu0
  %v2798 = vadd.f32 %v2562, %v2797
  %v2799 = vpop.f32.mrf.mxu0
  %v2800 = vadd.f32 %v2564, %v2799
  %2801 = vmatprep.mubr.f32.mxu0 0.0
  %v2802 = vand.u32 %v112, 4294901760
  %v2803 = vsub.f32 %v112, %v2802
  %v2804 = vand.u32 %v2803, 4294901760
  %2805 = vmatmul.mubr.f32.gmra.mxu0 %v2804
  %v2806 = vpop.f32.mrf.mxu0
  %v2807 = vadd.f32 %v2570, %v2806
  %v2808 = vpop.f32.mrf.mxu0
  %v2809 = vadd.f32 %v2572, %v2808
  %2810 = vmatprep.mubr.f32.mxu0 0.0
  %v2811 = vand.u32 %v113, 4294901760
  %v2812 = vsub.f32 %v113, %v2811
  %v2813 = vand.u32 %v2812, 4294901760
  %2814 = vmatmul.mubr.f32.gmra.mxu0 %v2813
  %v2815 = vpop.f32.mrf.mxu0
  %v2816 = vadd.f32 %v2578, %v2815
  %v2817 = vpop.f32.mrf.mxu0
  %v2818 = vadd.f32 %v2580, %v2817
  %2819 = vmatprep.mubr.f32.mxu0 0.0
  %v2820 = vand.u32 %v114, 4294901760
  %v2821 = vsub.f32 %v114, %v2820
  %v2822 = vand.u32 %v2821, 4294901760
  %2823 = vmatmul.mubr.f32.gmra.mxu0 %v2822
  %v2824 = vpop.f32.mrf.mxu0
  %v2825 = vadd.f32 %v2586, %v2824
  %v2826 = vpop.f32.mrf.mxu0
  %v2827 = vadd.f32 %v2588, %v2826
  %2828 = vmatprep.mubr.f32.mxu0 0.0
  %v2829 = vand.u32 %v115, 4294901760
  %v2830 = vsub.f32 %v115, %v2829
  %v2831 = vand.u32 %v2830, 4294901760
  %2832 = vmatmul.mubr.f32.gmra.mxu0 %v2831
  %v2833 = vpop.f32.mrf.mxu0
  %v2834 = vadd.f32 %v2594, %v2833
  %v2835 = vpop.f32.mrf.mxu0
  %v2836 = vadd.f32 %v2596, %v2835
  %2837 = vmatprep.mubr.f32.mxu0 0.0
  %v2838 = vand.u32 %v116, 4294901760
  %v2839 = vsub.f32 %v116, %v2838
  %v2840 = vand.u32 %v2839, 4294901760
  %2841 = vmatmul.mubr.f32.gmra.mxu0 %v2840
  %v2842 = vpop.f32.mrf.mxu0
  %v2843 = vadd.f32 %v2602, %v2842
  %v2844 = vpop.f32.mrf.mxu0
  %v2845 = vadd.f32 %v2604, %v2844
  %2846 = vdwg.mxu0
  %v2847 = vand.u32 %v148, 4294901760
  %v2848 = vsub.f32 %v148, %v2847
  %v2849 = vand.u32 %v2848, 4294901760
  %2850 = vmatprep.subr.mxu0 %v2849
  %v2851 = vand.u32 %v147, 4294901760
  %v2852 = vsub.f32 %v147, %v2851
  %v2853 = vand.u32 %v2852, 4294901760
  %2854 = vmatpush1.msra.mxu0 %v2853
  %v2855 = vand.u32 %v146, 4294901760
  %v2856 = vsub.f32 %v146, %v2855
  %v2857 = vand.u32 %v2856, 4294901760
  %2858 = vmatprep.subr.mxu0 %v2857
  %v2859 = vand.u32 %v145, 4294901760
  %v2860 = vsub.f32 %v145, %v2859
  %v2861 = vand.u32 %v2860, 4294901760
  %2862 = vmatpush1.msra.mxu0 %v2861
  %v2863 = vand.u32 %v144, 4294901760
  %v2864 = vsub.f32 %v144, %v2863
  %v2865 = vand.u32 %v2864, 4294901760
  %2866 = vmatprep.subr.mxu0 %v2865
  %v2867 = vand.u32 %v143, 4294901760
  %v2868 = vsub.f32 %v143, %v2867
  %v2869 = vand.u32 %v2868, 4294901760
  %2870 = vmatpush1.msra.mxu0 %v2869
  %v2871 = vand.u32 %v142, 4294901760
  %v2872 = vsub.f32 %v142, %v2871
  %v2873 = vand.u32 %v2872, 4294901760
  %2874 = vmatprep.subr.mxu0 %v2873
  %v2875 = vand.u32 %v141, 4294901760
  %v2876 = vsub.f32 %v141, %v2875
  %v2877 = vand.u32 %v2876, 4294901760
  %2878 = vmatpush1.msra.mxu0 %v2877
  %v2879 = vand.u32 %v140, 4294901760
  %v2880 = vsub.f32 %v140, %v2879
  %v2881 = vand.u32 %v2880, 4294901760
  %2882 = vmatprep.subr.mxu0 %v2881
  %v2883 = vand.u32 %v139, 4294901760
  %v2884 = vsub.f32 %v139, %v2883
  %v2885 = vand.u32 %v2884, 4294901760
  %2886 = vmatpush1.msra.mxu0 %v2885
  %v2887 = vand.u32 %v138, 4294901760
  %v2888 = vsub.f32 %v138, %v2887
  %v2889 = vand.u32 %v2888, 4294901760
  %2890 = vmatprep.subr.mxu0 %v2889
  %v2891 = vand.u32 %v137, 4294901760
  %v2892 = vsub.f32 %v137, %v2891
  %v2893 = vand.u32 %v2892, 4294901760
  %2894 = vmatpush1.msra.mxu0 %v2893
  %v2895 = vand.u32 %v136, 4294901760
  %v2896 = vsub.f32 %v136, %v2895
  %v2897 = vand.u32 %v2896, 4294901760
  %2898 = vmatprep.subr.mxu0 %v2897
  %v2899 = vand.u32 %v135, 4294901760
  %v2900 = vsub.f32 %v135, %v2899
  %v2901 = vand.u32 %v2900, 4294901760
  %2902 = vmatpush1.msra.mxu0 %v2901
  %v2903 = vand.u32 %v134, 4294901760
  %v2904 = vsub.f32 %v134, %v2903
  %v2905 = vand.u32 %v2904, 4294901760
  %2906 = vmatprep.subr.mxu0 %v2905
  %v2907 = vand.u32 %v133, 4294901760
  %v2908 = vsub.f32 %v133, %v2907
  %v2909 = vand.u32 %v2908, 4294901760
  %2910 = vmatpush1.msra.mxu0 %v2909
  %v2911 = vand.u32 %v132, 4294901760
  %v2912 = vsub.f32 %v132, %v2911
  %v2913 = vand.u32 %v2912, 4294901760
  %2914 = vmatprep.subr.mxu0 %v2913
  %v2915 = vand.u32 %v131, 4294901760
  %v2916 = vsub.f32 %v131, %v2915
  %v2917 = vand.u32 %v2916, 4294901760
  %2918 = vmatpush1.msra.mxu0 %v2917
  %v2919 = vand.u32 %v130, 4294901760
  %v2920 = vsub.f32 %v130, %v2919
  %v2921 = vand.u32 %v2920, 4294901760
  %2922 = vmatprep.subr.mxu0 %v2921
  %v2923 = vand.u32 %v129, 4294901760
  %v2924 = vsub.f32 %v129, %v2923
  %v2925 = vand.u32 %v2924, 4294901760
  %2926 = vmatpush1.msra.mxu0 %v2925
  %v2927 = vand.u32 %v128, 4294901760
  %v2928 = vsub.f32 %v128, %v2927
  %v2929 = vand.u32 %v2928, 4294901760
  %2930 = vmatprep.subr.mxu0 %v2929
  %v2931 = vand.u32 %v127, 4294901760
  %v2932 = vsub.f32 %v127, %v2931
  %v2933 = vand.u32 %v2932, 4294901760
  %2934 = vmatpush1.msra.mxu0 %v2933
  %v2935 = vand.u32 %v126, 4294901760
  %v2936 = vsub.f32 %v126, %v2935
  %v2937 = vand.u32 %v2936, 4294901760
  %2938 = vmatprep.subr.mxu0 %v2937
  %v2939 = vand.u32 %v125, 4294901760
  %v2940 = vsub.f32 %v125, %v2939
  %v2941 = vand.u32 %v2940, 4294901760
  %2942 = vmatpush1.msra.mxu0 %v2941
  %v2943 = vand.u32 %v124, 4294901760
  %v2944 = vsub.f32 %v124, %v2943
  %v2945 = vand.u32 %v2944, 4294901760
  %2946 = vmatprep.subr.mxu0 %v2945
  %v2947 = vand.u32 %v123, 4294901760
  %v2948 = vsub.f32 %v123, %v2947
  %v2949 = vand.u32 %v2948, 4294901760
  %2950 = vmatpush1.msra.mxu0 %v2949
  %v2951 = vand.u32 %v122, 4294901760
  %v2952 = vsub.f32 %v122, %v2951
  %v2953 = vand.u32 %v2952, 4294901760
  %2954 = vmatprep.subr.mxu0 %v2953
  %v2955 = vand.u32 %v121, 4294901760
  %v2956 = vsub.f32 %v121, %v2955
  %v2957 = vand.u32 %v2956, 4294901760
  %2958 = vmatpush1.msra.mxu0 %v2957
  %v2959 = vand.u32 %v120, 4294901760
  %v2960 = vsub.f32 %v120, %v2959
  %v2961 = vand.u32 %v2960, 4294901760
  %2962 = vmatprep.subr.mxu0 %v2961
  %v2963 = vand.u32 %v119, 4294901760
  %v2964 = vsub.f32 %v119, %v2963
  %v2965 = vand.u32 %v2964, 4294901760
  %2966 = vmatpush1.msra.mxu0 %v2965
  %v2967 = vand.u32 %v118, 4294901760
  %v2968 = vsub.f32 %v118, %v2967
  %v2969 = vand.u32 %v2968, 4294901760
  %2970 = vmatprep.subr.mxu0 %v2969
  %v2971 = vand.u32 %v117, 4294901760
  %v2972 = vsub.f32 %v117, %v2971
  %v2973 = vand.u32 %v2972, 4294901760
  %2974 = vmatpush1.msra.mxu0 %v2973
  %2975 = vmatprep.subr.mxu0 0.0
  %2976 = vmatpush2.msra.mxu0 0.0
  %2977 = vmatprep.subr.mxu0 0.0
  %2978 = vmatpush2.msra.mxu0 0.0
  %2979 = vmatprep.subr.mxu0 0.0
  %2980 = vmatpush2.msra.mxu0 0.0
  %2981 = vmatprep.subr.mxu0 0.0
  %2982 = vmatpush2.msra.mxu0 0.0
  %2983 = vmatprep.subr.mxu0 0.0
  %2984 = vmatpush2.msra.mxu0 0.0
  %2985 = vmatprep.subr.mxu0 0.0
  %2986 = vmatpush2.msra.mxu0 0.0
  %2987 = vmatprep.subr.mxu0 0.0
  %2988 = vmatpush2.msra.mxu0 0.0
  %2989 = vmatprep.subr.mxu0 0.0
  %2990 = vmatpush2.msra.mxu0 0.0
  %2991 = vmatprep.subr.mxu0 0.0
  %2992 = vmatpush2.msra.mxu0 0.0
  %2993 = vmatprep.subr.mxu0 0.0
  %2994 = vmatpush2.msra.mxu0 0.0
  %2995 = vmatprep.subr.mxu0 0.0
  %2996 = vmatpush2.msra.mxu0 0.0
  %2997 = vmatprep.subr.mxu0 0.0
  %2998 = vmatpush2.msra.mxu0 0.0
  %2999 = vmatprep.subr.mxu0 0.0
  %3000 = vmatpush2.msra.mxu0 0.0
  %3001 = vmatprep.subr.mxu0 0.0
  %3002 = vmatpush2.msra.mxu0 0.0
  %3003 = vmatprep.subr.mxu0 0.0
  %3004 = vmatpush2.msra.mxu0 0.0
  %3005 = vmatprep.subr.mxu0 0.0
  %3006 = vmatpush2.msra.mxu0 0.0
  %3007 = vmatprep.mubr.f32.mxu0 0.0
  %v3008 = vand.u32 %v101, 4294901760
  %3009 = vmatmul.mubr.f32.gmra.mxu0 %v3008
  %v3010 = vpop.f32.mrf.mxu0
  %v3011 = vadd.f32 %v2708, %v3010
  %v3012 = vpop.f32.mrf.mxu0
  %v3013 = vadd.f32 %v2710, %v3012
  %3014 = vmatprep.mubr.f32.mxu0 0.0
  %v3015 = vand.u32 %v102, 4294901760
  %3016 = vmatmul.mubr.f32.gmra.mxu0 %v3015
  %v3017 = vpop.f32.mrf.mxu0
  %v3018 = vadd.f32 %v2717, %v3017
  %v3019 = vpop.f32.mrf.mxu0
  %v3020 = vadd.f32 %v2719, %v3019
  %3021 = vmatprep.mubr.f32.mxu0 0.0
  %v3022 = vand.u32 %v103, 4294901760
  %3023 = vmatmul.mubr.f32.gmra.mxu0 %v3022
  %v3024 = vpop.f32.mrf.mxu0
  %v3025 = vadd.f32 %v2726, %v3024
  %v3026 = vpop.f32.mrf.mxu0
  %v3027 = vadd.f32 %v2728, %v3026
  %3028 = vmatprep.mubr.f32.mxu0 0.0
  %v3029 = vand.u32 %v104, 4294901760
  %3030 = vmatmul.mubr.f32.gmra.mxu0 %v3029
  %v3031 = vpop.f32.mrf.mxu0
  %v3032 = vadd.f32 %v2735, %v3031
  %v3033 = vpop.f32.mrf.mxu0
  %v3034 = vadd.f32 %v2737, %v3033
  %3035 = vmatprep.mubr.f32.mxu0 0.0
  %v3036 = vand.u32 %v105, 4294901760
  %3037 = vmatmul.mubr.f32.gmra.mxu0 %v3036
  %v3038 = vpop.f32.mrf.mxu0
  %v3039 = vadd.f32 %v2744, %v3038
  %v3040 = vpop.f32.mrf.mxu0
  %v3041 = vadd.f32 %v2746, %v3040
  %3042 = vmatprep.mubr.f32.mxu0 0.0
  %v3043 = vand.u32 %v106, 4294901760
  %3044 = vmatmul.mubr.f32.gmra.mxu0 %v3043
  %v3045 = vpop.f32.mrf.mxu0
  %v3046 = vadd.f32 %v2753, %v3045
  %v3047 = vpop.f32.mrf.mxu0
  %v3048 = vadd.f32 %v2755, %v3047
  %3049 = vmatprep.mubr.f32.mxu0 0.0
  %v3050 = vand.u32 %v107, 4294901760
  %3051 = vmatmul.mubr.f32.gmra.mxu0 %v3050
  %v3052 = vpop.f32.mrf.mxu0
  %v3053 = vadd.f32 %v2762, %v3052
  %v3054 = vpop.f32.mrf.mxu0
  %v3055 = vadd.f32 %v2764, %v3054
  %3056 = vmatprep.mubr.f32.mxu0 0.0
  %v3057 = vand.u32 %v108, 4294901760
  %3058 = vmatmul.mubr.f32.gmra.mxu0 %v3057
  %v3059 = vpop.f32.mrf.mxu0
  %v3060 = vadd.f32 %v2771, %v3059
  %v3061 = vpop.f32.mrf.mxu0
  %v3062 = vadd.f32 %v2773, %v3061
  %3063 = vmatprep.mubr.f32.mxu0 0.0
  %v3064 = vand.u32 %v109, 4294901760
  %3065 = vmatmul.mubr.f32.gmra.mxu0 %v3064
  %v3066 = vpop.f32.mrf.mxu0
  %v3067 = vadd.f32 %v2780, %v3066
  %v3068 = vpop.f32.mrf.mxu0
  %v3069 = vadd.f32 %v2782, %v3068
  %3070 = vmatprep.mubr.f32.mxu0 0.0
  %v3071 = vand.u32 %v110, 4294901760
  %3072 = vmatmul.mubr.f32.gmra.mxu0 %v3071
  %v3073 = vpop.f32.mrf.mxu0
  %v3074 = vadd.f32 %v2789, %v3073
  %v3075 = vpop.f32.mrf.mxu0
  %v3076 = vadd.f32 %v2791, %v3075
  %3077 = vmatprep.mubr.f32.mxu0 0.0
  %v3078 = vand.u32 %v111, 4294901760
  %3079 = vmatmul.mubr.f32.gmra.mxu0 %v3078
  %v3080 = vpop.f32.mrf.mxu0
  %v3081 = vadd.f32 %v2798, %v3080
  %v3082 = vpop.f32.mrf.mxu0
  %v3083 = vadd.f32 %v2800, %v3082
  %3084 = vmatprep.mubr.f32.mxu0 0.0
  %v3085 = vand.u32 %v112, 4294901760
  %3086 = vmatmul.mubr.f32.gmra.mxu0 %v3085
  %v3087 = vpop.f32.mrf.mxu0
  %v3088 = vadd.f32 %v2807, %v3087
  %v3089 = vpop.f32.mrf.mxu0
  %v3090 = vadd.f32 %v2809, %v3089
  %3091 = vmatprep.mubr.f32.mxu0 0.0
  %v3092 = vand.u32 %v113, 4294901760
  %3093 = vmatmul.mubr.f32.gmra.mxu0 %v3092
  %v3094 = vpop.f32.mrf.mxu0
  %v3095 = vadd.f32 %v2816, %v3094
  %v3096 = vpop.f32.mrf.mxu0
  %v3097 = vadd.f32 %v2818, %v3096
  %3098 = vmatprep.mubr.f32.mxu0 0.0
  %v3099 = vand.u32 %v114, 4294901760
  %3100 = vmatmul.mubr.f32.gmra.mxu0 %v3099
  %v3101 = vpop.f32.mrf.mxu0
  %v3102 = vadd.f32 %v2825, %v3101
  %v3103 = vpop.f32.mrf.mxu0
  %v3104 = vadd.f32 %v2827, %v3103
  %3105 = vmatprep.mubr.f32.mxu0 0.0
  %v3106 = vand.u32 %v115, 4294901760
  %3107 = vmatmul.mubr.f32.gmra.mxu0 %v3106
  %v3108 = vpop.f32.mrf.mxu0
  %v3109 = vadd.f32 %v2834, %v3108
  %v3110 = vpop.f32.mrf.mxu0
  %v3111 = vadd.f32 %v2836, %v3110
  %3112 = vmatprep.mubr.f32.mxu0 0.0
  %v3113 = vand.u32 %v116, 4294901760
  %3114 = vmatmul.mubr.f32.gmra.mxu0 %v3113
  %v3115 = vpop.f32.mrf.mxu0
  %v3116 = vadd.f32 %v2843, %v3115
  %v3117 = vpop.f32.mrf.mxu0
  %v3118 = vadd.f32 %v2845, %v3117
  %3119 = vdwg.mxu0
  %v3120 = vand.u32 %v148, 4294901760
  %3121 = vmatprep.subr.mxu0 %v3120
  %v3122 = vand.u32 %v147, 4294901760
  %3123 = vmatpush1.msra.mxu0 %v3122
  %v3124 = vand.u32 %v146, 4294901760
  %3125 = vmatprep.subr.mxu0 %v3124
  %v3126 = vand.u32 %v145, 4294901760
  %3127 = vmatpush1.msra.mxu0 %v3126
  %v3128 = vand.u32 %v144, 4294901760
  %3129 = vmatprep.subr.mxu0 %v3128
  %v3130 = vand.u32 %v143, 4294901760
  %3131 = vmatpush1.msra.mxu0 %v3130
  %v3132 = vand.u32 %v142, 4294901760
  %3133 = vmatprep.subr.mxu0 %v3132
  %v3134 = vand.u32 %v141, 4294901760
  %3135 = vmatpush1.msra.mxu0 %v3134
  %v3136 = vand.u32 %v140, 4294901760
  %3137 = vmatprep.subr.mxu0 %v3136
  %v3138 = vand.u32 %v139, 4294901760
  %3139 = vmatpush1.msra.mxu0 %v3138
  %v3140 = vand.u32 %v138, 4294901760
  %3141 = vmatprep.subr.mxu0 %v3140
  %v3142 = vand.u32 %v137, 4294901760
  %3143 = vmatpush1.msra.mxu0 %v3142
  %v3144 = vand.u32 %v136, 4294901760
  %3145 = vmatprep.subr.mxu0 %v3144
  %v3146 = vand.u32 %v135, 4294901760
  %3147 = vmatpush1.msra.mxu0 %v3146
  %v3148 = vand.u32 %v134, 4294901760
  %3149 = vmatprep.subr.mxu0 %v3148
  %v3150 = vand.u32 %v133, 4294901760
  %3151 = vmatpush1.msra.mxu0 %v3150
  %v3152 = vand.u32 %v132, 4294901760
  %3153 = vmatprep.subr.mxu0 %v3152
  %v3154 = vand.u32 %v131, 4294901760
  %3155 = vmatpush1.msra.mxu0 %v3154
  %v3156 = vand.u32 %v130, 4294901760
  %3157 = vmatprep.subr.mxu0 %v3156
  %v3158 = vand.u32 %v129, 4294901760
  %3159 = vmatpush1.msra.mxu0 %v3158
  %v3160 = vand.u32 %v128, 4294901760
  %3161 = vmatprep.subr.mxu0 %v3160
  %v3162 = vand.u32 %v127, 4294901760
  %3163 = vmatpush1.msra.mxu0 %v3162
  %v3164 = vand.u32 %v126, 4294901760
  %3165 = vmatprep.subr.mxu0 %v3164
  %v3166 = vand.u32 %v125, 4294901760
  %3167 = vmatpush1.msra.mxu0 %v3166
  %v3168 = vand.u32 %v124, 4294901760
  %3169 = vmatprep.subr.mxu0 %v3168
  %v3170 = vand.u32 %v123, 4294901760
  %3171 = vmatpush1.msra.mxu0 %v3170
  %v3172 = vand.u32 %v122, 4294901760
  %3173 = vmatprep.subr.mxu0 %v3172
  %v3174 = vand.u32 %v121, 4294901760
  %3175 = vmatpush1.msra.mxu0 %v3174
  %v3176 = vand.u32 %v120, 4294901760
  %3177 = vmatprep.subr.mxu0 %v3176
  %v3178 = vand.u32 %v119, 4294901760
  %3179 = vmatpush1.msra.mxu0 %v3178
  %v3180 = vand.u32 %v118, 4294901760
  %3181 = vmatprep.subr.mxu0 %v3180
  %v3182 = vand.u32 %v117, 4294901760
  %3183 = vmatpush1.msra.mxu0 %v3182
  %3184 = vmatprep.subr.mxu0 0.0
  %3185 = vmatpush2.msra.mxu0 0.0
  %3186 = vmatprep.subr.mxu0 0.0
  %3187 = vmatpush2.msra.mxu0 0.0
  %3188 = vmatprep.subr.mxu0 0.0
  %3189 = vmatpush2.msra.mxu0 0.0
  %3190 = vmatprep.subr.mxu0 0.0
  %3191 = vmatpush2.msra.mxu0 0.0
  %3192 = vmatprep.subr.mxu0 0.0
  %3193 = vmatpush2.msra.mxu0 0.0
  %3194 = vmatprep.subr.mxu0 0.0
  %3195 = vmatpush2.msra.mxu0 0.0
  %3196 = vmatprep.subr.mxu0 0.0
  %3197 = vmatpush2.msra.mxu0 0.0
  %3198 = vmatprep.subr.mxu0 0.0
  %3199 = vmatpush2.msra.mxu0 0.0
  %3200 = vmatprep.subr.mxu0 0.0
  %3201 = vmatpush2.msra.mxu0 0.0
  %3202 = vmatprep.subr.mxu0 0.0
  %3203 = vmatpush2.msra.mxu0 0.0
  %3204 = vmatprep.subr.mxu0 0.0
  %3205 = vmatpush2.msra.mxu0 0.0
  %3206 = vmatprep.subr.mxu0 0.0
  %3207 = vmatpush2.msra.mxu0 0.0
  %3208 = vmatprep.subr.mxu0 0.0
  %3209 = vmatpush2.msra.mxu0 0.0
  %3210 = vmatprep.subr.mxu0 0.0
  %3211 = vmatpush2.msra.mxu0 0.0
  %3212 = vmatprep.subr.mxu0 0.0
  %3213 = vmatpush2.msra.mxu0 0.0
  %3214 = vmatprep.subr.mxu0 0.0
  %3215 = vmatpush2.msra.mxu0 0.0
  %3216 = vmatprep.mubr.f32.mxu0 0.0
  %v3217 = vand.u32 %v101, 4294901760
  %3218 = vmatmul.mubr.f32.gmra.mxu0 %v3217
  %v3219 = vpop.f32.mrf.mxu0
  %v3220 = vadd.f32 %v3011, %v3219
  %v3221 = vpop.f32.mrf.mxu0
  %v3222 = vadd.f32 %v3013, %v3221
  %3223 = vmatprep.mubr.f32.mxu0 0.0
  %v3224 = vand.u32 %v102, 4294901760
  %3225 = vmatmul.mubr.f32.gmra.mxu0 %v3224
  %v3226 = vpop.f32.mrf.mxu0
  %v3227 = vadd.f32 %v3018, %v3226
  %v3228 = vpop.f32.mrf.mxu0
  %v3229 = vadd.f32 %v3020, %v3228
  %3230 = vmatprep.mubr.f32.mxu0 0.0
  %v3231 = vand.u32 %v103, 4294901760
  %3232 = vmatmul.mubr.f32.gmra.mxu0 %v3231
  %v3233 = vpop.f32.mrf.mxu0
  %v3234 = vadd.f32 %v3025, %v3233
  %v3235 = vpop.f32.mrf.mxu0
  %v3236 = vadd.f32 %v3027, %v3235
  %3237 = vmatprep.mubr.f32.mxu0 0.0
  %v3238 = vand.u32 %v104, 4294901760
  %3239 = vmatmul.mubr.f32.gmra.mxu0 %v3238
  %v3240 = vpop.f32.mrf.mxu0
  %v3241 = vadd.f32 %v3032, %v3240
  %v3242 = vpop.f32.mrf.mxu0
  %v3243 = vadd.f32 %v3034, %v3242
  %3244 = vmatprep.mubr.f32.mxu0 0.0
  %v3245 = vand.u32 %v105, 4294901760
  %3246 = vmatmul.mubr.f32.gmra.mxu0 %v3245
  %v3247 = vpop.f32.mrf.mxu0
  %v3248 = vadd.f32 %v3039, %v3247
  %v3249 = vpop.f32.mrf.mxu0
  %v3250 = vadd.f32 %v3041, %v3249
  %3251 = vmatprep.mubr.f32.mxu0 0.0
  %v3252 = vand.u32 %v106, 4294901760
  %3253 = vmatmul.mubr.f32.gmra.mxu0 %v3252
  %v3254 = vpop.f32.mrf.mxu0
  %v3255 = vadd.f32 %v3046, %v3254
  %v3256 = vpop.f32.mrf.mxu0
  %v3257 = vadd.f32 %v3048, %v3256
  %3258 = vmatprep.mubr.f32.mxu0 0.0
  %v3259 = vand.u32 %v107, 4294901760
  %3260 = vmatmul.mubr.f32.gmra.mxu0 %v3259
  %v3261 = vpop.f32.mrf.mxu0
  %v3262 = vadd.f32 %v3053, %v3261
  %v3263 = vpop.f32.mrf.mxu0
  %v3264 = vadd.f32 %v3055, %v3263
  %3265 = vmatprep.mubr.f32.mxu0 0.0
  %v3266 = vand.u32 %v108, 4294901760
  %3267 = vmatmul.mubr.f32.gmra.mxu0 %v3266
  %v3268 = vpop.f32.mrf.mxu0
  %v3269 = vadd.f32 %v3060, %v3268
  %v3270 = vpop.f32.mrf.mxu0
  %v3271 = vadd.f32 %v3062, %v3270
  %3272 = vmatprep.mubr.f32.mxu0 0.0
  %v3273 = vand.u32 %v109, 4294901760
  %3274 = vmatmul.mubr.f32.gmra.mxu0 %v3273
  %v3275 = vpop.f32.mrf.mxu0
  %v3276 = vadd.f32 %v3067, %v3275
  %v3277 = vpop.f32.mrf.mxu0
  %v3278 = vadd.f32 %v3069, %v3277
  %3279 = vmatprep.mubr.f32.mxu0 0.0
  %v3280 = vand.u32 %v110, 4294901760
  %3281 = vmatmul.mubr.f32.gmra.mxu0 %v3280
  %v3282 = vpop.f32.mrf.mxu0
  %v3283 = vadd.f32 %v3074, %v3282
  %v3284 = vpop.f32.mrf.mxu0
  %v3285 = vadd.f32 %v3076, %v3284
  %3286 = vmatprep.mubr.f32.mxu0 0.0
  %v3287 = vand.u32 %v111, 4294901760
  %3288 = vmatmul.mubr.f32.gmra.mxu0 %v3287
  %v3289 = vpop.f32.mrf.mxu0
  %v3290 = vadd.f32 %v3081, %v3289
  %v3291 = vpop.f32.mrf.mxu0
  %v3292 = vadd.f32 %v3083, %v3291
  %3293 = vmatprep.mubr.f32.mxu0 0.0
  %v3294 = vand.u32 %v112, 4294901760
  %3295 = vmatmul.mubr.f32.gmra.mxu0 %v3294
  %v3296 = vpop.f32.mrf.mxu0
  %v3297 = vadd.f32 %v3088, %v3296
  %v3298 = vpop.f32.mrf.mxu0
  %v3299 = vadd.f32 %v3090, %v3298
  %3300 = vmatprep.mubr.f32.mxu0 0.0
  %v3301 = vand.u32 %v113, 4294901760
  %3302 = vmatmul.mubr.f32.gmra.mxu0 %v3301
  %v3303 = vpop.f32.mrf.mxu0
  %v3304 = vadd.f32 %v3095, %v3303
  %v3305 = vpop.f32.mrf.mxu0
  %v3306 = vadd.f32 %v3097, %v3305
  %3307 = vmatprep.mubr.f32.mxu0 0.0
  %v3308 = vand.u32 %v114, 4294901760
  %3309 = vmatmul.mubr.f32.gmra.mxu0 %v3308
  %v3310 = vpop.f32.mrf.mxu0
  %v3311 = vadd.f32 %v3102, %v3310
  %v3312 = vpop.f32.mrf.mxu0
  %v3313 = vadd.f32 %v3104, %v3312
  %3314 = vmatprep.mubr.f32.mxu0 0.0
  %v3315 = vand.u32 %v115, 4294901760
  %3316 = vmatmul.mubr.f32.gmra.mxu0 %v3315
  %v3317 = vpop.f32.mrf.mxu0
  %v3318 = vadd.f32 %v3109, %v3317
  %v3319 = vpop.f32.mrf.mxu0
  %v3320 = vadd.f32 %v3111, %v3319
  %3321 = vmatprep.mubr.f32.mxu0 0.0
  %v3322 = vand.u32 %v116, 4294901760
  %3323 = vmatmul.mubr.f32.gmra.mxu0 %v3322
  %v3324 = vpop.f32.mrf.mxu0
  %v3325 = vadd.f32 %v3116, %v3324
  %v3326 = vpop.f32.mrf.mxu0
  %v3327 = vadd.f32 %v3118, %v3326
  %3328 = vdwg.mxu0
  %v3329 = vmul.f32 %v1630, %v1630
  %v3330 = vmul.f32 %v1637, %v1637
  %v3331 = vmul.f32 %v1644, %v1644
  %v3332 = vmul.f32 %v1651, %v1651
  %v3333 = vmul.f32 %v1658, %v1658
  %v3334 = vmul.f32 %v1665, %v1665
  %v3335 = vmul.f32 %v1672, %v1672
  %v3336 = vmul.f32 %v1679, %v1679
  %v3337 = vmul.f32 %v1686, %v1686
  %v3338 = vmul.f32 %v1693, %v1693
  %v3339 = vmul.f32 %v1700, %v1700
  %v3340 = vmul.f32 %v1707, %v1707
  %v3341 = vmul.f32 %v1714, %v1714
  %v3342 = vmul.f32 %v1721, %v1721
  %v3343 = vmul.f32 %v1728, %v1728
  %v3344 = vmul.f32 %v1735, %v1735
  %v3345 = vmul.f32 %v1632, %v1632
  %v3346 = vmul.f32 %v1639, %v1639
  %v3347 = vmul.f32 %v1646, %v1646
  %v3348 = vmul.f32 %v1653, %v1653
  %v3349 = vmul.f32 %v1660, %v1660
  %v3350 = vmul.f32 %v1667, %v1667
  %v3351 = vmul.f32 %v1674, %v1674
  %v3352 = vmul.f32 %v1681, %v1681
  %v3353 = vmul.f32 %v1688, %v1688
  %v3354 = vmul.f32 %v1695, %v1695
  %v3355 = vmul.f32 %v1702, %v1702
  %v3356 = vmul.f32 %v1709, %v1709
  %v3357 = vmul.f32 %v1716, %v1716
  %v3358 = vmul.f32 %v1723, %v1723
  %v3359 = vmul.f32 %v1730, %v1730
  %v3360 = vmul.f32 %v1737, %v1737
  %v3361 = vadd.f32 %v3329, %v3345
  %v3362 = vadd.f32 %v3330, %v3346
  %v3363 = vadd.f32 %v3331, %v3347
  %v3364 = vadd.f32 %v3332, %v3348
  %v3365 = vadd.f32 %v3333, %v3349
  %v3366 = vadd.f32 %v3334, %v3350
  %v3367 = vadd.f32 %v3335, %v3351
  %v3368 = vadd.f32 %v3336, %v3352
  %v3369 = vadd.f32 %v3337, %v3353
  %v3370 = vadd.f32 %v3338, %v3354
  %v3371 = vadd.f32 %v3339, %v3355
  %v3372 = vadd.f32 %v3340, %v3356
  %v3373 = vadd.f32 %v3341, %v3357
  %v3374 = vadd.f32 %v3342, %v3358
  %v3375 = vadd.f32 %v3343, %v3359
  %v3376 = vadd.f32 %v3344, %v3360
  %v3377 = vmul.f32 %v3220, %v3220
  %v3378 = vmul.f32 %v3227, %v3227
  %v3379 = vmul.f32 %v3234, %v3234
  %v3380 = vmul.f32 %v3241, %v3241
  %v3381 = vmul.f32 %v3248, %v3248
  %v3382 = vmul.f32 %v3255, %v3255
  %v3383 = vmul.f32 %v3262, %v3262
  %v3384 = vmul.f32 %v3269, %v3269
  %v3385 = vmul.f32 %v3276, %v3276
  %v3386 = vmul.f32 %v3283, %v3283
  %v3387 = vmul.f32 %v3290, %v3290
  %v3388 = vmul.f32 %v3297, %v3297
  %v3389 = vmul.f32 %v3304, %v3304
  %v3390 = vmul.f32 %v3311, %v3311
  %v3391 = vmul.f32 %v3318, %v3318
  %v3392 = vmul.f32 %v3325, %v3325
  %v3393 = vmul.f32 %v3222, %v3222
  %v3394 = vmul.f32 %v3229, %v3229
  %v3395 = vmul.f32 %v3236, %v3236
  %v3396 = vmul.f32 %v3243, %v3243
  %v3397 = vmul.f32 %v3250, %v3250
  %v3398 = vmul.f32 %v3257, %v3257
  %v3399 = vmul.f32 %v3264, %v3264
  %v3400 = vmul.f32 %v3271, %v3271
  %v3401 = vmul.f32 %v3278, %v3278
  %v3402 = vmul.f32 %v3285, %v3285
  %v3403 = vmul.f32 %v3292, %v3292
  %v3404 = vmul.f32 %v3299, %v3299
  %v3405 = vmul.f32 %v3306, %v3306
  %v3406 = vmul.f32 %v3313, %v3313
  %v3407 = vmul.f32 %v3320, %v3320
  %v3408 = vmul.f32 %v3327, %v3327
  %v3409 = vadd.f32 %v3377, %v3393
  %v3410 = vadd.f32 %v3378, %v3394
  %v3411 = vadd.f32 %v3379, %v3395
  %v3412 = vadd.f32 %v3380, %v3396
  %v3413 = vadd.f32 %v3381, %v3397
  %v3414 = vadd.f32 %v3382, %v3398
  %v3415 = vadd.f32 %v3383, %v3399
  %v3416 = vadd.f32 %v3384, %v3400
  %v3417 = vadd.f32 %v3385, %v3401
  %v3418 = vadd.f32 %v3386, %v3402
  %v3419 = vadd.f32 %v3387, %v3403
  %v3420 = vadd.f32 %v3388, %v3404
  %v3421 = vadd.f32 %v3389, %v3405
  %v3422 = vadd.f32 %v3390, %v3406
  %v3423 = vadd.f32 %v3391, %v3407
  %v3424 = vadd.f32 %v3392, %v3408
  %v3425 = vrsqrt.pop %v3361
  %v3426 = vmul.f32 %v3361, %v3425
  %vm3427 = vcmp.eq.f32.partialorder %v3361, inf
  %v3428 = vsel %vm3427, %v3361, %v3426
  %vm3429 = vcmp.eq.f32.partialorder %v3361, 0.0
  %v3430 = vand.u32 %v3361, 2147483648
  %v3431 = vsel %vm3429, %v3430, %v3428
  %v3432 = vrsqrt.pop %v3362
  %v3433 = vmul.f32 %v3362, %v3432
  %vm3434 = vcmp.eq.f32.partialorder %v3362, inf
  %v3435 = vsel %vm3434, %v3362, %v3433
  %vm3436 = vcmp.eq.f32.partialorder %v3362, 0.0
  %v3437 = vand.u32 %v3362, 2147483648
  %v3438 = vsel %vm3436, %v3437, %v3435
  %v3439 = vrsqrt.pop %v3363
  %v3440 = vmul.f32 %v3363, %v3439
  %vm3441 = vcmp.eq.f32.partialorder %v3363, inf
  %v3442 = vsel %vm3441, %v3363, %v3440
  %vm3443 = vcmp.eq.f32.partialorder %v3363, 0.0
  %v3444 = vand.u32 %v3363, 2147483648
  %v3445 = vsel %vm3443, %v3444, %v3442
  %v3446 = vrsqrt.pop %v3364
  %v3447 = vmul.f32 %v3364, %v3446
  %vm3448 = vcmp.eq.f32.partialorder %v3364, inf
  %v3449 = vsel %vm3448, %v3364, %v3447
  %vm3450 = vcmp.eq.f32.partialorder %v3364, 0.0
  %v3451 = vand.u32 %v3364, 2147483648
  %v3452 = vsel %vm3450, %v3451, %v3449
  %v3453 = vrsqrt.pop %v3365
  %v3454 = vmul.f32 %v3365, %v3453
  %vm3455 = vcmp.eq.f32.partialorder %v3365, inf
  %v3456 = vsel %vm3455, %v3365, %v3454
  %vm3457 = vcmp.eq.f32.partialorder %v3365, 0.0
  %v3458 = vand.u32 %v3365, 2147483648
  %v3459 = vsel %vm3457, %v3458, %v3456
  %v3460 = vrsqrt.pop %v3366
  %v3461 = vmul.f32 %v3366, %v3460
  %vm3462 = vcmp.eq.f32.partialorder %v3366, inf
  %v3463 = vsel %vm3462, %v3366, %v3461
  %vm3464 = vcmp.eq.f32.partialorder %v3366, 0.0
  %v3465 = vand.u32 %v3366, 2147483648
  %v3466 = vsel %vm3464, %v3465, %v3463
  %v3467 = vrsqrt.pop %v3367
  %v3468 = vmul.f32 %v3367, %v3467
  %vm3469 = vcmp.eq.f32.partialorder %v3367, inf
  %v3470 = vsel %vm3469, %v3367, %v3468
  %vm3471 = vcmp.eq.f32.partialorder %v3367, 0.0
  %v3472 = vand.u32 %v3367, 2147483648
  %v3473 = vsel %vm3471, %v3472, %v3470
  %v3474 = vrsqrt.pop %v3368
  %v3475 = vmul.f32 %v3368, %v3474
  %vm3476 = vcmp.eq.f32.partialorder %v3368, inf
  %v3477 = vsel %vm3476, %v3368, %v3475
  %vm3478 = vcmp.eq.f32.partialorder %v3368, 0.0
  %v3479 = vand.u32 %v3368, 2147483648
  %v3480 = vsel %vm3478, %v3479, %v3477
  %v3481 = vrsqrt.pop %v3369
  %v3482 = vmul.f32 %v3369, %v3481
  %vm3483 = vcmp.eq.f32.partialorder %v3369, inf
  %v3484 = vsel %vm3483, %v3369, %v3482
  %vm3485 = vcmp.eq.f32.partialorder %v3369, 0.0
  %v3486 = vand.u32 %v3369, 2147483648
  %v3487 = vsel %vm3485, %v3486, %v3484
  %v3488 = vrsqrt.pop %v3370
  %v3489 = vmul.f32 %v3370, %v3488
  %vm3490 = vcmp.eq.f32.partialorder %v3370, inf
  %v3491 = vsel %vm3490, %v3370, %v3489
  %vm3492 = vcmp.eq.f32.partialorder %v3370, 0.0
  %v3493 = vand.u32 %v3370, 2147483648
  %v3494 = vsel %vm3492, %v3493, %v3491
  %v3495 = vrsqrt.pop %v3371
  %v3496 = vmul.f32 %v3371, %v3495
  %vm3497 = vcmp.eq.f32.partialorder %v3371, inf
  %v3498 = vsel %vm3497, %v3371, %v3496
  %vm3499 = vcmp.eq.f32.partialorder %v3371, 0.0
  %v3500 = vand.u32 %v3371, 2147483648
  %v3501 = vsel %vm3499, %v3500, %v3498
  %v3502 = vrsqrt.pop %v3372
  %v3503 = vmul.f32 %v3372, %v3502
  %vm3504 = vcmp.eq.f32.partialorder %v3372, inf
  %v3505 = vsel %vm3504, %v3372, %v3503
  %vm3506 = vcmp.eq.f32.partialorder %v3372, 0.0
  %v3507 = vand.u32 %v3372, 2147483648
  %v3508 = vsel %vm3506, %v3507, %v3505
  %v3509 = vrsqrt.pop %v3373
  %v3510 = vmul.f32 %v3373, %v3509
  %vm3511 = vcmp.eq.f32.partialorder %v3373, inf
  %v3512 = vsel %vm3511, %v3373, %v3510
  %vm3513 = vcmp.eq.f32.partialorder %v3373, 0.0
  %v3514 = vand.u32 %v3373, 2147483648
  %v3515 = vsel %vm3513, %v3514, %v3512
  %v3516 = vrsqrt.pop %v3374
  %v3517 = vmul.f32 %v3374, %v3516
  %vm3518 = vcmp.eq.f32.partialorder %v3374, inf
  %v3519 = vsel %vm3518, %v3374, %v3517
  %vm3520 = vcmp.eq.f32.partialorder %v3374, 0.0
  %v3521 = vand.u32 %v3374, 2147483648
  %v3522 = vsel %vm3520, %v3521, %v3519
  %v3523 = vrsqrt.pop %v3375
  %v3524 = vmul.f32 %v3375, %v3523
  %vm3525 = vcmp.eq.f32.partialorder %v3375, inf
  %v3526 = vsel %vm3525, %v3375, %v3524
  %vm3527 = vcmp.eq.f32.partialorder %v3375, 0.0
  %v3528 = vand.u32 %v3375, 2147483648
  %v3529 = vsel %vm3527, %v3528, %v3526
  %v3530 = vrsqrt.pop %v3376
  %v3531 = vmul.f32 %v3376, %v3530
  %vm3532 = vcmp.eq.f32.partialorder %v3376, inf
  %v3533 = vsel %vm3532, %v3376, %v3531
  %vm3534 = vcmp.eq.f32.partialorder %v3376, 0.0
  %v3535 = vand.u32 %v3376, 2147483648
  %v3536 = vsel %vm3534, %v3535, %v3533
  %v3537 = vrsqrt.pop %v3409
  %v3538 = vmul.f32 %v3409, %v3537
  %vm3539 = vcmp.eq.f32.partialorder %v3409, inf
  %v3540 = vsel %vm3539, %v3409, %v3538
  %vm3541 = vcmp.eq.f32.partialorder %v3409, 0.0
  %v3542 = vand.u32 %v3409, 2147483648
  %v3543 = vsel %vm3541, %v3542, %v3540
  %v3544 = vrsqrt.pop %v3410
  %v3545 = vmul.f32 %v3410, %v3544
  %vm3546 = vcmp.eq.f32.partialorder %v3410, inf
  %v3547 = vsel %vm3546, %v3410, %v3545
  %vm3548 = vcmp.eq.f32.partialorder %v3410, 0.0
  %v3549 = vand.u32 %v3410, 2147483648
  %v3550 = vsel %vm3548, %v3549, %v3547
  %v3551 = vrsqrt.pop %v3411
  %v3552 = vmul.f32 %v3411, %v3551
  %vm3553 = vcmp.eq.f32.partialorder %v3411, inf
  %v3554 = vsel %vm3553, %v3411, %v3552
  %vm3555 = vcmp.eq.f32.partialorder %v3411, 0.0
  %v3556 = vand.u32 %v3411, 2147483648
  %v3557 = vsel %vm3555, %v3556, %v3554
  %v3558 = vrsqrt.pop %v3412
  %v3559 = vmul.f32 %v3412, %v3558
  %vm3560 = vcmp.eq.f32.partialorder %v3412, inf
  %v3561 = vsel %vm3560, %v3412, %v3559
  %vm3562 = vcmp.eq.f32.partialorder %v3412, 0.0
  %v3563 = vand.u32 %v3412, 2147483648
  %v3564 = vsel %vm3562, %v3563, %v3561
  %v3565 = vrsqrt.pop %v3413
  %v3566 = vmul.f32 %v3413, %v3565
  %vm3567 = vcmp.eq.f32.partialorder %v3413, inf
  %v3568 = vsel %vm3567, %v3413, %v3566
  %vm3569 = vcmp.eq.f32.partialorder %v3413, 0.0
  %v3570 = vand.u32 %v3413, 2147483648
  %v3571 = vsel %vm3569, %v3570, %v3568
  %v3572 = vrsqrt.pop %v3414
  %v3573 = vmul.f32 %v3414, %v3572
  %vm3574 = vcmp.eq.f32.partialorder %v3414, inf
  %v3575 = vsel %vm3574, %v3414, %v3573
  %vm3576 = vcmp.eq.f32.partialorder %v3414, 0.0
  %v3577 = vand.u32 %v3414, 2147483648
  %v3578 = vsel %vm3576, %v3577, %v3575
  %v3579 = vrsqrt.pop %v3415
  %v3580 = vmul.f32 %v3415, %v3579
  %vm3581 = vcmp.eq.f32.partialorder %v3415, inf
  %v3582 = vsel %vm3581, %v3415, %v3580
  %vm3583 = vcmp.eq.f32.partialorder %v3415, 0.0
  %v3584 = vand.u32 %v3415, 2147483648
  %v3585 = vsel %vm3583, %v3584, %v3582
  %v3586 = vrsqrt.pop %v3416
  %v3587 = vmul.f32 %v3416, %v3586
  %vm3588 = vcmp.eq.f32.partialorder %v3416, inf
  %v3589 = vsel %vm3588, %v3416, %v3587
  %vm3590 = vcmp.eq.f32.partialorder %v3416, 0.0
  %v3591 = vand.u32 %v3416, 2147483648
  %v3592 = vsel %vm3590, %v3591, %v3589
  %v3593 = vrsqrt.pop %v3417
  %v3594 = vmul.f32 %v3417, %v3593
  %vm3595 = vcmp.eq.f32.partialorder %v3417, inf
  %v3596 = vsel %vm3595, %v3417, %v3594
  %vm3597 = vcmp.eq.f32.partialorder %v3417, 0.0
  %v3598 = vand.u32 %v3417, 2147483648
  %v3599 = vsel %vm3597, %v3598, %v3596
  %v3600 = vrsqrt.pop %v3418
  %v3601 = vmul.f32 %v3418, %v3600
  %vm3602 = vcmp.eq.f32.partialorder %v3418, inf
  %v3603 = vsel %vm3602, %v3418, %v3601
  %vm3604 = vcmp.eq.f32.partialorder %v3418, 0.0
  %v3605 = vand.u32 %v3418, 2147483648
  %v3606 = vsel %vm3604, %v3605, %v3603
  %v3607 = vrsqrt.pop %v3419
  %v3608 = vmul.f32 %v3419, %v3607
  %vm3609 = vcmp.eq.f32.partialorder %v3419, inf
  %v3610 = vsel %vm3609, %v3419, %v3608
  %vm3611 = vcmp.eq.f32.partialorder %v3419, 0.0
  %v3612 = vand.u32 %v3419, 2147483648
  %v3613 = vsel %vm3611, %v3612, %v3610
  %v3614 = vrsqrt.pop %v3420
  %v3615 = vmul.f32 %v3420, %v3614
  %vm3616 = vcmp.eq.f32.partialorder %v3420, inf
  %v3617 = vsel %vm3616, %v3420, %v3615
  %vm3618 = vcmp.eq.f32.partialorder %v3420, 0.0
  %v3619 = vand.u32 %v3420, 2147483648
  %v3620 = vsel %vm3618, %v3619, %v3617
  %v3621 = vrsqrt.pop %v3421
  %v3622 = vmul.f32 %v3421, %v3621
  %vm3623 = vcmp.eq.f32.partialorder %v3421, inf
  %v3624 = vsel %vm3623, %v3421, %v3622
  %vm3625 = vcmp.eq.f32.partialorder %v3421, 0.0
  %v3626 = vand.u32 %v3421, 2147483648
  %v3627 = vsel %vm3625, %v3626, %v3624
  %v3628 = vrsqrt.pop %v3422
  %v3629 = vmul.f32 %v3422, %v3628
  %vm3630 = vcmp.eq.f32.partialorder %v3422, inf
  %v3631 = vsel %vm3630, %v3422, %v3629
  %vm3632 = vcmp.eq.f32.partialorder %v3422, 0.0
  %v3633 = vand.u32 %v3422, 2147483648
  %v3634 = vsel %vm3632, %v3633, %v3631
  %v3635 = vrsqrt.pop %v3423
  %v3636 = vmul.f32 %v3423, %v3635
  %vm3637 = vcmp.eq.f32.partialorder %v3423, inf
  %v3638 = vsel %vm3637, %v3423, %v3636
  %vm3639 = vcmp.eq.f32.partialorder %v3423, 0.0
  %v3640 = vand.u32 %v3423, 2147483648
  %v3641 = vsel %vm3639, %v3640, %v3638
  %v3642 = vrsqrt.pop %v3424
  %v3643 = vmul.f32 %v3424, %v3642
  %vm3644 = vcmp.eq.f32.partialorder %v3424, inf
  %v3645 = vsel %vm3644, %v3424, %v3643
  %vm3646 = vcmp.eq.f32.partialorder %v3424, 0.0
  %v3647 = vand.u32 %v3424, 2147483648
  %v3648 = vsel %vm3646, %v3647, %v3645
  %v3649 = vsub.f32 %v3431, %v3543
  %v3650 = vsub.f32 %v3438, %v3550
  %v3651 = vsub.f32 %v3445, %v3557
  %v3652 = vsub.f32 %v3452, %v3564
  %v3653 = vsub.f32 %v3459, %v3571
  %v3654 = vsub.f32 %v3466, %v3578
  %v3655 = vsub.f32 %v3473, %v3585
  %v3656 = vsub.f32 %v3480, %v3592
  %v3657 = vsub.f32 %v3487, %v3599
  %v3658 = vsub.f32 %v3494, %v3606
  %v3659 = vsub.f32 %v3501, %v3613
  %v3660 = vsub.f32 %v3508, %v3620
  %v3661 = vsub.f32 %v3515, %v3627
  %v3662 = vsub.f32 %v3522, %v3634
  %v3663 = vsub.f32 %v3529, %v3641
  %v3664 = vsub.f32 %v3536, %v3648
  %v3665 = vadd.f32 %v3431, 1e-07
  %v3666 = vadd.f32 %v3438, 1e-07
  %v3667 = vadd.f32 %v3445, 1e-07
  %v3668 = vadd.f32 %v3452, 1e-07
  %v3669 = vadd.f32 %v3459, 1e-07
  %v3670 = vadd.f32 %v3466, 1e-07
  %v3671 = vadd.f32 %v3473, 1e-07
  %v3672 = vadd.f32 %v3480, 1e-07
  %v3673 = vadd.f32 %v3487, 1e-07
  %v3674 = vadd.f32 %v3494, 1e-07
  %v3675 = vadd.f32 %v3501, 1e-07
  %v3676 = vadd.f32 %v3508, 1e-07
  %v3677 = vadd.f32 %v3515, 1e-07
  %v3678 = vadd.f32 %v3522, 1e-07
  %v3679 = vadd.f32 %v3529, 1e-07
  %v3680 = vadd.f32 %v3536, 1e-07
  %v3681 = vlog2.pop %v3665
  %v3682 = vmul.f32 %v3681, 0.6931472
  %v3683 = vlog2.pop %v3666
  %v3684 = vmul.f32 %v3683, 0.6931472
  %v3685 = vlog2.pop %v3667
  %v3686 = vmul.f32 %v3685, 0.6931472
  %v3687 = vlog2.pop %v3668
  %v3688 = vmul.f32 %v3687, 0.6931472
  %v3689 = vlog2.pop %v3669
  %v3690 = vmul.f32 %v3689, 0.6931472
  %v3691 = vlog2.pop %v3670
  %v3692 = vmul.f32 %v3691, 0.6931472
  %v3693 = vlog2.pop %v3671
  %v3694 = vmul.f32 %v3693, 0.6931472
  %v3695 = vlog2.pop %v3672
  %v3696 = vmul.f32 %v3695, 0.6931472
  %v3697 = vlog2.pop %v3673
  %v3698 = vmul.f32 %v3697, 0.6931472
  %v3699 = vlog2.pop %v3674
  %v3700 = vmul.f32 %v3699, 0.6931472
  %v3701 = vlog2.pop %v3675
  %v3702 = vmul.f32 %v3701, 0.6931472
  %v3703 = vlog2.pop %v3676
  %v3704 = vmul.f32 %v3703, 0.6931472
  %v3705 = vlog2.pop %v3677
  %v3706 = vmul.f32 %v3705, 0.6931472
  %v3707 = vlog2.pop %v3678
  %v3708 = vmul.f32 %v3707, 0.6931472
  %v3709 = vlog2.pop %v3679
  %v3710 = vmul.f32 %v3709, 0.6931472
  %v3711 = vlog2.pop %v3680
  %v3712 = vmul.f32 %v3711, 0.6931472
  %v3713 = vadd.f32 %v3543, 1e-07
  %v3714 = vadd.f32 %v3550, 1e-07
  %v3715 = vadd.f32 %v3557, 1e-07
  %v3716 = vadd.f32 %v3564, 1e-07
  %v3717 = vadd.f32 %v3571, 1e-07
  %v3718 = vadd.f32 %v3578, 1e-07
  %v3719 = vadd.f32 %v3585, 1e-07
  %v3720 = vadd.f32 %v3592, 1e-07
  %v3721 = vadd.f32 %v3599, 1e-07
  %v3722 = vadd.f32 %v3606, 1e-07
  %v3723 = vadd.f32 %v3613, 1e-07
  %v3724 = vadd.f32 %v3620, 1e-07
  %v3725 = vadd.f32 %v3627, 1e-07
  %v3726 = vadd.f32 %v3634, 1e-07
  %v3727 = vadd.f32 %v3641, 1e-07
  %v3728 = vadd.f32 %v3648, 1e-07
  %v3729 = vlog2.pop %v3713
  %v3730 = vmul.f32 %v3729, 0.6931472
  %v3731 = vlog2.pop %v3714
  %v3732 = vmul.f32 %v3731, 0.6931472
  %v3733 = vlog2.pop %v3715
  %v3734 = vmul.f32 %v3733, 0.6931472
  %v3735 = vlog2.pop %v3716
  %v3736 = vmul.f32 %v3735, 0.6931472
  %v3737 = vlog2.pop %v3717
  %v3738 = vmul.f32 %v3737, 0.6931472
  %v3739 = vlog2.pop %v3718
  %v3740 = vmul.f32 %v3739, 0.6931472
  %v3741 = vlog2.pop %v3719
  %v3742 = vmul.f32 %v3741, 0.6931472
  %v3743 = vlog2.pop %v3720
  %v3744 = vmul.f32 %v3743, 0.6931472
  %v3745 = vlog2.pop %v3721
  %v3746 = vmul.f32 %v3745, 0.6931472
  %v3747 = vlog2.pop %v3722
  %v3748 = vmul.f32 %v3747, 0.6931472
  %v3749 = vlog2.pop %v3723
  %v3750 = vmul.f32 %v3749, 0.6931472
  %v3751 = vlog2.pop %v3724
  %v3752 = vmul.f32 %v3751, 0.6931472
  %v3753 = vlog2.pop %v3725
  %v3754 = vmul.f32 %v3753, 0.6931472
  %v3755 = vlog2.pop %v3726
  %v3756 = vmul.f32 %v3755, 0.6931472
  %v3757 = vlog2.pop %v3727
  %v3758 = vmul.f32 %v3757, 0.6931472
  %v3759 = vlog2.pop %v3728
  %v3760 = vmul.f32 %v3759, 0.6931472
  %v3761 = vsub.f32 %v3682, %v3730
  %v3762 = vsub.f32 %v3684, %v3732
  %v3763 = vsub.f32 %v3686, %v3734
  %v3764 = vsub.f32 %v3688, %v3736
  %v3765 = vsub.f32 %v3690, %v3738
  %v3766 = vsub.f32 %v3692, %v3740
  %v3767 = vsub.f32 %v3694, %v3742
  %v3768 = vsub.f32 %v3696, %v3744
  %v3769 = vsub.f32 %v3698, %v3746
  %v3770 = vsub.f32 %v3700, %v3748
  %v3771 = vsub.f32 %v3702, %v3750
  %v3772 = vsub.f32 %v3704, %v3752
  %v3773 = vsub.f32 %v3706, %v3754
  %v3774 = vsub.f32 %v3708, %v3756
  %v3775 = vsub.f32 %v3710, %v3758
  %v3776 = vsub.f32 %v3712, %v3760
  %v3777 = vld [vmem:[#allocation2] sm:$0xff]
  %v3778 = vmul.f32 %v3649, %v3649
  %v3779 = vmul.f32 %v3650, %v3650
  %v3780 = vmul.f32 %v3651, %v3651
  %v3781 = vmul.f32 %v3652, %v3652
  %v3782 = vmul.f32 %v3653, %v3653
  %v3783 = vmul.f32 %v3654, %v3654
  %v3784 = vmul.f32 %v3655, %v3655
  %v3785 = vmul.f32 %v3656, %v3656
  %v3786 = vmul.f32 %v3657, %v3657
  %v3787 = vmul.f32 %v3658, %v3658
  %v3788 = vmul.f32 %v3659, %v3659
  %v3789 = vmul.f32 %v3660, %v3660
  %v3790 = vmul.f32 %v3661, %v3661
  %v3791 = vmul.f32 %v3662, %v3662
  %v3792 = vmul.f32 %v3663, %v3663
  %v3793 = vmul.f32 %v3664, %v3664
  %v3794 = vadd.f32 %v3778, %v3779
  %v3795 = vadd.f32 %v3794, %v3780
  %v3796 = vadd.f32 %v3795, %v3781
  %v3797 = vadd.f32 %v3796, %v3782
  %v3798 = vadd.f32 %v3797, %v3783
  %v3799 = vadd.f32 %v3798, %v3784
  %v3800 = vadd.f32 %v3799, %v3785
  %v3801 = vadd.f32 %v3800, %v3786
  %v3802 = vadd.f32 %v3801, %v3787
  %v3803 = vadd.f32 %v3802, %v3788
  %v3804 = vadd.f32 %v3803, %v3789
  %v3805 = vadd.f32 %v3804, %v3790
  %v3806 = vadd.f32 %v3805, %v3791
  %v3807 = vadd.f32 %v3806, %v3792
  %v3808 = vadd.f32 %v3807, %v3793
  %v3809 = vadd.f32 %v3777, %v3808
  %3810 = vst [vmem:[#allocation2] sm:$0xff] %v3809
  %v3811 = vld [vmem:[#allocation3] sm:$0xff]
  %v3812 = vadd.f32 %v3361, %v3362
  %v3813 = vadd.f32 %v3812, %v3363
  %v3814 = vadd.f32 %v3813, %v3364
  %v3815 = vadd.f32 %v3814, %v3365
  %v3816 = vadd.f32 %v3815, %v3366
  %v3817 = vadd.f32 %v3816, %v3367
  %v3818 = vadd.f32 %v3817, %v3368
  %v3819 = vadd.f32 %v3818, %v3369
  %v3820 = vadd.f32 %v3819, %v3370
  %v3821 = vadd.f32 %v3820, %v3371
  %v3822 = vadd.f32 %v3821, %v3372
  %v3823 = vadd.f32 %v3822, %v3373
  %v3824 = vadd.f32 %v3823, %v3374
  %v3825 = vadd.f32 %v3824, %v3375
  %v3826 = vadd.f32 %v3825, %v3376
  %v3827 = vadd.f32 %v3811, %v3826
  %3828 = vst [vmem:[#allocation3] sm:$0xff] %v3827
  %v3829 = vld [vmem:[#allocation4] sm:$0xff]
  %v3830 = vand.u32 2147483647, %v3761
  %v3831 = vand.u32 2147483647, %v3762
  %v3832 = vand.u32 2147483647, %v3763
  %v3833 = vand.u32 2147483647, %v3764
  %v3834 = vand.u32 2147483647, %v3765
  %v3835 = vand.u32 2147483647, %v3766
  %v3836 = vand.u32 2147483647, %v3767
  %v3837 = vand.u32 2147483647, %v3768
  %v3838 = vand.u32 2147483647, %v3769
  %v3839 = vand.u32 2147483647, %v3770
  %v3840 = vand.u32 2147483647, %v3771
  %v3841 = vand.u32 2147483647, %v3772
  %v3842 = vand.u32 2147483647, %v3773
  %v3843 = vand.u32 2147483647, %v3774
  %v3844 = vand.u32 2147483647, %v3775
  %v3845 = vand.u32 2147483647, %v3776
  %v3846 = vadd.f32 %v3830, %v3831
  %v3847 = vadd.f32 %v3846, %v3832
  %v3848 = vadd.f32 %v3847, %v3833
  %v3849 = vadd.f32 %v3848, %v3834
  %v3850 = vadd.f32 %v3849, %v3835
  %v3851 = vadd.f32 %v3850, %v3836
  %v3852 = vadd.f32 %v3851, %v3837
  %v3853 = vadd.f32 %v3852, %v3838
  %v3854 = vadd.f32 %v3853, %v3839
  %v3855 = vadd.f32 %v3854, %v3840
  %v3856 = vadd.f32 %v3855, %v3841
  %v3857 = vadd.f32 %v3856, %v3842
  %v3858 = vadd.f32 %v3857, %v3843
  %v3859 = vadd.f32 %v3858, %v3844
  %v3860 = vadd.f32 %v3859, %v3845
  %v3861 = vadd.f32 %v3829, %v3860
  %3862 = vst [vmem:[#allocation4] sm:$0xff] %v3861
  // Predicated region
  $region18: #{audio_distance_v1.2} parent=0 // pred_check
    %p3863 = pneg %p78
  $region19: #{audio_distance_v1.2} parent=0 // pred_check_branch
    %3865 = sbr.rel (%p3863) target = $region21
  $region20: #{audio_distance_v1.2} parent=0 // pred_region
    %v3866 = vld [vmem:[#allocation2] sm:$0xff]
    %3867 = vadd.xlane.f32.xlu0 %v3866
    %v3868 = vpop.xlane.xlu0 %3867
    %v3869 = vrot.slane %v3868, 4
    %v3870 = vadd.f32 %v3868, %v3869
    %v3871 = vrot.slane %v3870, 2
    %v3872 = vadd.f32 %v3870, %v3871
    %v3873 = vrot.slane %v3872, 1
    %v3874 = vadd.f32 %v3872, %v3873
    %s3875 = vtos %v3874
    %v3876 = vld [vmem:[#allocation3] sm:$0xff]
    %3877 = vadd.xlane.f32.xlu0 %v3876
    %v3878 = vpop.xlane.xlu0 %3877
    %v3879 = vrot.slane %v3878, 4
    %v3880 = vadd.f32 %v3878, %v3879
    %v3881 = vrot.slane %v3880, 2
    %v3882 = vadd.f32 %v3880, %v3881
    %v3883 = vrot.slane %v3882, 1
    %v3884 = vadd.f32 %v3882, %v3883
    %s3885 = vtos %v3884
    %v3886 = vld [vmem:[#allocation4] sm:$0xff]
    %3887 = vadd.xlane.f32.xlu0 %v3886
    %v3888 = vpop.xlane.xlu0 %3887
    %v3889 = vrot.slane %v3888, 4
    %v3890 = vadd.f32 %v3888, %v3889
    %v3891 = vrot.slane %v3890, 2
    %v3892 = vadd.f32 %v3890, %v3891
    %v3893 = vrot.slane %v3892, 1
    %v3894 = vadd.f32 %v3892, %v3893
    %s3895 = vtos %v3894
    %v3896 = vlaneseq
    %v3897 = vand.u32 %v3896, 127
    %v3898 = vlaneseq
    %v3899 = vshrl.u32 %v3898, 7
    %vm3900 = vcmp.eq.s32.totalorder %v3899, 0
    %vm3901 = vcmp.eq.s32.totalorder %v3897, 0
    %vm3902 = vmand %vm3900, %vm3901
    %vm3903 = vcmp.eq.s32.totalorder %v3897, 1
    %vm3904 = vmand %vm3900, %vm3903
    %vm3905 = vcmp.eq.s32.totalorder %v3897, 2
    %vm3906 = vmand %vm3900, %vm3905
    %v3907 = vstv %s3895
    %v3908 = vsel %vm3906, %v3907, 0.0
    %v3909 = vstv %s3885
    %v3910 = vsel %vm3904, %v3909, %v3908
    %v3911 = vstv %s3875
    %v3912 = vsel %vm3902, %v3911, %v3910
    %3913 = vst [vmem:[%s3] sm:$0xff] %v3912
  $region21: #{audio_distance_v1.2} parent=0 // pred_fallthru
    _
  // Predicated region
  $region22: #{audio_distance_v1.2} parent=0 // pred_check
    _
  $region23: #{audio_distance_v1.2} parent=0 // pred_check_branch
    %3915 = sbr.rel (0) target = $region25
  $region24: #{audio_distance_v1.2} parent=0 // pred_region
    _
  $region25: #{audio_distance_v1.2} parent=0 // pred_fallthru
    _
  // Predicated region
  $region26: #{audio_distance_v1.2} parent=0 // pred_check
    _
  $region27: #{audio_distance_v1.2} parent=0 // pred_check_branch
    %3917 = sbr.rel (0) target = $region29
  $region28: #{audio_distance_v1.2} parent=0 // pred_region
    _
  $region29: #{audio_distance_v1.2} parent=0 // pred_fallthru
    _

// kernel: audio_distance_v1.3
$region0: #{audio_distance_v1.3}
  #allocation0 [shape = 'u32[]', space=smem, size = 0x4, offset = 0x4, fixed_abs, tag = 'smem constant byte address 0x4 - core index']
  #allocation1 [shape = 'u32[144,128]{1,0:T(1,128)}', space=vmem, size = 0x12000, scoped, tag = 'internal scratch']
  #allocation2 [shape = 'f32[8,128]{1,0:T(8,128)}', space=vmem, size = 0x1000, scoped, tag = 'scratch operand']
  #allocation3 [shape = 'f32[8,128]{1,0:T(8,128)}', space=vmem, size = 0x1000, scoped, tag = 'scratch operand']
  #allocation4 [shape = 'f32[8,128]{1,0:T(8,128)}', space=vmem, size = 0x1000, scoped, tag = 'scratch operand']
  %s0 = inlined_call_operand.vmem [shape: f32[256,64], index: 0, kind: input, shape index: {}]
  %s1 = inlined_call_operand.vmem [shape: f32[256,64], index: 1, kind: input, shape index: {}]
  %s2 = inlined_call_operand.vmem [shape: f32[64,128], index: 2, kind: input, shape index: {}]
  %s3 = inlined_call_operand.vmem [shape: f32[1,8,128], index: 3, kind: output, shape index: {}]
  %s4 = sld [smem:[#allocation0]]
  $region30: #{audio_distance_v1.3} parent=0
    _
  %s6 = ssub.s32 1, %s4
  %s7 = scalar_select 0, %s6, %s4
  // Predicated region
  $region2: #{audio_distance_v1.3} parent=0 // pred_check
    _
  $region3: #{audio_distance_v1.3} parent=0 // pred_check_branch
    %9 = sbr.rel (0) target = $region5
  $region4: #{audio_distance_v1.3} parent=0 // pred_region
    %s10 = sadd.s32 0, 0
    %p11 = scmp.lt.s32.totalorder %s10, 0
    %s12 = scalar_select %p11, %s10, 0
    %s13 = smul.u32 32, %s12
    %p14 = scmp.lt.s32.totalorder %s13, 31
    %s15 = scalar_select %p14, %s13, 31
    %s16 = smul.addr %s15, 8
    %s17 = scalar_lea.vmem %s0, %s16
    %s18 = sadd.s32 0, 0
    %p19 = scmp.lt.s32.totalorder %s18, 0
    %s20 = scalar_select %p19, %s18, 0
    %s21 = smul.u32 32, %s20
  $region5: #{audio_distance_v1.3} parent=0 // pred_fallthru
    _
  // Predicated region
  $region6: #{audio_distance_v1.3} parent=0 // pred_check
    _
  $region7: #{audio_distance_v1.3} parent=0 // pred_check_branch
    %23 = sbr.rel (0) target = $region9
  $region8: #{audio_distance_v1.3} parent=0 // pred_region
    %s24 = sadd.s32 0, 0
    %p25 = scmp.lt.s32.totalorder %s24, 0
    %s26 = scalar_select %p25, %s24, 0
    %s27 = smul.u32 32, %s26
    %p28 = scmp.lt.s32.totalorder %s27, 31
    %s29 = scalar_select %p28, %s27, 31
    %s30 = smul.addr %s29, 8
    %s31 = scalar_lea.vmem %s1, %s30
    %s32 = sadd.s32 0, 0
    %p33 = scmp.lt.s32.totalorder %s32, 0
    %s34 = scalar_select %p33, %s32, 0
    %s35 = smul.u32 32, %s34
  $region9: #{audio_distance_v1.3} parent=0 // pred_fallthru
    _
  // Predicated region
  $region10: #{audio_distance_v1.3} parent=0 // pred_check
    _
  $region11: #{audio_distance_v1.3} parent=0 // pred_check_branch
    %37 = sbr.rel (0) target = $region13
  $region12: #{audio_distance_v1.3} parent=0 // pred_region
    _
  $region13: #{audio_distance_v1.3} parent=0 // pred_fallthru
    _
  %s38 = sadd.s32 0, 0
  %p39 = scmp.lt.s32.totalorder %s38, 0
  %s40 = scalar_select %p39, %s38, 0
  %s41 = smul.u32 32, %s40
  %p42 = scmp.lt.s32.totalorder %s41, 31
  %s43 = scalar_select %p42, %s41, 31
  %s44 = smul.addr %s43, 8
  %s45 = scalar_lea.vmem %s0, %s44
  %s46 = sadd.s32 0, 0
  %p47 = scmp.lt.s32.totalorder %s46, 0
  %s48 = scalar_select %p47, %s46, 0
  %s49 = smul.u32 32, %s48
  %p50 = scmp.lt.s32.totalorder %s49, 31
  %s51 = scalar_select %p50, %s49, 31
  %s52 = smul.addr %s51, 8
  %s53 = scalar_lea.vmem %s1, %s52
  %s54 = sadd.s32 0, 0
  %p55 = scmp.lt.s32.totalorder %s54, 0
  %s56 = scalar_select %p55, %s54, 0
  %s57 = smul.u32 32, %s56
  %p58 = scmp.lt.s32.totalorder %s57, 31
  %s59 = scalar_select %p58, %s57, 31
  %s60 = smul.addr %s59, 8
  %s61 = scalar_lea.vmem %s0, %s60
  %s62 = sadd.s32 0, 0
  %p63 = scmp.lt.s32.totalorder %s62, 0
  %s64 = scalar_select %p63, %s62, 0
  %s65 = smul.u32 32, %s64
  %s66 = sadd.s32 0, 0
  %p67 = scmp.lt.s32.totalorder %s66, 0
  %s68 = scalar_select %p67, %s66, 0
  %s69 = smul.u32 32, %s68
  %p70 = scmp.lt.s32.totalorder %s69, 31
  %s71 = scalar_select %p70, %s69, 31
  %s72 = smul.addr %s71, 8
  %s73 = scalar_lea.vmem %s1, %s72
  %s74 = sadd.s32 0, 0
  %p75 = scmp.lt.s32.totalorder %s74, 0
  %s76 = scalar_select %p75, %s74, 0
  %s77 = smul.u32 32, %s76
  %p78 = scmp.eq.s32.totalorder 0, 0
  // Predicated region
  $region14: #{audio_distance_v1.3} parent=0 // pred_check
    %p79 = pneg %p78
  $region15: #{audio_distance_v1.3} parent=0 // pred_check_branch
    %81 = sbr.rel (%p79) target = $region17
  $region16: #{audio_distance_v1.3} parent=0 // pred_region
    %82 = vst [vmem:[#allocation2] sm:$0xff] 0.0
    %83 = vst [vmem:[#allocation3] sm:$0xff] 0.0
    %84 = vst [vmem:[#allocation4] sm:$0xff] 0.0
  $region17: #{audio_distance_v1.3} parent=0 // pred_fallthru
    _
  %v85 = vld [vmem:[%s61] sm:$0xff]
  %v86 = vld [vmem:[%s61 + $0x8] sm:$0xff]
  %v87 = vld [vmem:[%s61 + $0x10] sm:$0xff]
  %v88 = vld [vmem:[%s61 + $0x18] sm:$0xff]
  %v89 = vld [vmem:[%s61 + $0x20] sm:$0xff]
  %v90 = vld [vmem:[%s61 + $0x28] sm:$0xff]
  %v91 = vld [vmem:[%s61 + $0x30] sm:$0xff]
  %v92 = vld [vmem:[%s61 + $0x38] sm:$0xff]
  %v93 = vld [vmem:[%s61 + $0x40] sm:$0xff]
  %v94 = vld [vmem:[%s61 + $0x48] sm:$0xff]
  %v95 = vld [vmem:[%s61 + $0x50] sm:$0xff]
  %v96 = vld [vmem:[%s61 + $0x58] sm:$0xff]
  %v97 = vld [vmem:[%s61 + $0x60] sm:$0xff]
  %v98 = vld [vmem:[%s61 + $0x68] sm:$0xff]
  %v99 = vld [vmem:[%s61 + $0x70] sm:$0xff]
  %v100 = vld [vmem:[%s61 + $0x78] sm:$0xff]
  %v101 = vld [vmem:[%s61 + $0x80] sm:$0xff]
  %v102 = vld [vmem:[%s61 + $0x88] sm:$0xff]
  %v103 = vld [vmem:[%s61 + $0x90] sm:$0xff]
  %v104 = vld [vmem:[%s61 + $0x98] sm:$0xff]
  %v105 = vld [vmem:[%s61 + $0xa0] sm:$0xff]
  %v106 = vld [vmem:[%s61 + $0xa8] sm:$0xff]
  %v107 = vld [vmem:[%s61 + $0xb0] sm:$0xff]
  %v108 = vld [vmem:[%s61 + $0xb8] sm:$0xff]
  %v109 = vld [vmem:[%s61 + $0xc0] sm:$0xff]
  %v110 = vld [vmem:[%s61 + $0xc8] sm:$0xff]
  %v111 = vld [vmem:[%s61 + $0xd0] sm:$0xff]
  %v112 = vld [vmem:[%s61 + $0xd8] sm:$0xff]
  %v113 = vld [vmem:[%s61 + $0xe0] sm:$0xff]
  %v114 = vld [vmem:[%s61 + $0xe8] sm:$0xff]
  %v115 = vld [vmem:[%s61 + $0xf0] sm:$0xff]
  %v116 = vld [vmem:[%s61 + $0xf8] sm:$0xff]
  %v117 = vld [vmem:[%s73] sm:$0xff]
  %v118 = vld [vmem:[%s73 + $0x8] sm:$0xff]
  %v119 = vld [vmem:[%s73 + $0x10] sm:$0xff]
  %v120 = vld [vmem:[%s73 + $0x18] sm:$0xff]
  %v121 = vld [vmem:[%s73 + $0x20] sm:$0xff]
  %v122 = vld [vmem:[%s73 + $0x28] sm:$0xff]
  %v123 = vld [vmem:[%s73 + $0x30] sm:$0xff]
  %v124 = vld [vmem:[%s73 + $0x38] sm:$0xff]
  %v125 = vld [vmem:[%s73 + $0x40] sm:$0xff]
  %v126 = vld [vmem:[%s73 + $0x48] sm:$0xff]
  %v127 = vld [vmem:[%s73 + $0x50] sm:$0xff]
  %v128 = vld [vmem:[%s73 + $0x58] sm:$0xff]
  %v129 = vld [vmem:[%s73 + $0x60] sm:$0xff]
  %v130 = vld [vmem:[%s73 + $0x68] sm:$0xff]
  %v131 = vld [vmem:[%s73 + $0x70] sm:$0xff]
  %v132 = vld [vmem:[%s73 + $0x78] sm:$0xff]
  %v133 = vld [vmem:[%s73 + $0x80] sm:$0xff]
  %v134 = vld [vmem:[%s73 + $0x88] sm:$0xff]
  %v135 = vld [vmem:[%s73 + $0x90] sm:$0xff]
  %v136 = vld [vmem:[%s73 + $0x98] sm:$0xff]
  %v137 = vld [vmem:[%s73 + $0xa0] sm:$0xff]
  %v138 = vld [vmem:[%s73 + $0xa8] sm:$0xff]
  %v139 = vld [vmem:[%s73 + $0xb0] sm:$0xff]
  %v140 = vld [vmem:[%s73 + $0xb8] sm:$0xff]
  %v141 = vld [vmem:[%s73 + $0xc0] sm:$0xff]
  %v142 = vld [vmem:[%s73 + $0xc8] sm:$0xff]
  %v143 = vld [vmem:[%s73 + $0xd0] sm:$0xff]
  %v144 = vld [vmem:[%s73 + $0xd8] sm:$0xff]
  %v145 = vld [vmem:[%s73 + $0xe0] sm:$0xff]
  %v146 = vld [vmem:[%s73 + $0xe8] sm:$0xff]
  %v147 = vld [vmem:[%s73 + $0xf0] sm:$0xff]
  %v148 = vld [vmem:[%s73 + $0xf8] sm:$0xff]
  %v149 = vld [vmem:[%s2] sm:$0xff]
  %v150 = vld [vmem:[%s2 + $0x8] sm:$0xff]
  %v151 = vld [vmem:[%s2 + $0x10] sm:$0xff]
  %v152 = vld [vmem:[%s2 + $0x18] sm:$0xff]
  %v153 = vld [vmem:[%s2 + $0x20] sm:$0xff]
  %v154 = vld [vmem:[%s2 + $0x28] sm:$0xff]
  %v155 = vld [vmem:[%s2 + $0x30] sm:$0xff]
  %v156 = vld [vmem:[%s2 + $0x38] sm:$0xff]
  %vm157 = vcmask 523264
  %v159 = vsel %vm157, %v85, 0
  %v162 = vsel %vm157, %v86, 0
  %v165 = vsel %vm157, %v87, 0
  %v168 = vsel %vm157, %v88, 0
  %v171 = vsel %vm157, %v89, 0
  %v174 = vsel %vm157, %v90, 0
  %v177 = vsel %vm157, %v91, 0
  %v180 = vsel %vm157, %v92, 0
  %v183 = vsel %vm157, %v93, 0
  %v186 = vsel %vm157, %v94, 0
  %v189 = vsel %vm157, %v95, 0
  %v192 = vsel %vm157, %v96, 0
  %v195 = vsel %vm157, %v97, 0
  %v198 = vsel %vm157, %v98, 0
  %v201 = vsel %vm157, %v99, 0
  %v204 = vsel %vm157, %v100, 0
  %v207 = vsel %vm157, %v101, 0
  %v210 = vsel %vm157, %v102, 0
  %v213 = vsel %vm157, %v103, 0
  %v216 = vsel %vm157, %v104, 0
  %v219 = vsel %vm157, %v105, 0
  %v222 = vsel %vm157, %v106, 0
  %v225 = vsel %vm157, %v107, 0
  %v228 = vsel %vm157, %v108, 0
  %v231 = vsel %vm157, %v109, 0
  %v234 = vsel %vm157, %v110, 0
  %v237 = vsel %vm157, %v111, 0
  %v240 = vsel %vm157, %v112, 0
  %v243 = vsel %vm157, %v113, 0
  %v246 = vsel %vm157, %v114, 0
  %v249 = vsel %vm157, %v115, 0
  %v252 = vsel %vm157, %v116, 0
  %254 = vmatprep.subr.mxu0 0.0
  %255 = vmatpush1.msra.mxu0 0.0
  %256 = vmatprep.subr.mxu0 0.0
  %257 = vmatpush1.msra.mxu0 0.0
  %258 = vmatprep.subr.mxu0 0.0
  %259 = vmatpush1.msra.mxu0 0.0
  %260 = vmatprep.subr.mxu0 0.0
  %261 = vmatpush1.msra.mxu0 0.0
  %262 = vmatprep.subr.mxu0 0.0
  %263 = vmatpush1.msra.mxu0 0.0
  %264 = vmatprep.subr.mxu0 0.0
  %265 = vmatpush1.msra.mxu0 0.0
  %266 = vmatprep.subr.mxu0 0.0
  %267 = vmatpush1.msra.mxu0 0.0
  %268 = vmatprep.subr.mxu0 0.0
  %269 = vmatpush1.msra.mxu0 0.0
  %270 = vmatprep.subr.mxu0 0.0
  %v271 = vand.u32 %v156, 4294901760
  %272 = vmatpush1.msra.mxu0 %v271
  %273 = vmatprep.subr.mxu0 0.0
  %v274 = vand.u32 %v155, 4294901760
  %275 = vmatpush1.msra.mxu0 %v274
  %276 = vmatprep.subr.mxu0 0.0
  %v277 = vand.u32 %v154, 4294901760
  %278 = vmatpush1.msra.mxu0 %v277
  %279 = vmatprep.subr.mxu0 0.0
  %v280 = vand.u32 %v153, 4294901760
  %281 = vmatpush1.msra.mxu0 %v280
  %282 = vmatprep.subr.mxu0 0.0
  %v283 = vand.u32 %v152, 4294901760
  %284 = vmatpush1.msra.mxu0 %v283
  %285 = vmatprep.subr.mxu0 0.0
  %v286 = vand.u32 %v151, 4294901760
  %287 = vmatpush1.msra.mxu0 %v286
  %288 = vmatprep.subr.mxu0 0.0
  %v289 = vand.u32 %v150, 4294901760
  %290 = vmatpush1.msra.mxu0 %v289
  %291 = vmatprep.subr.mxu0 0.0
  %v292 = vand.u32 %v149, 4294901760
  %293 = vmatpush1.msra.mxu0 %v292
  %294 = vmatprep.subr.mxu0 0.0
  %295 = vmatpush2.msra.mxu0 0.0
  %296 = vmatprep.subr.mxu0 0.0
  %297 = vmatpush2.msra.mxu0 0.0
  %298 = vmatprep.subr.mxu0 0.0
  %299 = vmatpush2.msra.mxu0 0.0
  %300 = vmatprep.subr.mxu0 0.0
  %301 = vmatpush2.msra.mxu0 0.0
  %302 = vmatprep.subr.mxu0 0.0
  %303 = vmatpush2.msra.mxu0 0.0
  %304 = vmatprep.subr.mxu0 0.0
  %305 = vmatpush2.msra.mxu0 0.0
  %306 = vmatprep.subr.mxu0 0.0
  %307 = vmatpush2.msra.mxu0 0.0
  %308 = vmatprep.subr.mxu0 0.0
  %309 = vmatpush2.msra.mxu0 0.0
  %310 = vmatprep.subr.mxu0 0.0
  %311 = vmatpush2.msra.mxu0 0.0
  %312 = vmatprep.subr.mxu0 0.0
  %313 = vmatpush2.msra.mxu0 0.0
  %314 = vmatprep.subr.mxu0 0.0
  %315 = vmatpush2.msra.mxu0 0.0
  %316 = vmatprep.subr.mxu0 0.0
  %317 = vmatpush2.msra.mxu0 0.0
  %318 = vmatprep.subr.mxu0 0.0
  %319 = vmatpush2.msra.mxu0 0.0
  %320 = vmatprep.subr.mxu0 0.0
  %321 = vmatpush2.msra.mxu0 0.0
  %322 = vmatprep.subr.mxu0 0.0
  %323 = vmatpush2.msra.mxu0 0.0
  %324 = vmatprep.subr.mxu0 0.0
  %325 = vmatpush2.msra.mxu0 0.0
  %326 = vmatprep.mubr.f32.mxu0 0.0
  %v327 = vand.u32 %v159, 4294901760
  %v328 = vsub.f32 %v159, %v327
  %v329 = vand.u32 %v328, 4294901760
  %v330 = vsub.f32 %v328, %v329
  %v331 = vand.u32 %v330, 4294901760
  %332 = vmatmul.mubr.f32.gmra.mxu0 %v331
  %v333 = vpop.f32.mrf.mxu0
  %v334 = vadd.f32 0.0, %v333
  %v335 = vpop.f32.mrf.mxu0
  %336 = vmatprep.mubr.f32.mxu0 0.0
  %v337 = vand.u32 %v162, 4294901760
  %v338 = vsub.f32 %v162, %v337
  %v339 = vand.u32 %v338, 4294901760
  %v340 = vsub.f32 %v338, %v339
  %v341 = vand.u32 %v340, 4294901760
  %342 = vmatmul.mubr.f32.gmra.mxu0 %v341
  %v343 = vpop.f32.mrf.mxu0
  %v344 = vadd.f32 0.0, %v343
  %v345 = vpop.f32.mrf.mxu0
  %346 = vmatprep.mubr.f32.mxu0 0.0
  %v347 = vand.u32 %v165, 4294901760
  %v348 = vsub.f32 %v165, %v347
  %v349 = vand.u32 %v348, 4294901760
  %v350 = vsub.f32 %v348, %v349
  %v351 = vand.u32 %v350, 4294901760
  %352 = vmatmul.mubr.f32.gmra.mxu0 %v351
  %v353 = vpop.f32.mrf.mxu0
  %v354 = vadd.f32 0.0, %v353
  %v355 = vpop.f32.mrf.mxu0
  %356 = vmatprep.mubr.f32.mxu0 0.0
  %v357 = vand.u32 %v168, 4294901760
  %v358 = vsub.f32 %v168, %v357
  %v359 = vand.u32 %v358, 4294901760
  %v360 = vsub.f32 %v358, %v359
  %v361 = vand.u32 %v360, 4294901760
  %362 = vmatmul.mubr.f32.gmra.mxu0 %v361
  %v363 = vpop.f32.mrf.mxu0
  %v364 = vadd.f32 0.0, %v363
  %v365 = vpop.f32.mrf.mxu0
  %366 = vmatprep.mubr.f32.mxu0 0.0
  %v367 = vand.u32 %v171, 4294901760
  %v368 = vsub.f32 %v171, %v367
  %v369 = vand.u32 %v368, 4294901760
  %v370 = vsub.f32 %v368, %v369
  %v371 = vand.u32 %v370, 4294901760
  %372 = vmatmul.mubr.f32.gmra.mxu0 %v371
  %v373 = vpop.f32.mrf.mxu0
  %v374 = vadd.f32 0.0, %v373
  %v375 = vpop.f32.mrf.mxu0
  %376 = vmatprep.mubr.f32.mxu0 0.0
  %v377 = vand.u32 %v174, 4294901760
  %v378 = vsub.f32 %v174, %v377
  %v379 = vand.u32 %v378, 4294901760
  %v380 = vsub.f32 %v378, %v379
  %v381 = vand.u32 %v380, 4294901760
  %382 = vmatmul.mubr.f32.gmra.mxu0 %v381
  %v383 = vpop.f32.mrf.mxu0
  %v384 = vadd.f32 0.0, %v383
  %v385 = vpop.f32.mrf.mxu0
  %386 = vmatprep.mubr.f32.mxu0 0.0
  %v387 = vand.u32 %v177, 4294901760
  %v388 = vsub.f32 %v177, %v387
  %v389 = vand.u32 %v388, 4294901760
  %v390 = vsub.f32 %v388, %v389
  %v391 = vand.u32 %v390, 4294901760
  %392 = vmatmul.mubr.f32.gmra.mxu0 %v391
  %v393 = vpop.f32.mrf.mxu0
  %v394 = vadd.f32 0.0, %v393
  %v395 = vpop.f32.mrf.mxu0
  %396 = vmatprep.mubr.f32.mxu0 0.0
  %v397 = vand.u32 %v180, 4294901760
  %v398 = vsub.f32 %v180, %v397
  %v399 = vand.u32 %v398, 4294901760
  %v400 = vsub.f32 %v398, %v399
  %v401 = vand.u32 %v400, 4294901760
  %402 = vmatmul.mubr.f32.gmra.mxu0 %v401
  %v403 = vpop.f32.mrf.mxu0
  %v404 = vadd.f32 0.0, %v403
  %v405 = vpop.f32.mrf.mxu0
  %406 = vmatprep.mubr.f32.mxu0 0.0
  %v407 = vand.u32 %v183, 4294901760
  %v408 = vsub.f32 %v183, %v407
  %v409 = vand.u32 %v408, 4294901760
  %v410 = vsub.f32 %v408, %v409
  %v411 = vand.u32 %v410, 4294901760
  %412 = vmatmul.mubr.f32.gmra.mxu0 %v411
  %v413 = vpop.f32.mrf.mxu0
  %v414 = vadd.f32 0.0, %v413
  %v415 = vpop.f32.mrf.mxu0
  %416 = vmatprep.mubr.f32.mxu0 0.0
  %v417 = vand.u32 %v186, 4294901760
  %v418 = vsub.f32 %v186, %v417
  %v419 = vand.u32 %v418, 4294901760
  %v420 = vsub.f32 %v418, %v419
  %v421 = vand.u32 %v420, 4294901760
  %422 = vmatmul.mubr.f32.gmra.mxu0 %v421
  %v423 = vpop.f32.mrf.mxu0
  %v424 = vadd.f32 0.0, %v423
  %v425 = vpop.f32.mrf.mxu0
  %426 = vmatprep.mubr.f32.mxu0 0.0
  %v427 = vand.u32 %v189, 4294901760
  %v428 = vsub.f32 %v189, %v427
  %v429 = vand.u32 %v428, 4294901760
  %v430 = vsub.f32 %v428, %v429
  %v431 = vand.u32 %v430, 4294901760
  %432 = vmatmul.mubr.f32.gmra.mxu0 %v431
  %v433 = vpop.f32.mrf.mxu0
  %v434 = vadd.f32 0.0, %v433
  %v435 = vpop.f32.mrf.mxu0
  %436 = vmatprep.mubr.f32.mxu0 0.0
  %v437 = vand.u32 %v192, 4294901760
  %v438 = vsub.f32 %v192, %v437
  %v439 = vand.u32 %v438, 4294901760
  %v440 = vsub.f32 %v438, %v439
  %v441 = vand.u32 %v440, 4294901760
  %442 = vmatmul.mubr.f32.gmra.mxu0 %v441
  %v443 = vpop.f32.mrf.mxu0
  %v444 = vadd.f32 0.0, %v443
  %v445 = vpop.f32.mrf.mxu0
  %446 = vmatprep.mubr.f32.mxu0 0.0
  %v447 = vand.u32 %v195, 4294901760
  %v448 = vsub.f32 %v195, %v447
  %v449 = vand.u32 %v448, 4294901760
  %v450 = vsub.f32 %v448, %v449
  %v451 = vand.u32 %v450, 4294901760
  %452 = vmatmul.mubr.f32.gmra.mxu0 %v451
  %v453 = vpop.f32.mrf.mxu0
  %v454 = vadd.f32 0.0, %v453
  %v455 = vpop.f32.mrf.mxu0
  %456 = vmatprep.mubr.f32.mxu0 0.0
  %v457 = vand.u32 %v198, 4294901760
  %v458 = vsub.f32 %v198, %v457
  %v459 = vand.u32 %v458, 4294901760
  %v460 = vsub.f32 %v458, %v459
  %v461 = vand.u32 %v460, 4294901760
  %462 = vmatmul.mubr.f32.gmra.mxu0 %v461
  %v463 = vpop.f32.mrf.mxu0
  %v464 = vadd.f32 0.0, %v463
  %v465 = vpop.f32.mrf.mxu0
  %466 = vmatprep.mubr.f32.mxu0 0.0
  %v467 = vand.u32 %v201, 4294901760
  %v468 = vsub.f32 %v201, %v467
  %v469 = vand.u32 %v468, 4294901760
  %v470 = vsub.f32 %v468, %v469
  %v471 = vand.u32 %v470, 4294901760
  %472 = vmatmul.mubr.f32.gmra.mxu0 %v471
  %v473 = vpop.f32.mrf.mxu0
  %v474 = vadd.f32 0.0, %v473
  %v475 = vpop.f32.mrf.mxu0
  %476 = vmatprep.mubr.f32.mxu0 0.0
  %v477 = vand.u32 %v204, 4294901760
  %v478 = vsub.f32 %v204, %v477
  %v479 = vand.u32 %v478, 4294901760
  %v480 = vsub.f32 %v478, %v479
  %v481 = vand.u32 %v480, 4294901760
  %482 = vmatmul.mubr.f32.gmra.mxu0 %v481
  %v483 = vpop.f32.mrf.mxu0
  %v484 = vadd.f32 0.0, %v483
  %v485 = vpop.f32.mrf.mxu0
  %486 = vmatprep.mubr.f32.mxu0 0.0
  %v487 = vand.u32 %v207, 4294901760
  %v488 = vsub.f32 %v207, %v487
  %v489 = vand.u32 %v488, 4294901760
  %v490 = vsub.f32 %v488, %v489
  %v491 = vand.u32 %v490, 4294901760
  %492 = vmatmul.mubr.f32.gmra.mxu0 %v491
  %v493 = vpop.f32.mrf.mxu0
  %v494 = vadd.f32 0.0, %v493
  %v495 = vpop.f32.mrf.mxu0
  %496 = vmatprep.mubr.f32.mxu0 0.0
  %v497 = vand.u32 %v210, 4294901760
  %v498 = vsub.f32 %v210, %v497
  %v499 = vand.u32 %v498, 4294901760
  %v500 = vsub.f32 %v498, %v499
  %v501 = vand.u32 %v500, 4294901760
  %502 = vmatmul.mubr.f32.gmra.mxu0 %v501
  %v503 = vpop.f32.mrf.mxu0
  %v504 = vadd.f32 0.0, %v503
  %v505 = vpop.f32.mrf.mxu0
  %506 = vmatprep.mubr.f32.mxu0 0.0
  %v507 = vand.u32 %v213, 4294901760
  %v508 = vsub.f32 %v213, %v507
  %v509 = vand.u32 %v508, 4294901760
  %v510 = vsub.f32 %v508, %v509
  %v511 = vand.u32 %v510, 4294901760
  %512 = vmatmul.mubr.f32.gmra.mxu0 %v511
  %v513 = vpop.f32.mrf.mxu0
  %v514 = vadd.f32 0.0, %v513
  %v515 = vpop.f32.mrf.mxu0
  %516 = vmatprep.mubr.f32.mxu0 0.0
  %v517 = vand.u32 %v216, 4294901760
  %v518 = vsub.f32 %v216, %v517
  %v519 = vand.u32 %v518, 4294901760
  %v520 = vsub.f32 %v518, %v519
  %v521 = vand.u32 %v520, 4294901760
  %522 = vmatmul.mubr.f32.gmra.mxu0 %v521
  %v523 = vpop.f32.mrf.mxu0
  %v524 = vadd.f32 0.0, %v523
  %v525 = vpop.f32.mrf.mxu0
  %526 = vmatprep.mubr.f32.mxu0 0.0
  %v527 = vand.u32 %v219, 4294901760
  %v528 = vsub.f32 %v219, %v527
  %v529 = vand.u32 %v528, 4294901760
  %v530 = vsub.f32 %v528, %v529
  %v531 = vand.u32 %v530, 4294901760
  %532 = vmatmul.mubr.f32.gmra.mxu0 %v531
  %v533 = vpop.f32.mrf.mxu0
  %v534 = vadd.f32 0.0, %v533
  %v535 = vpop.f32.mrf.mxu0
  %536 = vmatprep.mubr.f32.mxu0 0.0
  %v537 = vand.u32 %v222, 4294901760
  %v538 = vsub.f32 %v222, %v537
  %v539 = vand.u32 %v538, 4294901760
  %v540 = vsub.f32 %v538, %v539
  %v541 = vand.u32 %v540, 4294901760
  %542 = vmatmul.mubr.f32.gmra.mxu0 %v541
  %v543 = vpop.f32.mrf.mxu0
  %v544 = vadd.f32 0.0, %v543
  %v545 = vpop.f32.mrf.mxu0
  %546 = vmatprep.mubr.f32.mxu0 0.0
  %v547 = vand.u32 %v225, 4294901760
  %v548 = vsub.f32 %v225, %v547
  %v549 = vand.u32 %v548, 4294901760
  %v550 = vsub.f32 %v548, %v549
  %v551 = vand.u32 %v550, 4294901760
  %552 = vmatmul.mubr.f32.gmra.mxu0 %v551
  %v553 = vpop.f32.mrf.mxu0
  %v554 = vadd.f32 0.0, %v553
  %v555 = vpop.f32.mrf.mxu0
  %556 = vmatprep.mubr.f32.mxu0 0.0
  %v557 = vand.u32 %v228, 4294901760
  %v558 = vsub.f32 %v228, %v557
  %v559 = vand.u32 %v558, 4294901760
  %v560 = vsub.f32 %v558, %v559
  %v561 = vand.u32 %v560, 4294901760
  %562 = vmatmul.mubr.f32.gmra.mxu0 %v561
  %v563 = vpop.f32.mrf.mxu0
  %v564 = vadd.f32 0.0, %v563
  %v565 = vpop.f32.mrf.mxu0
  %566 = vmatprep.mubr.f32.mxu0 0.0
  %v567 = vand.u32 %v231, 4294901760
  %v568 = vsub.f32 %v231, %v567
  %v569 = vand.u32 %v568, 4294901760
  %v570 = vsub.f32 %v568, %v569
  %v571 = vand.u32 %v570, 4294901760
  %572 = vmatmul.mubr.f32.gmra.mxu0 %v571
  %v573 = vpop.f32.mrf.mxu0
  %v574 = vadd.f32 0.0, %v573
  %v575 = vpop.f32.mrf.mxu0
  %576 = vmatprep.mubr.f32.mxu0 0.0
  %v577 = vand.u32 %v234, 4294901760
  %v578 = vsub.f32 %v234, %v577
  %v579 = vand.u32 %v578, 4294901760
  %v580 = vsub.f32 %v578, %v579
  %v581 = vand.u32 %v580, 4294901760
  %582 = vmatmul.mubr.f32.gmra.mxu0 %v581
  %v583 = vpop.f32.mrf.mxu0
  %v584 = vadd.f32 0.0, %v583
  %v585 = vpop.f32.mrf.mxu0
  %586 = vmatprep.mubr.f32.mxu0 0.0
  %v587 = vand.u32 %v237, 4294901760
  %v588 = vsub.f32 %v237, %v587
  %v589 = vand.u32 %v588, 4294901760
  %v590 = vsub.f32 %v588, %v589
  %v591 = vand.u32 %v590, 4294901760
  %592 = vmatmul.mubr.f32.gmra.mxu0 %v591
  %v593 = vpop.f32.mrf.mxu0
  %v594 = vadd.f32 0.0, %v593
  %v595 = vpop.f32.mrf.mxu0
  %596 = vmatprep.mubr.f32.mxu0 0.0
  %v597 = vand.u32 %v240, 4294901760
  %v598 = vsub.f32 %v240, %v597
  %v599 = vand.u32 %v598, 4294901760
  %v600 = vsub.f32 %v598, %v599
  %v601 = vand.u32 %v600, 4294901760
  %602 = vmatmul.mubr.f32.gmra.mxu0 %v601
  %v603 = vpop.f32.mrf.mxu0
  %v604 = vadd.f32 0.0, %v603
  %v605 = vpop.f32.mrf.mxu0
  %606 = vmatprep.mubr.f32.mxu0 0.0
  %v607 = vand.u32 %v243, 4294901760
  %v608 = vsub.f32 %v243, %v607
  %v609 = vand.u32 %v608, 4294901760
  %v610 = vsub.f32 %v608, %v609
  %v611 = vand.u32 %v610, 4294901760
  %612 = vmatmul.mubr.f32.gmra.mxu0 %v611
  %v613 = vpop.f32.mrf.mxu0
  %v614 = vadd.f32 0.0, %v613
  %v615 = vpop.f32.mrf.mxu0
  %616 = vmatprep.mubr.f32.mxu0 0.0
  %v617 = vand.u32 %v246, 4294901760
  %v618 = vsub.f32 %v246, %v617
  %v619 = vand.u32 %v618, 4294901760
  %v620 = vsub.f32 %v618, %v619
  %v621 = vand.u32 %v620, 4294901760
  %622 = vmatmul.mubr.f32.gmra.mxu0 %v621
  %v623 = vpop.f32.mrf.mxu0
  %v624 = vadd.f32 0.0, %v623
  %v625 = vpop.f32.mrf.mxu0
  %626 = vmatprep.mubr.f32.mxu0 0.0
  %v627 = vand.u32 %v249, 4294901760
  %v628 = vsub.f32 %v249, %v627
  %v629 = vand.u32 %v628, 4294901760
  %v630 = vsub.f32 %v628, %v629
  %v631 = vand.u32 %v630, 4294901760
  %632 = vmatmul.mubr.f32.gmra.mxu0 %v631
  %v633 = vpop.f32.mrf.mxu0
  %v634 = vadd.f32 0.0, %v633
  %v635 = vpop.f32.mrf.mxu0
  %636 = vmatprep.mubr.f32.mxu0 0.0
  %v637 = vand.u32 %v252, 4294901760
  %v638 = vsub.f32 %v252, %v637
  %v639 = vand.u32 %v638, 4294901760
  %v640 = vsub.f32 %v638, %v639
  %v641 = vand.u32 %v640, 4294901760
  %642 = vmatmul.mubr.f32.gmra.mxu0 %v641
  %v643 = vpop.f32.mrf.mxu0
  %v644 = vadd.f32 0.0, %v643
  %v645 = vpop.f32.mrf.mxu0
  %646 = vdwg.mxu0
  %647 = vmatprep.subr.mxu0 0.0
  %648 = vmatpush1.msra.mxu0 0.0
  %649 = vmatprep.subr.mxu0 0.0
  %650 = vmatpush1.msra.mxu0 0.0
  %651 = vmatprep.subr.mxu0 0.0
  %652 = vmatpush1.msra.mxu0 0.0
  %653 = vmatprep.subr.mxu0 0.0
  %654 = vmatpush1.msra.mxu0 0.0
  %655 = vmatprep.subr.mxu0 0.0
  %656 = vmatpush1.msra.mxu0 0.0
  %657 = vmatprep.subr.mxu0 0.0
  %658 = vmatpush1.msra.mxu0 0.0
  %659 = vmatprep.subr.mxu0 0.0
  %660 = vmatpush1.msra.mxu0 0.0
  %661 = vmatprep.subr.mxu0 0.0
  %662 = vmatpush1.msra.mxu0 0.0
  %663 = vmatprep.subr.mxu0 0.0
  %v664 = vand.u32 %v156, 4294901760
  %v665 = vsub.f32 %v156, %v664
  %v666 = vand.u32 %v665, 4294901760
  %v667 = vsub.f32 %v665, %v666
  %v668 = vand.u32 %v667, 4294901760
  %669 = vmatpush1.msra.mxu0 %v668
  %670 = vmatprep.subr.mxu0 0.0
  %v671 = vand.u32 %v155, 4294901760
  %v672 = vsub.f32 %v155, %v671
  %v673 = vand.u32 %v672, 4294901760
  %v674 = vsub.f32 %v672, %v673
  %v675 = vand.u32 %v674, 4294901760
  %676 = vmatpush1.msra.mxu0 %v675
  %677 = vmatprep.subr.mxu0 0.0
  %v678 = vand.u32 %v154, 4294901760
  %v679 = vsub.f32 %v154, %v678
  %v680 = vand.u32 %v679, 4294901760
  %v681 = vsub.f32 %v679, %v680
  %v682 = vand.u32 %v681, 4294901760
  %683 = vmatpush1.msra.mxu0 %v682
  %684 = vmatprep.subr.mxu0 0.0
  %v685 = vand.u32 %v153, 4294901760
  %v686 = vsub.f32 %v153, %v685
  %v687 = vand.u32 %v686, 4294901760
  %v688 = vsub.f32 %v686, %v687
  %v689 = vand.u32 %v688, 4294901760
  %690 = vmatpush1.msra.mxu0 %v689
  %691 = vmatprep.subr.mxu0 0.0
  %v692 = vand.u32 %v152, 4294901760
  %v693 = vsub.f32 %v152, %v692
  %v694 = vand.u32 %v693, 4294901760
  %v695 = vsub.f32 %v693, %v694
  %v696 = vand.u32 %v695, 4294901760
  %697 = vmatpush1.msra.mxu0 %v696
  %698 = vmatprep.subr.mxu0 0.0
  %v699 = vand.u32 %v151, 4294901760
  %v700 = vsub.f32 %v151, %v699
  %v701 = vand.u32 %v700, 4294901760
  %v702 = vsub.f32 %v700, %v701
  %v703 = vand.u32 %v702, 4294901760
  %704 = vmatpush1.msra.mxu0 %v703
  %705 = vmatprep.subr.mxu0 0.0
  %v706 = vand.u32 %v150, 4294901760
  %v707 = vsub.f32 %v150, %v706
  %v708 = vand.u32 %v707, 4294901760
  %v709 = vsub.f32 %v707, %v708
  %v710 = vand.u32 %v709, 4294901760
  %711 = vmatpush1.msra.mxu0 %v710
  %712 = vmatprep.subr.mxu0 0.0
  %v713 = vand.u32 %v149, 4294901760
  %v714 = vsub.f32 %v149, %v713
  %v715 = vand.u32 %v714, 4294901760
  %v716 = vsub.f32 %v714, %v715
  %v717 = vand.u32 %v716, 4294901760
  %718 = vmatpush1.msra.mxu0 %v717
  %719 = vmatprep.subr.mxu0 0.0
  %720 = vmatpush2.msra.mxu0 0.0
  %721 = vmatprep.subr.mxu0 0.0
  %722 = vmatpush2.msra.mxu0 0.0
  %723 = vmatprep.subr.mxu0 0.0
  %724 = vmatpush2.msra.mxu0 0.0
  %725 = vmatprep.subr.mxu0 0.0
  %726 = vmatpush2.msra.mxu0 0.0
  %727 = vmatprep.subr.mxu0 0.0
  %728 = vmatpush2.msra.mxu0 0.0
  %729 = vmatprep.subr.mxu0 0.0
  %730 = vmatpush2.msra.mxu0 0.0
  %731 = vmatprep.subr.mxu0 0.0
  %732 = vmatpush2.msra.mxu0 0.0
  %733 = vmatprep.subr.mxu0 0.0
  %734 = vmatpush2.msra.mxu0 0.0
  %735 = vmatprep.subr.mxu0 0.0
  %736 = vmatpush2.msra.mxu0 0.0
  %737 = vmatprep.subr.mxu0 0.0
  %738 = vmatpush2.msra.mxu0 0.0
  %739 = vmatprep.subr.mxu0 0.0
  %740 = vmatpush2.msra.mxu0 0.0
  %741 = vmatprep.subr.mxu0 0.0
  %742 = vmatpush2.msra.mxu0 0.0
  %743 = vmatprep.subr.mxu0 0.0
  %744 = vmatpush2.msra.mxu0 0.0
  %745 = vmatprep.subr.mxu0 0.0
  %746 = vmatpush2.msra.mxu0 0.0
  %747 = vmatprep.subr.mxu0 0.0
  %748 = vmatpush2.msra.mxu0 0.0
  %749 = vmatprep.subr.mxu0 0.0
  %750 = vmatpush2.msra.mxu0 0.0
  %751 = vmatprep.mubr.f32.mxu0 0.0
  %v752 = vand.u32 %v159, 4294901760
  %753 = vmatmul.mubr.f32.gmra.mxu0 %v752
  %v754 = vpop.f32.mrf.mxu0
  %v755 = vadd.f32 %v334, %v754
  %v756 = vpop.f32.mrf.mxu0
  %757 = vmatprep.mubr.f32.mxu0 0.0
  %v758 = vand.u32 %v162, 4294901760
  %759 = vmatmul.mubr.f32.gmra.mxu0 %v758
  %v760 = vpop.f32.mrf.mxu0
  %v761 = vadd.f32 %v344, %v760
  %v762 = vpop.f32.mrf.mxu0
  %763 = vmatprep.mubr.f32.mxu0 0.0
  %v764 = vand.u32 %v165, 4294901760
  %765 = vmatmul.mubr.f32.gmra.mxu0 %v764
  %v766 = vpop.f32.mrf.mxu0
  %v767 = vadd.f32 %v354, %v766
  %v768 = vpop.f32.mrf.mxu0
  %769 = vmatprep.mubr.f32.mxu0 0.0
  %v770 = vand.u32 %v168, 4294901760
  %771 = vmatmul.mubr.f32.gmra.mxu0 %v770
  %v772 = vpop.f32.mrf.mxu0
  %v773 = vadd.f32 %v364, %v772
  %v774 = vpop.f32.mrf.mxu0
  %775 = vmatprep.mubr.f32.mxu0 0.0
  %v776 = vand.u32 %v171, 4294901760
  %777 = vmatmul.mubr.f32.gmra.mxu0 %v776
  %v778 = vpop.f32.mrf.mxu0
  %v779 = vadd.f32 %v374, %v778
  %v780 = vpop.f32.mrf.mxu0
  %781 = vmatprep.mubr.f32.mxu0 0.0
  %v782 = vand.u32 %v174, 4294901760
  %783 = vmatmul.mubr.f32.gmra.mxu0 %v782
  %v784 = vpop.f32.mrf.mxu0
  %v785 = vadd.f32 %v384, %v784
  %v786 = vpop.f32.mrf.mxu0
  %787 = vmatprep.mubr.f32.mxu0 0.0
  %v788 = vand.u32 %v177, 4294901760
  %789 = vmatmul.mubr.f32.gmra.mxu0 %v788
  %v790 = vpop.f32.mrf.mxu0
  %v791 = vadd.f32 %v394, %v790
  %v792 = vpop.f32.mrf.mxu0
  %793 = vmatprep.mubr.f32.mxu0 0.0
  %v794 = vand.u32 %v180, 4294901760
  %795 = vmatmul.mubr.f32.gmra.mxu0 %v794
  %v796 = vpop.f32.mrf.mxu0
  %v797 = vadd.f32 %v404, %v796
  %v798 = vpop.f32.mrf.mxu0
  %799 = vmatprep.mubr.f32.mxu0 0.0
  %v800 = vand.u32 %v183, 4294901760
  %801 = vmatmul.mubr.f32.gmra.mxu0 %v800
  %v802 = vpop.f32.mrf.mxu0
  %v803 = vadd.f32 %v414, %v802
  %v804 = vpop.f32.mrf.mxu0
  %805 = vmatprep.mubr.f32.mxu0 0.0
  %v806 = vand.u32 %v186, 4294901760
  %807 = vmatmul.mubr.f32.gmra.mxu0 %v806
  %v808 = vpop.f32.mrf.mxu0
  %v809 = vadd.f32 %v424, %v808
  %v810 = vpop.f32.mrf.mxu0
  %811 = vmatprep.mubr.f32.mxu0 0.0
  %v812 = vand.u32 %v189, 4294901760
  %813 = vmatmul.mubr.f32.gmra.mxu0 %v812
  %v814 = vpop.f32.mrf.mxu0
  %v815 = vadd.f32 %v434, %v814
  %v816 = vpop.f32.mrf.mxu0
  %817 = vmatprep.mubr.f32.mxu0 0.0
  %v818 = vand.u32 %v192, 4294901760
  %819 = vmatmul.mubr.f32.gmra.mxu0 %v818
  %v820 = vpop.f32.mrf.mxu0
  %v821 = vadd.f32 %v444, %v820
  %v822 = vpop.f32.mrf.mxu0
  %823 = vmatprep.mubr.f32.mxu0 0.0
  %v824 = vand.u32 %v195, 4294901760
  %825 = vmatmul.mubr.f32.gmra.mxu0 %v824
  %v826 = vpop.f32.mrf.mxu0
  %v827 = vadd.f32 %v454, %v826
  %v828 = vpop.f32.mrf.mxu0
  %829 = vmatprep.mubr.f32.mxu0 0.0
  %v830 = vand.u32 %v198, 4294901760
  %831 = vmatmul.mubr.f32.gmra.mxu0 %v830
  %v832 = vpop.f32.mrf.mxu0
  %v833 = vadd.f32 %v464, %v832
  %v834 = vpop.f32.mrf.mxu0
  %835 = vmatprep.mubr.f32.mxu0 0.0
  %v836 = vand.u32 %v201, 4294901760
  %837 = vmatmul.mubr.f32.gmra.mxu0 %v836
  %v838 = vpop.f32.mrf.mxu0
  %v839 = vadd.f32 %v474, %v838
  %v840 = vpop.f32.mrf.mxu0
  %841 = vmatprep.mubr.f32.mxu0 0.0
  %v842 = vand.u32 %v204, 4294901760
  %843 = vmatmul.mubr.f32.gmra.mxu0 %v842
  %v844 = vpop.f32.mrf.mxu0
  %v845 = vadd.f32 %v484, %v844
  %v846 = vpop.f32.mrf.mxu0
  %847 = vmatprep.mubr.f32.mxu0 0.0
  %v848 = vand.u32 %v207, 4294901760
  %849 = vmatmul.mubr.f32.gmra.mxu0 %v848
  %v850 = vpop.f32.mrf.mxu0
  %v851 = vadd.f32 %v494, %v850
  %v852 = vpop.f32.mrf.mxu0
  %853 = vmatprep.mubr.f32.mxu0 0.0
  %v854 = vand.u32 %v210, 4294901760
  %855 = vmatmul.mubr.f32.gmra.mxu0 %v854
  %v856 = vpop.f32.mrf.mxu0
  %v857 = vadd.f32 %v504, %v856
  %v858 = vpop.f32.mrf.mxu0
  %859 = vmatprep.mubr.f32.mxu0 0.0
  %v860 = vand.u32 %v213, 4294901760
  %861 = vmatmul.mubr.f32.gmra.mxu0 %v860
  %v862 = vpop.f32.mrf.mxu0
  %v863 = vadd.f32 %v514, %v862
  %v864 = vpop.f32.mrf.mxu0
  %865 = vmatprep.mubr.f32.mxu0 0.0
  %v866 = vand.u32 %v216, 4294901760
  %867 = vmatmul.mubr.f32.gmra.mxu0 %v866
  %v868 = vpop.f32.mrf.mxu0
  %v869 = vadd.f32 %v524, %v868
  %v870 = vpop.f32.mrf.mxu0
  %871 = vmatprep.mubr.f32.mxu0 0.0
  %v872 = vand.u32 %v219, 4294901760
  %873 = vmatmul.mubr.f32.gmra.mxu0 %v872
  %v874 = vpop.f32.mrf.mxu0
  %v875 = vadd.f32 %v534, %v874
  %v876 = vpop.f32.mrf.mxu0
  %877 = vmatprep.mubr.f32.mxu0 0.0
  %v878 = vand.u32 %v222, 4294901760
  %879 = vmatmul.mubr.f32.gmra.mxu0 %v878
  %v880 = vpop.f32.mrf.mxu0
  %v881 = vadd.f32 %v544, %v880
  %v882 = vpop.f32.mrf.mxu0
  %883 = vmatprep.mubr.f32.mxu0 0.0
  %v884 = vand.u32 %v225, 4294901760
  %885 = vmatmul.mubr.f32.gmra.mxu0 %v884
  %v886 = vpop.f32.mrf.mxu0
  %v887 = vadd.f32 %v554, %v886
  %v888 = vpop.f32.mrf.mxu0
  %889 = vmatprep.mubr.f32.mxu0 0.0
  %v890 = vand.u32 %v228, 4294901760
  %891 = vmatmul.mubr.f32.gmra.mxu0 %v890
  %v892 = vpop.f32.mrf.mxu0
  %v893 = vadd.f32 %v564, %v892
  %v894 = vpop.f32.mrf.mxu0
  %895 = vmatprep.mubr.f32.mxu0 0.0
  %v896 = vand.u32 %v231, 4294901760
  %897 = vmatmul.mubr.f32.gmra.mxu0 %v896
  %v898 = vpop.f32.mrf.mxu0
  %v899 = vadd.f32 %v574, %v898
  %v900 = vpop.f32.mrf.mxu0
  %901 = vmatprep.mubr.f32.mxu0 0.0
  %v902 = vand.u32 %v234, 4294901760
  %903 = vmatmul.mubr.f32.gmra.mxu0 %v902
  %v904 = vpop.f32.mrf.mxu0
  %v905 = vadd.f32 %v584, %v904
  %v906 = vpop.f32.mrf.mxu0
  %907 = vmatprep.mubr.f32.mxu0 0.0
  %v908 = vand.u32 %v237, 4294901760
  %909 = vmatmul.mubr.f32.gmra.mxu0 %v908
  %v910 = vpop.f32.mrf.mxu0
  %v911 = vadd.f32 %v594, %v910
  %v912 = vpop.f32.mrf.mxu0
  %913 = vmatprep.mubr.f32.mxu0 0.0
  %v914 = vand.u32 %v240, 4294901760
  %915 = vmatmul.mubr.f32.gmra.mxu0 %v914
  %v916 = vpop.f32.mrf.mxu0
  %v917 = vadd.f32 %v604, %v916
  %v918 = vpop.f32.mrf.mxu0
  %919 = vmatprep.mubr.f32.mxu0 0.0
  %v920 = vand.u32 %v243, 4294901760
  %921 = vmatmul.mubr.f32.gmra.mxu0 %v920
  %v922 = vpop.f32.mrf.mxu0
  %v923 = vadd.f32 %v614, %v922
  %v924 = vpop.f32.mrf.mxu0
  %925 = vmatprep.mubr.f32.mxu0 0.0
  %v926 = vand.u32 %v246, 4294901760
  %927 = vmatmul.mubr.f32.gmra.mxu0 %v926
  %v928 = vpop.f32.mrf.mxu0
  %v929 = vadd.f32 %v624, %v928
  %v930 = vpop.f32.mrf.mxu0
  %931 = vmatprep.mubr.f32.mxu0 0.0
  %v932 = vand.u32 %v249, 4294901760
  %933 = vmatmul.mubr.f32.gmra.mxu0 %v932
  %v934 = vpop.f32.mrf.mxu0
  %v935 = vadd.f32 %v634, %v934
  %v936 = vpop.f32.mrf.mxu0
  %937 = vmatprep.mubr.f32.mxu0 0.0
  %v938 = vand.u32 %v252, 4294901760
  %939 = vmatmul.mubr.f32.gmra.mxu0 %v938
  %v940 = vpop.f32.mrf.mxu0
  %v941 = vadd.f32 %v644, %v940
  %v942 = vpop.f32.mrf.mxu0
  %943 = vdwg.mxu0
  %944 = vmatprep.subr.mxu0 0.0
  %945 = vmatpush1.msra.mxu0 0.0
  %946 = vmatprep.subr.mxu0 0.0
  %947 = vmatpush1.msra.mxu0 0.0
  %948 = vmatprep.subr.mxu0 0.0
  %949 = vmatpush1.msra.mxu0 0.0
  %950 = vmatprep.subr.mxu0 0.0
  %951 = vmatpush1.msra.mxu0 0.0
  %952 = vmatprep.subr.mxu0 0.0
  %953 = vmatpush1.msra.mxu0 0.0
  %954 = vmatprep.subr.mxu0 0.0
  %955 = vmatpush1.msra.mxu0 0.0
  %956 = vmatprep.subr.mxu0 0.0
  %957 = vmatpush1.msra.mxu0 0.0
  %958 = vmatprep.subr.mxu0 0.0
  %959 = vmatpush1.msra.mxu0 0.0
  %960 = vmatprep.subr.mxu0 0.0
  %v961 = vand.u32 %v156, 4294901760
  %v962 = vsub.f32 %v156, %v961
  %963 = vmatpush1.msra.mxu0 %v962
  %964 = vmatprep.subr.mxu0 0.0
  %v965 = vand.u32 %v155, 4294901760
  %v966 = vsub.f32 %v155, %v965
  %967 = vmatpush1.msra.mxu0 %v966
  %968 = vmatprep.subr.mxu0 0.0
  %v969 = vand.u32 %v154, 4294901760
  %v970 = vsub.f32 %v154, %v969
  %971 = vmatpush1.msra.mxu0 %v970
  %972 = vmatprep.subr.mxu0 0.0
  %v973 = vand.u32 %v153, 4294901760
  %v974 = vsub.f32 %v153, %v973
  %975 = vmatpush1.msra.mxu0 %v974
  %976 = vmatprep.subr.mxu0 0.0
  %v977 = vand.u32 %v152, 4294901760
  %v978 = vsub.f32 %v152, %v977
  %979 = vmatpush1.msra.mxu0 %v978
  %980 = vmatprep.subr.mxu0 0.0
  %v981 = vand.u32 %v151, 4294901760
  %v982 = vsub.f32 %v151, %v981
  %983 = vmatpush1.msra.mxu0 %v982
  %984 = vmatprep.subr.mxu0 0.0
  %v985 = vand.u32 %v150, 4294901760
  %v986 = vsub.f32 %v150, %v985
  %987 = vmatpush1.msra.mxu0 %v986
  %988 = vmatprep.subr.mxu0 0.0
  %v989 = vand.u32 %v149, 4294901760
  %v990 = vsub.f32 %v149, %v989
  %991 = vmatpush1.msra.mxu0 %v990
  %992 = vmatprep.subr.mxu0 0.0
  %993 = vmatpush2.msra.mxu0 0.0
  %994 = vmatprep.subr.mxu0 0.0
  %995 = vmatpush2.msra.mxu0 0.0
  %996 = vmatprep.subr.mxu0 0.0
  %997 = vmatpush2.msra.mxu0 0.0
  %998 = vmatprep.subr.mxu0 0.0
  %999 = vmatpush2.msra.mxu0 0.0
  %1000 = vmatprep.subr.mxu0 0.0
  %1001 = vmatpush2.msra.mxu0 0.0
  %1002 = vmatprep.subr.mxu0 0.0
  %1003 = vmatpush2.msra.mxu0 0.0
  %1004 = vmatprep.subr.mxu0 0.0
  %1005 = vmatpush2.msra.mxu0 0.0
  %1006 = vmatprep.subr.mxu0 0.0
  %1007 = vmatpush2.msra.mxu0 0.0
  %1008 = vmatprep.subr.mxu0 0.0
  %1009 = vmatpush2.msra.mxu0 0.0
  %1010 = vmatprep.subr.mxu0 0.0
  %1011 = vmatpush2.msra.mxu0 0.0
  %1012 = vmatprep.subr.mxu0 0.0
  %1013 = vmatpush2.msra.mxu0 0.0
  %1014 = vmatprep.subr.mxu0 0.0
  %1015 = vmatpush2.msra.mxu0 0.0
  %1016 = vmatprep.subr.mxu0 0.0
  %1017 = vmatpush2.msra.mxu0 0.0
  %1018 = vmatprep.subr.mxu0 0.0
  %1019 = vmatpush2.msra.mxu0 0.0
  %1020 = vmatprep.subr.mxu0 0.0
  %1021 = vmatpush2.msra.mxu0 0.0
  %1022 = vmatprep.subr.mxu0 0.0
  %1023 = vmatpush2.msra.mxu0 0.0
  %1024 = vmatprep.mubr.f32.mxu0 0.0
  %v1025 = vand.u32 %v159, 4294901760
  %v1026 = vsub.f32 %v159, %v1025
  %1027 = vmatmul.mubr.f32.gmra.mxu0 %v1026
  %v1028 = vpop.f32.mrf.mxu0
  %v1029 = vadd.f32 %v755, %v1028
  %v1030 = vpop.f32.mrf.mxu0
  %1031 = vmatprep.mubr.f32.mxu0 0.0
  %v1032 = vand.u32 %v162, 4294901760
  %v1033 = vsub.f32 %v162, %v1032
  %1034 = vmatmul.mubr.f32.gmra.mxu0 %v1033
  %v1035 = vpop.f32.mrf.mxu0
  %v1036 = vadd.f32 %v761, %v1035
  %v1037 = vpop.f32.mrf.mxu0
  %1038 = vmatprep.mubr.f32.mxu0 0.0
  %v1039 = vand.u32 %v165, 4294901760
  %v1040 = vsub.f32 %v165, %v1039
  %1041 = vmatmul.mubr.f32.gmra.mxu0 %v1040
  %v1042 = vpop.f32.mrf.mxu0
  %v1043 = vadd.f32 %v767, %v1042
  %v1044 = vpop.f32.mrf.mxu0
  %1045 = vmatprep.mubr.f32.mxu0 0.0
  %v1046 = vand.u32 %v168, 4294901760
  %v1047 = vsub.f32 %v168, %v1046
  %1048 = vmatmul.mubr.f32.gmra.mxu0 %v1047
  %v1049 = vpop.f32.mrf.mxu0
  %v1050 = vadd.f32 %v773, %v1049
  %v1051 = vpop.f32.mrf.mxu0
  %1052 = vmatprep.mubr.f32.mxu0 0.0
  %v1053 = vand.u32 %v171, 4294901760
  %v1054 = vsub.f32 %v171, %v1053
  %1055 = vmatmul.mubr.f32.gmra.mxu0 %v1054
  %v1056 = vpop.f32.mrf.mxu0
  %v1057 = vadd.f32 %v779, %v1056
  %v1058 = vpop.f32.mrf.mxu0
  %1059 = vmatprep.mubr.f32.mxu0 0.0
  %v1060 = vand.u32 %v174, 4294901760
  %v1061 = vsub.f32 %v174, %v1060
  %1062 = vmatmul.mubr.f32.gmra.mxu0 %v1061
  %v1063 = vpop.f32.mrf.mxu0
  %v1064 = vadd.f32 %v785, %v1063
  %v1065 = vpop.f32.mrf.mxu0
  %1066 = vmatprep.mubr.f32.mxu0 0.0
  %v1067 = vand.u32 %v177, 4294901760
  %v1068 = vsub.f32 %v177, %v1067
  %1069 = vmatmul.mubr.f32.gmra.mxu0 %v1068
  %v1070 = vpop.f32.mrf.mxu0
  %v1071 = vadd.f32 %v791, %v1070
  %v1072 = vpop.f32.mrf.mxu0
  %1073 = vmatprep.mubr.f32.mxu0 0.0
  %v1074 = vand.u32 %v180, 4294901760
  %v1075 = vsub.f32 %v180, %v1074
  %1076 = vmatmul.mubr.f32.gmra.mxu0 %v1075
  %v1077 = vpop.f32.mrf.mxu0
  %v1078 = vadd.f32 %v797, %v1077
  %v1079 = vpop.f32.mrf.mxu0
  %1080 = vmatprep.mubr.f32.mxu0 0.0
  %v1081 = vand.u32 %v183, 4294901760
  %v1082 = vsub.f32 %v183, %v1081
  %1083 = vmatmul.mubr.f32.gmra.mxu0 %v1082
  %v1084 = vpop.f32.mrf.mxu0
  %v1085 = vadd.f32 %v803, %v1084
  %v1086 = vpop.f32.mrf.mxu0
  %1087 = vmatprep.mubr.f32.mxu0 0.0
  %v1088 = vand.u32 %v186, 4294901760
  %v1089 = vsub.f32 %v186, %v1088
  %1090 = vmatmul.mubr.f32.gmra.mxu0 %v1089
  %v1091 = vpop.f32.mrf.mxu0
  %v1092 = vadd.f32 %v809, %v1091
  %v1093 = vpop.f32.mrf.mxu0
  %1094 = vmatprep.mubr.f32.mxu0 0.0
  %v1095 = vand.u32 %v189, 4294901760
  %v1096 = vsub.f32 %v189, %v1095
  %1097 = vmatmul.mubr.f32.gmra.mxu0 %v1096
  %v1098 = vpop.f32.mrf.mxu0
  %v1099 = vadd.f32 %v815, %v1098
  %v1100 = vpop.f32.mrf.mxu0
  %1101 = vmatprep.mubr.f32.mxu0 0.0
  %v1102 = vand.u32 %v192, 4294901760
  %v1103 = vsub.f32 %v192, %v1102
  %1104 = vmatmul.mubr.f32.gmra.mxu0 %v1103
  %v1105 = vpop.f32.mrf.mxu0
  %v1106 = vadd.f32 %v821, %v1105
  %v1107 = vpop.f32.mrf.mxu0
  %1108 = vmatprep.mubr.f32.mxu0 0.0
  %v1109 = vand.u32 %v195, 4294901760
  %v1110 = vsub.f32 %v195, %v1109
  %1111 = vmatmul.mubr.f32.gmra.mxu0 %v1110
  %v1112 = vpop.f32.mrf.mxu0
  %v1113 = vadd.f32 %v827, %v1112
  %v1114 = vpop.f32.mrf.mxu0
  %1115 = vmatprep.mubr.f32.mxu0 0.0
  %v1116 = vand.u32 %v198, 4294901760
  %v1117 = vsub.f32 %v198, %v1116
  %1118 = vmatmul.mubr.f32.gmra.mxu0 %v1117
  %v1119 = vpop.f32.mrf.mxu0
  %v1120 = vadd.f32 %v833, %v1119
  %v1121 = vpop.f32.mrf.mxu0
  %1122 = vmatprep.mubr.f32.mxu0 0.0
  %v1123 = vand.u32 %v201, 4294901760
  %v1124 = vsub.f32 %v201, %v1123
  %1125 = vmatmul.mubr.f32.gmra.mxu0 %v1124
  %v1126 = vpop.f32.mrf.mxu0
  %v1127 = vadd.f32 %v839, %v1126
  %v1128 = vpop.f32.mrf.mxu0
  %1129 = vmatprep.mubr.f32.mxu0 0.0
  %v1130 = vand.u32 %v204, 4294901760
  %v1131 = vsub.f32 %v204, %v1130
  %1132 = vmatmul.mubr.f32.gmra.mxu0 %v1131
  %v1133 = vpop.f32.mrf.mxu0
  %v1134 = vadd.f32 %v845, %v1133
  %v1135 = vpop.f32.mrf.mxu0
  %1136 = vmatprep.mubr.f32.mxu0 0.0
  %v1137 = vand.u32 %v207, 4294901760
  %v1138 = vsub.f32 %v207, %v1137
  %1139 = vmatmul.mubr.f32.gmra.mxu0 %v1138
  %v1140 = vpop.f32.mrf.mxu0
  %v1141 = vadd.f32 %v851, %v1140
  %v1142 = vpop.f32.mrf.mxu0
  %1143 = vmatprep.mubr.f32.mxu0 0.0
  %v1144 = vand.u32 %v210, 4294901760
  %v1145 = vsub.f32 %v210, %v1144
  %1146 = vmatmul.mubr.f32.gmra.mxu0 %v1145
  %v1147 = vpop.f32.mrf.mxu0
  %v1148 = vadd.f32 %v857, %v1147
  %v1149 = vpop.f32.mrf.mxu0
  %1150 = vmatprep.mubr.f32.mxu0 0.0
  %v1151 = vand.u32 %v213, 4294901760
  %v1152 = vsub.f32 %v213, %v1151
  %1153 = vmatmul.mubr.f32.gmra.mxu0 %v1152
  %v1154 = vpop.f32.mrf.mxu0
  %v1155 = vadd.f32 %v863, %v1154
  %v1156 = vpop.f32.mrf.mxu0
  %1157 = vmatprep.mubr.f32.mxu0 0.0
  %v1158 = vand.u32 %v216, 4294901760
  %v1159 = vsub.f32 %v216, %v1158
  %1160 = vmatmul.mubr.f32.gmra.mxu0 %v1159
  %v1161 = vpop.f32.mrf.mxu0
  %v1162 = vadd.f32 %v869, %v1161
  %v1163 = vpop.f32.mrf.mxu0
  %1164 = vmatprep.mubr.f32.mxu0 0.0
  %v1165 = vand.u32 %v219, 4294901760
  %v1166 = vsub.f32 %v219, %v1165
  %1167 = vmatmul.mubr.f32.gmra.mxu0 %v1166
  %v1168 = vpop.f32.mrf.mxu0
  %v1169 = vadd.f32 %v875, %v1168
  %v1170 = vpop.f32.mrf.mxu0
  %1171 = vmatprep.mubr.f32.mxu0 0.0
  %v1172 = vand.u32 %v222, 4294901760
  %v1173 = vsub.f32 %v222, %v1172
  %1174 = vmatmul.mubr.f32.gmra.mxu0 %v1173
  %v1175 = vpop.f32.mrf.mxu0
  %v1176 = vadd.f32 %v881, %v1175
  %v1177 = vpop.f32.mrf.mxu0
  %1178 = vmatprep.mubr.f32.mxu0 0.0
  %v1179 = vand.u32 %v225, 4294901760
  %v1180 = vsub.f32 %v225, %v1179
  %1181 = vmatmul.mubr.f32.gmra.mxu0 %v1180
  %v1182 = vpop.f32.mrf.mxu0
  %v1183 = vadd.f32 %v887, %v1182
  %v1184 = vpop.f32.mrf.mxu0
  %1185 = vmatprep.mubr.f32.mxu0 0.0
  %v1186 = vand.u32 %v228, 4294901760
  %v1187 = vsub.f32 %v228, %v1186
  %1188 = vmatmul.mubr.f32.gmra.mxu0 %v1187
  %v1189 = vpop.f32.mrf.mxu0
  %v1190 = vadd.f32 %v893, %v1189
  %v1191 = vpop.f32.mrf.mxu0
  %1192 = vmatprep.mubr.f32.mxu0 0.0
  %v1193 = vand.u32 %v231, 4294901760
  %v1194 = vsub.f32 %v231, %v1193
  %1195 = vmatmul.mubr.f32.gmra.mxu0 %v1194
  %v1196 = vpop.f32.mrf.mxu0
  %v1197 = vadd.f32 %v899, %v1196
  %v1198 = vpop.f32.mrf.mxu0
  %1199 = vmatprep.mubr.f32.mxu0 0.0
  %v1200 = vand.u32 %v234, 4294901760
  %v1201 = vsub.f32 %v234, %v1200
  %1202 = vmatmul.mubr.f32.gmra.mxu0 %v1201
  %v1203 = vpop.f32.mrf.mxu0
  %v1204 = vadd.f32 %v905, %v1203
  %v1205 = vpop.f32.mrf.mxu0
  %1206 = vmatprep.mubr.f32.mxu0 0.0
  %v1207 = vand.u32 %v237, 4294901760
  %v1208 = vsub.f32 %v237, %v1207
  %1209 = vmatmul.mubr.f32.gmra.mxu0 %v1208
  %v1210 = vpop.f32.mrf.mxu0
  %v1211 = vadd.f32 %v911, %v1210
  %v1212 = vpop.f32.mrf.mxu0
  %1213 = vmatprep.mubr.f32.mxu0 0.0
  %v1214 = vand.u32 %v240, 4294901760
  %v1215 = vsub.f32 %v240, %v1214
  %1216 = vmatmul.mubr.f32.gmra.mxu0 %v1215
  %v1217 = vpop.f32.mrf.mxu0
  %v1218 = vadd.f32 %v917, %v1217
  %v1219 = vpop.f32.mrf.mxu0
  %1220 = vmatprep.mubr.f32.mxu0 0.0
  %v1221 = vand.u32 %v243, 4294901760
  %v1222 = vsub.f32 %v243, %v1221
  %1223 = vmatmul.mubr.f32.gmra.mxu0 %v1222
  %v1224 = vpop.f32.mrf.mxu0
  %v1225 = vadd.f32 %v923, %v1224
  %v1226 = vpop.f32.mrf.mxu0
  %1227 = vmatprep.mubr.f32.mxu0 0.0
  %v1228 = vand.u32 %v246, 4294901760
  %v1229 = vsub.f32 %v246, %v1228
  %1230 = vmatmul.mubr.f32.gmra.mxu0 %v1229
  %v1231 = vpop.f32.mrf.mxu0
  %v1232 = vadd.f32 %v929, %v1231
  %v1233 = vpop.f32.mrf.mxu0
  %1234 = vmatprep.mubr.f32.mxu0 0.0
  %v1235 = vand.u32 %v249, 4294901760
  %v1236 = vsub.f32 %v249, %v1235
  %1237 = vmatmul.mubr.f32.gmra.mxu0 %v1236
  %v1238 = vpop.f32.mrf.mxu0
  %v1239 = vadd.f32 %v935, %v1238
  %v1240 = vpop.f32.mrf.mxu0
  %1241 = vmatprep.mubr.f32.mxu0 0.0
  %v1242 = vand.u32 %v252, 4294901760
  %v1243 = vsub.f32 %v252, %v1242
  %1244 = vmatmul.mubr.f32.gmra.mxu0 %v1243
  %v1245 = vpop.f32.mrf.mxu0
  %v1246 = vadd.f32 %v941, %v1245
  %v1247 = vpop.f32.mrf.mxu0
  %1248 = vdwg.mxu0
  %1249 = vmatprep.subr.mxu0 0.0
  %1250 = vmatpush1.msra.mxu0 0.0
  %1251 = vmatprep.subr.mxu0 0.0
  %1252 = vmatpush1.msra.mxu0 0.0
  %1253 = vmatprep.subr.mxu0 0.0
  %1254 = vmatpush1.msra.mxu0 0.0
  %1255 = vmatprep.subr.mxu0 0.0
  %1256 = vmatpush1.msra.mxu0 0.0
  %1257 = vmatprep.subr.mxu0 0.0
  %1258 = vmatpush1.msra.mxu0 0.0
  %1259 = vmatprep.subr.mxu0 0.0
  %1260 = vmatpush1.msra.mxu0 0.0
  %1261 = vmatprep.subr.mxu0 0.0
  %1262 = vmatpush1.msra.mxu0 0.0
  %1263 = vmatprep.subr.mxu0 0.0
  %1264 = vmatpush1.msra.mxu0 0.0
  %1265 = vmatprep.subr.mxu0 0.0
  %v1266 = vand.u32 %v156, 4294901760
  %1267 = vmatpush1.msra.mxu0 %v1266
  %1268 = vmatprep.subr.mxu0 0.0
  %v1269 = vand.u32 %v155, 4294901760
  %1270 = vmatpush1.msra.mxu0 %v1269
  %1271 = vmatprep.subr.mxu0 0.0
  %v1272 = vand.u32 %v154, 4294901760
  %1273 = vmatpush1.msra.mxu0 %v1272
  %1274 = vmatprep.subr.mxu0 0.0
  %v1275 = vand.u32 %v153, 4294901760
  %1276 = vmatpush1.msra.mxu0 %v1275
  %1277 = vmatprep.subr.mxu0 0.0
  %v1278 = vand.u32 %v152, 4294901760
  %1279 = vmatpush1.msra.mxu0 %v1278
  %1280 = vmatprep.subr.mxu0 0.0
  %v1281 = vand.u32 %v151, 4294901760
  %1282 = vmatpush1.msra.mxu0 %v1281
  %1283 = vmatprep.subr.mxu0 0.0
  %v1284 = vand.u32 %v150, 4294901760
  %1285 = vmatpush1.msra.mxu0 %v1284
  %1286 = vmatprep.subr.mxu0 0.0
  %v1287 = vand.u32 %v149, 4294901760
  %1288 = vmatpush1.msra.mxu0 %v1287
  %1289 = vmatprep.subr.mxu0 0.0
  %1290 = vmatpush2.msra.mxu0 0.0
  %1291 = vmatprep.subr.mxu0 0.0
  %1292 = vmatpush2.msra.mxu0 0.0
  %1293 = vmatprep.subr.mxu0 0.0
  %1294 = vmatpush2.msra.mxu0 0.0
  %1295 = vmatprep.subr.mxu0 0.0
  %1296 = vmatpush2.msra.mxu0 0.0
  %1297 = vmatprep.subr.mxu0 0.0
  %1298 = vmatpush2.msra.mxu0 0.0
  %1299 = vmatprep.subr.mxu0 0.0
  %1300 = vmatpush2.msra.mxu0 0.0
  %1301 = vmatprep.subr.mxu0 0.0
  %1302 = vmatpush2.msra.mxu0 0.0
  %1303 = vmatprep.subr.mxu0 0.0
  %1304 = vmatpush2.msra.mxu0 0.0
  %1305 = vmatprep.subr.mxu0 0.0
  %1306 = vmatpush2.msra.mxu0 0.0
  %1307 = vmatprep.subr.mxu0 0.0
  %1308 = vmatpush2.msra.mxu0 0.0
  %1309 = vmatprep.subr.mxu0 0.0
  %1310 = vmatpush2.msra.mxu0 0.0
  %1311 = vmatprep.subr.mxu0 0.0
  %1312 = vmatpush2.msra.mxu0 0.0
  %1313 = vmatprep.subr.mxu0 0.0
  %1314 = vmatpush2.msra.mxu0 0.0
  %1315 = vmatprep.subr.mxu0 0.0
  %1316 = vmatpush2.msra.mxu0 0.0
  %1317 = vmatprep.subr.mxu0 0.0
  %1318 = vmatpush2.msra.mxu0 0.0
  %1319 = vmatprep.subr.mxu0 0.0
  %1320 = vmatpush2.msra.mxu0 0.0
  %1321 = vmatprep.mubr.f32.mxu0 0.0
  %v1322 = vand.u32 %v159, 4294901760
  %v1323 = vsub.f32 %v159, %v1322
  %v1324 = vand.u32 %v1323, 4294901760
  %1325 = vmatmul.mubr.f32.gmra.mxu0 %v1324
  %v1326 = vpop.f32.mrf.mxu0
  %v1327 = vadd.f32 %v1029, %v1326
  %v1328 = vpop.f32.mrf.mxu0
  %1329 = vmatprep.mubr.f32.mxu0 0.0
  %v1330 = vand.u32 %v162, 4294901760
  %v1331 = vsub.f32 %v162, %v1330
  %v1332 = vand.u32 %v1331, 4294901760
  %1333 = vmatmul.mubr.f32.gmra.mxu0 %v1332
  %v1334 = vpop.f32.mrf.mxu0
  %v1335 = vadd.f32 %v1036, %v1334
  %v1336 = vpop.f32.mrf.mxu0
  %1337 = vmatprep.mubr.f32.mxu0 0.0
  %v1338 = vand.u32 %v165, 4294901760
  %v1339 = vsub.f32 %v165, %v1338
  %v1340 = vand.u32 %v1339, 4294901760
  %1341 = vmatmul.mubr.f32.gmra.mxu0 %v1340
  %v1342 = vpop.f32.mrf.mxu0
  %v1343 = vadd.f32 %v1043, %v1342
  %v1344 = vpop.f32.mrf.mxu0
  %1345 = vmatprep.mubr.f32.mxu0 0.0
  %v1346 = vand.u32 %v168, 4294901760
  %v1347 = vsub.f32 %v168, %v1346
  %v1348 = vand.u32 %v1347, 4294901760
  %1349 = vmatmul.mubr.f32.gmra.mxu0 %v1348
  %v1350 = vpop.f32.mrf.mxu0
  %v1351 = vadd.f32 %v1050, %v1350
  %v1352 = vpop.f32.mrf.mxu0
  %1353 = vmatprep.mubr.f32.mxu0 0.0
  %v1354 = vand.u32 %v171, 4294901760
  %v1355 = vsub.f32 %v171, %v1354
  %v1356 = vand.u32 %v1355, 4294901760
  %1357 = vmatmul.mubr.f32.gmra.mxu0 %v1356
  %v1358 = vpop.f32.mrf.mxu0
  %v1359 = vadd.f32 %v1057, %v1358
  %v1360 = vpop.f32.mrf.mxu0
  %1361 = vmatprep.mubr.f32.mxu0 0.0
  %v1362 = vand.u32 %v174, 4294901760
  %v1363 = vsub.f32 %v174, %v1362
  %v1364 = vand.u32 %v1363, 4294901760
  %1365 = vmatmul.mubr.f32.gmra.mxu0 %v1364
  %v1366 = vpop.f32.mrf.mxu0
  %v1367 = vadd.f32 %v1064, %v1366
  %v1368 = vpop.f32.mrf.mxu0
  %1369 = vmatprep.mubr.f32.mxu0 0.0
  %v1370 = vand.u32 %v177, 4294901760
  %v1371 = vsub.f32 %v177, %v1370
  %v1372 = vand.u32 %v1371, 4294901760
  %1373 = vmatmul.mubr.f32.gmra.mxu0 %v1372
  %v1374 = vpop.f32.mrf.mxu0
  %v1375 = vadd.f32 %v1071, %v1374
  %v1376 = vpop.f32.mrf.mxu0
  %1377 = vmatprep.mubr.f32.mxu0 0.0
  %v1378 = vand.u32 %v180, 4294901760
  %v1379 = vsub.f32 %v180, %v1378
  %v1380 = vand.u32 %v1379, 4294901760
  %1381 = vmatmul.mubr.f32.gmra.mxu0 %v1380
  %v1382 = vpop.f32.mrf.mxu0
  %v1383 = vadd.f32 %v1078, %v1382
  %v1384 = vpop.f32.mrf.mxu0
  %1385 = vmatprep.mubr.f32.mxu0 0.0
  %v1386 = vand.u32 %v183, 4294901760
  %v1387 = vsub.f32 %v183, %v1386
  %v1388 = vand.u32 %v1387, 4294901760
  %1389 = vmatmul.mubr.f32.gmra.mxu0 %v1388
  %v1390 = vpop.f32.mrf.mxu0
  %v1391 = vadd.f32 %v1085, %v1390
  %v1392 = vpop.f32.mrf.mxu0
  %1393 = vmatprep.mubr.f32.mxu0 0.0
  %v1394 = vand.u32 %v186, 4294901760
  %v1395 = vsub.f32 %v186, %v1394
  %v1396 = vand.u32 %v1395, 4294901760
  %1397 = vmatmul.mubr.f32.gmra.mxu0 %v1396
  %v1398 = vpop.f32.mrf.mxu0
  %v1399 = vadd.f32 %v1092, %v1398
  %v1400 = vpop.f32.mrf.mxu0
  %1401 = vmatprep.mubr.f32.mxu0 0.0
  %v1402 = vand.u32 %v189, 4294901760
  %v1403 = vsub.f32 %v189, %v1402
  %v1404 = vand.u32 %v1403, 4294901760
  %1405 = vmatmul.mubr.f32.gmra.mxu0 %v1404
  %v1406 = vpop.f32.mrf.mxu0
  %v1407 = vadd.f32 %v1099, %v1406
  %v1408 = vpop.f32.mrf.mxu0
  %1409 = vmatprep.mubr.f32.mxu0 0.0
  %v1410 = vand.u32 %v192, 4294901760
  %v1411 = vsub.f32 %v192, %v1410
  %v1412 = vand.u32 %v1411, 4294901760
  %1413 = vmatmul.mubr.f32.gmra.mxu0 %v1412
  %v1414 = vpop.f32.mrf.mxu0
  %v1415 = vadd.f32 %v1106, %v1414
  %v1416 = vpop.f32.mrf.mxu0
  %1417 = vmatprep.mubr.f32.mxu0 0.0
  %v1418 = vand.u32 %v195, 4294901760
  %v1419 = vsub.f32 %v195, %v1418
  %v1420 = vand.u32 %v1419, 4294901760
  %1421 = vmatmul.mubr.f32.gmra.mxu0 %v1420
  %v1422 = vpop.f32.mrf.mxu0
  %v1423 = vadd.f32 %v1113, %v1422
  %v1424 = vpop.f32.mrf.mxu0
  %1425 = vmatprep.mubr.f32.mxu0 0.0
  %v1426 = vand.u32 %v198, 4294901760
  %v1427 = vsub.f32 %v198, %v1426
  %v1428 = vand.u32 %v1427, 4294901760
  %1429 = vmatmul.mubr.f32.gmra.mxu0 %v1428
  %v1430 = vpop.f32.mrf.mxu0
  %v1431 = vadd.f32 %v1120, %v1430
  %v1432 = vpop.f32.mrf.mxu0
  %1433 = vmatprep.mubr.f32.mxu0 0.0
  %v1434 = vand.u32 %v201, 4294901760
  %v1435 = vsub.f32 %v201, %v1434
  %v1436 = vand.u32 %v1435, 4294901760
  %1437 = vmatmul.mubr.f32.gmra.mxu0 %v1436
  %v1438 = vpop.f32.mrf.mxu0
  %v1439 = vadd.f32 %v1127, %v1438
  %v1440 = vpop.f32.mrf.mxu0
  %1441 = vmatprep.mubr.f32.mxu0 0.0
  %v1442 = vand.u32 %v204, 4294901760
  %v1443 = vsub.f32 %v204, %v1442
  %v1444 = vand.u32 %v1443, 4294901760
  %1445 = vmatmul.mubr.f32.gmra.mxu0 %v1444
  %v1446 = vpop.f32.mrf.mxu0
  %v1447 = vadd.f32 %v1134, %v1446
  %v1448 = vpop.f32.mrf.mxu0
  %1449 = vmatprep.mubr.f32.mxu0 0.0
  %v1450 = vand.u32 %v207, 4294901760
  %v1451 = vsub.f32 %v207, %v1450
  %v1452 = vand.u32 %v1451, 4294901760
  %1453 = vmatmul.mubr.f32.gmra.mxu0 %v1452
  %v1454 = vpop.f32.mrf.mxu0
  %v1455 = vadd.f32 %v1141, %v1454
  %v1456 = vpop.f32.mrf.mxu0
  %1457 = vmatprep.mubr.f32.mxu0 0.0
  %v1458 = vand.u32 %v210, 4294901760
  %v1459 = vsub.f32 %v210, %v1458
  %v1460 = vand.u32 %v1459, 4294901760
  %1461 = vmatmul.mubr.f32.gmra.mxu0 %v1460
  %v1462 = vpop.f32.mrf.mxu0
  %v1463 = vadd.f32 %v1148, %v1462
  %v1464 = vpop.f32.mrf.mxu0
  %1465 = vmatprep.mubr.f32.mxu0 0.0
  %v1466 = vand.u32 %v213, 4294901760
  %v1467 = vsub.f32 %v213, %v1466
  %v1468 = vand.u32 %v1467, 4294901760
  %1469 = vmatmul.mubr.f32.gmra.mxu0 %v1468
  %v1470 = vpop.f32.mrf.mxu0
  %v1471 = vadd.f32 %v1155, %v1470
  %v1472 = vpop.f32.mrf.mxu0
  %1473 = vmatprep.mubr.f32.mxu0 0.0
  %v1474 = vand.u32 %v216, 4294901760
  %v1475 = vsub.f32 %v216, %v1474
  %v1476 = vand.u32 %v1475, 4294901760
  %1477 = vmatmul.mubr.f32.gmra.mxu0 %v1476
  %v1478 = vpop.f32.mrf.mxu0
  %v1479 = vadd.f32 %v1162, %v1478
  %v1480 = vpop.f32.mrf.mxu0
  %1481 = vmatprep.mubr.f32.mxu0 0.0
  %v1482 = vand.u32 %v219, 4294901760
  %v1483 = vsub.f32 %v219, %v1482
  %v1484 = vand.u32 %v1483, 4294901760
  %1485 = vmatmul.mubr.f32.gmra.mxu0 %v1484
  %v1486 = vpop.f32.mrf.mxu0
  %v1487 = vadd.f32 %v1169, %v1486
  %v1488 = vpop.f32.mrf.mxu0
  %1489 = vmatprep.mubr.f32.mxu0 0.0
  %v1490 = vand.u32 %v222, 4294901760
  %v1491 = vsub.f32 %v222, %v1490
  %v1492 = vand.u32 %v1491, 4294901760
  %1493 = vmatmul.mubr.f32.gmra.mxu0 %v1492
  %v1494 = vpop.f32.mrf.mxu0
  %v1495 = vadd.f32 %v1176, %v1494
  %v1496 = vpop.f32.mrf.mxu0
  %1497 = vmatprep.mubr.f32.mxu0 0.0
  %v1498 = vand.u32 %v225, 4294901760
  %v1499 = vsub.f32 %v225, %v1498
  %v1500 = vand.u32 %v1499, 4294901760
  %1501 = vmatmul.mubr.f32.gmra.mxu0 %v1500
  %v1502 = vpop.f32.mrf.mxu0
  %v1503 = vadd.f32 %v1183, %v1502
  %v1504 = vpop.f32.mrf.mxu0
  %1505 = vmatprep.mubr.f32.mxu0 0.0
  %v1506 = vand.u32 %v228, 4294901760
  %v1507 = vsub.f32 %v228, %v1506
  %v1508 = vand.u32 %v1507, 4294901760
  %1509 = vmatmul.mubr.f32.gmra.mxu0 %v1508
  %v1510 = vpop.f32.mrf.mxu0
  %v1511 = vadd.f32 %v1190, %v1510
  %v1512 = vpop.f32.mrf.mxu0
  %1513 = vmatprep.mubr.f32.mxu0 0.0
  %v1514 = vand.u32 %v231, 4294901760
  %v1515 = vsub.f32 %v231, %v1514
  %v1516 = vand.u32 %v1515, 4294901760
  %1517 = vmatmul.mubr.f32.gmra.mxu0 %v1516
  %v1518 = vpop.f32.mrf.mxu0
  %v1519 = vadd.f32 %v1197, %v1518
  %v1520 = vpop.f32.mrf.mxu0
  %1521 = vmatprep.mubr.f32.mxu0 0.0
  %v1522 = vand.u32 %v234, 4294901760
  %v1523 = vsub.f32 %v234, %v1522
  %v1524 = vand.u32 %v1523, 4294901760
  %1525 = vmatmul.mubr.f32.gmra.mxu0 %v1524
  %v1526 = vpop.f32.mrf.mxu0
  %v1527 = vadd.f32 %v1204, %v1526
  %v1528 = vpop.f32.mrf.mxu0
  %1529 = vmatprep.mubr.f32.mxu0 0.0
  %v1530 = vand.u32 %v237, 4294901760
  %v1531 = vsub.f32 %v237, %v1530
  %v1532 = vand.u32 %v1531, 4294901760
  %1533 = vmatmul.mubr.f32.gmra.mxu0 %v1532
  %v1534 = vpop.f32.mrf.mxu0
  %v1535 = vadd.f32 %v1211, %v1534
  %v1536 = vpop.f32.mrf.mxu0
  %1537 = vmatprep.mubr.f32.mxu0 0.0
  %v1538 = vand.u32 %v240, 4294901760
  %v1539 = vsub.f32 %v240, %v1538
  %v1540 = vand.u32 %v1539, 4294901760
  %1541 = vmatmul.mubr.f32.gmra.mxu0 %v1540
  %v1542 = vpop.f32.mrf.mxu0
  %v1543 = vadd.f32 %v1218, %v1542
  %v1544 = vpop.f32.mrf.mxu0
  %1545 = vmatprep.mubr.f32.mxu0 0.0
  %v1546 = vand.u32 %v243, 4294901760
  %v1547 = vsub.f32 %v243, %v1546
  %v1548 = vand.u32 %v1547, 4294901760
  %1549 = vmatmul.mubr.f32.gmra.mxu0 %v1548
  %v1550 = vpop.f32.mrf.mxu0
  %v1551 = vadd.f32 %v1225, %v1550
  %v1552 = vpop.f32.mrf.mxu0
  %1553 = vmatprep.mubr.f32.mxu0 0.0
  %v1554 = vand.u32 %v246, 4294901760
  %v1555 = vsub.f32 %v246, %v1554
  %v1556 = vand.u32 %v1555, 4294901760
  %1557 = vmatmul.mubr.f32.gmra.mxu0 %v1556
  %v1558 = vpop.f32.mrf.mxu0
  %v1559 = vadd.f32 %v1232, %v1558
  %v1560 = vpop.f32.mrf.mxu0
  %1561 = vmatprep.mubr.f32.mxu0 0.0
  %v1562 = vand.u32 %v249, 4294901760
  %v1563 = vsub.f32 %v249, %v1562
  %v1564 = vand.u32 %v1563, 4294901760
  %1565 = vmatmul.mubr.f32.gmra.mxu0 %v1564
  %v1566 = vpop.f32.mrf.mxu0
  %v1567 = vadd.f32 %v1239, %v1566
  %v1568 = vpop.f32.mrf.mxu0
  %1569 = vmatprep.mubr.f32.mxu0 0.0
  %v1570 = vand.u32 %v252, 4294901760
  %v1571 = vsub.f32 %v252, %v1570
  %v1572 = vand.u32 %v1571, 4294901760
  %1573 = vmatmul.mubr.f32.gmra.mxu0 %v1572
  %v1574 = vpop.f32.mrf.mxu0
  %v1575 = vadd.f32 %v1246, %v1574
  %v1576 = vpop.f32.mrf.mxu0
  %1577 = vdwg.mxu0
  %1578 = vmatprep.subr.mxu0 0.0
  %1579 = vmatpush1.msra.mxu0 0.0
  %1580 = vmatprep.subr.mxu0 0.0
  %1581 = vmatpush1.msra.mxu0 0.0
  %1582 = vmatprep.subr.mxu0 0.0
  %1583 = vmatpush1.msra.mxu0 0.0
  %1584 = vmatprep.subr.mxu0 0.0
  %1585 = vmatpush1.msra.mxu0 0.0
  %1586 = vmatprep.subr.mxu0 0.0
  %1587 = vmatpush1.msra.mxu0 0.0
  %1588 = vmatprep.subr.mxu0 0.0
  %1589 = vmatpush1.msra.mxu0 0.0
  %1590 = vmatprep.subr.mxu0 0.0
  %1591 = vmatpush1.msra.mxu0 0.0
  %1592 = vmatprep.subr.mxu0 0.0
  %1593 = vmatpush1.msra.mxu0 0.0
  %1594 = vmatprep.subr.mxu0 0.0
  %v1595 = vand.u32 %v156, 4294901760
  %v1596 = vsub.f32 %v156, %v1595
  %v1597 = vand.u32 %v1596, 4294901760
  %1598 = vmatpush1.msra.mxu0 %v1597
  %1599 = vmatprep.subr.mxu0 0.0
  %v1600 = vand.u32 %v155, 4294901760
  %v1601 = vsub.f32 %v155, %v1600
  %v1602 = vand.u32 %v1601, 4294901760
  %1603 = vmatpush1.msra.mxu0 %v1602
  %1604 = vmatprep.subr.mxu0 0.0
  %v1605 = vand.u32 %v154, 4294901760
  %v1606 = vsub.f32 %v154, %v1605
  %v1607 = vand.u32 %v1606, 4294901760
  %1608 = vmatpush1.msra.mxu0 %v1607
  %1609 = vmatprep.subr.mxu0 0.0
  %v1610 = vand.u32 %v153, 4294901760
  %v1611 = vsub.f32 %v153, %v1610
  %v1612 = vand.u32 %v1611, 4294901760
  %1613 = vmatpush1.msra.mxu0 %v1612
  %1614 = vmatprep.subr.mxu0 0.0
  %v1615 = vand.u32 %v152, 4294901760
  %v1616 = vsub.f32 %v152, %v1615
  %v1617 = vand.u32 %v1616, 4294901760
  %1618 = vmatpush1.msra.mxu0 %v1617
  %1619 = vmatprep.subr.mxu0 0.0
  %v1620 = vand.u32 %v151, 4294901760
  %v1621 = vsub.f32 %v151, %v1620
  %v1622 = vand.u32 %v1621, 4294901760
  %1623 = vmatpush1.msra.mxu0 %v1622
  %1624 = vmatprep.subr.mxu0 0.0
  %v1625 = vand.u32 %v150, 4294901760
  %v1626 = vsub.f32 %v150, %v1625
  %v1627 = vand.u32 %v1626, 4294901760
  %1628 = vmatpush1.msra.mxu0 %v1627
  %1629 = vmatprep.subr.mxu0 0.0
  %v1630 = vand.u32 %v149, 4294901760
  %v1631 = vsub.f32 %v149, %v1630
  %v1632 = vand.u32 %v1631, 4294901760
  %1633 = vmatpush1.msra.mxu0 %v1632
  %1634 = vmatprep.subr.mxu0 0.0
  %1635 = vmatpush2.msra.mxu0 0.0
  %1636 = vmatprep.subr.mxu0 0.0
  %1637 = vmatpush2.msra.mxu0 0.0
  %1638 = vmatprep.subr.mxu0 0.0
  %1639 = vmatpush2.msra.mxu0 0.0
  %1640 = vmatprep.subr.mxu0 0.0
  %1641 = vmatpush2.msra.mxu0 0.0
  %1642 = vmatprep.subr.mxu0 0.0
  %1643 = vmatpush2.msra.mxu0 0.0
  %1644 = vmatprep.subr.mxu0 0.0
  %1645 = vmatpush2.msra.mxu0 0.0
  %1646 = vmatprep.subr.mxu0 0.0
  %1647 = vmatpush2.msra.mxu0 0.0
  %1648 = vmatprep.subr.mxu0 0.0
  %1649 = vmatpush2.msra.mxu0 0.0
  %1650 = vmatprep.subr.mxu0 0.0
  %1651 = vmatpush2.msra.mxu0 0.0
  %1652 = vmatprep.subr.mxu0 0.0
  %1653 = vmatpush2.msra.mxu0 0.0
  %1654 = vmatprep.subr.mxu0 0.0
  %1655 = vmatpush2.msra.mxu0 0.0
  %1656 = vmatprep.subr.mxu0 0.0
  %1657 = vmatpush2.msra.mxu0 0.0
  %1658 = vmatprep.subr.mxu0 0.0
  %1659 = vmatpush2.msra.mxu0 0.0
  %1660 = vmatprep.subr.mxu0 0.0
  %1661 = vmatpush2.msra.mxu0 0.0
  %1662 = vmatprep.subr.mxu0 0.0
  %1663 = vmatpush2.msra.mxu0 0.0
  %1664 = vmatprep.subr.mxu0 0.0
  %1665 = vmatpush2.msra.mxu0 0.0
  %1666 = vmatprep.mubr.f32.mxu0 0.0
  %v1667 = vand.u32 %v159, 4294901760
  %1668 = vmatmul.mubr.f32.gmra.mxu0 %v1667
  %v1669 = vpop.f32.mrf.mxu0
  %v1670 = vadd.f32 %v1327, %v1669
  %v1671 = vpop.f32.mrf.mxu0
  %1672 = vmatprep.mubr.f32.mxu0 0.0
  %v1673 = vand.u32 %v162, 4294901760
  %1674 = vmatmul.mubr.f32.gmra.mxu0 %v1673
  %v1675 = vpop.f32.mrf.mxu0
  %v1676 = vadd.f32 %v1335, %v1675
  %v1677 = vpop.f32.mrf.mxu0
  %1678 = vmatprep.mubr.f32.mxu0 0.0
  %v1679 = vand.u32 %v165, 4294901760
  %1680 = vmatmul.mubr.f32.gmra.mxu0 %v1679
  %v1681 = vpop.f32.mrf.mxu0
  %v1682 = vadd.f32 %v1343, %v1681
  %v1683 = vpop.f32.mrf.mxu0
  %1684 = vmatprep.mubr.f32.mxu0 0.0
  %v1685 = vand.u32 %v168, 4294901760
  %1686 = vmatmul.mubr.f32.gmra.mxu0 %v1685
  %v1687 = vpop.f32.mrf.mxu0
  %v1688 = vadd.f32 %v1351, %v1687
  %v1689 = vpop.f32.mrf.mxu0
  %1690 = vmatprep.mubr.f32.mxu0 0.0
  %v1691 = vand.u32 %v171, 4294901760
  %1692 = vmatmul.mubr.f32.gmra.mxu0 %v1691
  %v1693 = vpop.f32.mrf.mxu0
  %v1694 = vadd.f32 %v1359, %v1693
  %v1695 = vpop.f32.mrf.mxu0
  %1696 = vmatprep.mubr.f32.mxu0 0.0
  %v1697 = vand.u32 %v174, 4294901760
  %1698 = vmatmul.mubr.f32.gmra.mxu0 %v1697
  %v1699 = vpop.f32.mrf.mxu0
  %v1700 = vadd.f32 %v1367, %v1699
  %v1701 = vpop.f32.mrf.mxu0
  %1702 = vmatprep.mubr.f32.mxu0 0.0
  %v1703 = vand.u32 %v177, 4294901760
  %1704 = vmatmul.mubr.f32.gmra.mxu0 %v1703
  %v1705 = vpop.f32.mrf.mxu0
  %v1706 = vadd.f32 %v1375, %v1705
  %v1707 = vpop.f32.mrf.mxu0
  %1708 = vmatprep.mubr.f32.mxu0 0.0
  %v1709 = vand.u32 %v180, 4294901760
  %1710 = vmatmul.mubr.f32.gmra.mxu0 %v1709
  %v1711 = vpop.f32.mrf.mxu0
  %v1712 = vadd.f32 %v1383, %v1711
  %v1713 = vpop.f32.mrf.mxu0
  %1714 = vmatprep.mubr.f32.mxu0 0.0
  %v1715 = vand.u32 %v183, 4294901760
  %1716 = vmatmul.mubr.f32.gmra.mxu0 %v1715
  %v1717 = vpop.f32.mrf.mxu0
  %v1718 = vadd.f32 %v1391, %v1717
  %v1719 = vpop.f32.mrf.mxu0
  %1720 = vmatprep.mubr.f32.mxu0 0.0
  %v1721 = vand.u32 %v186, 4294901760
  %1722 = vmatmul.mubr.f32.gmra.mxu0 %v1721
  %v1723 = vpop.f32.mrf.mxu0
  %v1724 = vadd.f32 %v1399, %v1723
  %v1725 = vpop.f32.mrf.mxu0
  %1726 = vmatprep.mubr.f32.mxu0 0.0
  %v1727 = vand.u32 %v189, 4294901760
  %1728 = vmatmul.mubr.f32.gmra.mxu0 %v1727
  %v1729 = vpop.f32.mrf.mxu0
  %v1730 = vadd.f32 %v1407, %v1729
  %v1731 = vpop.f32.mrf.mxu0
  %1732 = vmatprep.mubr.f32.mxu0 0.0
  %v1733 = vand.u32 %v192, 4294901760
  %1734 = vmatmul.mubr.f32.gmra.mxu0 %v1733
  %v1735 = vpop.f32.mrf.mxu0
  %v1736 = vadd.f32 %v1415, %v1735
  %v1737 = vpop.f32.mrf.mxu0
  %1738 = vmatprep.mubr.f32.mxu0 0.0
  %v1739 = vand.u32 %v195, 4294901760
  %1740 = vmatmul.mubr.f32.gmra.mxu0 %v1739
  %v1741 = vpop.f32.mrf.mxu0
  %v1742 = vadd.f32 %v1423, %v1741
  %v1743 = vpop.f32.mrf.mxu0
  %1744 = vmatprep.mubr.f32.mxu0 0.0
  %v1745 = vand.u32 %v198, 4294901760
  %1746 = vmatmul.mubr.f32.gmra.mxu0 %v1745
  %v1747 = vpop.f32.mrf.mxu0
  %v1748 = vadd.f32 %v1431, %v1747
  %v1749 = vpop.f32.mrf.mxu0
  %1750 = vmatprep.mubr.f32.mxu0 0.0
  %v1751 = vand.u32 %v201, 4294901760
  %1752 = vmatmul.mubr.f32.gmra.mxu0 %v1751
  %v1753 = vpop.f32.mrf.mxu0
  %v1754 = vadd.f32 %v1439, %v1753
  %v1755 = vpop.f32.mrf.mxu0
  %1756 = vmatprep.mubr.f32.mxu0 0.0
  %v1757 = vand.u32 %v204, 4294901760
  %1758 = vmatmul.mubr.f32.gmra.mxu0 %v1757
  %v1759 = vpop.f32.mrf.mxu0
  %v1760 = vadd.f32 %v1447, %v1759
  %v1761 = vpop.f32.mrf.mxu0
  %1762 = vmatprep.mubr.f32.mxu0 0.0
  %v1763 = vand.u32 %v207, 4294901760
  %1764 = vmatmul.mubr.f32.gmra.mxu0 %v1763
  %v1765 = vpop.f32.mrf.mxu0
  %v1766 = vadd.f32 %v1455, %v1765
  %v1767 = vpop.f32.mrf.mxu0
  %1768 = vmatprep.mubr.f32.mxu0 0.0
  %v1769 = vand.u32 %v210, 4294901760
  %1770 = vmatmul.mubr.f32.gmra.mxu0 %v1769
  %v1771 = vpop.f32.mrf.mxu0
  %v1772 = vadd.f32 %v1463, %v1771
  %v1773 = vpop.f32.mrf.mxu0
  %1774 = vmatprep.mubr.f32.mxu0 0.0
  %v1775 = vand.u32 %v213, 4294901760
  %1776 = vmatmul.mubr.f32.gmra.mxu0 %v1775
  %v1777 = vpop.f32.mrf.mxu0
  %v1778 = vadd.f32 %v1471, %v1777
  %v1779 = vpop.f32.mrf.mxu0
  %1780 = vmatprep.mubr.f32.mxu0 0.0
  %v1781 = vand.u32 %v216, 4294901760
  %1782 = vmatmul.mubr.f32.gmra.mxu0 %v1781
  %v1783 = vpop.f32.mrf.mxu0
  %v1784 = vadd.f32 %v1479, %v1783
  %v1785 = vpop.f32.mrf.mxu0
  %1786 = vmatprep.mubr.f32.mxu0 0.0
  %v1787 = vand.u32 %v219, 4294901760
  %1788 = vmatmul.mubr.f32.gmra.mxu0 %v1787
  %v1789 = vpop.f32.mrf.mxu0
  %v1790 = vadd.f32 %v1487, %v1789
  %v1791 = vpop.f32.mrf.mxu0
  %1792 = vmatprep.mubr.f32.mxu0 0.0
  %v1793 = vand.u32 %v222, 4294901760
  %1794 = vmatmul.mubr.f32.gmra.mxu0 %v1793
  %v1795 = vpop.f32.mrf.mxu0
  %v1796 = vadd.f32 %v1495, %v1795
  %v1797 = vpop.f32.mrf.mxu0
  %1798 = vmatprep.mubr.f32.mxu0 0.0
  %v1799 = vand.u32 %v225, 4294901760
  %1800 = vmatmul.mubr.f32.gmra.mxu0 %v1799
  %v1801 = vpop.f32.mrf.mxu0
  %v1802 = vadd.f32 %v1503, %v1801
  %v1803 = vpop.f32.mrf.mxu0
  %1804 = vmatprep.mubr.f32.mxu0 0.0
  %v1805 = vand.u32 %v228, 4294901760
  %1806 = vmatmul.mubr.f32.gmra.mxu0 %v1805
  %v1807 = vpop.f32.mrf.mxu0
  %v1808 = vadd.f32 %v1511, %v1807
  %v1809 = vpop.f32.mrf.mxu0
  %1810 = vmatprep.mubr.f32.mxu0 0.0
  %v1811 = vand.u32 %v231, 4294901760
  %1812 = vmatmul.mubr.f32.gmra.mxu0 %v1811
  %v1813 = vpop.f32.mrf.mxu0
  %v1814 = vadd.f32 %v1519, %v1813
  %v1815 = vpop.f32.mrf.mxu0
  %1816 = vmatprep.mubr.f32.mxu0 0.0
  %v1817 = vand.u32 %v234, 4294901760
  %1818 = vmatmul.mubr.f32.gmra.mxu0 %v1817
  %v1819 = vpop.f32.mrf.mxu0
  %v1820 = vadd.f32 %v1527, %v1819
  %v1821 = vpop.f32.mrf.mxu0
  %1822 = vmatprep.mubr.f32.mxu0 0.0
  %v1823 = vand.u32 %v237, 4294901760
  %1824 = vmatmul.mubr.f32.gmra.mxu0 %v1823
  %v1825 = vpop.f32.mrf.mxu0
  %v1826 = vadd.f32 %v1535, %v1825
  %v1827 = vpop.f32.mrf.mxu0
  %1828 = vmatprep.mubr.f32.mxu0 0.0
  %v1829 = vand.u32 %v240, 4294901760
  %1830 = vmatmul.mubr.f32.gmra.mxu0 %v1829
  %v1831 = vpop.f32.mrf.mxu0
  %v1832 = vadd.f32 %v1543, %v1831
  %v1833 = vpop.f32.mrf.mxu0
  %1834 = vmatprep.mubr.f32.mxu0 0.0
  %v1835 = vand.u32 %v243, 4294901760
  %1836 = vmatmul.mubr.f32.gmra.mxu0 %v1835
  %v1837 = vpop.f32.mrf.mxu0
  %v1838 = vadd.f32 %v1551, %v1837
  %v1839 = vpop.f32.mrf.mxu0
  %1840 = vmatprep.mubr.f32.mxu0 0.0
  %v1841 = vand.u32 %v246, 4294901760
  %1842 = vmatmul.mubr.f32.gmra.mxu0 %v1841
  %v1843 = vpop.f32.mrf.mxu0
  %v1844 = vadd.f32 %v1559, %v1843
  %v1845 = vpop.f32.mrf.mxu0
  %1846 = vmatprep.mubr.f32.mxu0 0.0
  %v1847 = vand.u32 %v249, 4294901760
  %1848 = vmatmul.mubr.f32.gmra.mxu0 %v1847
  %v1849 = vpop.f32.mrf.mxu0
  %v1850 = vadd.f32 %v1567, %v1849
  %v1851 = vpop.f32.mrf.mxu0
  %1852 = vmatprep.mubr.f32.mxu0 0.0
  %v1853 = vand.u32 %v252, 4294901760
  %1854 = vmatmul.mubr.f32.gmra.mxu0 %v1853
  %v1855 = vpop.f32.mrf.mxu0
  %v1856 = vadd.f32 %v1575, %v1855
  %v1857 = vpop.f32.mrf.mxu0
  %1858 = vdwg.mxu0
  %1859 = vmatprep.subr.mxu0 0.0
  %1860 = vmatpush1.msra.mxu0 0.0
  %1861 = vmatprep.subr.mxu0 0.0
  %1862 = vmatpush1.msra.mxu0 0.0
  %1863 = vmatprep.subr.mxu0 0.0
  %1864 = vmatpush1.msra.mxu0 0.0
  %1865 = vmatprep.subr.mxu0 0.0
  %1866 = vmatpush1.msra.mxu0 0.0
  %1867 = vmatprep.subr.mxu0 0.0
  %1868 = vmatpush1.msra.mxu0 0.0
  %1869 = vmatprep.subr.mxu0 0.0
  %1870 = vmatpush1.msra.mxu0 0.0
  %1871 = vmatprep.subr.mxu0 0.0
  %1872 = vmatpush1.msra.mxu0 0.0
  %1873 = vmatprep.subr.mxu0 0.0
  %1874 = vmatpush1.msra.mxu0 0.0
  %1875 = vmatprep.subr.mxu0 0.0
  %v1876 = vand.u32 %v156, 4294901760
  %1877 = vmatpush1.msra.mxu0 %v1876
  %1878 = vmatprep.subr.mxu0 0.0
  %v1879 = vand.u32 %v155, 4294901760
  %1880 = vmatpush1.msra.mxu0 %v1879
  %1881 = vmatprep.subr.mxu0 0.0
  %v1882 = vand.u32 %v154, 4294901760
  %1883 = vmatpush1.msra.mxu0 %v1882
  %1884 = vmatprep.subr.mxu0 0.0
  %v1885 = vand.u32 %v153, 4294901760
  %1886 = vmatpush1.msra.mxu0 %v1885
  %1887 = vmatprep.subr.mxu0 0.0
  %v1888 = vand.u32 %v152, 4294901760
  %1889 = vmatpush1.msra.mxu0 %v1888
  %1890 = vmatprep.subr.mxu0 0.0
  %v1891 = vand.u32 %v151, 4294901760
  %1892 = vmatpush1.msra.mxu0 %v1891
  %1893 = vmatprep.subr.mxu0 0.0
  %v1894 = vand.u32 %v150, 4294901760
  %1895 = vmatpush1.msra.mxu0 %v1894
  %1896 = vmatprep.subr.mxu0 0.0
  %v1897 = vand.u32 %v149, 4294901760
  %1898 = vmatpush1.msra.mxu0 %v1897
  %1899 = vmatprep.subr.mxu0 0.0
  %1900 = vmatpush2.msra.mxu0 0.0
  %1901 = vmatprep.subr.mxu0 0.0
  %1902 = vmatpush2.msra.mxu0 0.0
  %1903 = vmatprep.subr.mxu0 0.0
  %1904 = vmatpush2.msra.mxu0 0.0
  %1905 = vmatprep.subr.mxu0 0.0
  %1906 = vmatpush2.msra.mxu0 0.0
  %1907 = vmatprep.subr.mxu0 0.0
  %1908 = vmatpush2.msra.mxu0 0.0
  %1909 = vmatprep.subr.mxu0 0.0
  %1910 = vmatpush2.msra.mxu0 0.0
  %1911 = vmatprep.subr.mxu0 0.0
  %1912 = vmatpush2.msra.mxu0 0.0
  %1913 = vmatprep.subr.mxu0 0.0
  %1914 = vmatpush2.msra.mxu0 0.0
  %1915 = vmatprep.subr.mxu0 0.0
  %1916 = vmatpush2.msra.mxu0 0.0
  %1917 = vmatprep.subr.mxu0 0.0
  %1918 = vmatpush2.msra.mxu0 0.0
  %1919 = vmatprep.subr.mxu0 0.0
  %1920 = vmatpush2.msra.mxu0 0.0
  %1921 = vmatprep.subr.mxu0 0.0
  %1922 = vmatpush2.msra.mxu0 0.0
  %1923 = vmatprep.subr.mxu0 0.0
  %1924 = vmatpush2.msra.mxu0 0.0
  %1925 = vmatprep.subr.mxu0 0.0
  %1926 = vmatpush2.msra.mxu0 0.0
  %1927 = vmatprep.subr.mxu0 0.0
  %1928 = vmatpush2.msra.mxu0 0.0
  %1929 = vmatprep.subr.mxu0 0.0
  %1930 = vmatpush2.msra.mxu0 0.0
  %1931 = vmatprep.mubr.f32.mxu0 0.0
  %v1932 = vand.u32 %v159, 4294901760
  %1933 = vmatmul.mubr.f32.gmra.mxu0 %v1932
  %v1934 = vpop.f32.mrf.mxu0
  %v1935 = vadd.f32 %v1670, %v1934
  %v1936 = vpop.f32.mrf.mxu0
  %1937 = vmatprep.mubr.f32.mxu0 0.0
  %v1938 = vand.u32 %v162, 4294901760
  %1939 = vmatmul.mubr.f32.gmra.mxu0 %v1938
  %v1940 = vpop.f32.mrf.mxu0
  %v1941 = vadd.f32 %v1676, %v1940
  %v1942 = vpop.f32.mrf.mxu0
  %1943 = vmatprep.mubr.f32.mxu0 0.0
  %v1944 = vand.u32 %v165, 4294901760
  %1945 = vmatmul.mubr.f32.gmra.mxu0 %v1944
  %v1946 = vpop.f32.mrf.mxu0
  %v1947 = vadd.f32 %v1682, %v1946
  %v1948 = vpop.f32.mrf.mxu0
  %1949 = vmatprep.mubr.f32.mxu0 0.0
  %v1950 = vand.u32 %v168, 4294901760
  %1951 = vmatmul.mubr.f32.gmra.mxu0 %v1950
  %v1952 = vpop.f32.mrf.mxu0
  %v1953 = vadd.f32 %v1688, %v1952
  %v1954 = vpop.f32.mrf.mxu0
  %1955 = vmatprep.mubr.f32.mxu0 0.0
  %v1956 = vand.u32 %v171, 4294901760
  %1957 = vmatmul.mubr.f32.gmra.mxu0 %v1956
  %v1958 = vpop.f32.mrf.mxu0
  %v1959 = vadd.f32 %v1694, %v1958
  %v1960 = vpop.f32.mrf.mxu0
  %1961 = vmatprep.mubr.f32.mxu0 0.0
  %v1962 = vand.u32 %v174, 4294901760
  %1963 = vmatmul.mubr.f32.gmra.mxu0 %v1962
  %v1964 = vpop.f32.mrf.mxu0
  %v1965 = vadd.f32 %v1700, %v1964
  %v1966 = vpop.f32.mrf.mxu0
  %1967 = vmatprep.mubr.f32.mxu0 0.0
  %v1968 = vand.u32 %v177, 4294901760
  %1969 = vmatmul.mubr.f32.gmra.mxu0 %v1968
  %v1970 = vpop.f32.mrf.mxu0
  %v1971 = vadd.f32 %v1706, %v1970
  %v1972 = vpop.f32.mrf.mxu0
  %1973 = vmatprep.mubr.f32.mxu0 0.0
  %v1974 = vand.u32 %v180, 4294901760
  %1975 = vmatmul.mubr.f32.gmra.mxu0 %v1974
  %v1976 = vpop.f32.mrf.mxu0
  %v1977 = vadd.f32 %v1712, %v1976
  %v1978 = vpop.f32.mrf.mxu0
  %1979 = vmatprep.mubr.f32.mxu0 0.0
  %v1980 = vand.u32 %v183, 4294901760
  %1981 = vmatmul.mubr.f32.gmra.mxu0 %v1980
  %v1982 = vpop.f32.mrf.mxu0
  %v1983 = vadd.f32 %v1718, %v1982
  %v1984 = vpop.f32.mrf.mxu0
  %1985 = vmatprep.mubr.f32.mxu0 0.0
  %v1986 = vand.u32 %v186, 4294901760
  %1987 = vmatmul.mubr.f32.gmra.mxu0 %v1986
  %v1988 = vpop.f32.mrf.mxu0
  %v1989 = vadd.f32 %v1724, %v1988
  %v1990 = vpop.f32.mrf.mxu0
  %1991 = vmatprep.mubr.f32.mxu0 0.0
  %v1992 = vand.u32 %v189, 4294901760
  %1993 = vmatmul.mubr.f32.gmra.mxu0 %v1992
  %v1994 = vpop.f32.mrf.mxu0
  %v1995 = vadd.f32 %v1730, %v1994
  %v1996 = vpop.f32.mrf.mxu0
  %1997 = vmatprep.mubr.f32.mxu0 0.0
  %v1998 = vand.u32 %v192, 4294901760
  %1999 = vmatmul.mubr.f32.gmra.mxu0 %v1998
  %v2000 = vpop.f32.mrf.mxu0
  %v2001 = vadd.f32 %v1736, %v2000
  %v2002 = vpop.f32.mrf.mxu0
  %2003 = vmatprep.mubr.f32.mxu0 0.0
  %v2004 = vand.u32 %v195, 4294901760
  %2005 = vmatmul.mubr.f32.gmra.mxu0 %v2004
  %v2006 = vpop.f32.mrf.mxu0
  %v2007 = vadd.f32 %v1742, %v2006
  %v2008 = vpop.f32.mrf.mxu0
  %2009 = vmatprep.mubr.f32.mxu0 0.0
  %v2010 = vand.u32 %v198, 4294901760
  %2011 = vmatmul.mubr.f32.gmra.mxu0 %v2010
  %v2012 = vpop.f32.mrf.mxu0
  %v2013 = vadd.f32 %v1748, %v2012
  %v2014 = vpop.f32.mrf.mxu0
  %2015 = vmatprep.mubr.f32.mxu0 0.0
  %v2016 = vand.u32 %v201, 4294901760
  %2017 = vmatmul.mubr.f32.gmra.mxu0 %v2016
  %v2018 = vpop.f32.mrf.mxu0
  %v2019 = vadd.f32 %v1754, %v2018
  %v2020 = vpop.f32.mrf.mxu0
  %2021 = vmatprep.mubr.f32.mxu0 0.0
  %v2022 = vand.u32 %v204, 4294901760
  %2023 = vmatmul.mubr.f32.gmra.mxu0 %v2022
  %v2024 = vpop.f32.mrf.mxu0
  %v2025 = vadd.f32 %v1760, %v2024
  %v2026 = vpop.f32.mrf.mxu0
  %2027 = vmatprep.mubr.f32.mxu0 0.0
  %v2028 = vand.u32 %v207, 4294901760
  %2029 = vmatmul.mubr.f32.gmra.mxu0 %v2028
  %v2030 = vpop.f32.mrf.mxu0
  %v2031 = vadd.f32 %v1766, %v2030
  %v2032 = vpop.f32.mrf.mxu0
  %2033 = vmatprep.mubr.f32.mxu0 0.0
  %v2034 = vand.u32 %v210, 4294901760
  %2035 = vmatmul.mubr.f32.gmra.mxu0 %v2034
  %v2036 = vpop.f32.mrf.mxu0
  %v2037 = vadd.f32 %v1772, %v2036
  %v2038 = vpop.f32.mrf.mxu0
  %2039 = vmatprep.mubr.f32.mxu0 0.0
  %v2040 = vand.u32 %v213, 4294901760
  %2041 = vmatmul.mubr.f32.gmra.mxu0 %v2040
  %v2042 = vpop.f32.mrf.mxu0
  %v2043 = vadd.f32 %v1778, %v2042
  %v2044 = vpop.f32.mrf.mxu0
  %2045 = vmatprep.mubr.f32.mxu0 0.0
  %v2046 = vand.u32 %v216, 4294901760
  %2047 = vmatmul.mubr.f32.gmra.mxu0 %v2046
  %v2048 = vpop.f32.mrf.mxu0
  %v2049 = vadd.f32 %v1784, %v2048
  %v2050 = vpop.f32.mrf.mxu0
  %2051 = vmatprep.mubr.f32.mxu0 0.0
  %v2052 = vand.u32 %v219, 4294901760
  %2053 = vmatmul.mubr.f32.gmra.mxu0 %v2052
  %v2054 = vpop.f32.mrf.mxu0
  %v2055 = vadd.f32 %v1790, %v2054
  %v2056 = vpop.f32.mrf.mxu0
  %2057 = vmatprep.mubr.f32.mxu0 0.0
  %v2058 = vand.u32 %v222, 4294901760
  %2059 = vmatmul.mubr.f32.gmra.mxu0 %v2058
  %v2060 = vpop.f32.mrf.mxu0
  %v2061 = vadd.f32 %v1796, %v2060
  %v2062 = vpop.f32.mrf.mxu0
  %2063 = vmatprep.mubr.f32.mxu0 0.0
  %v2064 = vand.u32 %v225, 4294901760
  %2065 = vmatmul.mubr.f32.gmra.mxu0 %v2064
  %v2066 = vpop.f32.mrf.mxu0
  %v2067 = vadd.f32 %v1802, %v2066
  %v2068 = vpop.f32.mrf.mxu0
  %2069 = vmatprep.mubr.f32.mxu0 0.0
  %v2070 = vand.u32 %v228, 4294901760
  %2071 = vmatmul.mubr.f32.gmra.mxu0 %v2070
  %v2072 = vpop.f32.mrf.mxu0
  %v2073 = vadd.f32 %v1808, %v2072
  %v2074 = vpop.f32.mrf.mxu0
  %2075 = vmatprep.mubr.f32.mxu0 0.0
  %v2076 = vand.u32 %v231, 4294901760
  %2077 = vmatmul.mubr.f32.gmra.mxu0 %v2076
  %v2078 = vpop.f32.mrf.mxu0
  %v2079 = vadd.f32 %v1814, %v2078
  %v2080 = vpop.f32.mrf.mxu0
  %2081 = vmatprep.mubr.f32.mxu0 0.0
  %v2082 = vand.u32 %v234, 4294901760
  %2083 = vmatmul.mubr.f32.gmra.mxu0 %v2082
  %v2084 = vpop.f32.mrf.mxu0
  %v2085 = vadd.f32 %v1820, %v2084
  %v2086 = vpop.f32.mrf.mxu0
  %2087 = vmatprep.mubr.f32.mxu0 0.0
  %v2088 = vand.u32 %v237, 4294901760
  %2089 = vmatmul.mubr.f32.gmra.mxu0 %v2088
  %v2090 = vpop.f32.mrf.mxu0
  %v2091 = vadd.f32 %v1826, %v2090
  %v2092 = vpop.f32.mrf.mxu0
  %2093 = vmatprep.mubr.f32.mxu0 0.0
  %v2094 = vand.u32 %v240, 4294901760
  %2095 = vmatmul.mubr.f32.gmra.mxu0 %v2094
  %v2096 = vpop.f32.mrf.mxu0
  %v2097 = vadd.f32 %v1832, %v2096
  %v2098 = vpop.f32.mrf.mxu0
  %2099 = vmatprep.mubr.f32.mxu0 0.0
  %v2100 = vand.u32 %v243, 4294901760
  %2101 = vmatmul.mubr.f32.gmra.mxu0 %v2100
  %v2102 = vpop.f32.mrf.mxu0
  %v2103 = vadd.f32 %v1838, %v2102
  %v2104 = vpop.f32.mrf.mxu0
  %2105 = vmatprep.mubr.f32.mxu0 0.0
  %v2106 = vand.u32 %v246, 4294901760
  %2107 = vmatmul.mubr.f32.gmra.mxu0 %v2106
  %v2108 = vpop.f32.mrf.mxu0
  %v2109 = vadd.f32 %v1844, %v2108
  %v2110 = vpop.f32.mrf.mxu0
  %2111 = vmatprep.mubr.f32.mxu0 0.0
  %v2112 = vand.u32 %v249, 4294901760
  %2113 = vmatmul.mubr.f32.gmra.mxu0 %v2112
  %v2114 = vpop.f32.mrf.mxu0
  %v2115 = vadd.f32 %v1850, %v2114
  %v2116 = vpop.f32.mrf.mxu0
  %2117 = vmatprep.mubr.f32.mxu0 0.0
  %v2118 = vand.u32 %v252, 4294901760
  %2119 = vmatmul.mubr.f32.gmra.mxu0 %v2118
  %v2120 = vpop.f32.mrf.mxu0
  %v2121 = vadd.f32 %v1856, %v2120
  %v2122 = vpop.f32.mrf.mxu0
  %2123 = vdwg.mxu0
  %v2125 = vsel %vm157, %v117, 0
  %v2128 = vsel %vm157, %v118, 0
  %v2131 = vsel %vm157, %v119, 0
  %v2134 = vsel %vm157, %v120, 0
  %v2137 = vsel %vm157, %v121, 0
  %v2140 = vsel %vm157, %v122, 0
  %v2143 = vsel %vm157, %v123, 0
  %v2146 = vsel %vm157, %v124, 0
  %v2149 = vsel %vm157, %v125, 0
  %v2152 = vsel %vm157, %v126, 0
  %v2155 = vsel %vm157, %v127, 0
  %v2158 = vsel %vm157, %v128, 0
  %v2161 = vsel %vm157, %v129, 0
  %v2164 = vsel %vm157, %v130, 0
  %v2167 = vsel %vm157, %v131, 0
  %v2170 = vsel %vm157, %v132, 0
  %v2173 = vsel %vm157, %v133, 0
  %v2176 = vsel %vm157, %v134, 0
  %v2179 = vsel %vm157, %v135, 0
  %v2182 = vsel %vm157, %v136, 0
  %v2185 = vsel %vm157, %v137, 0
  %v2188 = vsel %vm157, %v138, 0
  %v2191 = vsel %vm157, %v139, 0
  %v2194 = vsel %vm157, %v140, 0
  %v2197 = vsel %vm157, %v141, 0
  %v2200 = vsel %vm157, %v142, 0
  %v2203 = vsel %vm157, %v143, 0
  %v2206 = vsel %vm157, %v144, 0
  %v2209 = vsel %vm157, %v145, 0
  %v2212 = vsel %vm157, %v146, 0
  %v2215 = vsel %vm157, %v147, 0
  %v2218 = vsel %vm157, %v148, 0
  %2220 = vmatprep.subr.mxu0 0.0
  %2221 = vmatpush1.msra.mxu0 0.0
  %2222 = vmatprep.subr.mxu0 0.0
  %2223 = vmatpush1.msra.mxu0 0.0
  %2224 = vmatprep.subr.mxu0 0.0
  %2225 = vmatpush1.msra.mxu0 0.0
  %2226 = vmatprep.subr.mxu0 0.0
  %2227 = vmatpush1.msra.mxu0 0.0
  %2228 = vmatprep.subr.mxu0 0.0
  %2229 = vmatpush1.msra.mxu0 0.0
  %2230 = vmatprep.subr.mxu0 0.0
  %2231 = vmatpush1.msra.mxu0 0.0
  %2232 = vmatprep.subr.mxu0 0.0
  %2233 = vmatpush1.msra.mxu0 0.0
  %2234 = vmatprep.subr.mxu0 0.0
  %2235 = vmatpush1.msra.mxu0 0.0
  %2236 = vmatprep.subr.mxu0 0.0
  %v2237 = vand.u32 %v156, 4294901760
  %2238 = vmatpush1.msra.mxu0 %v2237
  %2239 = vmatprep.subr.mxu0 0.0
  %v2240 = vand.u32 %v155, 4294901760
  %2241 = vmatpush1.msra.mxu0 %v2240
  %2242 = vmatprep.subr.mxu0 0.0
  %v2243 = vand.u32 %v154, 4294901760
  %2244 = vmatpush1.msra.mxu0 %v2243
  %2245 = vmatprep.subr.mxu0 0.0
  %v2246 = vand.u32 %v153, 4294901760
  %2247 = vmatpush1.msra.mxu0 %v2246
  %2248 = vmatprep.subr.mxu0 0.0
  %v2249 = vand.u32 %v152, 4294901760
  %2250 = vmatpush1.msra.mxu0 %v2249
  %2251 = vmatprep.subr.mxu0 0.0
  %v2252 = vand.u32 %v151, 4294901760
  %2253 = vmatpush1.msra.mxu0 %v2252
  %2254 = vmatprep.subr.mxu0 0.0
  %v2255 = vand.u32 %v150, 4294901760
  %2256 = vmatpush1.msra.mxu0 %v2255
  %2257 = vmatprep.subr.mxu0 0.0
  %v2258 = vand.u32 %v149, 4294901760
  %2259 = vmatpush1.msra.mxu0 %v2258
  %2260 = vmatprep.subr.mxu0 0.0
  %2261 = vmatpush2.msra.mxu0 0.0
  %2262 = vmatprep.subr.mxu0 0.0
  %2263 = vmatpush2.msra.mxu0 0.0
  %2264 = vmatprep.subr.mxu0 0.0
  %2265 = vmatpush2.msra.mxu0 0.0
  %2266 = vmatprep.subr.mxu0 0.0
  %2267 = vmatpush2.msra.mxu0 0.0
  %2268 = vmatprep.subr.mxu0 0.0
  %2269 = vmatpush2.msra.mxu0 0.0
  %2270 = vmatprep.subr.mxu0 0.0
  %2271 = vmatpush2.msra.mxu0 0.0
  %2272 = vmatprep.subr.mxu0 0.0
  %2273 = vmatpush2.msra.mxu0 0.0
  %2274 = vmatprep.subr.mxu0 0.0
  %2275 = vmatpush2.msra.mxu0 0.0
  %2276 = vmatprep.subr.mxu0 0.0
  %2277 = vmatpush2.msra.mxu0 0.0
  %2278 = vmatprep.subr.mxu0 0.0
  %2279 = vmatpush2.msra.mxu0 0.0
  %2280 = vmatprep.subr.mxu0 0.0
  %2281 = vmatpush2.msra.mxu0 0.0
  %2282 = vmatprep.subr.mxu0 0.0
  %2283 = vmatpush2.msra.mxu0 0.0
  %2284 = vmatprep.subr.mxu0 0.0
  %2285 = vmatpush2.msra.mxu0 0.0
  %2286 = vmatprep.subr.mxu0 0.0
  %2287 = vmatpush2.msra.mxu0 0.0
  %2288 = vmatprep.subr.mxu0 0.0
  %2289 = vmatpush2.msra.mxu0 0.0
  %2290 = vmatprep.subr.mxu0 0.0
  %2291 = vmatpush2.msra.mxu0 0.0
  %2292 = vmatprep.mubr.f32.mxu0 0.0
  %v2293 = vand.u32 %v2125, 4294901760
  %v2294 = vsub.f32 %v2125, %v2293
  %v2295 = vand.u32 %v2294, 4294901760
  %v2296 = vsub.f32 %v2294, %v2295
  %v2297 = vand.u32 %v2296, 4294901760
  %2298 = vmatmul.mubr.f32.gmra.mxu0 %v2297
  %v2299 = vpop.f32.mrf.mxu0
  %v2300 = vadd.f32 0.0, %v2299
  %v2301 = vpop.f32.mrf.mxu0
  %2302 = vmatprep.mubr.f32.mxu0 0.0
  %v2303 = vand.u32 %v2128, 4294901760
  %v2304 = vsub.f32 %v2128, %v2303
  %v2305 = vand.u32 %v2304, 4294901760
  %v2306 = vsub.f32 %v2304, %v2305
  %v2307 = vand.u32 %v2306, 4294901760
  %2308 = vmatmul.mubr.f32.gmra.mxu0 %v2307
  %v2309 = vpop.f32.mrf.mxu0
  %v2310 = vadd.f32 0.0, %v2309
  %v2311 = vpop.f32.mrf.mxu0
  %2312 = vmatprep.mubr.f32.mxu0 0.0
  %v2313 = vand.u32 %v2131, 4294901760
  %v2314 = vsub.f32 %v2131, %v2313
  %v2315 = vand.u32 %v2314, 4294901760
  %v2316 = vsub.f32 %v2314, %v2315
  %v2317 = vand.u32 %v2316, 4294901760
  %2318 = vmatmul.mubr.f32.gmra.mxu0 %v2317
  %v2319 = vpop.f32.mrf.mxu0
  %v2320 = vadd.f32 0.0, %v2319
  %v2321 = vpop.f32.mrf.mxu0
  %2322 = vmatprep.mubr.f32.mxu0 0.0
  %v2323 = vand.u32 %v2134, 4294901760
  %v2324 = vsub.f32 %v2134, %v2323
  %v2325 = vand.u32 %v2324, 4294901760
  %v2326 = vsub.f32 %v2324, %v2325
  %v2327 = vand.u32 %v2326, 4294901760
  %2328 = vmatmul.mubr.f32.gmra.mxu0 %v2327
  %v2329 = vpop.f32.mrf.mxu0
  %v2330 = vadd.f32 0.0, %v2329
  %v2331 = vpop.f32.mrf.mxu0
  %2332 = vmatprep.mubr.f32.mxu0 0.0
  %v2333 = vand.u32 %v2137, 4294901760
  %v2334 = vsub.f32 %v2137, %v2333
  %v2335 = vand.u32 %v2334, 4294901760
  %v2336 = vsub.f32 %v2334, %v2335
  %v2337 = vand.u32 %v2336, 4294901760
  %2338 = vmatmul.mubr.f32.gmra.mxu0 %v2337
  %v2339 = vpop.f32.mrf.mxu0
  %v2340 = vadd.f32 0.0, %v2339
  %v2341 = vpop.f32.mrf.mxu0
  %2342 = vmatprep.mubr.f32.mxu0 0.0
  %v2343 = vand.u32 %v2140, 4294901760
  %v2344 = vsub.f32 %v2140, %v2343
  %v2345 = vand.u32 %v2344, 4294901760
  %v2346 = vsub.f32 %v2344, %v2345
  %v2347 = vand.u32 %v2346, 4294901760
  %2348 = vmatmul.mubr.f32.gmra.mxu0 %v2347
  %v2349 = vpop.f32.mrf.mxu0
  %v2350 = vadd.f32 0.0, %v2349
  %v2351 = vpop.f32.mrf.mxu0
  %2352 = vmatprep.mubr.f32.mxu0 0.0
  %v2353 = vand.u32 %v2143, 4294901760
  %v2354 = vsub.f32 %v2143, %v2353
  %v2355 = vand.u32 %v2354, 4294901760
  %v2356 = vsub.f32 %v2354, %v2355
  %v2357 = vand.u32 %v2356, 4294901760
  %2358 = vmatmul.mubr.f32.gmra.mxu0 %v2357
  %v2359 = vpop.f32.mrf.mxu0
  %v2360 = vadd.f32 0.0, %v2359
  %v2361 = vpop.f32.mrf.mxu0
  %2362 = vmatprep.mubr.f32.mxu0 0.0
  %v2363 = vand.u32 %v2146, 4294901760
  %v2364 = vsub.f32 %v2146, %v2363
  %v2365 = vand.u32 %v2364, 4294901760
  %v2366 = vsub.f32 %v2364, %v2365
  %v2367 = vand.u32 %v2366, 4294901760
  %2368 = vmatmul.mubr.f32.gmra.mxu0 %v2367
  %v2369 = vpop.f32.mrf.mxu0
  %v2370 = vadd.f32 0.0, %v2369
  %v2371 = vpop.f32.mrf.mxu0
  %2372 = vmatprep.mubr.f32.mxu0 0.0
  %v2373 = vand.u32 %v2149, 4294901760
  %v2374 = vsub.f32 %v2149, %v2373
  %v2375 = vand.u32 %v2374, 4294901760
  %v2376 = vsub.f32 %v2374, %v2375
  %v2377 = vand.u32 %v2376, 4294901760
  %2378 = vmatmul.mubr.f32.gmra.mxu0 %v2377
  %v2379 = vpop.f32.mrf.mxu0
  %v2380 = vadd.f32 0.0, %v2379
  %v2381 = vpop.f32.mrf.mxu0
  %2382 = vmatprep.mubr.f32.mxu0 0.0
  %v2383 = vand.u32 %v2152, 4294901760
  %v2384 = vsub.f32 %v2152, %v2383
  %v2385 = vand.u32 %v2384, 4294901760
  %v2386 = vsub.f32 %v2384, %v2385
  %v2387 = vand.u32 %v2386, 4294901760
  %2388 = vmatmul.mubr.f32.gmra.mxu0 %v2387
  %v2389 = vpop.f32.mrf.mxu0
  %v2390 = vadd.f32 0.0, %v2389
  %v2391 = vpop.f32.mrf.mxu0
  %2392 = vmatprep.mubr.f32.mxu0 0.0
  %v2393 = vand.u32 %v2155, 4294901760
  %v2394 = vsub.f32 %v2155, %v2393
  %v2395 = vand.u32 %v2394, 4294901760
  %v2396 = vsub.f32 %v2394, %v2395
  %v2397 = vand.u32 %v2396, 4294901760
  %2398 = vmatmul.mubr.f32.gmra.mxu0 %v2397
  %v2399 = vpop.f32.mrf.mxu0
  %v2400 = vadd.f32 0.0, %v2399
  %v2401 = vpop.f32.mrf.mxu0
  %2402 = vmatprep.mubr.f32.mxu0 0.0
  %v2403 = vand.u32 %v2158, 4294901760
  %v2404 = vsub.f32 %v2158, %v2403
  %v2405 = vand.u32 %v2404, 4294901760
  %v2406 = vsub.f32 %v2404, %v2405
  %v2407 = vand.u32 %v2406, 4294901760
  %2408 = vmatmul.mubr.f32.gmra.mxu0 %v2407
  %v2409 = vpop.f32.mrf.mxu0
  %v2410 = vadd.f32 0.0, %v2409
  %v2411 = vpop.f32.mrf.mxu0
  %2412 = vmatprep.mubr.f32.mxu0 0.0
  %v2413 = vand.u32 %v2161, 4294901760
  %v2414 = vsub.f32 %v2161, %v2413
  %v2415 = vand.u32 %v2414, 4294901760
  %v2416 = vsub.f32 %v2414, %v2415
  %v2417 = vand.u32 %v2416, 4294901760
  %2418 = vmatmul.mubr.f32.gmra.mxu0 %v2417
  %v2419 = vpop.f32.mrf.mxu0
  %v2420 = vadd.f32 0.0, %v2419
  %v2421 = vpop.f32.mrf.mxu0
  %2422 = vmatprep.mubr.f32.mxu0 0.0
  %v2423 = vand.u32 %v2164, 4294901760
  %v2424 = vsub.f32 %v2164, %v2423
  %v2425 = vand.u32 %v2424, 4294901760
  %v2426 = vsub.f32 %v2424, %v2425
  %v2427 = vand.u32 %v2426, 4294901760
  %2428 = vmatmul.mubr.f32.gmra.mxu0 %v2427
  %v2429 = vpop.f32.mrf.mxu0
  %v2430 = vadd.f32 0.0, %v2429
  %v2431 = vpop.f32.mrf.mxu0
  %2432 = vmatprep.mubr.f32.mxu0 0.0
  %v2433 = vand.u32 %v2167, 4294901760
  %v2434 = vsub.f32 %v2167, %v2433
  %v2435 = vand.u32 %v2434, 4294901760
  %v2436 = vsub.f32 %v2434, %v2435
  %v2437 = vand.u32 %v2436, 4294901760
  %2438 = vmatmul.mubr.f32.gmra.mxu0 %v2437
  %v2439 = vpop.f32.mrf.mxu0
  %v2440 = vadd.f32 0.0, %v2439
  %v2441 = vpop.f32.mrf.mxu0
  %2442 = vmatprep.mubr.f32.mxu0 0.0
  %v2443 = vand.u32 %v2170, 4294901760
  %v2444 = vsub.f32 %v2170, %v2443
  %v2445 = vand.u32 %v2444, 4294901760
  %v2446 = vsub.f32 %v2444, %v2445
  %v2447 = vand.u32 %v2446, 4294901760
  %2448 = vmatmul.mubr.f32.gmra.mxu0 %v2447
  %v2449 = vpop.f32.mrf.mxu0
  %v2450 = vadd.f32 0.0, %v2449
  %v2451 = vpop.f32.mrf.mxu0
  %2452 = vmatprep.mubr.f32.mxu0 0.0
  %v2453 = vand.u32 %v2173, 4294901760
  %v2454 = vsub.f32 %v2173, %v2453
  %v2455 = vand.u32 %v2454, 4294901760
  %v2456 = vsub.f32 %v2454, %v2455
  %v2457 = vand.u32 %v2456, 4294901760
  %2458 = vmatmul.mubr.f32.gmra.mxu0 %v2457
  %v2459 = vpop.f32.mrf.mxu0
  %v2460 = vadd.f32 0.0, %v2459
  %v2461 = vpop.f32.mrf.mxu0
  %2462 = vmatprep.mubr.f32.mxu0 0.0
  %v2463 = vand.u32 %v2176, 4294901760
  %v2464 = vsub.f32 %v2176, %v2463
  %v2465 = vand.u32 %v2464, 4294901760
  %v2466 = vsub.f32 %v2464, %v2465
  %v2467 = vand.u32 %v2466, 4294901760
  %2468 = vmatmul.mubr.f32.gmra.mxu0 %v2467
  %v2469 = vpop.f32.mrf.mxu0
  %v2470 = vadd.f32 0.0, %v2469
  %v2471 = vpop.f32.mrf.mxu0
  %2472 = vmatprep.mubr.f32.mxu0 0.0
  %v2473 = vand.u32 %v2179, 4294901760
  %v2474 = vsub.f32 %v2179, %v2473
  %v2475 = vand.u32 %v2474, 4294901760
  %v2476 = vsub.f32 %v2474, %v2475
  %v2477 = vand.u32 %v2476, 4294901760
  %2478 = vmatmul.mubr.f32.gmra.mxu0 %v2477
  %v2479 = vpop.f32.mrf.mxu0
  %v2480 = vadd.f32 0.0, %v2479
  %v2481 = vpop.f32.mrf.mxu0
  %2482 = vmatprep.mubr.f32.mxu0 0.0
  %v2483 = vand.u32 %v2182, 4294901760
  %v2484 = vsub.f32 %v2182, %v2483
  %v2485 = vand.u32 %v2484, 4294901760
  %v2486 = vsub.f32 %v2484, %v2485
  %v2487 = vand.u32 %v2486, 4294901760
  %2488 = vmatmul.mubr.f32.gmra.mxu0 %v2487
  %v2489 = vpop.f32.mrf.mxu0
  %v2490 = vadd.f32 0.0, %v2489
  %v2491 = vpop.f32.mrf.mxu0
  %2492 = vmatprep.mubr.f32.mxu0 0.0
  %v2493 = vand.u32 %v2185, 4294901760
  %v2494 = vsub.f32 %v2185, %v2493
  %v2495 = vand.u32 %v2494, 4294901760
  %v2496 = vsub.f32 %v2494, %v2495
  %v2497 = vand.u32 %v2496, 4294901760
  %2498 = vmatmul.mubr.f32.gmra.mxu0 %v2497
  %v2499 = vpop.f32.mrf.mxu0
  %v2500 = vadd.f32 0.0, %v2499
  %v2501 = vpop.f32.mrf.mxu0
  %2502 = vmatprep.mubr.f32.mxu0 0.0
  %v2503 = vand.u32 %v2188, 4294901760
  %v2504 = vsub.f32 %v2188, %v2503
  %v2505 = vand.u32 %v2504, 4294901760
  %v2506 = vsub.f32 %v2504, %v2505
  %v2507 = vand.u32 %v2506, 4294901760
  %2508 = vmatmul.mubr.f32.gmra.mxu0 %v2507
  %v2509 = vpop.f32.mrf.mxu0
  %v2510 = vadd.f32 0.0, %v2509
  %v2511 = vpop.f32.mrf.mxu0
  %2512 = vmatprep.mubr.f32.mxu0 0.0
  %v2513 = vand.u32 %v2191, 4294901760
  %v2514 = vsub.f32 %v2191, %v2513
  %v2515 = vand.u32 %v2514, 4294901760
  %v2516 = vsub.f32 %v2514, %v2515
  %v2517 = vand.u32 %v2516, 4294901760
  %2518 = vmatmul.mubr.f32.gmra.mxu0 %v2517
  %v2519 = vpop.f32.mrf.mxu0
  %v2520 = vadd.f32 0.0, %v2519
  %v2521 = vpop.f32.mrf.mxu0
  %2522 = vmatprep.mubr.f32.mxu0 0.0
  %v2523 = vand.u32 %v2194, 4294901760
  %v2524 = vsub.f32 %v2194, %v2523
  %v2525 = vand.u32 %v2524, 4294901760
  %v2526 = vsub.f32 %v2524, %v2525
  %v2527 = vand.u32 %v2526, 4294901760
  %2528 = vmatmul.mubr.f32.gmra.mxu0 %v2527
  %v2529 = vpop.f32.mrf.mxu0
  %v2530 = vadd.f32 0.0, %v2529
  %v2531 = vpop.f32.mrf.mxu0
  %2532 = vmatprep.mubr.f32.mxu0 0.0
  %v2533 = vand.u32 %v2197, 4294901760
  %v2534 = vsub.f32 %v2197, %v2533
  %v2535 = vand.u32 %v2534, 4294901760
  %v2536 = vsub.f32 %v2534, %v2535
  %v2537 = vand.u32 %v2536, 4294901760
  %2538 = vmatmul.mubr.f32.gmra.mxu0 %v2537
  %v2539 = vpop.f32.mrf.mxu0
  %v2540 = vadd.f32 0.0, %v2539
  %v2541 = vpop.f32.mrf.mxu0
  %2542 = vmatprep.mubr.f32.mxu0 0.0
  %v2543 = vand.u32 %v2200, 4294901760
  %v2544 = vsub.f32 %v2200, %v2543
  %v2545 = vand.u32 %v2544, 4294901760
  %v2546 = vsub.f32 %v2544, %v2545
  %v2547 = vand.u32 %v2546, 4294901760
  %2548 = vmatmul.mubr.f32.gmra.mxu0 %v2547
  %v2549 = vpop.f32.mrf.mxu0
  %v2550 = vadd.f32 0.0, %v2549
  %v2551 = vpop.f32.mrf.mxu0
  %2552 = vmatprep.mubr.f32.mxu0 0.0
  %v2553 = vand.u32 %v2203, 4294901760
  %v2554 = vsub.f32 %v2203, %v2553
  %v2555 = vand.u32 %v2554, 4294901760
  %v2556 = vsub.f32 %v2554, %v2555
  %v2557 = vand.u32 %v2556, 4294901760
  %2558 = vmatmul.mubr.f32.gmra.mxu0 %v2557
  %v2559 = vpop.f32.mrf.mxu0
  %v2560 = vadd.f32 0.0, %v2559
  %v2561 = vpop.f32.mrf.mxu0
  %2562 = vmatprep.mubr.f32.mxu0 0.0
  %v2563 = vand.u32 %v2206, 4294901760
  %v2564 = vsub.f32 %v2206, %v2563
  %v2565 = vand.u32 %v2564, 4294901760
  %v2566 = vsub.f32 %v2564, %v2565
  %v2567 = vand.u32 %v2566, 4294901760
  %2568 = vmatmul.mubr.f32.gmra.mxu0 %v2567
  %v2569 = vpop.f32.mrf.mxu0
  %v2570 = vadd.f32 0.0, %v2569
  %v2571 = vpop.f32.mrf.mxu0
  %2572 = vmatprep.mubr.f32.mxu0 0.0
  %v2573 = vand.u32 %v2209, 4294901760
  %v2574 = vsub.f32 %v2209, %v2573
  %v2575 = vand.u32 %v2574, 4294901760
  %v2576 = vsub.f32 %v2574, %v2575
  %v2577 = vand.u32 %v2576, 4294901760
  %2578 = vmatmul.mubr.f32.gmra.mxu0 %v2577
  %v2579 = vpop.f32.mrf.mxu0
  %v2580 = vadd.f32 0.0, %v2579
  %v2581 = vpop.f32.mrf.mxu0
  %2582 = vmatprep.mubr.f32.mxu0 0.0
  %v2583 = vand.u32 %v2212, 4294901760
  %v2584 = vsub.f32 %v2212, %v2583
  %v2585 = vand.u32 %v2584, 4294901760
  %v2586 = vsub.f32 %v2584, %v2585
  %v2587 = vand.u32 %v2586, 4294901760
  %2588 = vmatmul.mubr.f32.gmra.mxu0 %v2587
  %v2589 = vpop.f32.mrf.mxu0
  %v2590 = vadd.f32 0.0, %v2589
  %v2591 = vpop.f32.mrf.mxu0
  %2592 = vmatprep.mubr.f32.mxu0 0.0
  %v2593 = vand.u32 %v2215, 4294901760
  %v2594 = vsub.f32 %v2215, %v2593
  %v2595 = vand.u32 %v2594, 4294901760
  %v2596 = vsub.f32 %v2594, %v2595
  %v2597 = vand.u32 %v2596, 4294901760
  %2598 = vmatmul.mubr.f32.gmra.mxu0 %v2597
  %v2599 = vpop.f32.mrf.mxu0
  %v2600 = vadd.f32 0.0, %v2599
  %v2601 = vpop.f32.mrf.mxu0
  %2602 = vmatprep.mubr.f32.mxu0 0.0
  %v2603 = vand.u32 %v2218, 4294901760
  %v2604 = vsub.f32 %v2218, %v2603
  %v2605 = vand.u32 %v2604, 4294901760
  %v2606 = vsub.f32 %v2604, %v2605
  %v2607 = vand.u32 %v2606, 4294901760
  %2608 = vmatmul.mubr.f32.gmra.mxu0 %v2607
  %v2609 = vpop.f32.mrf.mxu0
  %v2610 = vadd.f32 0.0, %v2609
  %v2611 = vpop.f32.mrf.mxu0
  %2612 = vdwg.mxu0
  %2613 = vmatprep.subr.mxu0 0.0
  %2614 = vmatpush1.msra.mxu0 0.0
  %2615 = vmatprep.subr.mxu0 0.0
  %2616 = vmatpush1.msra.mxu0 0.0
  %2617 = vmatprep.subr.mxu0 0.0
  %2618 = vmatpush1.msra.mxu0 0.0
  %2619 = vmatprep.subr.mxu0 0.0
  %2620 = vmatpush1.msra.mxu0 0.0
  %2621 = vmatprep.subr.mxu0 0.0
  %2622 = vmatpush1.msra.mxu0 0.0
  %2623 = vmatprep.subr.mxu0 0.0
  %2624 = vmatpush1.msra.mxu0 0.0
  %2625 = vmatprep.subr.mxu0 0.0
  %2626 = vmatpush1.msra.mxu0 0.0
  %2627 = vmatprep.subr.mxu0 0.0
  %2628 = vmatpush1.msra.mxu0 0.0
  %2629 = vmatprep.subr.mxu0 0.0
  %v2630 = vand.u32 %v156, 4294901760
  %v2631 = vsub.f32 %v156, %v2630
  %v2632 = vand.u32 %v2631, 4294901760
  %v2633 = vsub.f32 %v2631, %v2632
  %v2634 = vand.u32 %v2633, 4294901760
  %2635 = vmatpush1.msra.mxu0 %v2634
  %2636 = vmatprep.subr.mxu0 0.0
  %v2637 = vand.u32 %v155, 4294901760
  %v2638 = vsub.f32 %v155, %v2637
  %v2639 = vand.u32 %v2638, 4294901760
  %v2640 = vsub.f32 %v2638, %v2639
  %v2641 = vand.u32 %v2640, 4294901760
  %2642 = vmatpush1.msra.mxu0 %v2641
  %2643 = vmatprep.subr.mxu0 0.0
  %v2644 = vand.u32 %v154, 4294901760
  %v2645 = vsub.f32 %v154, %v2644
  %v2646 = vand.u32 %v2645, 4294901760
  %v2647 = vsub.f32 %v2645, %v2646
  %v2648 = vand.u32 %v2647, 4294901760
  %2649 = vmatpush1.msra.mxu0 %v2648
  %2650 = vmatprep.subr.mxu0 0.0
  %v2651 = vand.u32 %v153, 4294901760
  %v2652 = vsub.f32 %v153, %v2651
  %v2653 = vand.u32 %v2652, 4294901760
  %v2654 = vsub.f32 %v2652, %v2653
  %v2655 = vand.u32 %v2654, 4294901760
  %2656 = vmatpush1.msra.mxu0 %v2655
  %2657 = vmatprep.subr.mxu0 0.0
  %v2658 = vand.u32 %v152, 4294901760
  %v2659 = vsub.f32 %v152, %v2658
  %v2660 = vand.u32 %v2659, 4294901760
  %v2661 = vsub.f32 %v2659, %v2660
  %v2662 = vand.u32 %v2661, 4294901760
  %2663 = vmatpush1.msra.mxu0 %v2662
  %2664 = vmatprep.subr.mxu0 0.0
  %v2665 = vand.u32 %v151, 4294901760
  %v2666 = vsub.f32 %v151, %v2665
  %v2667 = vand.u32 %v2666, 4294901760
  %v2668 = vsub.f32 %v2666, %v2667
  %v2669 = vand.u32 %v2668, 4294901760
  %2670 = vmatpush1.msra.mxu0 %v2669
  %2671 = vmatprep.subr.mxu0 0.0
  %v2672 = vand.u32 %v150, 4294901760
  %v2673 = vsub.f32 %v150, %v2672
  %v2674 = vand.u32 %v2673, 4294901760
  %v2675 = vsub.f32 %v2673, %v2674
  %v2676 = vand.u32 %v2675, 4294901760
  %2677 = vmatpush1.msra.mxu0 %v2676
  %2678 = vmatprep.subr.mxu0 0.0
  %v2679 = vand.u32 %v149, 4294901760
  %v2680 = vsub.f32 %v149, %v2679
  %v2681 = vand.u32 %v2680, 4294901760
  %v2682 = vsub.f32 %v2680, %v2681
  %v2683 = vand.u32 %v2682, 4294901760
  %2684 = vmatpush1.msra.mxu0 %v2683
  %2685 = vmatprep.subr.mxu0 0.0
  %2686 = vmatpush2.msra.mxu0 0.0
  %2687 = vmatprep.subr.mxu0 0.0
  %2688 = vmatpush2.msra.mxu0 0.0
  %2689 = vmatprep.subr.mxu0 0.0
  %2690 = vmatpush2.msra.mxu0 0.0
  %2691 = vmatprep.subr.mxu0 0.0
  %2692 = vmatpush2.msra.mxu0 0.0
  %2693 = vmatprep.subr.mxu0 0.0
  %2694 = vmatpush2.msra.mxu0 0.0
  %2695 = vmatprep.subr.mxu0 0.0
  %2696 = vmatpush2.msra.mxu0 0.0
  %2697 = vmatprep.subr.mxu0 0.0
  %2698 = vmatpush2.msra.mxu0 0.0
  %2699 = vmatprep.subr.mxu0 0.0
  %2700 = vmatpush2.msra.mxu0 0.0
  %2701 = vmatprep.subr.mxu0 0.0
  %2702 = vmatpush2.msra.mxu0 0.0
  %2703 = vmatprep.subr.mxu0 0.0
  %2704 = vmatpush2.msra.mxu0 0.0
  %2705 = vmatprep.subr.mxu0 0.0
  %2706 = vmatpush2.msra.mxu0 0.0
  %2707 = vmatprep.subr.mxu0 0.0
  %2708 = vmatpush2.msra.mxu0 0.0
  %2709 = vmatprep.subr.mxu0 0.0
  %2710 = vmatpush2.msra.mxu0 0.0
  %2711 = vmatprep.subr.mxu0 0.0
  %2712 = vmatpush2.msra.mxu0 0.0
  %2713 = vmatprep.subr.mxu0 0.0
  %2714 = vmatpush2.msra.mxu0 0.0
  %2715 = vmatprep.subr.mxu0 0.0
  %2716 = vmatpush2.msra.mxu0 0.0
  %2717 = vmatprep.mubr.f32.mxu0 0.0
  %v2718 = vand.u32 %v2125, 4294901760
  %2719 = vmatmul.mubr.f32.gmra.mxu0 %v2718
  %v2720 = vpop.f32.mrf.mxu0
  %v2721 = vadd.f32 %v2300, %v2720
  %v2722 = vpop.f32.mrf.mxu0
  %2723 = vmatprep.mubr.f32.mxu0 0.0
  %v2724 = vand.u32 %v2128, 4294901760
  %2725 = vmatmul.mubr.f32.gmra.mxu0 %v2724
  %v2726 = vpop.f32.mrf.mxu0
  %v2727 = vadd.f32 %v2310, %v2726
  %v2728 = vpop.f32.mrf.mxu0
  %2729 = vmatprep.mubr.f32.mxu0 0.0
  %v2730 = vand.u32 %v2131, 4294901760
  %2731 = vmatmul.mubr.f32.gmra.mxu0 %v2730
  %v2732 = vpop.f32.mrf.mxu0
  %v2733 = vadd.f32 %v2320, %v2732
  %v2734 = vpop.f32.mrf.mxu0
  %2735 = vmatprep.mubr.f32.mxu0 0.0
  %v2736 = vand.u32 %v2134, 4294901760
  %2737 = vmatmul.mubr.f32.gmra.mxu0 %v2736
  %v2738 = vpop.f32.mrf.mxu0
  %v2739 = vadd.f32 %v2330, %v2738
  %v2740 = vpop.f32.mrf.mxu0
  %2741 = vmatprep.mubr.f32.mxu0 0.0
  %v2742 = vand.u32 %v2137, 4294901760
  %2743 = vmatmul.mubr.f32.gmra.mxu0 %v2742
  %v2744 = vpop.f32.mrf.mxu0
  %v2745 = vadd.f32 %v2340, %v2744
  %v2746 = vpop.f32.mrf.mxu0
  %2747 = vmatprep.mubr.f32.mxu0 0.0
  %v2748 = vand.u32 %v2140, 4294901760
  %2749 = vmatmul.mubr.f32.gmra.mxu0 %v2748
  %v2750 = vpop.f32.mrf.mxu0
  %v2751 = vadd.f32 %v2350, %v2750
  %v2752 = vpop.f32.mrf.mxu0
  %2753 = vmatprep.mubr.f32.mxu0 0.0
  %v2754 = vand.u32 %v2143, 4294901760
  %2755 = vmatmul.mubr.f32.gmra.mxu0 %v2754
  %v2756 = vpop.f32.mrf.mxu0
  %v2757 = vadd.f32 %v2360, %v2756
  %v2758 = vpop.f32.mrf.mxu0
  %2759 = vmatprep.mubr.f32.mxu0 0.0
  %v2760 = vand.u32 %v2146, 4294901760
  %2761 = vmatmul.mubr.f32.gmra.mxu0 %v2760
  %v2762 = vpop.f32.mrf.mxu0
  %v2763 = vadd.f32 %v2370, %v2762
  %v2764 = vpop.f32.mrf.mxu0
  %2765 = vmatprep.mubr.f32.mxu0 0.0
  %v2766 = vand.u32 %v2149, 4294901760
  %2767 = vmatmul.mubr.f32.gmra.mxu0 %v2766
  %v2768 = vpop.f32.mrf.mxu0
  %v2769 = vadd.f32 %v2380, %v2768
  %v2770 = vpop.f32.mrf.mxu0
  %2771 = vmatprep.mubr.f32.mxu0 0.0
  %v2772 = vand.u32 %v2152, 4294901760
  %2773 = vmatmul.mubr.f32.gmra.mxu0 %v2772
  %v2774 = vpop.f32.mrf.mxu0
  %v2775 = vadd.f32 %v2390, %v2774
  %v2776 = vpop.f32.mrf.mxu0
  %2777 = vmatprep.mubr.f32.mxu0 0.0
  %v2778 = vand.u32 %v2155, 4294901760
  %2779 = vmatmul.mubr.f32.gmra.mxu0 %v2778
  %v2780 = vpop.f32.mrf.mxu0
  %v2781 = vadd.f32 %v2400, %v2780
  %v2782 = vpop.f32.mrf.mxu0
  %2783 = vmatprep.mubr.f32.mxu0 0.0
  %v2784 = vand.u32 %v2158, 4294901760
  %2785 = vmatmul.mubr.f32.gmra.mxu0 %v2784
  %v2786 = vpop.f32.mrf.mxu0
  %v2787 = vadd.f32 %v2410, %v2786
  %v2788 = vpop.f32.mrf.mxu0
  %2789 = vmatprep.mubr.f32.mxu0 0.0
  %v2790 = vand.u32 %v2161, 4294901760
  %2791 = vmatmul.mubr.f32.gmra.mxu0 %v2790
  %v2792 = vpop.f32.mrf.mxu0
  %v2793 = vadd.f32 %v2420, %v2792
  %v2794 = vpop.f32.mrf.mxu0
  %2795 = vmatprep.mubr.f32.mxu0 0.0
  %v2796 = vand.u32 %v2164, 4294901760
  %2797 = vmatmul.mubr.f32.gmra.mxu0 %v2796
  %v2798 = vpop.f32.mrf.mxu0
  %v2799 = vadd.f32 %v2430, %v2798
  %v2800 = vpop.f32.mrf.mxu0
  %2801 = vmatprep.mubr.f32.mxu0 0.0
  %v2802 = vand.u32 %v2167, 4294901760
  %2803 = vmatmul.mubr.f32.gmra.mxu0 %v2802
  %v2804 = vpop.f32.mrf.mxu0
  %v2805 = vadd.f32 %v2440, %v2804
  %v2806 = vpop.f32.mrf.mxu0
  %2807 = vmatprep.mubr.f32.mxu0 0.0
  %v2808 = vand.u32 %v2170, 4294901760
  %2809 = vmatmul.mubr.f32.gmra.mxu0 %v2808
  %v2810 = vpop.f32.mrf.mxu0
  %v2811 = vadd.f32 %v2450, %v2810
  %v2812 = vpop.f32.mrf.mxu0
  %2813 = vmatprep.mubr.f32.mxu0 0.0
  %v2814 = vand.u32 %v2173, 4294901760
  %2815 = vmatmul.mubr.f32.gmra.mxu0 %v2814
  %v2816 = vpop.f32.mrf.mxu0
  %v2817 = vadd.f32 %v2460, %v2816
  %v2818 = vpop.f32.mrf.mxu0
  %2819 = vmatprep.mubr.f32.mxu0 0.0
  %v2820 = vand.u32 %v2176, 4294901760
  %2821 = vmatmul.mubr.f32.gmra.mxu0 %v2820
  %v2822 = vpop.f32.mrf.mxu0
  %v2823 = vadd.f32 %v2470, %v2822
  %v2824 = vpop.f32.mrf.mxu0
  %2825 = vmatprep.mubr.f32.mxu0 0.0
  %v2826 = vand.u32 %v2179, 4294901760
  %2827 = vmatmul.mubr.f32.gmra.mxu0 %v2826
  %v2828 = vpop.f32.mrf.mxu0
  %v2829 = vadd.f32 %v2480, %v2828
  %v2830 = vpop.f32.mrf.mxu0
  %2831 = vmatprep.mubr.f32.mxu0 0.0
  %v2832 = vand.u32 %v2182, 4294901760
  %2833 = vmatmul.mubr.f32.gmra.mxu0 %v2832
  %v2834 = vpop.f32.mrf.mxu0
  %v2835 = vadd.f32 %v2490, %v2834
  %v2836 = vpop.f32.mrf.mxu0
  %2837 = vmatprep.mubr.f32.mxu0 0.0
  %v2838 = vand.u32 %v2185, 4294901760
  %2839 = vmatmul.mubr.f32.gmra.mxu0 %v2838
  %v2840 = vpop.f32.mrf.mxu0
  %v2841 = vadd.f32 %v2500, %v2840
  %v2842 = vpop.f32.mrf.mxu0
  %2843 = vmatprep.mubr.f32.mxu0 0.0
  %v2844 = vand.u32 %v2188, 4294901760
  %2845 = vmatmul.mubr.f32.gmra.mxu0 %v2844
  %v2846 = vpop.f32.mrf.mxu0
  %v2847 = vadd.f32 %v2510, %v2846
  %v2848 = vpop.f32.mrf.mxu0
  %2849 = vmatprep.mubr.f32.mxu0 0.0
  %v2850 = vand.u32 %v2191, 4294901760
  %2851 = vmatmul.mubr.f32.gmra.mxu0 %v2850
  %v2852 = vpop.f32.mrf.mxu0
  %v2853 = vadd.f32 %v2520, %v2852
  %v2854 = vpop.f32.mrf.mxu0
  %2855 = vmatprep.mubr.f32.mxu0 0.0
  %v2856 = vand.u32 %v2194, 4294901760
  %2857 = vmatmul.mubr.f32.gmra.mxu0 %v2856
  %v2858 = vpop.f32.mrf.mxu0
  %v2859 = vadd.f32 %v2530, %v2858
  %v2860 = vpop.f32.mrf.mxu0
  %2861 = vmatprep.mubr.f32.mxu0 0.0
  %v2862 = vand.u32 %v2197, 4294901760
  %2863 = vmatmul.mubr.f32.gmra.mxu0 %v2862
  %v2864 = vpop.f32.mrf.mxu0
  %v2865 = vadd.f32 %v2540, %v2864
  %v2866 = vpop.f32.mrf.mxu0
  %2867 = vmatprep.mubr.f32.mxu0 0.0
  %v2868 = vand.u32 %v2200, 4294901760
  %2869 = vmatmul.mubr.f32.gmra.mxu0 %v2868
  %v2870 = vpop.f32.mrf.mxu0
  %v2871 = vadd.f32 %v2550, %v2870
  %v2872 = vpop.f32.mrf.mxu0
  %2873 = vmatprep.mubr.f32.mxu0 0.0
  %v2874 = vand.u32 %v2203, 4294901760
  %2875 = vmatmul.mubr.f32.gmra.mxu0 %v2874
  %v2876 = vpop.f32.mrf.mxu0
  %v2877 = vadd.f32 %v2560, %v2876
  %v2878 = vpop.f32.mrf.mxu0
  %2879 = vmatprep.mubr.f32.mxu0 0.0
  %v2880 = vand.u32 %v2206, 4294901760
  %2881 = vmatmul.mubr.f32.gmra.mxu0 %v2880
  %v2882 = vpop.f32.mrf.mxu0
  %v2883 = vadd.f32 %v2570, %v2882
  %v2884 = vpop.f32.mrf.mxu0
  %2885 = vmatprep.mubr.f32.mxu0 0.0
  %v2886 = vand.u32 %v2209, 4294901760
  %2887 = vmatmul.mubr.f32.gmra.mxu0 %v2886
  %v2888 = vpop.f32.mrf.mxu0
  %v2889 = vadd.f32 %v2580, %v2888
  %v2890 = vpop.f32.mrf.mxu0
  %2891 = vmatprep.mubr.f32.mxu0 0.0
  %v2892 = vand.u32 %v2212, 4294901760
  %2893 = vmatmul.mubr.f32.gmra.mxu0 %v2892
  %v2894 = vpop.f32.mrf.mxu0
  %v2895 = vadd.f32 %v2590, %v2894
  %v2896 = vpop.f32.mrf.mxu0
  %2897 = vmatprep.mubr.f32.mxu0 0.0
  %v2898 = vand.u32 %v2215, 4294901760
  %2899 = vmatmul.mubr.f32.gmra.mxu0 %v2898
  %v2900 = vpop.f32.mrf.mxu0
  %v2901 = vadd.f32 %v2600, %v2900
  %v2902 = vpop.f32.mrf.mxu0
  %2903 = vmatprep.mubr.f32.mxu0 0.0
  %v2904 = vand.u32 %v2218, 4294901760
  %2905 = vmatmul.mubr.f32.gmra.mxu0 %v2904
  %v2906 = vpop.f32.mrf.mxu0
  %v2907 = vadd.f32 %v2610, %v2906
  %v2908 = vpop.f32.mrf.mxu0
  %2909 = vdwg.mxu0
  %2910 = vmatprep.subr.mxu0 0.0
  %2911 = vmatpush1.msra.mxu0 0.0
  %2912 = vmatprep.subr.mxu0 0.0
  %2913 = vmatpush1.msra.mxu0 0.0
  %2914 = vmatprep.subr.mxu0 0.0
  %2915 = vmatpush1.msra.mxu0 0.0
  %2916 = vmatprep.subr.mxu0 0.0
  %2917 = vmatpush1.msra.mxu0 0.0
  %2918 = vmatprep.subr.mxu0 0.0
  %2919 = vmatpush1.msra.mxu0 0.0
  %2920 = vmatprep.subr.mxu0 0.0
  %2921 = vmatpush1.msra.mxu0 0.0
  %2922 = vmatprep.subr.mxu0 0.0
  %2923 = vmatpush1.msra.mxu0 0.0
  %2924 = vmatprep.subr.mxu0 0.0
  %2925 = vmatpush1.msra.mxu0 0.0
  %2926 = vmatprep.subr.mxu0 0.0
  %v2927 = vand.u32 %v156, 4294901760
  %v2928 = vsub.f32 %v156, %v2927
  %2929 = vmatpush1.msra.mxu0 %v2928
  %2930 = vmatprep.subr.mxu0 0.0
  %v2931 = vand.u32 %v155, 4294901760
  %v2932 = vsub.f32 %v155, %v2931
  %2933 = vmatpush1.msra.mxu0 %v2932
  %2934 = vmatprep.subr.mxu0 0.0
  %v2935 = vand.u32 %v154, 4294901760
  %v2936 = vsub.f32 %v154, %v2935
  %2937 = vmatpush1.msra.mxu0 %v2936
  %2938 = vmatprep.subr.mxu0 0.0
  %v2939 = vand.u32 %v153, 4294901760
  %v2940 = vsub.f32 %v153, %v2939
  %2941 = vmatpush1.msra.mxu0 %v2940
  %2942 = vmatprep.subr.mxu0 0.0
  %v2943 = vand.u32 %v152, 4294901760
  %v2944 = vsub.f32 %v152, %v2943
  %2945 = vmatpush1.msra.mxu0 %v2944
  %2946 = vmatprep.subr.mxu0 0.0
  %v2947 = vand.u32 %v151, 4294901760
  %v2948 = vsub.f32 %v151, %v2947
  %2949 = vmatpush1.msra.mxu0 %v2948
  %2950 = vmatprep.subr.mxu0 0.0
  %v2951 = vand.u32 %v150, 4294901760
  %v2952 = vsub.f32 %v150, %v2951
  %2953 = vmatpush1.msra.mxu0 %v2952
  %2954 = vmatprep.subr.mxu0 0.0
  %v2955 = vand.u32 %v149, 4294901760
  %v2956 = vsub.f32 %v149, %v2955
  %2957 = vmatpush1.msra.mxu0 %v2956
  %2958 = vmatprep.subr.mxu0 0.0
  %2959 = vmatpush2.msra.mxu0 0.0
  %2960 = vmatprep.subr.mxu0 0.0
  %2961 = vmatpush2.msra.mxu0 0.0
  %2962 = vmatprep.subr.mxu0 0.0
  %2963 = vmatpush2.msra.mxu0 0.0
  %2964 = vmatprep.subr.mxu0 0.0
  %2965 = vmatpush2.msra.mxu0 0.0
  %2966 = vmatprep.subr.mxu0 0.0
  %2967 = vmatpush2.msra.mxu0 0.0
  %2968 = vmatprep.subr.mxu0 0.0
  %2969 = vmatpush2.msra.mxu0 0.0
  %2970 = vmatprep.subr.mxu0 0.0
  %2971 = vmatpush2.msra.mxu0 0.0
  %2972 = vmatprep.subr.mxu0 0.0
  %2973 = vmatpush2.msra.mxu0 0.0
  %2974 = vmatprep.subr.mxu0 0.0
  %2975 = vmatpush2.msra.mxu0 0.0
  %2976 = vmatprep.subr.mxu0 0.0
  %2977 = vmatpush2.msra.mxu0 0.0
  %2978 = vmatprep.subr.mxu0 0.0
  %2979 = vmatpush2.msra.mxu0 0.0
  %2980 = vmatprep.subr.mxu0 0.0
  %2981 = vmatpush2.msra.mxu0 0.0
  %2982 = vmatprep.subr.mxu0 0.0
  %2983 = vmatpush2.msra.mxu0 0.0
  %2984 = vmatprep.subr.mxu0 0.0
  %2985 = vmatpush2.msra.mxu0 0.0
  %2986 = vmatprep.subr.mxu0 0.0
  %2987 = vmatpush2.msra.mxu0 0.0
  %2988 = vmatprep.subr.mxu0 0.0
  %2989 = vmatpush2.msra.mxu0 0.0
  %2990 = vmatprep.mubr.f32.mxu0 0.0
  %v2991 = vand.u32 %v2125, 4294901760
  %v2992 = vsub.f32 %v2125, %v2991
  %2993 = vmatmul.mubr.f32.gmra.mxu0 %v2992
  %v2994 = vpop.f32.mrf.mxu0
  %v2995 = vadd.f32 %v2721, %v2994
  %v2996 = vpop.f32.mrf.mxu0
  %2997 = vmatprep.mubr.f32.mxu0 0.0
  %v2998 = vand.u32 %v2128, 4294901760
  %v2999 = vsub.f32 %v2128, %v2998
  %3000 = vmatmul.mubr.f32.gmra.mxu0 %v2999
  %v3001 = vpop.f32.mrf.mxu0
  %v3002 = vadd.f32 %v2727, %v3001
  %v3003 = vpop.f32.mrf.mxu0
  %3004 = vmatprep.mubr.f32.mxu0 0.0
  %v3005 = vand.u32 %v2131, 4294901760
  %v3006 = vsub.f32 %v2131, %v3005
  %3007 = vmatmul.mubr.f32.gmra.mxu0 %v3006
  %v3008 = vpop.f32.mrf.mxu0
  %v3009 = vadd.f32 %v2733, %v3008
  %v3010 = vpop.f32.mrf.mxu0
  %3011 = vmatprep.mubr.f32.mxu0 0.0
  %v3012 = vand.u32 %v2134, 4294901760
  %v3013 = vsub.f32 %v2134, %v3012
  %3014 = vmatmul.mubr.f32.gmra.mxu0 %v3013
  %v3015 = vpop.f32.mrf.mxu0
  %v3016 = vadd.f32 %v2739, %v3015
  %v3017 = vpop.f32.mrf.mxu0
  %3018 = vmatprep.mubr.f32.mxu0 0.0
  %v3019 = vand.u32 %v2137, 4294901760
  %v3020 = vsub.f32 %v2137, %v3019
  %3021 = vmatmul.mubr.f32.gmra.mxu0 %v3020
  %v3022 = vpop.f32.mrf.mxu0
  %v3023 = vadd.f32 %v2745, %v3022
  %v3024 = vpop.f32.mrf.mxu0
  %3025 = vmatprep.mubr.f32.mxu0 0.0
  %v3026 = vand.u32 %v2140, 4294901760
  %v3027 = vsub.f32 %v2140, %v3026
  %3028 = vmatmul.mubr.f32.gmra.mxu0 %v3027
  %v3029 = vpop.f32.mrf.mxu0
  %v3030 = vadd.f32 %v2751, %v3029
  %v3031 = vpop.f32.mrf.mxu0
  %3032 = vmatprep.mubr.f32.mxu0 0.0
  %v3033 = vand.u32 %v2143, 4294901760
  %v3034 = vsub.f32 %v2143, %v3033
  %3035 = vmatmul.mubr.f32.gmra.mxu0 %v3034
  %v3036 = vpop.f32.mrf.mxu0
  %v3037 = vadd.f32 %v2757, %v3036
  %v3038 = vpop.f32.mrf.mxu0
  %3039 = vmatprep.mubr.f32.mxu0 0.0
  %v3040 = vand.u32 %v2146, 4294901760
  %v3041 = vsub.f32 %v2146, %v3040
  %3042 = vmatmul.mubr.f32.gmra.mxu0 %v3041
  %v3043 = vpop.f32.mrf.mxu0
  %v3044 = vadd.f32 %v2763, %v3043
  %v3045 = vpop.f32.mrf.mxu0
  %3046 = vmatprep.mubr.f32.mxu0 0.0
  %v3047 = vand.u32 %v2149, 4294901760
  %v3048 = vsub.f32 %v2149, %v3047
  %3049 = vmatmul.mubr.f32.gmra.mxu0 %v3048
  %v3050 = vpop.f32.mrf.mxu0
  %v3051 = vadd.f32 %v2769, %v3050
  %v3052 = vpop.f32.mrf.mxu0
  %3053 = vmatprep.mubr.f32.mxu0 0.0
  %v3054 = vand.u32 %v2152, 4294901760
  %v3055 = vsub.f32 %v2152, %v3054
  %3056 = vmatmul.mubr.f32.gmra.mxu0 %v3055
  %v3057 = vpop.f32.mrf.mxu0
  %v3058 = vadd.f32 %v2775, %v3057
  %v3059 = vpop.f32.mrf.mxu0
  %3060 = vmatprep.mubr.f32.mxu0 0.0
  %v3061 = vand.u32 %v2155, 4294901760
  %v3062 = vsub.f32 %v2155, %v3061
  %3063 = vmatmul.mubr.f32.gmra.mxu0 %v3062
  %v3064 = vpop.f32.mrf.mxu0
  %v3065 = vadd.f32 %v2781, %v3064
  %v3066 = vpop.f32.mrf.mxu0
  %3067 = vmatprep.mubr.f32.mxu0 0.0
  %v3068 = vand.u32 %v2158, 4294901760
  %v3069 = vsub.f32 %v2158, %v3068
  %3070 = vmatmul.mubr.f32.gmra.mxu0 %v3069
  %v3071 = vpop.f32.mrf.mxu0
  %v3072 = vadd.f32 %v2787, %v3071
  %v3073 = vpop.f32.mrf.mxu0
  %3074 = vmatprep.mubr.f32.mxu0 0.0
  %v3075 = vand.u32 %v2161, 4294901760
  %v3076 = vsub.f32 %v2161, %v3075
  %3077 = vmatmul.mubr.f32.gmra.mxu0 %v3076
  %v3078 = vpop.f32.mrf.mxu0
  %v3079 = vadd.f32 %v2793, %v3078
  %v3080 = vpop.f32.mrf.mxu0
  %3081 = vmatprep.mubr.f32.mxu0 0.0
  %v3082 = vand.u32 %v2164, 4294901760
  %v3083 = vsub.f32 %v2164, %v3082
  %3084 = vmatmul.mubr.f32.gmra.mxu0 %v3083
  %v3085 = vpop.f32.mrf.mxu0
  %v3086 = vadd.f32 %v2799, %v3085
  %v3087 = vpop.f32.mrf.mxu0
  %3088 = vmatprep.mubr.f32.mxu0 0.0
  %v3089 = vand.u32 %v2167, 4294901760
  %v3090 = vsub.f32 %v2167, %v3089
  %3091 = vmatmul.mubr.f32.gmra.mxu0 %v3090
  %v3092 = vpop.f32.mrf.mxu0
  %v3093 = vadd.f32 %v2805, %v3092
  %v3094 = vpop.f32.mrf.mxu0
  %3095 = vmatprep.mubr.f32.mxu0 0.0
  %v3096 = vand.u32 %v2170, 4294901760
  %v3097 = vsub.f32 %v2170, %v3096
  %3098 = vmatmul.mubr.f32.gmra.mxu0 %v3097
  %v3099 = vpop.f32.mrf.mxu0
  %v3100 = vadd.f32 %v2811, %v3099
  %v3101 = vpop.f32.mrf.mxu0
  %3102 = vmatprep.mubr.f32.mxu0 0.0
  %v3103 = vand.u32 %v2173, 4294901760
  %v3104 = vsub.f32 %v2173, %v3103
  %3105 = vmatmul.mubr.f32.gmra.mxu0 %v3104
  %v3106 = vpop.f32.mrf.mxu0
  %v3107 = vadd.f32 %v2817, %v3106
  %v3108 = vpop.f32.mrf.mxu0
  %3109 = vmatprep.mubr.f32.mxu0 0.0
  %v3110 = vand.u32 %v2176, 4294901760
  %v3111 = vsub.f32 %v2176, %v3110
  %3112 = vmatmul.mubr.f32.gmra.mxu0 %v3111
  %v3113 = vpop.f32.mrf.mxu0
  %v3114 = vadd.f32 %v2823, %v3113
  %v3115 = vpop.f32.mrf.mxu0
  %3116 = vmatprep.mubr.f32.mxu0 0.0
  %v3117 = vand.u32 %v2179, 4294901760
  %v3118 = vsub.f32 %v2179, %v3117
  %3119 = vmatmul.mubr.f32.gmra.mxu0 %v3118
  %v3120 = vpop.f32.mrf.mxu0
  %v3121 = vadd.f32 %v2829, %v3120
  %v3122 = vpop.f32.mrf.mxu0
  %3123 = vmatprep.mubr.f32.mxu0 0.0
  %v3124 = vand.u32 %v2182, 4294901760
  %v3125 = vsub.f32 %v2182, %v3124
  %3126 = vmatmul.mubr.f32.gmra.mxu0 %v3125
  %v3127 = vpop.f32.mrf.mxu0
  %v3128 = vadd.f32 %v2835, %v3127
  %v3129 = vpop.f32.mrf.mxu0
  %3130 = vmatprep.mubr.f32.mxu0 0.0
  %v3131 = vand.u32 %v2185, 4294901760
  %v3132 = vsub.f32 %v2185, %v3131
  %3133 = vmatmul.mubr.f32.gmra.mxu0 %v3132
  %v3134 = vpop.f32.mrf.mxu0
  %v3135 = vadd.f32 %v2841, %v3134
  %v3136 = vpop.f32.mrf.mxu0
  %3137 = vmatprep.mubr.f32.mxu0 0.0
  %v3138 = vand.u32 %v2188, 4294901760
  %v3139 = vsub.f32 %v2188, %v3138
  %3140 = vmatmul.mubr.f32.gmra.mxu0 %v3139
  %v3141 = vpop.f32.mrf.mxu0
  %v3142 = vadd.f32 %v2847, %v3141
  %v3143 = vpop.f32.mrf.mxu0
  %3144 = vmatprep.mubr.f32.mxu0 0.0
  %v3145 = vand.u32 %v2191, 4294901760
  %v3146 = vsub.f32 %v2191, %v3145
  %3147 = vmatmul.mubr.f32.gmra.mxu0 %v3146
  %v3148 = vpop.f32.mrf.mxu0
  %v3149 = vadd.f32 %v2853, %v3148
  %v3150 = vpop.f32.mrf.mxu0
  %3151 = vmatprep.mubr.f32.mxu0 0.0
  %v3152 = vand.u32 %v2194, 4294901760
  %v3153 = vsub.f32 %v2194, %v3152
  %3154 = vmatmul.mubr.f32.gmra.mxu0 %v3153
  %v3155 = vpop.f32.mrf.mxu0
  %v3156 = vadd.f32 %v2859, %v3155
  %v3157 = vpop.f32.mrf.mxu0
  %3158 = vmatprep.mubr.f32.mxu0 0.0
  %v3159 = vand.u32 %v2197, 4294901760
  %v3160 = vsub.f32 %v2197, %v3159
  %3161 = vmatmul.mubr.f32.gmra.mxu0 %v3160
  %v3162 = vpop.f32.mrf.mxu0
  %v3163 = vadd.f32 %v2865, %v3162
  %v3164 = vpop.f32.mrf.mxu0
  %3165 = vmatprep.mubr.f32.mxu0 0.0
  %v3166 = vand.u32 %v2200, 4294901760
  %v3167 = vsub.f32 %v2200, %v3166
  %3168 = vmatmul.mubr.f32.gmra.mxu0 %v3167
  %v3169 = vpop.f32.mrf.mxu0
  %v3170 = vadd.f32 %v2871, %v3169
  %v3171 = vpop.f32.mrf.mxu0
  %3172 = vmatprep.mubr.f32.mxu0 0.0
  %v3173 = vand.u32 %v2203, 4294901760
  %v3174 = vsub.f32 %v2203, %v3173
  %3175 = vmatmul.mubr.f32.gmra.mxu0 %v3174
  %v3176 = vpop.f32.mrf.mxu0
  %v3177 = vadd.f32 %v2877, %v3176
  %v3178 = vpop.f32.mrf.mxu0
  %3179 = vmatprep.mubr.f32.mxu0 0.0
  %v3180 = vand.u32 %v2206, 4294901760
  %v3181 = vsub.f32 %v2206, %v3180
  %3182 = vmatmul.mubr.f32.gmra.mxu0 %v3181
  %v3183 = vpop.f32.mrf.mxu0
  %v3184 = vadd.f32 %v2883, %v3183
  %v3185 = vpop.f32.mrf.mxu0
  %3186 = vmatprep.mubr.f32.mxu0 0.0
  %v3187 = vand.u32 %v2209, 4294901760
  %v3188 = vsub.f32 %v2209, %v3187
  %3189 = vmatmul.mubr.f32.gmra.mxu0 %v3188
  %v3190 = vpop.f32.mrf.mxu0
  %v3191 = vadd.f32 %v2889, %v3190
  %v3192 = vpop.f32.mrf.mxu0
  %3193 = vmatprep.mubr.f32.mxu0 0.0
  %v3194 = vand.u32 %v2212, 4294901760
  %v3195 = vsub.f32 %v2212, %v3194
  %3196 = vmatmul.mubr.f32.gmra.mxu0 %v3195
  %v3197 = vpop.f32.mrf.mxu0
  %v3198 = vadd.f32 %v2895, %v3197
  %v3199 = vpop.f32.mrf.mxu0
  %3200 = vmatprep.mubr.f32.mxu0 0.0
  %v3201 = vand.u32 %v2215, 4294901760
  %v3202 = vsub.f32 %v2215, %v3201
  %3203 = vmatmul.mubr.f32.gmra.mxu0 %v3202
  %v3204 = vpop.f32.mrf.mxu0
  %v3205 = vadd.f32 %v2901, %v3204
  %v3206 = vpop.f32.mrf.mxu0
  %3207 = vmatprep.mubr.f32.mxu0 0.0
  %v3208 = vand.u32 %v2218, 4294901760
  %v3209 = vsub.f32 %v2218, %v3208
  %3210 = vmatmul.mubr.f32.gmra.mxu0 %v3209
  %v3211 = vpop.f32.mrf.mxu0
  %v3212 = vadd.f32 %v2907, %v3211
  %v3213 = vpop.f32.mrf.mxu0
  %3214 = vdwg.mxu0
  %3215 = vmatprep.subr.mxu0 0.0
  %3216 = vmatpush1.msra.mxu0 0.0
  %3217 = vmatprep.subr.mxu0 0.0
  %3218 = vmatpush1.msra.mxu0 0.0
  %3219 = vmatprep.subr.mxu0 0.0
  %3220 = vmatpush1.msra.mxu0 0.0
  %3221 = vmatprep.subr.mxu0 0.0
  %3222 = vmatpush1.msra.mxu0 0.0
  %3223 = vmatprep.subr.mxu0 0.0
  %3224 = vmatpush1.msra.mxu0 0.0
  %3225 = vmatprep.subr.mxu0 0.0
  %3226 = vmatpush1.msra.mxu0 0.0
  %3227 = vmatprep.subr.mxu0 0.0
  %3228 = vmatpush1.msra.mxu0 0.0
  %3229 = vmatprep.subr.mxu0 0.0
  %3230 = vmatpush1.msra.mxu0 0.0
  %3231 = vmatprep.subr.mxu0 0.0
  %v3232 = vand.u32 %v156, 4294901760
  %3233 = vmatpush1.msra.mxu0 %v3232
  %3234 = vmatprep.subr.mxu0 0.0
  %v3235 = vand.u32 %v155, 4294901760
  %3236 = vmatpush1.msra.mxu0 %v3235
  %3237 = vmatprep.subr.mxu0 0.0
  %v3238 = vand.u32 %v154, 4294901760
  %3239 = vmatpush1.msra.mxu0 %v3238
  %3240 = vmatprep.subr.mxu0 0.0
  %v3241 = vand.u32 %v153, 4294901760
  %3242 = vmatpush1.msra.mxu0 %v3241
  %3243 = vmatprep.subr.mxu0 0.0
  %v3244 = vand.u32 %v152, 4294901760
  %3245 = vmatpush1.msra.mxu0 %v3244
  %3246 = vmatprep.subr.mxu0 0.0
  %v3247 = vand.u32 %v151, 4294901760
  %3248 = vmatpush1.msra.mxu0 %v3247
  %3249 = vmatprep.subr.mxu0 0.0
  %v3250 = vand.u32 %v150, 4294901760
  %3251 = vmatpush1.msra.mxu0 %v3250
  %3252 = vmatprep.subr.mxu0 0.0
  %v3253 = vand.u32 %v149, 4294901760
  %3254 = vmatpush1.msra.mxu0 %v3253
  %3255 = vmatprep.subr.mxu0 0.0
  %3256 = vmatpush2.msra.mxu0 0.0
  %3257 = vmatprep.subr.mxu0 0.0
  %3258 = vmatpush2.msra.mxu0 0.0
  %3259 = vmatprep.subr.mxu0 0.0
  %3260 = vmatpush2.msra.mxu0 0.0
  %3261 = vmatprep.subr.mxu0 0.0
  %3262 = vmatpush2.msra.mxu0 0.0
  %3263 = vmatprep.subr.mxu0 0.0
  %3264 = vmatpush2.msra.mxu0 0.0
  %3265 = vmatprep.subr.mxu0 0.0
  %3266 = vmatpush2.msra.mxu0 0.0
  %3267 = vmatprep.subr.mxu0 0.0
  %3268 = vmatpush2.msra.mxu0 0.0
  %3269 = vmatprep.subr.mxu0 0.0
  %3270 = vmatpush2.msra.mxu0 0.0
  %3271 = vmatprep.subr.mxu0 0.0
  %3272 = vmatpush2.msra.mxu0 0.0
  %3273 = vmatprep.subr.mxu0 0.0
  %3274 = vmatpush2.msra.mxu0 0.0
  %3275 = vmatprep.subr.mxu0 0.0
  %3276 = vmatpush2.msra.mxu0 0.0
  %3277 = vmatprep.subr.mxu0 0.0
  %3278 = vmatpush2.msra.mxu0 0.0
  %3279 = vmatprep.subr.mxu0 0.0
  %3280 = vmatpush2.msra.mxu0 0.0
  %3281 = vmatprep.subr.mxu0 0.0
  %3282 = vmatpush2.msra.mxu0 0.0
  %3283 = vmatprep.subr.mxu0 0.0
  %3284 = vmatpush2.msra.mxu0 0.0
  %3285 = vmatprep.subr.mxu0 0.0
  %3286 = vmatpush2.msra.mxu0 0.0
  %3287 = vmatprep.mubr.f32.mxu0 0.0
  %v3288 = vand.u32 %v2125, 4294901760
  %v3289 = vsub.f32 %v2125, %v3288
  %v3290 = vand.u32 %v3289, 4294901760
  %3291 = vmatmul.mubr.f32.gmra.mxu0 %v3290
  %v3292 = vpop.f32.mrf.mxu0
  %v3293 = vadd.f32 %v2995, %v3292
  %v3294 = vpop.f32.mrf.mxu0
  %3295 = vmatprep.mubr.f32.mxu0 0.0
  %v3296 = vand.u32 %v2128, 4294901760
  %v3297 = vsub.f32 %v2128, %v3296
  %v3298 = vand.u32 %v3297, 4294901760
  %3299 = vmatmul.mubr.f32.gmra.mxu0 %v3298
  %v3300 = vpop.f32.mrf.mxu0
  %v3301 = vadd.f32 %v3002, %v3300
  %v3302 = vpop.f32.mrf.mxu0
  %3303 = vmatprep.mubr.f32.mxu0 0.0
  %v3304 = vand.u32 %v2131, 4294901760
  %v3305 = vsub.f32 %v2131, %v3304
  %v3306 = vand.u32 %v3305, 4294901760
  %3307 = vmatmul.mubr.f32.gmra.mxu0 %v3306
  %v3308 = vpop.f32.mrf.mxu0
  %v3309 = vadd.f32 %v3009, %v3308
  %v3310 = vpop.f32.mrf.mxu0
  %3311 = vmatprep.mubr.f32.mxu0 0.0
  %v3312 = vand.u32 %v2134, 4294901760
  %v3313 = vsub.f32 %v2134, %v3312
  %v3314 = vand.u32 %v3313, 4294901760
  %3315 = vmatmul.mubr.f32.gmra.mxu0 %v3314
  %v3316 = vpop.f32.mrf.mxu0
  %v3317 = vadd.f32 %v3016, %v3316
  %v3318 = vpop.f32.mrf.mxu0
  %3319 = vmatprep.mubr.f32.mxu0 0.0
  %v3320 = vand.u32 %v2137, 4294901760
  %v3321 = vsub.f32 %v2137, %v3320
  %v3322 = vand.u32 %v3321, 4294901760
  %3323 = vmatmul.mubr.f32.gmra.mxu0 %v3322
  %v3324 = vpop.f32.mrf.mxu0
  %v3325 = vadd.f32 %v3023, %v3324
  %v3326 = vpop.f32.mrf.mxu0
  %3327 = vmatprep.mubr.f32.mxu0 0.0
  %v3328 = vand.u32 %v2140, 4294901760
  %v3329 = vsub.f32 %v2140, %v3328
  %v3330 = vand.u32 %v3329, 4294901760
  %3331 = vmatmul.mubr.f32.gmra.mxu0 %v3330
  %v3332 = vpop.f32.mrf.mxu0
  %v3333 = vadd.f32 %v3030, %v3332
  %v3334 = vpop.f32.mrf.mxu0
  %3335 = vmatprep.mubr.f32.mxu0 0.0
  %v3336 = vand.u32 %v2143, 4294901760
  %v3337 = vsub.f32 %v2143, %v3336
  %v3338 = vand.u32 %v3337, 4294901760
  %3339 = vmatmul.mubr.f32.gmra.mxu0 %v3338
  %v3340 = vpop.f32.mrf.mxu0
  %v3341 = vadd.f32 %v3037, %v3340
  %v3342 = vpop.f32.mrf.mxu0
  %3343 = vmatprep.mubr.f32.mxu0 0.0
  %v3344 = vand.u32 %v2146, 4294901760
  %v3345 = vsub.f32 %v2146, %v3344
  %v3346 = vand.u32 %v3345, 4294901760
  %3347 = vmatmul.mubr.f32.gmra.mxu0 %v3346
  %v3348 = vpop.f32.mrf.mxu0
  %v3349 = vadd.f32 %v3044, %v3348
  %v3350 = vpop.f32.mrf.mxu0
  %3351 = vmatprep.mubr.f32.mxu0 0.0
  %v3352 = vand.u32 %v2149, 4294901760
  %v3353 = vsub.f32 %v2149, %v3352
  %v3354 = vand.u32 %v3353, 4294901760
  %3355 = vmatmul.mubr.f32.gmra.mxu0 %v3354
  %v3356 = vpop.f32.mrf.mxu0
  %v3357 = vadd.f32 %v3051, %v3356
  %v3358 = vpop.f32.mrf.mxu0
  %3359 = vmatprep.mubr.f32.mxu0 0.0
  %v3360 = vand.u32 %v2152, 4294901760
  %v3361 = vsub.f32 %v2152, %v3360
  %v3362 = vand.u32 %v3361, 4294901760
  %3363 = vmatmul.mubr.f32.gmra.mxu0 %v3362
  %v3364 = vpop.f32.mrf.mxu0
  %v3365 = vadd.f32 %v3058, %v3364
  %v3366 = vpop.f32.mrf.mxu0
  %3367 = vmatprep.mubr.f32.mxu0 0.0
  %v3368 = vand.u32 %v2155, 4294901760
  %v3369 = vsub.f32 %v2155, %v3368
  %v3370 = vand.u32 %v3369, 4294901760
  %3371 = vmatmul.mubr.f32.gmra.mxu0 %v3370
  %v3372 = vpop.f32.mrf.mxu0
  %v3373 = vadd.f32 %v3065, %v3372
  %v3374 = vpop.f32.mrf.mxu0
  %3375 = vmatprep.mubr.f32.mxu0 0.0
  %v3376 = vand.u32 %v2158, 4294901760
  %v3377 = vsub.f32 %v2158, %v3376
  %v3378 = vand.u32 %v3377, 4294901760
  %3379 = vmatmul.mubr.f32.gmra.mxu0 %v3378
  %v3380 = vpop.f32.mrf.mxu0
  %v3381 = vadd.f32 %v3072, %v3380
  %v3382 = vpop.f32.mrf.mxu0
  %3383 = vmatprep.mubr.f32.mxu0 0.0
  %v3384 = vand.u32 %v2161, 4294901760
  %v3385 = vsub.f32 %v2161, %v3384
  %v3386 = vand.u32 %v3385, 4294901760
  %3387 = vmatmul.mubr.f32.gmra.mxu0 %v3386
  %v3388 = vpop.f32.mrf.mxu0
  %v3389 = vadd.f32 %v3079, %v3388
  %v3390 = vpop.f32.mrf.mxu0
  %3391 = vmatprep.mubr.f32.mxu0 0.0
  %v3392 = vand.u32 %v2164, 4294901760
  %v3393 = vsub.f32 %v2164, %v3392
  %v3394 = vand.u32 %v3393, 4294901760
  %3395 = vmatmul.mubr.f32.gmra.mxu0 %v3394
  %v3396 = vpop.f32.mrf.mxu0
  %v3397 = vadd.f32 %v3086, %v3396
  %v3398 = vpop.f32.mrf.mxu0
  %3399 = vmatprep.mubr.f32.mxu0 0.0
  %v3400 = vand.u32 %v2167, 4294901760
  %v3401 = vsub.f32 %v2167, %v3400
  %v3402 = vand.u32 %v3401, 4294901760
  %3403 = vmatmul.mubr.f32.gmra.mxu0 %v3402
  %v3404 = vpop.f32.mrf.mxu0
  %v3405 = vadd.f32 %v3093, %v3404
  %v3406 = vpop.f32.mrf.mxu0
  %3407 = vmatprep.mubr.f32.mxu0 0.0
  %v3408 = vand.u32 %v2170, 4294901760
  %v3409 = vsub.f32 %v2170, %v3408
  %v3410 = vand.u32 %v3409, 4294901760
  %3411 = vmatmul.mubr.f32.gmra.mxu0 %v3410
  %v3412 = vpop.f32.mrf.mxu0
  %v3413 = vadd.f32 %v3100, %v3412
  %v3414 = vpop.f32.mrf.mxu0
  %3415 = vmatprep.mubr.f32.mxu0 0.0
  %v3416 = vand.u32 %v2173, 4294901760
  %v3417 = vsub.f32 %v2173, %v3416
  %v3418 = vand.u32 %v3417, 4294901760
  %3419 = vmatmul.mubr.f32.gmra.mxu0 %v3418
  %v3420 = vpop.f32.mrf.mxu0
  %v3421 = vadd.f32 %v3107, %v3420
  %v3422 = vpop.f32.mrf.mxu0
  %3423 = vmatprep.mubr.f32.mxu0 0.0
  %v3424 = vand.u32 %v2176, 4294901760
  %v3425 = vsub.f32 %v2176, %v3424
  %v3426 = vand.u32 %v3425, 4294901760
  %3427 = vmatmul.mubr.f32.gmra.mxu0 %v3426
  %v3428 = vpop.f32.mrf.mxu0
  %v3429 = vadd.f32 %v3114, %v3428
  %v3430 = vpop.f32.mrf.mxu0
  %3431 = vmatprep.mubr.f32.mxu0 0.0
  %v3432 = vand.u32 %v2179, 4294901760
  %v3433 = vsub.f32 %v2179, %v3432
  %v3434 = vand.u32 %v3433, 4294901760
  %3435 = vmatmul.mubr.f32.gmra.mxu0 %v3434
  %v3436 = vpop.f32.mrf.mxu0
  %v3437 = vadd.f32 %v3121, %v3436
  %v3438 = vpop.f32.mrf.mxu0
  %3439 = vmatprep.mubr.f32.mxu0 0.0
  %v3440 = vand.u32 %v2182, 4294901760
  %v3441 = vsub.f32 %v2182, %v3440
  %v3442 = vand.u32 %v3441, 4294901760
  %3443 = vmatmul.mubr.f32.gmra.mxu0 %v3442
  %v3444 = vpop.f32.mrf.mxu0
  %v3445 = vadd.f32 %v3128, %v3444
  %v3446 = vpop.f32.mrf.mxu0
  %3447 = vmatprep.mubr.f32.mxu0 0.0
  %v3448 = vand.u32 %v2185, 4294901760
  %v3449 = vsub.f32 %v2185, %v3448
  %v3450 = vand.u32 %v3449, 4294901760
  %3451 = vmatmul.mubr.f32.gmra.mxu0 %v3450
  %v3452 = vpop.f32.mrf.mxu0
  %v3453 = vadd.f32 %v3135, %v3452
  %v3454 = vpop.f32.mrf.mxu0
  %3455 = vmatprep.mubr.f32.mxu0 0.0
  %v3456 = vand.u32 %v2188, 4294901760
  %v3457 = vsub.f32 %v2188, %v3456
  %v3458 = vand.u32 %v3457, 4294901760
  %3459 = vmatmul.mubr.f32.gmra.mxu0 %v3458
  %v3460 = vpop.f32.mrf.mxu0
  %v3461 = vadd.f32 %v3142, %v3460
  %v3462 = vpop.f32.mrf.mxu0
  %3463 = vmatprep.mubr.f32.mxu0 0.0
  %v3464 = vand.u32 %v2191, 4294901760
  %v3465 = vsub.f32 %v2191, %v3464
  %v3466 = vand.u32 %v3465, 4294901760
  %3467 = vmatmul.mubr.f32.gmra.mxu0 %v3466
  %v3468 = vpop.f32.mrf.mxu0
  %v3469 = vadd.f32 %v3149, %v3468
  %v3470 = vpop.f32.mrf.mxu0
  %3471 = vmatprep.mubr.f32.mxu0 0.0
  %v3472 = vand.u32 %v2194, 4294901760
  %v3473 = vsub.f32 %v2194, %v3472
  %v3474 = vand.u32 %v3473, 4294901760
  %3475 = vmatmul.mubr.f32.gmra.mxu0 %v3474
  %v3476 = vpop.f32.mrf.mxu0
  %v3477 = vadd.f32 %v3156, %v3476
  %v3478 = vpop.f32.mrf.mxu0
  %3479 = vmatprep.mubr.f32.mxu0 0.0
  %v3480 = vand.u32 %v2197, 4294901760
  %v3481 = vsub.f32 %v2197, %v3480
  %v3482 = vand.u32 %v3481, 4294901760
  %3483 = vmatmul.mubr.f32.gmra.mxu0 %v3482
  %v3484 = vpop.f32.mrf.mxu0
  %v3485 = vadd.f32 %v3163, %v3484
  %v3486 = vpop.f32.mrf.mxu0
  %3487 = vmatprep.mubr.f32.mxu0 0.0
  %v3488 = vand.u32 %v2200, 4294901760
  %v3489 = vsub.f32 %v2200, %v3488
  %v3490 = vand.u32 %v3489, 4294901760
  %3491 = vmatmul.mubr.f32.gmra.mxu0 %v3490
  %v3492 = vpop.f32.mrf.mxu0
  %v3493 = vadd.f32 %v3170, %v3492
  %v3494 = vpop.f32.mrf.mxu0
  %3495 = vmatprep.mubr.f32.mxu0 0.0
  %v3496 = vand.u32 %v2203, 4294901760
  %v3497 = vsub.f32 %v2203, %v3496
  %v3498 = vand.u32 %v3497, 4294901760
  %3499 = vmatmul.mubr.f32.gmra.mxu0 %v3498
  %v3500 = vpop.f32.mrf.mxu0
  %v3501 = vadd.f32 %v3177, %v3500
  %v3502 = vpop.f32.mrf.mxu0
  %3503 = vmatprep.mubr.f32.mxu0 0.0
  %v3504 = vand.u32 %v2206, 4294901760
  %v3505 = vsub.f32 %v2206, %v3504
  %v3506 = vand.u32 %v3505, 4294901760
  %3507 = vmatmul.mubr.f32.gmra.mxu0 %v3506
  %v3508 = vpop.f32.mrf.mxu0
  %v3509 = vadd.f32 %v3184, %v3508
  %v3510 = vpop.f32.mrf.mxu0
  %3511 = vmatprep.mubr.f32.mxu0 0.0
  %v3512 = vand.u32 %v2209, 4294901760
  %v3513 = vsub.f32 %v2209, %v3512
  %v3514 = vand.u32 %v3513, 4294901760
  %3515 = vmatmul.mubr.f32.gmra.mxu0 %v3514
  %v3516 = vpop.f32.mrf.mxu0
  %v3517 = vadd.f32 %v3191, %v3516
  %v3518 = vpop.f32.mrf.mxu0
  %3519 = vmatprep.mubr.f32.mxu0 0.0
  %v3520 = vand.u32 %v2212, 4294901760
  %v3521 = vsub.f32 %v2212, %v3520
  %v3522 = vand.u32 %v3521, 4294901760
  %3523 = vmatmul.mubr.f32.gmra.mxu0 %v3522
  %v3524 = vpop.f32.mrf.mxu0
  %v3525 = vadd.f32 %v3198, %v3524
  %v3526 = vpop.f32.mrf.mxu0
  %3527 = vmatprep.mubr.f32.mxu0 0.0
  %v3528 = vand.u32 %v2215, 4294901760
  %v3529 = vsub.f32 %v2215, %v3528
  %v3530 = vand.u32 %v3529, 4294901760
  %3531 = vmatmul.mubr.f32.gmra.mxu0 %v3530
  %v3532 = vpop.f32.mrf.mxu0
  %v3533 = vadd.f32 %v3205, %v3532
  %v3534 = vpop.f32.mrf.mxu0
  %3535 = vmatprep.mubr.f32.mxu0 0.0
  %v3536 = vand.u32 %v2218, 4294901760
  %v3537 = vsub.f32 %v2218, %v3536
  %v3538 = vand.u32 %v3537, 4294901760
  %3539 = vmatmul.mubr.f32.gmra.mxu0 %v3538
  %v3540 = vpop.f32.mrf.mxu0
  %v3541 = vadd.f32 %v3212, %v3540
  %v3542 = vpop.f32.mrf.mxu0
  %3543 = vdwg.mxu0
  %3544 = vmatprep.subr.mxu0 0.0
  %3545 = vmatpush1.msra.mxu0 0.0
  %3546 = vmatprep.subr.mxu0 0.0
  %3547 = vmatpush1.msra.mxu0 0.0
  %3548 = vmatprep.subr.mxu0 0.0
  %3549 = vmatpush1.msra.mxu0 0.0
  %3550 = vmatprep.subr.mxu0 0.0
  %3551 = vmatpush1.msra.mxu0 0.0
  %3552 = vmatprep.subr.mxu0 0.0
  %3553 = vmatpush1.msra.mxu0 0.0
  %3554 = vmatprep.subr.mxu0 0.0
  %3555 = vmatpush1.msra.mxu0 0.0
  %3556 = vmatprep.subr.mxu0 0.0
  %3557 = vmatpush1.msra.mxu0 0.0
  %3558 = vmatprep.subr.mxu0 0.0
  %3559 = vmatpush1.msra.mxu0 0.0
  %3560 = vmatprep.subr.mxu0 0.0
  %v3561 = vand.u32 %v156, 4294901760
  %v3562 = vsub.f32 %v156, %v3561
  %v3563 = vand.u32 %v3562, 4294901760
  %3564 = vmatpush1.msra.mxu0 %v3563
  %3565 = vmatprep.subr.mxu0 0.0
  %v3566 = vand.u32 %v155, 4294901760
  %v3567 = vsub.f32 %v155, %v3566
  %v3568 = vand.u32 %v3567, 4294901760
  %3569 = vmatpush1.msra.mxu0 %v3568
  %3570 = vmatprep.subr.mxu0 0.0
  %v3571 = vand.u32 %v154, 4294901760
  %v3572 = vsub.f32 %v154, %v3571
  %v3573 = vand.u32 %v3572, 4294901760
  %3574 = vmatpush1.msra.mxu0 %v3573
  %3575 = vmatprep.subr.mxu0 0.0
  %v3576 = vand.u32 %v153, 4294901760
  %v3577 = vsub.f32 %v153, %v3576
  %v3578 = vand.u32 %v3577, 4294901760
  %3579 = vmatpush1.msra.mxu0 %v3578
  %3580 = vmatprep.subr.mxu0 0.0
  %v3581 = vand.u32 %v152, 4294901760
  %v3582 = vsub.f32 %v152, %v3581
  %v3583 = vand.u32 %v3582, 4294901760
  %3584 = vmatpush1.msra.mxu0 %v3583
  %3585 = vmatprep.subr.mxu0 0.0
  %v3586 = vand.u32 %v151, 4294901760
  %v3587 = vsub.f32 %v151, %v3586
  %v3588 = vand.u32 %v3587, 4294901760
  %3589 = vmatpush1.msra.mxu0 %v3588
  %3590 = vmatprep.subr.mxu0 0.0
  %v3591 = vand.u32 %v150, 4294901760
  %v3592 = vsub.f32 %v150, %v3591
  %v3593 = vand.u32 %v3592, 4294901760
  %3594 = vmatpush1.msra.mxu0 %v3593
  %3595 = vmatprep.subr.mxu0 0.0
  %v3596 = vand.u32 %v149, 4294901760
  %v3597 = vsub.f32 %v149, %v3596
  %v3598 = vand.u32 %v3597, 4294901760
  %3599 = vmatpush1.msra.mxu0 %v3598
  %3600 = vmatprep.subr.mxu0 0.0
  %3601 = vmatpush2.msra.mxu0 0.0
  %3602 = vmatprep.subr.mxu0 0.0
  %3603 = vmatpush2.msra.mxu0 0.0
  %3604 = vmatprep.subr.mxu0 0.0
  %3605 = vmatpush2.msra.mxu0 0.0
  %3606 = vmatprep.subr.mxu0 0.0
  %3607 = vmatpush2.msra.mxu0 0.0
  %3608 = vmatprep.subr.mxu0 0.0
  %3609 = vmatpush2.msra.mxu0 0.0
  %3610 = vmatprep.subr.mxu0 0.0
  %3611 = vmatpush2.msra.mxu0 0.0
  %3612 = vmatprep.subr.mxu0 0.0
  %3613 = vmatpush2.msra.mxu0 0.0
  %3614 = vmatprep.subr.mxu0 0.0
  %3615 = vmatpush2.msra.mxu0 0.0
  %3616 = vmatprep.subr.mxu0 0.0
  %3617 = vmatpush2.msra.mxu0 0.0
  %3618 = vmatprep.subr.mxu0 0.0
  %3619 = vmatpush2.msra.mxu0 0.0
  %3620 = vmatprep.subr.mxu0 0.0
  %3621 = vmatpush2.msra.mxu0 0.0
  %3622 = vmatprep.subr.mxu0 0.0
  %3623 = vmatpush2.msra.mxu0 0.0
  %3624 = vmatprep.subr.mxu0 0.0
  %3625 = vmatpush2.msra.mxu0 0.0
  %3626 = vmatprep.subr.mxu0 0.0
  %3627 = vmatpush2.msra.mxu0 0.0
  %3628 = vmatprep.subr.mxu0 0.0
  %3629 = vmatpush2.msra.mxu0 0.0
  %3630 = vmatprep.subr.mxu0 0.0
  %3631 = vmatpush2.msra.mxu0 0.0
  %3632 = vmatprep.mubr.f32.mxu0 0.0
  %v3633 = vand.u32 %v2125, 4294901760
  %3634 = vmatmul.mubr.f32.gmra.mxu0 %v3633
  %v3635 = vpop.f32.mrf.mxu0
  %v3636 = vadd.f32 %v3293, %v3635
  %v3637 = vpop.f32.mrf.mxu0
  %3638 = vmatprep.mubr.f32.mxu0 0.0
  %v3639 = vand.u32 %v2128, 4294901760
  %3640 = vmatmul.mubr.f32.gmra.mxu0 %v3639
  %v3641 = vpop.f32.mrf.mxu0
  %v3642 = vadd.f32 %v3301, %v3641
  %v3643 = vpop.f32.mrf.mxu0
  %3644 = vmatprep.mubr.f32.mxu0 0.0
  %v3645 = vand.u32 %v2131, 4294901760
  %3646 = vmatmul.mubr.f32.gmra.mxu0 %v3645
  %v3647 = vpop.f32.mrf.mxu0
  %v3648 = vadd.f32 %v3309, %v3647
  %v3649 = vpop.f32.mrf.mxu0
  %3650 = vmatprep.mubr.f32.mxu0 0.0
  %v3651 = vand.u32 %v2134, 4294901760
  %3652 = vmatmul.mubr.f32.gmra.mxu0 %v3651
  %v3653 = vpop.f32.mrf.mxu0
  %v3654 = vadd.f32 %v3317, %v3653
  %v3655 = vpop.f32.mrf.mxu0
  %3656 = vmatprep.mubr.f32.mxu0 0.0
  %v3657 = vand.u32 %v2137, 4294901760
  %3658 = vmatmul.mubr.f32.gmra.mxu0 %v3657
  %v3659 = vpop.f32.mrf.mxu0
  %v3660 = vadd.f32 %v3325, %v3659
  %v3661 = vpop.f32.mrf.mxu0
  %3662 = vmatprep.mubr.f32.mxu0 0.0
  %v3663 = vand.u32 %v2140, 4294901760
  %3664 = vmatmul.mubr.f32.gmra.mxu0 %v3663
  %v3665 = vpop.f32.mrf.mxu0
  %v3666 = vadd.f32 %v3333, %v3665
  %v3667 = vpop.f32.mrf.mxu0
  %3668 = vmatprep.mubr.f32.mxu0 0.0
  %v3669 = vand.u32 %v2143, 4294901760
  %3670 = vmatmul.mubr.f32.gmra.mxu0 %v3669
  %v3671 = vpop.f32.mrf.mxu0
  %v3672 = vadd.f32 %v3341, %v3671
  %v3673 = vpop.f32.mrf.mxu0
  %3674 = vmatprep.mubr.f32.mxu0 0.0
  %v3675 = vand.u32 %v2146, 4294901760
  %3676 = vmatmul.mubr.f32.gmra.mxu0 %v3675
  %v3677 = vpop.f32.mrf.mxu0
  %v3678 = vadd.f32 %v3349, %v3677
  %v3679 = vpop.f32.mrf.mxu0
  %3680 = vmatprep.mubr.f32.mxu0 0.0
  %v3681 = vand.u32 %v2149, 4294901760
  %3682 = vmatmul.mubr.f32.gmra.mxu0 %v3681
  %v3683 = vpop.f32.mrf.mxu0
  %v3684 = vadd.f32 %v3357, %v3683
  %v3685 = vpop.f32.mrf.mxu0
  %3686 = vmatprep.mubr.f32.mxu0 0.0
  %v3687 = vand.u32 %v2152, 4294901760
  %3688 = vmatmul.mubr.f32.gmra.mxu0 %v3687
  %v3689 = vpop.f32.mrf.mxu0
  %v3690 = vadd.f32 %v3365, %v3689
  %v3691 = vpop.f32.mrf.mxu0
  %3692 = vmatprep.mubr.f32.mxu0 0.0
  %v3693 = vand.u32 %v2155, 4294901760
  %3694 = vmatmul.mubr.f32.gmra.mxu0 %v3693
  %v3695 = vpop.f32.mrf.mxu0
  %v3696 = vadd.f32 %v3373, %v3695
  %v3697 = vpop.f32.mrf.mxu0
  %3698 = vmatprep.mubr.f32.mxu0 0.0
  %v3699 = vand.u32 %v2158, 4294901760
  %3700 = vmatmul.mubr.f32.gmra.mxu0 %v3699
  %v3701 = vpop.f32.mrf.mxu0
  %v3702 = vadd.f32 %v3381, %v3701
  %v3703 = vpop.f32.mrf.mxu0
  %3704 = vmatprep.mubr.f32.mxu0 0.0
  %v3705 = vand.u32 %v2161, 4294901760
  %3706 = vmatmul.mubr.f32.gmra.mxu0 %v3705
  %v3707 = vpop.f32.mrf.mxu0
  %v3708 = vadd.f32 %v3389, %v3707
  %v3709 = vpop.f32.mrf.mxu0
  %3710 = vmatprep.mubr.f32.mxu0 0.0
  %v3711 = vand.u32 %v2164, 4294901760
  %3712 = vmatmul.mubr.f32.gmra.mxu0 %v3711
  %v3713 = vpop.f32.mrf.mxu0
  %v3714 = vadd.f32 %v3397, %v3713
  %v3715 = vpop.f32.mrf.mxu0
  %3716 = vmatprep.mubr.f32.mxu0 0.0
  %v3717 = vand.u32 %v2167, 4294901760
  %3718 = vmatmul.mubr.f32.gmra.mxu0 %v3717
  %v3719 = vpop.f32.mrf.mxu0
  %v3720 = vadd.f32 %v3405, %v3719
  %v3721 = vpop.f32.mrf.mxu0
  %3722 = vmatprep.mubr.f32.mxu0 0.0
  %v3723 = vand.u32 %v2170, 4294901760
  %3724 = vmatmul.mubr.f32.gmra.mxu0 %v3723
  %v3725 = vpop.f32.mrf.mxu0
  %v3726 = vadd.f32 %v3413, %v3725
  %v3727 = vpop.f32.mrf.mxu0
  %3728 = vmatprep.mubr.f32.mxu0 0.0
  %v3729 = vand.u32 %v2173, 4294901760
  %3730 = vmatmul.mubr.f32.gmra.mxu0 %v3729
  %v3731 = vpop.f32.mrf.mxu0
  %v3732 = vadd.f32 %v3421, %v3731
  %v3733 = vpop.f32.mrf.mxu0
  %3734 = vmatprep.mubr.f32.mxu0 0.0
  %v3735 = vand.u32 %v2176, 4294901760
  %3736 = vmatmul.mubr.f32.gmra.mxu0 %v3735
  %v3737 = vpop.f32.mrf.mxu0
  %v3738 = vadd.f32 %v3429, %v3737
  %v3739 = vpop.f32.mrf.mxu0
  %3740 = vmatprep.mubr.f32.mxu0 0.0
  %v3741 = vand.u32 %v2179, 4294901760
  %3742 = vmatmul.mubr.f32.gmra.mxu0 %v3741
  %v3743 = vpop.f32.mrf.mxu0
  %v3744 = vadd.f32 %v3437, %v3743
  %v3745 = vpop.f32.mrf.mxu0
  %3746 = vmatprep.mubr.f32.mxu0 0.0
  %v3747 = vand.u32 %v2182, 4294901760
  %3748 = vmatmul.mubr.f32.gmra.mxu0 %v3747
  %v3749 = vpop.f32.mrf.mxu0
  %v3750 = vadd.f32 %v3445, %v3749
  %v3751 = vpop.f32.mrf.mxu0
  %3752 = vmatprep.mubr.f32.mxu0 0.0
  %v3753 = vand.u32 %v2185, 4294901760
  %3754 = vmatmul.mubr.f32.gmra.mxu0 %v3753
  %v3755 = vpop.f32.mrf.mxu0
  %v3756 = vadd.f32 %v3453, %v3755
  %v3757 = vpop.f32.mrf.mxu0
  %3758 = vmatprep.mubr.f32.mxu0 0.0
  %v3759 = vand.u32 %v2188, 4294901760
  %3760 = vmatmul.mubr.f32.gmra.mxu0 %v3759
  %v3761 = vpop.f32.mrf.mxu0
  %v3762 = vadd.f32 %v3461, %v3761
  %v3763 = vpop.f32.mrf.mxu0
  %3764 = vmatprep.mubr.f32.mxu0 0.0
  %v3765 = vand.u32 %v2191, 4294901760
  %3766 = vmatmul.mubr.f32.gmra.mxu0 %v3765
  %v3767 = vpop.f32.mrf.mxu0
  %v3768 = vadd.f32 %v3469, %v3767
  %v3769 = vpop.f32.mrf.mxu0
  %3770 = vmatprep.mubr.f32.mxu0 0.0
  %v3771 = vand.u32 %v2194, 4294901760
  %3772 = vmatmul.mubr.f32.gmra.mxu0 %v3771
  %v3773 = vpop.f32.mrf.mxu0
  %v3774 = vadd.f32 %v3477, %v3773
  %v3775 = vpop.f32.mrf.mxu0
  %3776 = vmatprep.mubr.f32.mxu0 0.0
  %v3777 = vand.u32 %v2197, 4294901760
  %3778 = vmatmul.mubr.f32.gmra.mxu0 %v3777
  %v3779 = vpop.f32.mrf.mxu0
  %v3780 = vadd.f32 %v3485, %v3779
  %v3781 = vpop.f32.mrf.mxu0
  %3782 = vmatprep.mubr.f32.mxu0 0.0
  %v3783 = vand.u32 %v2200, 4294901760
  %3784 = vmatmul.mubr.f32.gmra.mxu0 %v3783
  %v3785 = vpop.f32.mrf.mxu0
  %v3786 = vadd.f32 %v3493, %v3785
  %v3787 = vpop.f32.mrf.mxu0
  %3788 = vmatprep.mubr.f32.mxu0 0.0
  %v3789 = vand.u32 %v2203, 4294901760
  %3790 = vmatmul.mubr.f32.gmra.mxu0 %v3789
  %v3791 = vpop.f32.mrf.mxu0
  %v3792 = vadd.f32 %v3501, %v3791
  %v3793 = vpop.f32.mrf.mxu0
  %3794 = vmatprep.mubr.f32.mxu0 0.0
  %v3795 = vand.u32 %v2206, 4294901760
  %3796 = vmatmul.mubr.f32.gmra.mxu0 %v3795
  %v3797 = vpop.f32.mrf.mxu0
  %v3798 = vadd.f32 %v3509, %v3797
  %v3799 = vpop.f32.mrf.mxu0
  %3800 = vmatprep.mubr.f32.mxu0 0.0
  %v3801 = vand.u32 %v2209, 4294901760
  %3802 = vmatmul.mubr.f32.gmra.mxu0 %v3801
  %v3803 = vpop.f32.mrf.mxu0
  %v3804 = vadd.f32 %v3517, %v3803
  %v3805 = vpop.f32.mrf.mxu0
  %3806 = vmatprep.mubr.f32.mxu0 0.0
  %v3807 = vand.u32 %v2212, 4294901760
  %3808 = vmatmul.mubr.f32.gmra.mxu0 %v3807
  %v3809 = vpop.f32.mrf.mxu0
  %v3810 = vadd.f32 %v3525, %v3809
  %v3811 = vpop.f32.mrf.mxu0
  %3812 = vmatprep.mubr.f32.mxu0 0.0
  %v3813 = vand.u32 %v2215, 4294901760
  %3814 = vmatmul.mubr.f32.gmra.mxu0 %v3813
  %v3815 = vpop.f32.mrf.mxu0
  %v3816 = vadd.f32 %v3533, %v3815
  %v3817 = vpop.f32.mrf.mxu0
  %3818 = vmatprep.mubr.f32.mxu0 0.0
  %v3819 = vand.u32 %v2218, 4294901760
  %3820 = vmatmul.mubr.f32.gmra.mxu0 %v3819
  %v3821 = vpop.f32.mrf.mxu0
  %v3822 = vadd.f32 %v3541, %v3821
  %v3823 = vpop.f32.mrf.mxu0
  %3824 = vdwg.mxu0
  %3825 = vmatprep.subr.mxu0 0.0
  %3826 = vmatpush1.msra.mxu0 0.0
  %3827 = vmatprep.subr.mxu0 0.0
  %3828 = vmatpush1.msra.mxu0 0.0
  %3829 = vmatprep.subr.mxu0 0.0
  %3830 = vmatpush1.msra.mxu0 0.0
  %3831 = vmatprep.subr.mxu0 0.0
  %3832 = vmatpush1.msra.mxu0 0.0
  %3833 = vmatprep.subr.mxu0 0.0
  %3834 = vmatpush1.msra.mxu0 0.0
  %3835 = vmatprep.subr.mxu0 0.0
  %3836 = vmatpush1.msra.mxu0 0.0
  %3837 = vmatprep.subr.mxu0 0.0
  %3838 = vmatpush1.msra.mxu0 0.0
  %3839 = vmatprep.subr.mxu0 0.0
  %3840 = vmatpush1.msra.mxu0 0.0
  %3841 = vmatprep.subr.mxu0 0.0
  %v3842 = vand.u32 %v156, 4294901760
  %3843 = vmatpush1.msra.mxu0 %v3842
  %3844 = vmatprep.subr.mxu0 0.0
  %v3845 = vand.u32 %v155, 4294901760
  %3846 = vmatpush1.msra.mxu0 %v3845
  %3847 = vmatprep.subr.mxu0 0.0
  %v3848 = vand.u32 %v154, 4294901760
  %3849 = vmatpush1.msra.mxu0 %v3848
  %3850 = vmatprep.subr.mxu0 0.0
  %v3851 = vand.u32 %v153, 4294901760
  %3852 = vmatpush1.msra.mxu0 %v3851
  %3853 = vmatprep.subr.mxu0 0.0
  %v3854 = vand.u32 %v152, 4294901760
  %3855 = vmatpush1.msra.mxu0 %v3854
  %3856 = vmatprep.subr.mxu0 0.0
  %v3857 = vand.u32 %v151, 4294901760
  %3858 = vmatpush1.msra.mxu0 %v3857
  %3859 = vmatprep.subr.mxu0 0.0
  %v3860 = vand.u32 %v150, 4294901760
  %3861 = vmatpush1.msra.mxu0 %v3860
  %3862 = vmatprep.subr.mxu0 0.0
  %v3863 = vand.u32 %v149, 4294901760
  %3864 = vmatpush1.msra.mxu0 %v3863
  %3865 = vmatprep.subr.mxu0 0.0
  %3866 = vmatpush2.msra.mxu0 0.0
  %3867 = vmatprep.subr.mxu0 0.0
  %3868 = vmatpush2.msra.mxu0 0.0
  %3869 = vmatprep.subr.mxu0 0.0
  %3870 = vmatpush2.msra.mxu0 0.0
  %3871 = vmatprep.subr.mxu0 0.0
  %3872 = vmatpush2.msra.mxu0 0.0
  %3873 = vmatprep.subr.mxu0 0.0
  %3874 = vmatpush2.msra.mxu0 0.0
  %3875 = vmatprep.subr.mxu0 0.0
  %3876 = vmatpush2.msra.mxu0 0.0
  %3877 = vmatprep.subr.mxu0 0.0
  %3878 = vmatpush2.msra.mxu0 0.0
  %3879 = vmatprep.subr.mxu0 0.0
  %3880 = vmatpush2.msra.mxu0 0.0
  %3881 = vmatprep.subr.mxu0 0.0
  %3882 = vmatpush2.msra.mxu0 0.0
  %3883 = vmatprep.subr.mxu0 0.0
  %3884 = vmatpush2.msra.mxu0 0.0
  %3885 = vmatprep.subr.mxu0 0.0
  %3886 = vmatpush2.msra.mxu0 0.0
  %3887 = vmatprep.subr.mxu0 0.0
  %3888 = vmatpush2.msra.mxu0 0.0
  %3889 = vmatprep.subr.mxu0 0.0
  %3890 = vmatpush2.msra.mxu0 0.0
  %3891 = vmatprep.subr.mxu0 0.0
  %3892 = vmatpush2.msra.mxu0 0.0
  %3893 = vmatprep.subr.mxu0 0.0
  %3894 = vmatpush2.msra.mxu0 0.0
  %3895 = vmatprep.subr.mxu0 0.0
  %3896 = vmatpush2.msra.mxu0 0.0
  %3897 = vmatprep.mubr.f32.mxu0 0.0
  %v3898 = vand.u32 %v2125, 4294901760
  %3899 = vmatmul.mubr.f32.gmra.mxu0 %v3898
  %v3900 = vpop.f32.mrf.mxu0
  %v3901 = vadd.f32 %v3636, %v3900
  %v3902 = vpop.f32.mrf.mxu0
  %3903 = vmatprep.mubr.f32.mxu0 0.0
  %v3904 = vand.u32 %v2128, 4294901760
  %3905 = vmatmul.mubr.f32.gmra.mxu0 %v3904
  %v3906 = vpop.f32.mrf.mxu0
  %v3907 = vadd.f32 %v3642, %v3906
  %v3908 = vpop.f32.mrf.mxu0
  %3909 = vmatprep.mubr.f32.mxu0 0.0
  %v3910 = vand.u32 %v2131, 4294901760
  %3911 = vmatmul.mubr.f32.gmra.mxu0 %v3910
  %v3912 = vpop.f32.mrf.mxu0
  %v3913 = vadd.f32 %v3648, %v3912
  %v3914 = vpop.f32.mrf.mxu0
  %3915 = vmatprep.mubr.f32.mxu0 0.0
  %v3916 = vand.u32 %v2134, 4294901760
  %3917 = vmatmul.mubr.f32.gmra.mxu0 %v3916
  %v3918 = vpop.f32.mrf.mxu0
  %v3919 = vadd.f32 %v3654, %v3918
  %v3920 = vpop.f32.mrf.mxu0
  %3921 = vmatprep.mubr.f32.mxu0 0.0
  %v3922 = vand.u32 %v2137, 4294901760
  %3923 = vmatmul.mubr.f32.gmra.mxu0 %v3922
  %v3924 = vpop.f32.mrf.mxu0
  %v3925 = vadd.f32 %v3660, %v3924
  %v3926 = vpop.f32.mrf.mxu0
  %3927 = vmatprep.mubr.f32.mxu0 0.0
  %v3928 = vand.u32 %v2140, 4294901760
  %3929 = vmatmul.mubr.f32.gmra.mxu0 %v3928
  %v3930 = vpop.f32.mrf.mxu0
  %v3931 = vadd.f32 %v3666, %v3930
  %v3932 = vpop.f32.mrf.mxu0
  %3933 = vmatprep.mubr.f32.mxu0 0.0
  %v3934 = vand.u32 %v2143, 4294901760
  %3935 = vmatmul.mubr.f32.gmra.mxu0 %v3934
  %v3936 = vpop.f32.mrf.mxu0
  %v3937 = vadd.f32 %v3672, %v3936
  %v3938 = vpop.f32.mrf.mxu0
  %3939 = vmatprep.mubr.f32.mxu0 0.0
  %v3940 = vand.u32 %v2146, 4294901760
  %3941 = vmatmul.mubr.f32.gmra.mxu0 %v3940
  %v3942 = vpop.f32.mrf.mxu0
  %v3943 = vadd.f32 %v3678, %v3942
  %v3944 = vpop.f32.mrf.mxu0
  %3945 = vmatprep.mubr.f32.mxu0 0.0
  %v3946 = vand.u32 %v2149, 4294901760
  %3947 = vmatmul.mubr.f32.gmra.mxu0 %v3946
  %v3948 = vpop.f32.mrf.mxu0
  %v3949 = vadd.f32 %v3684, %v3948
  %v3950 = vpop.f32.mrf.mxu0
  %3951 = vmatprep.mubr.f32.mxu0 0.0
  %v3952 = vand.u32 %v2152, 4294901760
  %3953 = vmatmul.mubr.f32.gmra.mxu0 %v3952
  %v3954 = vpop.f32.mrf.mxu0
  %v3955 = vadd.f32 %v3690, %v3954
  %v3956 = vpop.f32.mrf.mxu0
  %3957 = vmatprep.mubr.f32.mxu0 0.0
  %v3958 = vand.u32 %v2155, 4294901760
  %3959 = vmatmul.mubr.f32.gmra.mxu0 %v3958
  %v3960 = vpop.f32.mrf.mxu0
  %v3961 = vadd.f32 %v3696, %v3960
  %v3962 = vpop.f32.mrf.mxu0
  %3963 = vmatprep.mubr.f32.mxu0 0.0
  %v3964 = vand.u32 %v2158, 4294901760
  %3965 = vmatmul.mubr.f32.gmra.mxu0 %v3964
  %v3966 = vpop.f32.mrf.mxu0
  %v3967 = vadd.f32 %v3702, %v3966
  %v3968 = vpop.f32.mrf.mxu0
  %3969 = vmatprep.mubr.f32.mxu0 0.0
  %v3970 = vand.u32 %v2161, 4294901760
  %3971 = vmatmul.mubr.f32.gmra.mxu0 %v3970
  %v3972 = vpop.f32.mrf.mxu0
  %v3973 = vadd.f32 %v3708, %v3972
  %v3974 = vpop.f32.mrf.mxu0
  %3975 = vmatprep.mubr.f32.mxu0 0.0
  %v3976 = vand.u32 %v2164, 4294901760
  %3977 = vmatmul.mubr.f32.gmra.mxu0 %v3976
  %v3978 = vpop.f32.mrf.mxu0
  %v3979 = vadd.f32 %v3714, %v3978
  %v3980 = vpop.f32.mrf.mxu0
  %3981 = vmatprep.mubr.f32.mxu0 0.0
  %v3982 = vand.u32 %v2167, 4294901760
  %3983 = vmatmul.mubr.f32.gmra.mxu0 %v3982
  %v3984 = vpop.f32.mrf.mxu0
  %v3985 = vadd.f32 %v3720, %v3984
  %v3986 = vpop.f32.mrf.mxu0
  %3987 = vmatprep.mubr.f32.mxu0 0.0
  %v3988 = vand.u32 %v2170, 4294901760
  %3989 = vmatmul.mubr.f32.gmra.mxu0 %v3988
  %v3990 = vpop.f32.mrf.mxu0
  %v3991 = vadd.f32 %v3726, %v3990
  %v3992 = vpop.f32.mrf.mxu0
  %3993 = vmatprep.mubr.f32.mxu0 0.0
  %v3994 = vand.u32 %v2173, 4294901760
  %3995 = vmatmul.mubr.f32.gmra.mxu0 %v3994
  %v3996 = vpop.f32.mrf.mxu0
  %v3997 = vadd.f32 %v3732, %v3996
  %v3998 = vpop.f32.mrf.mxu0
  %3999 = vmatprep.mubr.f32.mxu0 0.0
  %v4000 = vand.u32 %v2176, 4294901760
  %4001 = vmatmul.mubr.f32.gmra.mxu0 %v4000
  %v4002 = vpop.f32.mrf.mxu0
  %v4003 = vadd.f32 %v3738, %v4002
  %v4004 = vpop.f32.mrf.mxu0
  %4005 = vmatprep.mubr.f32.mxu0 0.0
  %v4006 = vand.u32 %v2179, 4294901760
  %4007 = vmatmul.mubr.f32.gmra.mxu0 %v4006
  %v4008 = vpop.f32.mrf.mxu0
  %v4009 = vadd.f32 %v3744, %v4008
  %v4010 = vpop.f32.mrf.mxu0
  %4011 = vmatprep.mubr.f32.mxu0 0.0
  %v4012 = vand.u32 %v2182, 4294901760
  %4013 = vmatmul.mubr.f32.gmra.mxu0 %v4012
  %v4014 = vpop.f32.mrf.mxu0
  %v4015 = vadd.f32 %v3750, %v4014
  %v4016 = vpop.f32.mrf.mxu0
  %4017 = vmatprep.mubr.f32.mxu0 0.0
  %v4018 = vand.u32 %v2185, 4294901760
  %4019 = vmatmul.mubr.f32.gmra.mxu0 %v4018
  %v4020 = vpop.f32.mrf.mxu0
  %v4021 = vadd.f32 %v3756, %v4020
  %v4022 = vpop.f32.mrf.mxu0
  %4023 = vmatprep.mubr.f32.mxu0 0.0
  %v4024 = vand.u32 %v2188, 4294901760
  %4025 = vmatmul.mubr.f32.gmra.mxu0 %v4024
  %v4026 = vpop.f32.mrf.mxu0
  %v4027 = vadd.f32 %v3762, %v4026
  %v4028 = vpop.f32.mrf.mxu0
  %4029 = vmatprep.mubr.f32.mxu0 0.0
  %v4030 = vand.u32 %v2191, 4294901760
  %4031 = vmatmul.mubr.f32.gmra.mxu0 %v4030
  %v4032 = vpop.f32.mrf.mxu0
  %v4033 = vadd.f32 %v3768, %v4032
  %v4034 = vpop.f32.mrf.mxu0
  %4035 = vmatprep.mubr.f32.mxu0 0.0
  %v4036 = vand.u32 %v2194, 4294901760
  %4037 = vmatmul.mubr.f32.gmra.mxu0 %v4036
  %v4038 = vpop.f32.mrf.mxu0
  %v4039 = vadd.f32 %v3774, %v4038
  %v4040 = vpop.f32.mrf.mxu0
  %4041 = vmatprep.mubr.f32.mxu0 0.0
  %v4042 = vand.u32 %v2197, 4294901760
  %4043 = vmatmul.mubr.f32.gmra.mxu0 %v4042
  %v4044 = vpop.f32.mrf.mxu0
  %v4045 = vadd.f32 %v3780, %v4044
  %v4046 = vpop.f32.mrf.mxu0
  %4047 = vmatprep.mubr.f32.mxu0 0.0
  %v4048 = vand.u32 %v2200, 4294901760
  %4049 = vmatmul.mubr.f32.gmra.mxu0 %v4048
  %v4050 = vpop.f32.mrf.mxu0
  %v4051 = vadd.f32 %v3786, %v4050
  %v4052 = vpop.f32.mrf.mxu0
  %4053 = vmatprep.mubr.f32.mxu0 0.0
  %v4054 = vand.u32 %v2203, 4294901760
  %4055 = vmatmul.mubr.f32.gmra.mxu0 %v4054
  %v4056 = vpop.f32.mrf.mxu0
  %v4057 = vadd.f32 %v3792, %v4056
  %v4058 = vpop.f32.mrf.mxu0
  %4059 = vmatprep.mubr.f32.mxu0 0.0
  %v4060 = vand.u32 %v2206, 4294901760
  %4061 = vmatmul.mubr.f32.gmra.mxu0 %v4060
  %v4062 = vpop.f32.mrf.mxu0
  %v4063 = vadd.f32 %v3798, %v4062
  %v4064 = vpop.f32.mrf.mxu0
  %4065 = vmatprep.mubr.f32.mxu0 0.0
  %v4066 = vand.u32 %v2209, 4294901760
  %4067 = vmatmul.mubr.f32.gmra.mxu0 %v4066
  %v4068 = vpop.f32.mrf.mxu0
  %v4069 = vadd.f32 %v3804, %v4068
  %v4070 = vpop.f32.mrf.mxu0
  %4071 = vmatprep.mubr.f32.mxu0 0.0
  %v4072 = vand.u32 %v2212, 4294901760
  %4073 = vmatmul.mubr.f32.gmra.mxu0 %v4072
  %v4074 = vpop.f32.mrf.mxu0
  %v4075 = vadd.f32 %v3810, %v4074
  %v4076 = vpop.f32.mrf.mxu0
  %4077 = vmatprep.mubr.f32.mxu0 0.0
  %v4078 = vand.u32 %v2215, 4294901760
  %4079 = vmatmul.mubr.f32.gmra.mxu0 %v4078
  %v4080 = vpop.f32.mrf.mxu0
  %v4081 = vadd.f32 %v3816, %v4080
  %v4082 = vpop.f32.mrf.mxu0
  %4083 = vmatprep.mubr.f32.mxu0 0.0
  %v4084 = vand.u32 %v2218, 4294901760
  %4085 = vmatmul.mubr.f32.gmra.mxu0 %v4084
  %v4086 = vpop.f32.mrf.mxu0
  %v4087 = vadd.f32 %v3822, %v4086
  %v4088 = vpop.f32.mrf.mxu0
  %4089 = vdwg.mxu0
  %v4090 = vmul.f32 %v1935, %v1935
  %v4091 = vmul.f32 %v1941, %v1941
  %v4092 = vmul.f32 %v1947, %v1947
  %v4093 = vmul.f32 %v1953, %v1953
  %v4094 = vmul.f32 %v1959, %v1959
  %v4095 = vmul.f32 %v1965, %v1965
  %v4096 = vmul.f32 %v1971, %v1971
  %v4097 = vmul.f32 %v1977, %v1977
  %v4098 = vmul.f32 %v1983, %v1983
  %v4099 = vmul.f32 %v1989, %v1989
  %v4100 = vmul.f32 %v1995, %v1995
  %v4101 = vmul.f32 %v2001, %v2001
  %v4102 = vmul.f32 %v2007, %v2007
  %v4103 = vmul.f32 %v2013, %v2013
  %v4104 = vmul.f32 %v2019, %v2019
  %v4105 = vmul.f32 %v2025, %v2025
  %v4106 = vmul.f32 %v2031, %v2031
  %v4107 = vmul.f32 %v2037, %v2037
  %v4108 = vmul.f32 %v2043, %v2043
  %v4109 = vmul.f32 %v2049, %v2049
  %v4110 = vmul.f32 %v2055, %v2055
  %v4111 = vmul.f32 %v2061, %v2061
  %v4112 = vmul.f32 %v2067, %v2067
  %v4113 = vmul.f32 %v2073, %v2073
  %v4114 = vmul.f32 %v2079, %v2079
  %v4115 = vmul.f32 %v2085, %v2085
  %v4116 = vmul.f32 %v2091, %v2091
  %v4117 = vmul.f32 %v2097, %v2097
  %v4118 = vmul.f32 %v2103, %v2103
  %v4119 = vmul.f32 %v2109, %v2109
  %v4120 = vmul.f32 %v2115, %v2115
  %v4121 = vmul.f32 %v2121, %v2121
  %v4122 = vmul.f32 %v3901, %v3901
  %v4123 = vmul.f32 %v3907, %v3907
  %v4124 = vmul.f32 %v3913, %v3913
  %v4125 = vmul.f32 %v3919, %v3919
  %v4126 = vmul.f32 %v3925, %v3925
  %v4127 = vmul.f32 %v3931, %v3931
  %v4128 = vmul.f32 %v3937, %v3937
  %v4129 = vmul.f32 %v3943, %v3943
  %v4130 = vmul.f32 %v3949, %v3949
  %v4131 = vmul.f32 %v3955, %v3955
  %v4132 = vmul.f32 %v3961, %v3961
  %v4133 = vmul.f32 %v3967, %v3967
  %v4134 = vmul.f32 %v3973, %v3973
  %v4135 = vmul.f32 %v3979, %v3979
  %v4136 = vmul.f32 %v3985, %v3985
  %v4137 = vmul.f32 %v3991, %v3991
  %v4138 = vmul.f32 %v3997, %v3997
  %v4139 = vmul.f32 %v4003, %v4003
  %v4140 = vmul.f32 %v4009, %v4009
  %v4141 = vmul.f32 %v4015, %v4015
  %v4142 = vmul.f32 %v4021, %v4021
  %v4143 = vmul.f32 %v4027, %v4027
  %v4144 = vmul.f32 %v4033, %v4033
  %v4145 = vmul.f32 %v4039, %v4039
  %v4146 = vmul.f32 %v4045, %v4045
  %v4147 = vmul.f32 %v4051, %v4051
  %v4148 = vmul.f32 %v4057, %v4057
  %v4149 = vmul.f32 %v4063, %v4063
  %v4150 = vmul.f32 %v4069, %v4069
  %v4151 = vmul.f32 %v4075, %v4075
  %v4152 = vmul.f32 %v4081, %v4081
  %v4153 = vmul.f32 %v4087, %v4087
  %v4154 = vlaneseq
  %v4155 = vand.u32 %v4154, 127
  %vm4156 = vcmp.lt.s32.totalorder %v4155, 64
  %4157 = vrot.lane.b32.xlu0 %v4090, 64
  %v4158 = vpop.permute.xlu0 %4157
  %4159 = vrot.lane.b32.xlu0 %v4091, 64
  %v4160 = vpop.permute.xlu0 %4159
  %4161 = vrot.lane.b32.xlu0 %v4092, 64
  %v4162 = vpop.permute.xlu0 %4161
  %4163 = vrot.lane.b32.xlu0 %v4093, 64
  %v4164 = vpop.permute.xlu0 %4163
  %4165 = vrot.lane.b32.xlu0 %v4094, 64
  %v4166 = vpop.permute.xlu0 %4165
  %4167 = vrot.lane.b32.xlu0 %v4095, 64
  %v4168 = vpop.permute.xlu0 %4167
  %4169 = vrot.lane.b32.xlu0 %v4096, 64
  %v4170 = vpop.permute.xlu0 %4169
  %4171 = vrot.lane.b32.xlu0 %v4097, 64
  %v4172 = vpop.permute.xlu0 %4171
  %4173 = vrot.lane.b32.xlu0 %v4098, 64
  %v4174 = vpop.permute.xlu0 %4173
  %4175 = vrot.lane.b32.xlu0 %v4099, 64
  %v4176 = vpop.permute.xlu0 %4175
  %4177 = vrot.lane.b32.xlu0 %v4100, 64
  %v4178 = vpop.permute.xlu0 %4177
  %4179 = vrot.lane.b32.xlu0 %v4101, 64
  %v4180 = vpop.permute.xlu0 %4179
  %4181 = vrot.lane.b32.xlu0 %v4102, 64
  %v4182 = vpop.permute.xlu0 %4181
  %4183 = vrot.lane.b32.xlu0 %v4103, 64
  %v4184 = vpop.permute.xlu0 %4183
  %4185 = vrot.lane.b32.xlu0 %v4104, 64
  %v4186 = vpop.permute.xlu0 %4185
  %4187 = vrot.lane.b32.xlu0 %v4105, 64
  %v4188 = vpop.permute.xlu0 %4187
  %4189 = vrot.lane.b32.xlu0 %v4106, 64
  %v4190 = vpop.permute.xlu0 %4189
  %4191 = vrot.lane.b32.xlu0 %v4107, 64
  %v4192 = vpop.permute.xlu0 %4191
  %4193 = vrot.lane.b32.xlu0 %v4108, 64
  %v4194 = vpop.permute.xlu0 %4193
  %4195 = vrot.lane.b32.xlu0 %v4109, 64
  %v4196 = vpop.permute.xlu0 %4195
  %4197 = vrot.lane.b32.xlu0 %v4110, 64
  %v4198 = vpop.permute.xlu0 %4197
  %4199 = vrot.lane.b32.xlu0 %v4111, 64
  %v4200 = vpop.permute.xlu0 %4199
  %4201 = vrot.lane.b32.xlu0 %v4112, 64
  %v4202 = vpop.permute.xlu0 %4201
  %4203 = vrot.lane.b32.xlu0 %v4113, 64
  %v4204 = vpop.permute.xlu0 %4203
  %4205 = vrot.lane.b32.xlu0 %v4114, 64
  %v4206 = vpop.permute.xlu0 %4205
  %4207 = vrot.lane.b32.xlu0 %v4115, 64
  %v4208 = vpop.permute.xlu0 %4207
  %4209 = vrot.lane.b32.xlu0 %v4116, 64
  %v4210 = vpop.permute.xlu0 %4209
  %4211 = vrot.lane.b32.xlu0 %v4117, 64
  %v4212 = vpop.permute.xlu0 %4211
  %4213 = vrot.lane.b32.xlu0 %v4118, 64
  %v4214 = vpop.permute.xlu0 %4213
  %4215 = vrot.lane.b32.xlu0 %v4119, 64
  %v4216 = vpop.permute.xlu0 %4215
  %4217 = vrot.lane.b32.xlu0 %v4120, 64
  %v4218 = vpop.permute.xlu0 %4217
  %4219 = vrot.lane.b32.xlu0 %v4121, 64
  %v4220 = vpop.permute.xlu0 %4219
  %v4221 = vadd.f32 %v4090, %v4158
  %v4222 = vadd.f32 %v4091, %v4160
  %v4223 = vadd.f32 %v4092, %v4162
  %v4224 = vadd.f32 %v4093, %v4164
  %v4225 = vadd.f32 %v4094, %v4166
  %v4226 = vadd.f32 %v4095, %v4168
  %v4227 = vadd.f32 %v4096, %v4170
  %v4228 = vadd.f32 %v4097, %v4172
  %v4229 = vadd.f32 %v4098, %v4174
  %v4230 = vadd.f32 %v4099, %v4176
  %v4231 = vadd.f32 %v4100, %v4178
  %v4232 = vadd.f32 %v4101, %v4180
  %v4233 = vadd.f32 %v4102, %v4182
  %v4234 = vadd.f32 %v4103, %v4184
  %v4235 = vadd.f32 %v4104, %v4186
  %v4236 = vadd.f32 %v4105, %v4188
  %v4237 = vadd.f32 %v4106, %v4190
  %v4238 = vadd.f32 %v4107, %v4192
  %v4239 = vadd.f32 %v4108, %v4194
  %v4240 = vadd.f32 %v4109, %v4196
  %v4241 = vadd.f32 %v4110, %v4198
  %v4242 = vadd.f32 %v4111, %v4200
  %v4243 = vadd.f32 %v4112, %v4202
  %v4244 = vadd.f32 %v4113, %v4204
  %v4245 = vadd.f32 %v4114, %v4206
  %v4246 = vadd.f32 %v4115, %v4208
  %v4247 = vadd.f32 %v4116, %v4210
  %v4248 = vadd.f32 %v4117, %v4212
  %v4249 = vadd.f32 %v4118, %v4214
  %v4250 = vadd.f32 %v4119, %v4216
  %v4251 = vadd.f32 %v4120, %v4218
  %v4252 = vadd.f32 %v4121, %v4220
  %v4253 = vsel %vm4156, 1, 0
  %vm4254 = vcmp.eq.s32.totalorder %v4253, 1
  %v4255 = vsel %vm4254, %v4221, 0.0
  %v4256 = vsel %vm4254, %v4222, 0.0
  %v4257 = vsel %vm4254, %v4223, 0.0
  %v4258 = vsel %vm4254, %v4224, 0.0
  %v4259 = vsel %vm4254, %v4225, 0.0
  %v4260 = vsel %vm4254, %v4226, 0.0
  %v4261 = vsel %vm4254, %v4227, 0.0
  %v4262 = vsel %vm4254, %v4228, 0.0
  %v4263 = vsel %vm4254, %v4229, 0.0
  %v4264 = vsel %vm4254, %v4230, 0.0
  %v4265 = vsel %vm4254, %v4231, 0.0
  %v4266 = vsel %vm4254, %v4232, 0.0
  %v4267 = vsel %vm4254, %v4233, 0.0
  %v4268 = vsel %vm4254, %v4234, 0.0
  %v4269 = vsel %vm4254, %v4235, 0.0
  %v4270 = vsel %vm4254, %v4236, 0.0
  %v4271 = vsel %vm4254, %v4237, 0.0
  %v4272 = vsel %vm4254, %v4238, 0.0
  %v4273 = vsel %vm4254, %v4239, 0.0
  %v4274 = vsel %vm4254, %v4240, 0.0
  %v4275 = vsel %vm4254, %v4241, 0.0
  %v4276 = vsel %vm4254, %v4242, 0.0
  %v4277 = vsel %vm4254, %v4243, 0.0
  %v4278 = vsel %vm4254, %v4244, 0.0
  %v4279 = vsel %vm4254, %v4245, 0.0
  %v4280 = vsel %vm4254, %v4246, 0.0
  %v4281 = vsel %vm4254, %v4247, 0.0
  %v4282 = vsel %vm4254, %v4248, 0.0
  %v4283 = vsel %vm4254, %v4249, 0.0
  %v4284 = vsel %vm4254, %v4250, 0.0
  %v4285 = vsel %vm4254, %v4251, 0.0
  %v4286 = vsel %vm4254, %v4252, 0.0
  %4287 = vrot.lane.b32.xlu0 %v4122, 64
  %v4288 = vpop.permute.xlu0 %4287
  %4289 = vrot.lane.b32.xlu0 %v4123, 64
  %v4290 = vpop.permute.xlu0 %4289
  %4291 = vrot.lane.b32.xlu0 %v4124, 64
  %v4292 = vpop.permute.xlu0 %4291
  %4293 = vrot.lane.b32.xlu0 %v4125, 64
  %v4294 = vpop.permute.xlu0 %4293
  %4295 = vrot.lane.b32.xlu0 %v4126, 64
  %v4296 = vpop.permute.xlu0 %4295
  %4297 = vrot.lane.b32.xlu0 %v4127, 64
  %v4298 = vpop.permute.xlu0 %4297
  %4299 = vrot.lane.b32.xlu0 %v4128, 64
  %v4300 = vpop.permute.xlu0 %4299
  %4301 = vrot.lane.b32.xlu0 %v4129, 64
  %v4302 = vpop.permute.xlu0 %4301
  %4303 = vrot.lane.b32.xlu0 %v4130, 64
  %v4304 = vpop.permute.xlu0 %4303
  %4305 = vrot.lane.b32.xlu0 %v4131, 64
  %v4306 = vpop.permute.xlu0 %4305
  %4307 = vrot.lane.b32.xlu0 %v4132, 64
  %v4308 = vpop.permute.xlu0 %4307
  %4309 = vrot.lane.b32.xlu0 %v4133, 64
  %v4310 = vpop.permute.xlu0 %4309
  %4311 = vrot.lane.b32.xlu0 %v4134, 64
  %v4312 = vpop.permute.xlu0 %4311
  %4313 = vrot.lane.b32.xlu0 %v4135, 64
  %v4314 = vpop.permute.xlu0 %4313
  %4315 = vrot.lane.b32.xlu0 %v4136, 64
  %v4316 = vpop.permute.xlu0 %4315
  %4317 = vrot.lane.b32.xlu0 %v4137, 64
  %v4318 = vpop.permute.xlu0 %4317
  %4319 = vrot.lane.b32.xlu0 %v4138, 64
  %v4320 = vpop.permute.xlu0 %4319
  %4321 = vrot.lane.b32.xlu0 %v4139, 64
  %v4322 = vpop.permute.xlu0 %4321
  %4323 = vrot.lane.b32.xlu0 %v4140, 64
  %v4324 = vpop.permute.xlu0 %4323
  %4325 = vrot.lane.b32.xlu0 %v4141, 64
  %v4326 = vpop.permute.xlu0 %4325
  %4327 = vrot.lane.b32.xlu0 %v4142, 64
  %v4328 = vpop.permute.xlu0 %4327
  %4329 = vrot.lane.b32.xlu0 %v4143, 64
  %v4330 = vpop.permute.xlu0 %4329
  %4331 = vrot.lane.b32.xlu0 %v4144, 64
  %v4332 = vpop.permute.xlu0 %4331
  %4333 = vrot.lane.b32.xlu0 %v4145, 64
  %v4334 = vpop.permute.xlu0 %4333
  %4335 = vrot.lane.b32.xlu0 %v4146, 64
  %v4336 = vpop.permute.xlu0 %4335
  %4337 = vrot.lane.b32.xlu0 %v4147, 64
  %v4338 = vpop.permute.xlu0 %4337
  %4339 = vrot.lane.b32.xlu0 %v4148, 64
  %v4340 = vpop.permute.xlu0 %4339
  %4341 = vrot.lane.b32.xlu0 %v4149, 64
  %v4342 = vpop.permute.xlu0 %4341
  %4343 = vrot.lane.b32.xlu0 %v4150, 64
  %v4344 = vpop.permute.xlu0 %4343
  %4345 = vrot.lane.b32.xlu0 %v4151, 64
  %v4346 = vpop.permute.xlu0 %4345
  %4347 = vrot.lane.b32.xlu0 %v4152, 64
  %v4348 = vpop.permute.xlu0 %4347
  %4349 = vrot.lane.b32.xlu0 %v4153, 64
  %v4350 = vpop.permute.xlu0 %4349
  %v4351 = vadd.f32 %v4122, %v4288
  %v4352 = vadd.f32 %v4123, %v4290
  %v4353 = vadd.f32 %v4124, %v4292
  %v4354 = vadd.f32 %v4125, %v4294
  %v4355 = vadd.f32 %v4126, %v4296
  %v4356 = vadd.f32 %v4127, %v4298
  %v4357 = vadd.f32 %v4128, %v4300
  %v4358 = vadd.f32 %v4129, %v4302
  %v4359 = vadd.f32 %v4130, %v4304
  %v4360 = vadd.f32 %v4131, %v4306
  %v4361 = vadd.f32 %v4132, %v4308
  %v4362 = vadd.f32 %v4133, %v4310
  %v4363 = vadd.f32 %v4134, %v4312
  %v4364 = vadd.f32 %v4135, %v4314
  %v4365 = vadd.f32 %v4136, %v4316
  %v4366 = vadd.f32 %v4137, %v4318
  %v4367 = vadd.f32 %v4138, %v4320
  %v4368 = vadd.f32 %v4139, %v4322
  %v4369 = vadd.f32 %v4140, %v4324
  %v4370 = vadd.f32 %v4141, %v4326
  %v4371 = vadd.f32 %v4142, %v4328
  %v4372 = vadd.f32 %v4143, %v4330
  %v4373 = vadd.f32 %v4144, %v4332
  %v4374 = vadd.f32 %v4145, %v4334
  %v4375 = vadd.f32 %v4146, %v4336
  %v4376 = vadd.f32 %v4147, %v4338
  %v4377 = vadd.f32 %v4148, %v4340
  %v4378 = vadd.f32 %v4149, %v4342
  %v4379 = vadd.f32 %v4150, %v4344
  %v4380 = vadd.f32 %v4151, %v4346
  %v4381 = vadd.f32 %v4152, %v4348
  %v4382 = vadd.f32 %v4153, %v4350
  %v4383 = vsel %vm4254, %v4351, 0.0
  %v4384 = vsel %vm4254, %v4352, 0.0
  %v4385 = vsel %vm4254, %v4353, 0.0
  %v4386 = vsel %vm4254, %v4354, 0.0
  %v4387 = vsel %vm4254, %v4355, 0.0
  %v4388 = vsel %vm4254, %v4356, 0.0
  %v4389 = vsel %vm4254, %v4357, 0.0
  %v4390 = vsel %vm4254, %v4358, 0.0
  %v4391 = vsel %vm4254, %v4359, 0.0
  %v4392 = vsel %vm4254, %v4360, 0.0
  %v4393 = vsel %vm4254, %v4361, 0.0
  %v4394 = vsel %vm4254, %v4362, 0.0
  %v4395 = vsel %vm4254, %v4363, 0.0
  %v4396 = vsel %vm4254, %v4364, 0.0
  %v4397 = vsel %vm4254, %v4365, 0.0
  %v4398 = vsel %vm4254, %v4366, 0.0
  %v4399 = vsel %vm4254, %v4367, 0.0
  %v4400 = vsel %vm4254, %v4368, 0.0
  %v4401 = vsel %vm4254, %v4369, 0.0
  %v4402 = vsel %vm4254, %v4370, 0.0
  %v4403 = vsel %vm4254, %v4371, 0.0
  %v4404 = vsel %vm4254, %v4372, 0.0
  %v4405 = vsel %vm4254, %v4373, 0.0
  %v4406 = vsel %vm4254, %v4374, 0.0
  %v4407 = vsel %vm4254, %v4375, 0.0
  %v4408 = vsel %vm4254, %v4376, 0.0
  %v4409 = vsel %vm4254, %v4377, 0.0
  %v4410 = vsel %vm4254, %v4378, 0.0
  %v4411 = vsel %vm4254, %v4379, 0.0
  %v4412 = vsel %vm4254, %v4380, 0.0
  %v4413 = vsel %vm4254, %v4381, 0.0
  %v4414 = vsel %vm4254, %v4382, 0.0
  %v4415 = vrsqrt.pop %v4255
  %v4416 = vmul.f32 %v4255, %v4415
  %vm4417 = vcmp.eq.f32.partialorder %v4255, inf
  %v4418 = vsel %vm4417, %v4255, %v4416
  %vm4419 = vcmp.eq.f32.partialorder %v4255, 0.0
  %v4420 = vand.u32 %v4255, 2147483648
  %v4421 = vsel %vm4419, %v4420, %v4418
  %v4422 = vrsqrt.pop %v4256
  %v4423 = vmul.f32 %v4256, %v4422
  %vm4424 = vcmp.eq.f32.partialorder %v4256, inf
  %v4425 = vsel %vm4424, %v4256, %v4423
  %vm4426 = vcmp.eq.f32.partialorder %v4256, 0.0
  %v4427 = vand.u32 %v4256, 2147483648
  %v4428 = vsel %vm4426, %v4427, %v4425
  %v4429 = vrsqrt.pop %v4257
  %v4430 = vmul.f32 %v4257, %v4429
  %vm4431 = vcmp.eq.f32.partialorder %v4257, inf
  %v4432 = vsel %vm4431, %v4257, %v4430
  %vm4433 = vcmp.eq.f32.partialorder %v4257, 0.0
  %v4434 = vand.u32 %v4257, 2147483648
  %v4435 = vsel %vm4433, %v4434, %v4432
  %v4436 = vrsqrt.pop %v4258
  %v4437 = vmul.f32 %v4258, %v4436
  %vm4438 = vcmp.eq.f32.partialorder %v4258, inf
  %v4439 = vsel %vm4438, %v4258, %v4437
  %vm4440 = vcmp.eq.f32.partialorder %v4258, 0.0
  %v4441 = vand.u32 %v4258, 2147483648
  %v4442 = vsel %vm4440, %v4441, %v4439
  %v4443 = vrsqrt.pop %v4259
  %v4444 = vmul.f32 %v4259, %v4443
  %vm4445 = vcmp.eq.f32.partialorder %v4259, inf
  %v4446 = vsel %vm4445, %v4259, %v4444
  %vm4447 = vcmp.eq.f32.partialorder %v4259, 0.0
  %v4448 = vand.u32 %v4259, 2147483648
  %v4449 = vsel %vm4447, %v4448, %v4446
  %v4450 = vrsqrt.pop %v4260
  %v4451 = vmul.f32 %v4260, %v4450
  %vm4452 = vcmp.eq.f32.partialorder %v4260, inf
  %v4453 = vsel %vm4452, %v4260, %v4451
  %vm4454 = vcmp.eq.f32.partialorder %v4260, 0.0
  %v4455 = vand.u32 %v4260, 2147483648
  %v4456 = vsel %vm4454, %v4455, %v4453
  %v4457 = vrsqrt.pop %v4261
  %v4458 = vmul.f32 %v4261, %v4457
  %vm4459 = vcmp.eq.f32.partialorder %v4261, inf
  %v4460 = vsel %vm4459, %v4261, %v4458
  %vm4461 = vcmp.eq.f32.partialorder %v4261, 0.0
  %v4462 = vand.u32 %v4261, 2147483648
  %v4463 = vsel %vm4461, %v4462, %v4460
  %v4464 = vrsqrt.pop %v4262
  %v4465 = vmul.f32 %v4262, %v4464
  %vm4466 = vcmp.eq.f32.partialorder %v4262, inf
  %v4467 = vsel %vm4466, %v4262, %v4465
  %vm4468 = vcmp.eq.f32.partialorder %v4262, 0.0
  %v4469 = vand.u32 %v4262, 2147483648
  %v4470 = vsel %vm4468, %v4469, %v4467
  %v4471 = vrsqrt.pop %v4263
  %v4472 = vmul.f32 %v4263, %v4471
  %vm4473 = vcmp.eq.f32.partialorder %v4263, inf
  %v4474 = vsel %vm4473, %v4263, %v4472
  %vm4475 = vcmp.eq.f32.partialorder %v4263, 0.0
  %v4476 = vand.u32 %v4263, 2147483648
  %v4477 = vsel %vm4475, %v4476, %v4474
  %v4478 = vrsqrt.pop %v4264
  %v4479 = vmul.f32 %v4264, %v4478
  %vm4480 = vcmp.eq.f32.partialorder %v4264, inf
  %v4481 = vsel %vm4480, %v4264, %v4479
  %vm4482 = vcmp.eq.f32.partialorder %v4264, 0.0
  %v4483 = vand.u32 %v4264, 2147483648
  %v4484 = vsel %vm4482, %v4483, %v4481
  %v4485 = vrsqrt.pop %v4265
  %v4486 = vmul.f32 %v4265, %v4485
  %vm4487 = vcmp.eq.f32.partialorder %v4265, inf
  %v4488 = vsel %vm4487, %v4265, %v4486
  %vm4489 = vcmp.eq.f32.partialorder %v4265, 0.0
  %v4490 = vand.u32 %v4265, 2147483648
  %v4491 = vsel %vm4489, %v4490, %v4488
  %v4492 = vrsqrt.pop %v4266
  %v4493 = vmul.f32 %v4266, %v4492
  %vm4494 = vcmp.eq.f32.partialorder %v4266, inf
  %v4495 = vsel %vm4494, %v4266, %v4493
  %vm4496 = vcmp.eq.f32.partialorder %v4266, 0.0
  %v4497 = vand.u32 %v4266, 2147483648
  %v4498 = vsel %vm4496, %v4497, %v4495
  %v4499 = vrsqrt.pop %v4267
  %v4500 = vmul.f32 %v4267, %v4499
  %vm4501 = vcmp.eq.f32.partialorder %v4267, inf
  %v4502 = vsel %vm4501, %v4267, %v4500
  %vm4503 = vcmp.eq.f32.partialorder %v4267, 0.0
  %v4504 = vand.u32 %v4267, 2147483648
  %v4505 = vsel %vm4503, %v4504, %v4502
  %v4506 = vrsqrt.pop %v4268
  %v4507 = vmul.f32 %v4268, %v4506
  %vm4508 = vcmp.eq.f32.partialorder %v4268, inf
  %v4509 = vsel %vm4508, %v4268, %v4507
  %vm4510 = vcmp.eq.f32.partialorder %v4268, 0.0
  %v4511 = vand.u32 %v4268, 2147483648
  %v4512 = vsel %vm4510, %v4511, %v4509
  %v4513 = vrsqrt.pop %v4269
  %v4514 = vmul.f32 %v4269, %v4513
  %vm4515 = vcmp.eq.f32.partialorder %v4269, inf
  %v4516 = vsel %vm4515, %v4269, %v4514
  %vm4517 = vcmp.eq.f32.partialorder %v4269, 0.0
  %v4518 = vand.u32 %v4269, 2147483648
  %v4519 = vsel %vm4517, %v4518, %v4516
  %v4520 = vrsqrt.pop %v4270
  %v4521 = vmul.f32 %v4270, %v4520
  %vm4522 = vcmp.eq.f32.partialorder %v4270, inf
  %v4523 = vsel %vm4522, %v4270, %v4521
  %vm4524 = vcmp.eq.f32.partialorder %v4270, 0.0
  %v4525 = vand.u32 %v4270, 2147483648
  %v4526 = vsel %vm4524, %v4525, %v4523
  %v4527 = vrsqrt.pop %v4271
  %v4528 = vmul.f32 %v4271, %v4527
  %vm4529 = vcmp.eq.f32.partialorder %v4271, inf
  %v4530 = vsel %vm4529, %v4271, %v4528
  %vm4531 = vcmp.eq.f32.partialorder %v4271, 0.0
  %v4532 = vand.u32 %v4271, 2147483648
  %v4533 = vsel %vm4531, %v4532, %v4530
  %v4534 = vrsqrt.pop %v4272
  %v4535 = vmul.f32 %v4272, %v4534
  %vm4536 = vcmp.eq.f32.partialorder %v4272, inf
  %v4537 = vsel %vm4536, %v4272, %v4535
  %vm4538 = vcmp.eq.f32.partialorder %v4272, 0.0
  %v4539 = vand.u32 %v4272, 2147483648
  %v4540 = vsel %vm4538, %v4539, %v4537
  %v4541 = vrsqrt.pop %v4273
  %v4542 = vmul.f32 %v4273, %v4541
  %vm4543 = vcmp.eq.f32.partialorder %v4273, inf
  %v4544 = vsel %vm4543, %v4273, %v4542
  %vm4545 = vcmp.eq.f32.partialorder %v4273, 0.0
  %v4546 = vand.u32 %v4273, 2147483648
  %v4547 = vsel %vm4545, %v4546, %v4544
  %v4548 = vrsqrt.pop %v4274
  %v4549 = vmul.f32 %v4274, %v4548
  %vm4550 = vcmp.eq.f32.partialorder %v4274, inf
  %v4551 = vsel %vm4550, %v4274, %v4549
  %vm4552 = vcmp.eq.f32.partialorder %v4274, 0.0
  %v4553 = vand.u32 %v4274, 2147483648
  %v4554 = vsel %vm4552, %v4553, %v4551
  %v4555 = vrsqrt.pop %v4275
  %v4556 = vmul.f32 %v4275, %v4555
  %vm4557 = vcmp.eq.f32.partialorder %v4275, inf
  %v4558 = vsel %vm4557, %v4275, %v4556
  %vm4559 = vcmp.eq.f32.partialorder %v4275, 0.0
  %v4560 = vand.u32 %v4275, 2147483648
  %v4561 = vsel %vm4559, %v4560, %v4558
  %v4562 = vrsqrt.pop %v4276
  %v4563 = vmul.f32 %v4276, %v4562
  %vm4564 = vcmp.eq.f32.partialorder %v4276, inf
  %v4565 = vsel %vm4564, %v4276, %v4563
  %vm4566 = vcmp.eq.f32.partialorder %v4276, 0.0
  %v4567 = vand.u32 %v4276, 2147483648
  %v4568 = vsel %vm4566, %v4567, %v4565
  %v4569 = vrsqrt.pop %v4277
  %v4570 = vmul.f32 %v4277, %v4569
  %vm4571 = vcmp.eq.f32.partialorder %v4277, inf
  %v4572 = vsel %vm4571, %v4277, %v4570
  %vm4573 = vcmp.eq.f32.partialorder %v4277, 0.0
  %v4574 = vand.u32 %v4277, 2147483648
  %v4575 = vsel %vm4573, %v4574, %v4572
  %v4576 = vrsqrt.pop %v4278
  %v4577 = vmul.f32 %v4278, %v4576
  %vm4578 = vcmp.eq.f32.partialorder %v4278, inf
  %v4579 = vsel %vm4578, %v4278, %v4577
  %vm4580 = vcmp.eq.f32.partialorder %v4278, 0.0
  %v4581 = vand.u32 %v4278, 2147483648
  %v4582 = vsel %vm4580, %v4581, %v4579
  %v4583 = vrsqrt.pop %v4279
  %v4584 = vmul.f32 %v4279, %v4583
  %vm4585 = vcmp.eq.f32.partialorder %v4279, inf
  %v4586 = vsel %vm4585, %v4279, %v4584
  %vm4587 = vcmp.eq.f32.partialorder %v4279, 0.0
  %v4588 = vand.u32 %v4279, 2147483648
  %v4589 = vsel %vm4587, %v4588, %v4586
  %v4590 = vrsqrt.pop %v4280
  %v4591 = vmul.f32 %v4280, %v4590
  %vm4592 = vcmp.eq.f32.partialorder %v4280, inf
  %v4593 = vsel %vm4592, %v4280, %v4591
  %vm4594 = vcmp.eq.f32.partialorder %v4280, 0.0
  %v4595 = vand.u32 %v4280, 2147483648
  %v4596 = vsel %vm4594, %v4595, %v4593
  %v4597 = vrsqrt.pop %v4281
  %v4598 = vmul.f32 %v4281, %v4597
  %vm4599 = vcmp.eq.f32.partialorder %v4281, inf
  %v4600 = vsel %vm4599, %v4281, %v4598
  %vm4601 = vcmp.eq.f32.partialorder %v4281, 0.0
  %v4602 = vand.u32 %v4281, 2147483648
  %v4603 = vsel %vm4601, %v4602, %v4600
  %v4604 = vrsqrt.pop %v4282
  %v4605 = vmul.f32 %v4282, %v4604
  %vm4606 = vcmp.eq.f32.partialorder %v4282, inf
  %v4607 = vsel %vm4606, %v4282, %v4605
  %vm4608 = vcmp.eq.f32.partialorder %v4282, 0.0
  %v4609 = vand.u32 %v4282, 2147483648
  %v4610 = vsel %vm4608, %v4609, %v4607
  %v4611 = vrsqrt.pop %v4283
  %v4612 = vmul.f32 %v4283, %v4611
  %vm4613 = vcmp.eq.f32.partialorder %v4283, inf
  %v4614 = vsel %vm4613, %v4283, %v4612
  %vm4615 = vcmp.eq.f32.partialorder %v4283, 0.0
  %v4616 = vand.u32 %v4283, 2147483648
  %v4617 = vsel %vm4615, %v4616, %v4614
  %v4618 = vrsqrt.pop %v4284
  %v4619 = vmul.f32 %v4284, %v4618
  %vm4620 = vcmp.eq.f32.partialorder %v4284, inf
  %v4621 = vsel %vm4620, %v4284, %v4619
  %vm4622 = vcmp.eq.f32.partialorder %v4284, 0.0
  %v4623 = vand.u32 %v4284, 2147483648
  %v4624 = vsel %vm4622, %v4623, %v4621
  %v4625 = vrsqrt.pop %v4285
  %v4626 = vmul.f32 %v4285, %v4625
  %vm4627 = vcmp.eq.f32.partialorder %v4285, inf
  %v4628 = vsel %vm4627, %v4285, %v4626
  %vm4629 = vcmp.eq.f32.partialorder %v4285, 0.0
  %v4630 = vand.u32 %v4285, 2147483648
  %v4631 = vsel %vm4629, %v4630, %v4628
  %v4632 = vrsqrt.pop %v4286
  %v4633 = vmul.f32 %v4286, %v4632
  %vm4634 = vcmp.eq.f32.partialorder %v4286, inf
  %v4635 = vsel %vm4634, %v4286, %v4633
  %vm4636 = vcmp.eq.f32.partialorder %v4286, 0.0
  %v4637 = vand.u32 %v4286, 2147483648
  %v4638 = vsel %vm4636, %v4637, %v4635
  %v4639 = vrsqrt.pop %v4383
  %v4640 = vmul.f32 %v4383, %v4639
  %vm4641 = vcmp.eq.f32.partialorder %v4383, inf
  %v4642 = vsel %vm4641, %v4383, %v4640
  %vm4643 = vcmp.eq.f32.partialorder %v4383, 0.0
  %v4644 = vand.u32 %v4383, 2147483648
  %v4645 = vsel %vm4643, %v4644, %v4642
  %v4646 = vrsqrt.pop %v4384
  %v4647 = vmul.f32 %v4384, %v4646
  %vm4648 = vcmp.eq.f32.partialorder %v4384, inf
  %v4649 = vsel %vm4648, %v4384, %v4647
  %vm4650 = vcmp.eq.f32.partialorder %v4384, 0.0
  %v4651 = vand.u32 %v4384, 2147483648
  %v4652 = vsel %vm4650, %v4651, %v4649
  %v4653 = vrsqrt.pop %v4385
  %v4654 = vmul.f32 %v4385, %v4653
  %vm4655 = vcmp.eq.f32.partialorder %v4385, inf
  %v4656 = vsel %vm4655, %v4385, %v4654
  %vm4657 = vcmp.eq.f32.partialorder %v4385, 0.0
  %v4658 = vand.u32 %v4385, 2147483648
  %v4659 = vsel %vm4657, %v4658, %v4656
  %v4660 = vrsqrt.pop %v4386
  %v4661 = vmul.f32 %v4386, %v4660
  %vm4662 = vcmp.eq.f32.partialorder %v4386, inf
  %v4663 = vsel %vm4662, %v4386, %v4661
  %vm4664 = vcmp.eq.f32.partialorder %v4386, 0.0
  %v4665 = vand.u32 %v4386, 2147483648
  %v4666 = vsel %vm4664, %v4665, %v4663
  %v4667 = vrsqrt.pop %v4387
  %v4668 = vmul.f32 %v4387, %v4667
  %vm4669 = vcmp.eq.f32.partialorder %v4387, inf
  %v4670 = vsel %vm4669, %v4387, %v4668
  %vm4671 = vcmp.eq.f32.partialorder %v4387, 0.0
  %v4672 = vand.u32 %v4387, 2147483648
  %v4673 = vsel %vm4671, %v4672, %v4670
  %v4674 = vrsqrt.pop %v4388
  %v4675 = vmul.f32 %v4388, %v4674
  %vm4676 = vcmp.eq.f32.partialorder %v4388, inf
  %v4677 = vsel %vm4676, %v4388, %v4675
  %vm4678 = vcmp.eq.f32.partialorder %v4388, 0.0
  %v4679 = vand.u32 %v4388, 2147483648
  %v4680 = vsel %vm4678, %v4679, %v4677
  %v4681 = vrsqrt.pop %v4389
  %v4682 = vmul.f32 %v4389, %v4681
  %vm4683 = vcmp.eq.f32.partialorder %v4389, inf
  %v4684 = vsel %vm4683, %v4389, %v4682
  %vm4685 = vcmp.eq.f32.partialorder %v4389, 0.0
  %v4686 = vand.u32 %v4389, 2147483648
  %v4687 = vsel %vm4685, %v4686, %v4684
  %v4688 = vrsqrt.pop %v4390
  %v4689 = vmul.f32 %v4390, %v4688
  %vm4690 = vcmp.eq.f32.partialorder %v4390, inf
  %v4691 = vsel %vm4690, %v4390, %v4689
  %vm4692 = vcmp.eq.f32.partialorder %v4390, 0.0
  %v4693 = vand.u32 %v4390, 2147483648
  %v4694 = vsel %vm4692, %v4693, %v4691
  %v4695 = vrsqrt.pop %v4391
  %v4696 = vmul.f32 %v4391, %v4695
  %vm4697 = vcmp.eq.f32.partialorder %v4391, inf
  %v4698 = vsel %vm4697, %v4391, %v4696
  %vm4699 = vcmp.eq.f32.partialorder %v4391, 0.0
  %v4700 = vand.u32 %v4391, 2147483648
  %v4701 = vsel %vm4699, %v4700, %v4698
  %v4702 = vrsqrt.pop %v4392
  %v4703 = vmul.f32 %v4392, %v4702
  %vm4704 = vcmp.eq.f32.partialorder %v4392, inf
  %v4705 = vsel %vm4704, %v4392, %v4703
  %vm4706 = vcmp.eq.f32.partialorder %v4392, 0.0
  %v4707 = vand.u32 %v4392, 2147483648
  %v4708 = vsel %vm4706, %v4707, %v4705
  %v4709 = vrsqrt.pop %v4393
  %v4710 = vmul.f32 %v4393, %v4709
  %vm4711 = vcmp.eq.f32.partialorder %v4393, inf
  %v4712 = vsel %vm4711, %v4393, %v4710
  %vm4713 = vcmp.eq.f32.partialorder %v4393, 0.0
  %v4714 = vand.u32 %v4393, 2147483648
  %v4715 = vsel %vm4713, %v4714, %v4712
  %v4716 = vrsqrt.pop %v4394
  %v4717 = vmul.f32 %v4394, %v4716
  %vm4718 = vcmp.eq.f32.partialorder %v4394, inf
  %v4719 = vsel %vm4718, %v4394, %v4717
  %vm4720 = vcmp.eq.f32.partialorder %v4394, 0.0
  %v4721 = vand.u32 %v4394, 2147483648
  %v4722 = vsel %vm4720, %v4721, %v4719
  %v4723 = vrsqrt.pop %v4395
  %v4724 = vmul.f32 %v4395, %v4723
  %vm4725 = vcmp.eq.f32.partialorder %v4395, inf
  %v4726 = vsel %vm4725, %v4395, %v4724
  %vm4727 = vcmp.eq.f32.partialorder %v4395, 0.0
  %v4728 = vand.u32 %v4395, 2147483648
  %v4729 = vsel %vm4727, %v4728, %v4726
  %v4730 = vrsqrt.pop %v4396
  %v4731 = vmul.f32 %v4396, %v4730
  %vm4732 = vcmp.eq.f32.partialorder %v4396, inf
  %v4733 = vsel %vm4732, %v4396, %v4731
  %vm4734 = vcmp.eq.f32.partialorder %v4396, 0.0
  %v4735 = vand.u32 %v4396, 2147483648
  %v4736 = vsel %vm4734, %v4735, %v4733
  %v4737 = vrsqrt.pop %v4397
  %v4738 = vmul.f32 %v4397, %v4737
  %vm4739 = vcmp.eq.f32.partialorder %v4397, inf
  %v4740 = vsel %vm4739, %v4397, %v4738
  %vm4741 = vcmp.eq.f32.partialorder %v4397, 0.0
  %v4742 = vand.u32 %v4397, 2147483648
  %v4743 = vsel %vm4741, %v4742, %v4740
  %v4744 = vrsqrt.pop %v4398
  %v4745 = vmul.f32 %v4398, %v4744
  %vm4746 = vcmp.eq.f32.partialorder %v4398, inf
  %v4747 = vsel %vm4746, %v4398, %v4745
  %vm4748 = vcmp.eq.f32.partialorder %v4398, 0.0
  %v4749 = vand.u32 %v4398, 2147483648
  %v4750 = vsel %vm4748, %v4749, %v4747
  %v4751 = vrsqrt.pop %v4399
  %v4752 = vmul.f32 %v4399, %v4751
  %vm4753 = vcmp.eq.f32.partialorder %v4399, inf
  %v4754 = vsel %vm4753, %v4399, %v4752
  %vm4755 = vcmp.eq.f32.partialorder %v4399, 0.0
  %v4756 = vand.u32 %v4399, 2147483648
  %v4757 = vsel %vm4755, %v4756, %v4754
  %v4758 = vrsqrt.pop %v4400
  %v4759 = vmul.f32 %v4400, %v4758
  %vm4760 = vcmp.eq.f32.partialorder %v4400, inf
  %v4761 = vsel %vm4760, %v4400, %v4759
  %vm4762 = vcmp.eq.f32.partialorder %v4400, 0.0
  %v4763 = vand.u32 %v4400, 2147483648
  %v4764 = vsel %vm4762, %v4763, %v4761
  %v4765 = vrsqrt.pop %v4401
  %v4766 = vmul.f32 %v4401, %v4765
  %vm4767 = vcmp.eq.f32.partialorder %v4401, inf
  %v4768 = vsel %vm4767, %v4401, %v4766
  %vm4769 = vcmp.eq.f32.partialorder %v4401, 0.0
  %v4770 = vand.u32 %v4401, 2147483648
  %v4771 = vsel %vm4769, %v4770, %v4768
  %v4772 = vrsqrt.pop %v4402
  %v4773 = vmul.f32 %v4402, %v4772
  %vm4774 = vcmp.eq.f32.partialorder %v4402, inf
  %v4775 = vsel %vm4774, %v4402, %v4773
  %vm4776 = vcmp.eq.f32.partialorder %v4402, 0.0
  %v4777 = vand.u32 %v4402, 2147483648
  %v4778 = vsel %vm4776, %v4777, %v4775
  %v4779 = vrsqrt.pop %v4403
  %v4780 = vmul.f32 %v4403, %v4779
  %vm4781 = vcmp.eq.f32.partialorder %v4403, inf
  %v4782 = vsel %vm4781, %v4403, %v4780
  %vm4783 = vcmp.eq.f32.partialorder %v4403, 0.0
  %v4784 = vand.u32 %v4403, 2147483648
  %v4785 = vsel %vm4783, %v4784, %v4782
  %v4786 = vrsqrt.pop %v4404
  %v4787 = vmul.f32 %v4404, %v4786
  %vm4788 = vcmp.eq.f32.partialorder %v4404, inf
  %v4789 = vsel %vm4788, %v4404, %v4787
  %vm4790 = vcmp.eq.f32.partialorder %v4404, 0.0
  %v4791 = vand.u32 %v4404, 2147483648
  %v4792 = vsel %vm4790, %v4791, %v4789
  %v4793 = vrsqrt.pop %v4405
  %v4794 = vmul.f32 %v4405, %v4793
  %vm4795 = vcmp.eq.f32.partialorder %v4405, inf
  %v4796 = vsel %vm4795, %v4405, %v4794
  %vm4797 = vcmp.eq.f32.partialorder %v4405, 0.0
  %v4798 = vand.u32 %v4405, 2147483648
  %v4799 = vsel %vm4797, %v4798, %v4796
  %v4800 = vrsqrt.pop %v4406
  %v4801 = vmul.f32 %v4406, %v4800
  %vm4802 = vcmp.eq.f32.partialorder %v4406, inf
  %v4803 = vsel %vm4802, %v4406, %v4801
  %vm4804 = vcmp.eq.f32.partialorder %v4406, 0.0
  %v4805 = vand.u32 %v4406, 2147483648
  %v4806 = vsel %vm4804, %v4805, %v4803
  %v4807 = vrsqrt.pop %v4407
  %v4808 = vmul.f32 %v4407, %v4807
  %vm4809 = vcmp.eq.f32.partialorder %v4407, inf
  %v4810 = vsel %vm4809, %v4407, %v4808
  %vm4811 = vcmp.eq.f32.partialorder %v4407, 0.0
  %v4812 = vand.u32 %v4407, 2147483648
  %v4813 = vsel %vm4811, %v4812, %v4810
  %v4814 = vrsqrt.pop %v4408
  %v4815 = vmul.f32 %v4408, %v4814
  %vm4816 = vcmp.eq.f32.partialorder %v4408, inf
  %v4817 = vsel %vm4816, %v4408, %v4815
  %vm4818 = vcmp.eq.f32.partialorder %v4408, 0.0
  %v4819 = vand.u32 %v4408, 2147483648
  %v4820 = vsel %vm4818, %v4819, %v4817
  %v4821 = vrsqrt.pop %v4409
  %v4822 = vmul.f32 %v4409, %v4821
  %vm4823 = vcmp.eq.f32.partialorder %v4409, inf
  %v4824 = vsel %vm4823, %v4409, %v4822
  %vm4825 = vcmp.eq.f32.partialorder %v4409, 0.0
  %v4826 = vand.u32 %v4409, 2147483648
  %v4827 = vsel %vm4825, %v4826, %v4824
  %v4828 = vrsqrt.pop %v4410
  %v4829 = vmul.f32 %v4410, %v4828
  %vm4830 = vcmp.eq.f32.partialorder %v4410, inf
  %v4831 = vsel %vm4830, %v4410, %v4829
  %vm4832 = vcmp.eq.f32.partialorder %v4410, 0.0
  %v4833 = vand.u32 %v4410, 2147483648
  %v4834 = vsel %vm4832, %v4833, %v4831
  %v4835 = vrsqrt.pop %v4411
  %v4836 = vmul.f32 %v4411, %v4835
  %vm4837 = vcmp.eq.f32.partialorder %v4411, inf
  %v4838 = vsel %vm4837, %v4411, %v4836
  %vm4839 = vcmp.eq.f32.partialorder %v4411, 0.0
  %v4840 = vand.u32 %v4411, 2147483648
  %v4841 = vsel %vm4839, %v4840, %v4838
  %v4842 = vrsqrt.pop %v4412
  %v4843 = vmul.f32 %v4412, %v4842
  %vm4844 = vcmp.eq.f32.partialorder %v4412, inf
  %v4845 = vsel %vm4844, %v4412, %v4843
  %vm4846 = vcmp.eq.f32.partialorder %v4412, 0.0
  %v4847 = vand.u32 %v4412, 2147483648
  %v4848 = vsel %vm4846, %v4847, %v4845
  %v4849 = vrsqrt.pop %v4413
  %v4850 = vmul.f32 %v4413, %v4849
  %vm4851 = vcmp.eq.f32.partialorder %v4413, inf
  %v4852 = vsel %vm4851, %v4413, %v4850
  %vm4853 = vcmp.eq.f32.partialorder %v4413, 0.0
  %v4854 = vand.u32 %v4413, 2147483648
  %v4855 = vsel %vm4853, %v4854, %v4852
  %v4856 = vrsqrt.pop %v4414
  %v4857 = vmul.f32 %v4414, %v4856
  %vm4858 = vcmp.eq.f32.partialorder %v4414, inf
  %v4859 = vsel %vm4858, %v4414, %v4857
  %vm4860 = vcmp.eq.f32.partialorder %v4414, 0.0
  %v4861 = vand.u32 %v4414, 2147483648
  %v4862 = vsel %vm4860, %v4861, %v4859
  %v4863 = vsub.f32 %v4421, %v4645
  %v4864 = vsub.f32 %v4428, %v4652
  %v4865 = vsub.f32 %v4435, %v4659
  %v4866 = vsub.f32 %v4442, %v4666
  %v4867 = vsub.f32 %v4449, %v4673
  %v4868 = vsub.f32 %v4456, %v4680
  %v4869 = vsub.f32 %v4463, %v4687
  %v4870 = vsub.f32 %v4470, %v4694
  %v4871 = vsub.f32 %v4477, %v4701
  %v4872 = vsub.f32 %v4484, %v4708
  %v4873 = vsub.f32 %v4491, %v4715
  %v4874 = vsub.f32 %v4498, %v4722
  %v4875 = vsub.f32 %v4505, %v4729
  %v4876 = vsub.f32 %v4512, %v4736
  %v4877 = vsub.f32 %v4519, %v4743
  %v4878 = vsub.f32 %v4526, %v4750
  %v4879 = vsub.f32 %v4533, %v4757
  %v4880 = vsub.f32 %v4540, %v4764
  %v4881 = vsub.f32 %v4547, %v4771
  %v4882 = vsub.f32 %v4554, %v4778
  %v4883 = vsub.f32 %v4561, %v4785
  %v4884 = vsub.f32 %v4568, %v4792
  %v4885 = vsub.f32 %v4575, %v4799
  %v4886 = vsub.f32 %v4582, %v4806
  %v4887 = vsub.f32 %v4589, %v4813
  %v4888 = vsub.f32 %v4596, %v4820
  %v4889 = vsub.f32 %v4603, %v4827
  %v4890 = vsub.f32 %v4610, %v4834
  %v4891 = vsub.f32 %v4617, %v4841
  %v4892 = vsub.f32 %v4624, %v4848
  %v4893 = vsub.f32 %v4631, %v4855
  %v4894 = vsub.f32 %v4638, %v4862
  %v4895 = vadd.f32 %v4421, 1e-07
  %v4896 = vadd.f32 %v4428, 1e-07
  %v4897 = vadd.f32 %v4435, 1e-07
  %v4898 = vadd.f32 %v4442, 1e-07
  %v4899 = vadd.f32 %v4449, 1e-07
  %v4900 = vadd.f32 %v4456, 1e-07
  %v4901 = vadd.f32 %v4463, 1e-07
  %v4902 = vadd.f32 %v4470, 1e-07
  %v4903 = vadd.f32 %v4477, 1e-07
  %v4904 = vadd.f32 %v4484, 1e-07
  %v4905 = vadd.f32 %v4491, 1e-07
  %v4906 = vadd.f32 %v4498, 1e-07
  %v4907 = vadd.f32 %v4505, 1e-07
  %v4908 = vadd.f32 %v4512, 1e-07
  %v4909 = vadd.f32 %v4519, 1e-07
  %v4910 = vadd.f32 %v4526, 1e-07
  %v4911 = vadd.f32 %v4533, 1e-07
  %v4912 = vadd.f32 %v4540, 1e-07
  %v4913 = vadd.f32 %v4547, 1e-07
  %v4914 = vadd.f32 %v4554, 1e-07
  %v4915 = vadd.f32 %v4561, 1e-07
  %v4916 = vadd.f32 %v4568, 1e-07
  %v4917 = vadd.f32 %v4575, 1e-07
  %v4918 = vadd.f32 %v4582, 1e-07
  %v4919 = vadd.f32 %v4589, 1e-07
  %v4920 = vadd.f32 %v4596, 1e-07
  %v4921 = vadd.f32 %v4603, 1e-07
  %v4922 = vadd.f32 %v4610, 1e-07
  %v4923 = vadd.f32 %v4617, 1e-07
  %v4924 = vadd.f32 %v4624, 1e-07
  %v4925 = vadd.f32 %v4631, 1e-07
  %v4926 = vadd.f32 %v4638, 1e-07
  %v4927 = vlog2.pop %v4895
  %v4928 = vmul.f32 %v4927, 0.6931472
  %v4929 = vlog2.pop %v4896
  %v4930 = vmul.f32 %v4929, 0.6931472
  %v4931 = vlog2.pop %v4897
  %v4932 = vmul.f32 %v4931, 0.6931472
  %v4933 = vlog2.pop %v4898
  %v4934 = vmul.f32 %v4933, 0.6931472
  %v4935 = vlog2.pop %v4899
  %v4936 = vmul.f32 %v4935, 0.6931472
  %v4937 = vlog2.pop %v4900
  %v4938 = vmul.f32 %v4937, 0.6931472
  %v4939 = vlog2.pop %v4901
  %v4940 = vmul.f32 %v4939, 0.6931472
  %v4941 = vlog2.pop %v4902
  %v4942 = vmul.f32 %v4941, 0.6931472
  %v4943 = vlog2.pop %v4903
  %v4944 = vmul.f32 %v4943, 0.6931472
  %v4945 = vlog2.pop %v4904
  %v4946 = vmul.f32 %v4945, 0.6931472
  %v4947 = vlog2.pop %v4905
  %v4948 = vmul.f32 %v4947, 0.6931472
  %v4949 = vlog2.pop %v4906
  %v4950 = vmul.f32 %v4949, 0.6931472
  %v4951 = vlog2.pop %v4907
  %v4952 = vmul.f32 %v4951, 0.6931472
  %v4953 = vlog2.pop %v4908
  %v4954 = vmul.f32 %v4953, 0.6931472
  %v4955 = vlog2.pop %v4909
  %v4956 = vmul.f32 %v4955, 0.6931472
  %v4957 = vlog2.pop %v4910
  %v4958 = vmul.f32 %v4957, 0.6931472
  %v4959 = vlog2.pop %v4911
  %v4960 = vmul.f32 %v4959, 0.6931472
  %v4961 = vlog2.pop %v4912
  %v4962 = vmul.f32 %v4961, 0.6931472
  %v4963 = vlog2.pop %v4913
  %v4964 = vmul.f32 %v4963, 0.6931472
  %v4965 = vlog2.pop %v4914
  %v4966 = vmul.f32 %v4965, 0.6931472
  %v4967 = vlog2.pop %v4915
  %v4968 = vmul.f32 %v4967, 0.6931472
  %v4969 = vlog2.pop %v4916
  %v4970 = vmul.f32 %v4969, 0.6931472
  %v4971 = vlog2.pop %v4917
  %v4972 = vmul.f32 %v4971, 0.6931472
  %v4973 = vlog2.pop %v4918
  %v4974 = vmul.f32 %v4973, 0.6931472
  %v4975 = vlog2.pop %v4919
  %v4976 = vmul.f32 %v4975, 0.6931472
  %v4977 = vlog2.pop %v4920
  %v4978 = vmul.f32 %v4977, 0.6931472
  %v4979 = vlog2.pop %v4921
  %v4980 = vmul.f32 %v4979, 0.6931472
  %v4981 = vlog2.pop %v4922
  %v4982 = vmul.f32 %v4981, 0.6931472
  %v4983 = vlog2.pop %v4923
  %v4984 = vmul.f32 %v4983, 0.6931472
  %v4985 = vlog2.pop %v4924
  %v4986 = vmul.f32 %v4985, 0.6931472
  %v4987 = vlog2.pop %v4925
  %v4988 = vmul.f32 %v4987, 0.6931472
  %v4989 = vlog2.pop %v4926
  %v4990 = vmul.f32 %v4989, 0.6931472
  %v4991 = vadd.f32 %v4645, 1e-07
  %v4992 = vadd.f32 %v4652, 1e-07
  %v4993 = vadd.f32 %v4659, 1e-07
  %v4994 = vadd.f32 %v4666, 1e-07
  %v4995 = vadd.f32 %v4673, 1e-07
  %v4996 = vadd.f32 %v4680, 1e-07
  %v4997 = vadd.f32 %v4687, 1e-07
  %v4998 = vadd.f32 %v4694, 1e-07
  %v4999 = vadd.f32 %v4701, 1e-07
  %v5000 = vadd.f32 %v4708, 1e-07
  %v5001 = vadd.f32 %v4715, 1e-07
  %v5002 = vadd.f32 %v4722, 1e-07
  %v5003 = vadd.f32 %v4729, 1e-07
  %v5004 = vadd.f32 %v4736, 1e-07
  %v5005 = vadd.f32 %v4743, 1e-07
  %v5006 = vadd.f32 %v4750, 1e-07
  %v5007 = vadd.f32 %v4757, 1e-07
  %v5008 = vadd.f32 %v4764, 1e-07
  %v5009 = vadd.f32 %v4771, 1e-07
  %v5010 = vadd.f32 %v4778, 1e-07
  %v5011 = vadd.f32 %v4785, 1e-07
  %v5012 = vadd.f32 %v4792, 1e-07
  %v5013 = vadd.f32 %v4799, 1e-07
  %v5014 = vadd.f32 %v4806, 1e-07
  %v5015 = vadd.f32 %v4813, 1e-07
  %v5016 = vadd.f32 %v4820, 1e-07
  %v5017 = vadd.f32 %v4827, 1e-07
  %v5018 = vadd.f32 %v4834, 1e-07
  %v5019 = vadd.f32 %v4841, 1e-07
  %v5020 = vadd.f32 %v4848, 1e-07
  %v5021 = vadd.f32 %v4855, 1e-07
  %v5022 = vadd.f32 %v4862, 1e-07
  %v5023 = vlog2.pop %v4991
  %v5024 = vmul.f32 %v5023, 0.6931472
  %v5025 = vlog2.pop %v4992
  %v5026 = vmul.f32 %v5025, 0.6931472
  %v5027 = vlog2.pop %v4993
  %v5028 = vmul.f32 %v5027, 0.6931472
  %v5029 = vlog2.pop %v4994
  %v5030 = vmul.f32 %v5029, 0.6931472
  %v5031 = vlog2.pop %v4995
  %v5032 = vmul.f32 %v5031, 0.6931472
  %v5033 = vlog2.pop %v4996
  %v5034 = vmul.f32 %v5033, 0.6931472
  %v5035 = vlog2.pop %v4997
  %v5036 = vmul.f32 %v5035, 0.6931472
  %v5037 = vlog2.pop %v4998
  %v5038 = vmul.f32 %v5037, 0.6931472
  %v5039 = vlog2.pop %v4999
  %v5040 = vmul.f32 %v5039, 0.6931472
  %v5041 = vlog2.pop %v5000
  %v5042 = vmul.f32 %v5041, 0.6931472
  %v5043 = vlog2.pop %v5001
  %v5044 = vmul.f32 %v5043, 0.6931472
  %v5045 = vlog2.pop %v5002
  %v5046 = vmul.f32 %v5045, 0.6931472
  %v5047 = vlog2.pop %v5003
  %v5048 = vmul.f32 %v5047, 0.6931472
  %v5049 = vlog2.pop %v5004
  %v5050 = vmul.f32 %v5049, 0.6931472
  %v5051 = vlog2.pop %v5005
  %v5052 = vmul.f32 %v5051, 0.6931472
  %v5053 = vlog2.pop %v5006
  %v5054 = vmul.f32 %v5053, 0.6931472
  %v5055 = vlog2.pop %v5007
  %v5056 = vmul.f32 %v5055, 0.6931472
  %v5057 = vlog2.pop %v5008
  %v5058 = vmul.f32 %v5057, 0.6931472
  %v5059 = vlog2.pop %v5009
  %v5060 = vmul.f32 %v5059, 0.6931472
  %v5061 = vlog2.pop %v5010
  %v5062 = vmul.f32 %v5061, 0.6931472
  %v5063 = vlog2.pop %v5011
  %v5064 = vmul.f32 %v5063, 0.6931472
  %v5065 = vlog2.pop %v5012
  %v5066 = vmul.f32 %v5065, 0.6931472
  %v5067 = vlog2.pop %v5013
  %v5068 = vmul.f32 %v5067, 0.6931472
  %v5069 = vlog2.pop %v5014
  %v5070 = vmul.f32 %v5069, 0.6931472
  %v5071 = vlog2.pop %v5015
  %v5072 = vmul.f32 %v5071, 0.6931472
  %v5073 = vlog2.pop %v5016
  %v5074 = vmul.f32 %v5073, 0.6931472
  %v5075 = vlog2.pop %v5017
  %v5076 = vmul.f32 %v5075, 0.6931472
  %v5077 = vlog2.pop %v5018
  %v5078 = vmul.f32 %v5077, 0.6931472
  %v5079 = vlog2.pop %v5019
  %v5080 = vmul.f32 %v5079, 0.6931472
  %v5081 = vlog2.pop %v5020
  %v5082 = vmul.f32 %v5081, 0.6931472
  %v5083 = vlog2.pop %v5021
  %v5084 = vmul.f32 %v5083, 0.6931472
  %v5085 = vlog2.pop %v5022
  %v5086 = vmul.f32 %v5085, 0.6931472
  %v5087 = vsub.f32 %v4928, %v5024
  %v5088 = vsub.f32 %v4930, %v5026
  %v5089 = vsub.f32 %v4932, %v5028
  %v5090 = vsub.f32 %v4934, %v5030
  %v5091 = vsub.f32 %v4936, %v5032
  %v5092 = vsub.f32 %v4938, %v5034
  %v5093 = vsub.f32 %v4940, %v5036
  %v5094 = vsub.f32 %v4942, %v5038
  %v5095 = vsub.f32 %v4944, %v5040
  %v5096 = vsub.f32 %v4946, %v5042
  %v5097 = vsub.f32 %v4948, %v5044
  %v5098 = vsub.f32 %v4950, %v5046
  %v5099 = vsub.f32 %v4952, %v5048
  %v5100 = vsub.f32 %v4954, %v5050
  %v5101 = vsub.f32 %v4956, %v5052
  %v5102 = vsub.f32 %v4958, %v5054
  %v5103 = vsub.f32 %v4960, %v5056
  %v5104 = vsub.f32 %v4962, %v5058
  %v5105 = vsub.f32 %v4964, %v5060
  %v5106 = vsub.f32 %v4966, %v5062
  %v5107 = vsub.f32 %v4968, %v5064
  %v5108 = vsub.f32 %v4970, %v5066
  %v5109 = vsub.f32 %v4972, %v5068
  %v5110 = vsub.f32 %v4974, %v5070
  %v5111 = vsub.f32 %v4976, %v5072
  %v5112 = vsub.f32 %v4978, %v5074
  %v5113 = vsub.f32 %v4980, %v5076
  %v5114 = vsub.f32 %v4982, %v5078
  %v5115 = vsub.f32 %v4984, %v5080
  %v5116 = vsub.f32 %v4986, %v5082
  %v5117 = vsub.f32 %v4988, %v5084
  %v5118 = vsub.f32 %v4990, %v5086
  %v5119 = vld [vmem:[#allocation2] sm:$0xff]
  %v5120 = vmul.f32 %v4863, %v4863
  %v5121 = vmul.f32 %v4864, %v4864
  %v5122 = vmul.f32 %v4865, %v4865
  %v5123 = vmul.f32 %v4866, %v4866
  %v5124 = vmul.f32 %v4867, %v4867
  %v5125 = vmul.f32 %v4868, %v4868
  %v5126 = vmul.f32 %v4869, %v4869
  %v5127 = vmul.f32 %v4870, %v4870
  %v5128 = vmul.f32 %v4871, %v4871
  %v5129 = vmul.f32 %v4872, %v4872
  %v5130 = vmul.f32 %v4873, %v4873
  %v5131 = vmul.f32 %v4874, %v4874
  %v5132 = vmul.f32 %v4875, %v4875
  %v5133 = vmul.f32 %v4876, %v4876
  %v5134 = vmul.f32 %v4877, %v4877
  %v5135 = vmul.f32 %v4878, %v4878
  %v5136 = vmul.f32 %v4879, %v4879
  %v5137 = vmul.f32 %v4880, %v4880
  %v5138 = vmul.f32 %v4881, %v4881
  %v5139 = vmul.f32 %v4882, %v4882
  %v5140 = vmul.f32 %v4883, %v4883
  %v5141 = vmul.f32 %v4884, %v4884
  %v5142 = vmul.f32 %v4885, %v4885
  %v5143 = vmul.f32 %v4886, %v4886
  %v5144 = vmul.f32 %v4887, %v4887
  %v5145 = vmul.f32 %v4888, %v4888
  %v5146 = vmul.f32 %v4889, %v4889
  %v5147 = vmul.f32 %v4890, %v4890
  %v5148 = vmul.f32 %v4891, %v4891
  %v5149 = vmul.f32 %v4892, %v4892
  %v5150 = vmul.f32 %v4893, %v4893
  %v5151 = vmul.f32 %v4894, %v4894
  %v5152 = vadd.f32 %v5120, %v5121
  %v5153 = vadd.f32 %v5152, %v5122
  %v5154 = vadd.f32 %v5153, %v5123
  %v5155 = vadd.f32 %v5154, %v5124
  %v5156 = vadd.f32 %v5155, %v5125
  %v5157 = vadd.f32 %v5156, %v5126
  %v5158 = vadd.f32 %v5157, %v5127
  %v5159 = vadd.f32 %v5158, %v5128
  %v5160 = vadd.f32 %v5159, %v5129
  %v5161 = vadd.f32 %v5160, %v5130
  %v5162 = vadd.f32 %v5161, %v5131
  %v5163 = vadd.f32 %v5162, %v5132
  %v5164 = vadd.f32 %v5163, %v5133
  %v5165 = vadd.f32 %v5164, %v5134
  %v5166 = vadd.f32 %v5165, %v5135
  %v5167 = vadd.f32 %v5166, %v5136
  %v5168 = vadd.f32 %v5167, %v5137
  %v5169 = vadd.f32 %v5168, %v5138
  %v5170 = vadd.f32 %v5169, %v5139
  %v5171 = vadd.f32 %v5170, %v5140
  %v5172 = vadd.f32 %v5171, %v5141
  %v5173 = vadd.f32 %v5172, %v5142
  %v5174 = vadd.f32 %v5173, %v5143
  %v5175 = vadd.f32 %v5174, %v5144
  %v5176 = vadd.f32 %v5175, %v5145
  %v5177 = vadd.f32 %v5176, %v5146
  %v5178 = vadd.f32 %v5177, %v5147
  %v5179 = vadd.f32 %v5178, %v5148
  %v5180 = vadd.f32 %v5179, %v5149
  %v5181 = vadd.f32 %v5180, %v5150
  %v5182 = vadd.f32 %v5181, %v5151
  %v5183 = vadd.f32 %v5119, %v5182
  %5184 = vst [vmem:[#allocation2] sm:$0xff] %v5183
  %v5185 = vld [vmem:[#allocation3] sm:$0xff]
  %v5186 = vadd.f32 %v4255, %v4256
  %v5187 = vadd.f32 %v5186, %v4257
  %v5188 = vadd.f32 %v5187, %v4258
  %v5189 = vadd.f32 %v5188, %v4259
  %v5190 = vadd.f32 %v5189, %v4260
  %v5191 = vadd.f32 %v5190, %v4261
  %v5192 = vadd.f32 %v5191, %v4262
  %v5193 = vadd.f32 %v5192, %v4263
  %v5194 = vadd.f32 %v5193, %v4264
  %v5195 = vadd.f32 %v5194, %v4265
  %v5196 = vadd.f32 %v5195, %v4266
  %v5197 = vadd.f32 %v5196, %v4267
  %v5198 = vadd.f32 %v5197, %v4268
  %v5199 = vadd.f32 %v5198, %v4269
  %v5200 = vadd.f32 %v5199, %v4270
  %v5201 = vadd.f32 %v5200, %v4271
  %v5202 = vadd.f32 %v5201, %v4272
  %v5203 = vadd.f32 %v5202, %v4273
  %v5204 = vadd.f32 %v5203, %v4274
  %v5205 = vadd.f32 %v5204, %v4275
  %v5206 = vadd.f32 %v5205, %v4276
  %v5207 = vadd.f32 %v5206, %v4277
  %v5208 = vadd.f32 %v5207, %v4278
  %v5209 = vadd.f32 %v5208, %v4279
  %v5210 = vadd.f32 %v5209, %v4280
  %v5211 = vadd.f32 %v5210, %v4281
  %v5212 = vadd.f32 %v5211, %v4282
  %v5213 = vadd.f32 %v5212, %v4283
  %v5214 = vadd.f32 %v5213, %v4284
  %v5215 = vadd.f32 %v5214, %v4285
  %v5216 = vadd.f32 %v5215, %v4286
  %v5217 = vadd.f32 %v5185, %v5216
  %5218 = vst [vmem:[#allocation3] sm:$0xff] %v5217
  %v5219 = vld [vmem:[#allocation4] sm:$0xff]
  %v5220 = vand.u32 2147483647, %v5087
  %v5221 = vand.u32 2147483647, %v5088
  %v5222 = vand.u32 2147483647, %v5089
  %v5223 = vand.u32 2147483647, %v5090
  %v5224 = vand.u32 2147483647, %v5091
  %v5225 = vand.u32 2147483647, %v5092
  %v5226 = vand.u32 2147483647, %v5093
  %v5227 = vand.u32 2147483647, %v5094
  %v5228 = vand.u32 2147483647, %v5095
  %v5229 = vand.u32 2147483647, %v5096
  %v5230 = vand.u32 2147483647, %v5097
  %v5231 = vand.u32 2147483647, %v5098
  %v5232 = vand.u32 2147483647, %v5099
  %v5233 = vand.u32 2147483647, %v5100
  %v5234 = vand.u32 2147483647, %v5101
  %v5235 = vand.u32 2147483647, %v5102
  %v5236 = vand.u32 2147483647, %v5103
  %v5237 = vand.u32 2147483647, %v5104
  %v5238 = vand.u32 2147483647, %v5105
  %v5239 = vand.u32 2147483647, %v5106
  %v5240 = vand.u32 2147483647, %v5107
  %v5241 = vand.u32 2147483647, %v5108
  %v5242 = vand.u32 2147483647, %v5109
  %v5243 = vand.u32 2147483647, %v5110
  %v5244 = vand.u32 2147483647, %v5111
  %v5245 = vand.u32 2147483647, %v5112
  %v5246 = vand.u32 2147483647, %v5113
  %v5247 = vand.u32 2147483647, %v5114
  %v5248 = vand.u32 2147483647, %v5115
  %v5249 = vand.u32 2147483647, %v5116
  %v5250 = vand.u32 2147483647, %v5117
  %v5251 = vand.u32 2147483647, %v5118
  %v5252 = vadd.f32 %v5220, %v5221
  %v5253 = vadd.f32 %v5252, %v5222
  %v5254 = vadd.f32 %v5253, %v5223
  %v5255 = vadd.f32 %v5254, %v5224
  %v5256 = vadd.f32 %v5255, %v5225
  %v5257 = vadd.f32 %v5256, %v5226
  %v5258 = vadd.f32 %v5257, %v5227
  %v5259 = vadd.f32 %v5258, %v5228
  %v5260 = vadd.f32 %v5259, %v5229
  %v5261 = vadd.f32 %v5260, %v5230
  %v5262 = vadd.f32 %v5261, %v5231
  %v5263 = vadd.f32 %v5262, %v5232
  %v5264 = vadd.f32 %v5263, %v5233
  %v5265 = vadd.f32 %v5264, %v5234
  %v5266 = vadd.f32 %v5265, %v5235
  %v5267 = vadd.f32 %v5266, %v5236
  %v5268 = vadd.f32 %v5267, %v5237
  %v5269 = vadd.f32 %v5268, %v5238
  %v5270 = vadd.f32 %v5269, %v5239
  %v5271 = vadd.f32 %v5270, %v5240
  %v5272 = vadd.f32 %v5271, %v5241
  %v5273 = vadd.f32 %v5272, %v5242
  %v5274 = vadd.f32 %v5273, %v5243
  %v5275 = vadd.f32 %v5274, %v5244
  %v5276 = vadd.f32 %v5275, %v5245
  %v5277 = vadd.f32 %v5276, %v5246
  %v5278 = vadd.f32 %v5277, %v5247
  %v5279 = vadd.f32 %v5278, %v5248
  %v5280 = vadd.f32 %v5279, %v5249
  %v5281 = vadd.f32 %v5280, %v5250
  %v5282 = vadd.f32 %v5281, %v5251
  %v5283 = vadd.f32 %v5219, %v5282
  %5284 = vst [vmem:[#allocation4] sm:$0xff] %v5283
  // Predicated region
  $region18: #{audio_distance_v1.3} parent=0 // pred_check
    %p5285 = pneg %p78
  $region19: #{audio_distance_v1.3} parent=0 // pred_check_branch
    %5287 = sbr.rel (%p5285) target = $region21
  $region20: #{audio_distance_v1.3} parent=0 // pred_region
    %v5288 = vld [vmem:[#allocation2] sm:$0xff]
    %5289 = vadd.xlane.f32.xlu0 %v5288
    %v5290 = vpop.xlane.xlu0 %5289
    %v5291 = vrot.slane %v5290, 4
    %v5292 = vadd.f32 %v5290, %v5291
    %v5293 = vrot.slane %v5292, 2
    %v5294 = vadd.f32 %v5292, %v5293
    %v5295 = vrot.slane %v5294, 1
    %v5296 = vadd.f32 %v5294, %v5295
    %s5297 = vtos %v5296
    %v5298 = vld [vmem:[#allocation3] sm:$0xff]
    %5299 = vadd.xlane.f32.xlu0 %v5298
    %v5300 = vpop.xlane.xlu0 %5299
    %v5301 = vrot.slane %v5300, 4
    %v5302 = vadd.f32 %v5300, %v5301
    %v5303 = vrot.slane %v5302, 2
    %v5304 = vadd.f32 %v5302, %v5303
    %v5305 = vrot.slane %v5304, 1
    %v5306 = vadd.f32 %v5304, %v5305
    %s5307 = vtos %v5306
    %v5308 = vld [vmem:[#allocation4] sm:$0xff]
    %5309 = vadd.xlane.f32.xlu0 %v5308
    %v5310 = vpop.xlane.xlu0 %5309
    %v5311 = vrot.slane %v5310, 4
    %v5312 = vadd.f32 %v5310, %v5311
    %v5313 = vrot.slane %v5312, 2
    %v5314 = vadd.f32 %v5312, %v5313
    %v5315 = vrot.slane %v5314, 1
    %v5316 = vadd.f32 %v5314, %v5315
    %s5317 = vtos %v5316
    %v5318 = vlaneseq
    %v5319 = vshrl.u32 %v5318, 7
    %vm5320 = vcmp.eq.s32.totalorder %v5319, 0
    %vm5321 = vcmp.eq.s32.totalorder %v4155, 0
    %vm5322 = vmand %vm5320, %vm5321
    %vm5323 = vcmp.eq.s32.totalorder %v4155, 1
    %vm5324 = vmand %vm5320, %vm5323
    %vm5325 = vcmp.eq.s32.totalorder %v4155, 2
    %vm5326 = vmand %vm5320, %vm5325
    %v5327 = vstv %s5317
    %v5328 = vsel %vm5326, %v5327, 0.0
    %v5329 = vstv %s5307
    %v5330 = vsel %vm5324, %v5329, %v5328
    %v5331 = vstv %s5297
    %v5332 = vsel %vm5322, %v5331, %v5330
    %5333 = vst [vmem:[%s3] sm:$0xff] %v5332
  $region21: #{audio_distance_v1.3} parent=0 // pred_fallthru
    _
  // Predicated region
  $region22: #{audio_distance_v1.3} parent=0 // pred_check
    _
  $region23: #{audio_distance_v1.3} parent=0 // pred_check_branch
    %5335 = sbr.rel (0) target = $region25
  $region24: #{audio_distance_v1.3} parent=0 // pred_region
    _
  $region25: #{audio_distance_v1.3} parent=0 // pred_fallthru
    _
  // Predicated region
  $region26: #{audio_distance_v1.3} parent=0 // pred_check
    _
  $region27: #{audio_distance_v1.3} parent=0 // pred_check_branch
    %5337 = sbr.rel (0) target = $region29
  $region28: #{audio_distance_v1.3} parent=0 // pred_region
    _
  $region29: #{audio_distance_v1.3} parent=0 // pred_fallthru
    _

</llo_original>
